<compile_context>
chip_gen: v6e
topology: v6e:2x2x1
jax: 0.10.0
libtpu: 0.0.40
codegen_flags: <defaults>
</compile_context>

<pallas_src>
import functools

import jax
import jax.numpy as jnp
from jax.experimental import pallas as pl
from jax.experimental.pallas import tpu as pltpu


# ---------------------------------------------------------------------------
# Fused Pallas kernel
# ---------------------------------------------------------------------------

def _gwnet_kernel(x_ref, adj_ref,
                  w_tcn_ref, b_tcn_ref,
                  w_big_ref, b_id_ref,
                  w_sc_ref, b_sc_ref,
                  w_out0_ref, b_out0_ref,
                  w_out1_ref, b_out1_ref,
                  o_ref,
                  g0_ref, g1_ref,
                  *, dilations, n_nodes, seq_len, c_res, c_dil, c_skip, n_adj):
    """Whole GraphWavenet forward.  Activation layout: (L*N, C), row = l*N + n."""
    N = n_nodes
    f32 = jnp.float32

    def mm(a, b):
        # bf16 MXU matmul with f32 accumulation.
        return jnp.dot(a.astype(jnp.bfloat16), b.astype(jnp.bfloat16),
                       preferred_element_type=f32)

    # Ping-pong residual buffers in VMEM (layer li reads scr[li%2], writes the other).
    scr = (g0_ref, g1_ref)
    scr[0][...] = x_ref[...].astype(f32)

    x_skip = jnp.zeros((N, c_skip), f32)
    cur_len = seq_len
    for li, d in enumerate(dilations):
        src = scr[li % 2]
        dst = scr[(li + 1) % 2]
        lp = cur_len - d          # output sequence length of this layer
        m = lp * N

        # ---- Gated TCN: Conv1d(k=2, dilation=d) as ONE fused matmul --------
        xc = src[0:m, :]                      # time steps [0, lp)
        xs = src[d * N: d * N + m, :]         # time steps [d, d+lp)
        xcat = jnp.concatenate([xc, xs], axis=1)               # (m, 2*c_res)
        fg = mm(xcat, w_tcn_ref[li]) + b_tcn_ref[li]           # (m, 2*c_dil)
        h = jnp.tanh(fg[:, :c_dil]) * jax.nn.sigmoid(fg[:, c_dil:])

        # ---- Diffusion GCN: one wide projection, per-timestep node mixing --
        proj = mm(h, w_big_ref[li])                            # (m, (1+K)*c_res)
        id_part = proj[:, :c_res] + b_id_ref[li]
        hw = [proj[:, (k + 1) * c_res:(k + 2) * c_res] for k in range(n_adj)]

        last = None
        for l in range(lp):                    # static unroll, contiguous blocks
            r0 = l * N
            acc = id_part[r0:r0 + N, :]
            for k in range(n_adj):
                acc = acc + mm(adj_ref[k], hw[k][r0:r0 + N, :])
            dst[r0:r0 + N, :] = acc
            last = acc                         # last valid timestep block

        # ---- skip_conv on last timestep (skip_linear already folded in) ----
        x_skip = x_skip + mm(last, w_sc_ref[li]) + b_sc_ref[li]
        cur_len = lp

    # ---- output head: relu -> out_linear_0 -> relu -> out_linear_1 ---------
    y = jnp.maximum(x_skip, 0.0)
    y = mm(y, w_out0_ref[...]) + b_out0_ref[...]
    y = jnp.maximum(y, 0.0)
    y = mm(y, w_out1_ref[...]) + b_out1_ref[...]
    o_ref[...] = y


def gwnet_pallas(x2d, adjs, p, *, dilations):
    """x2d: (L*N, c_res) bf16 time-major slab; adjs: (n_adj, N, N) bf16."""
    seq_len_nodes, c_res = x2d.shape
    n_adj, n_nodes, _ = adjs.shape
    seq_len = seq_len_nodes // n_nodes
    c_dil = p['w_big'].shape[1]
    c_skip = p['b_sc'].shape[-1]
    c_out = p['b_out1'].shape[-1]

    args = (x2d, adjs,
            p['w_tcn'], p['b_tcn'], p['w_big'], p['b_id'],
            p['w_sc'], p['b_sc'],
            p['w_out0'], p['b_out0'], p['w_out1'], p['b_out1'])
    kern = functools.partial(
        _gwnet_kernel, dilations=tuple(dilations), n_nodes=n_nodes,
        seq_len=seq_len, c_res=c_res, c_dil=c_dil, c_skip=c_skip, n_adj=n_adj)
    return pl.pallas_call(
        kern,
        out_shape=jax.ShapeDtypeStruct((n_nodes, c_out), jnp.float32),
        in_specs=[pl.BlockSpec(memory_space=pltpu.MemorySpace.VMEM)] * len(args),
        out_specs=pl.BlockSpec(memory_space=pltpu.MemorySpace.VMEM),
        scratch_shapes=[pltpu.VMEM((seq_len * n_nodes, c_res), jnp.float32),
                        pltpu.VMEM((seq_len * n_nodes, c_res), jnp.float32)],
    )(*args)


# ---------------------------------------------------------------------------
# Host-side glue: parameters, weight folding, adjacency precompute
# ---------------------------------------------------------------------------

def build_adjs(key, n_nodes, batch_size, k_hops):
    """Block-diagonal weighted adjacency -> row-normalized transition matrix ->
    elementwise powers (fwd) / powers of the transpose (bck), node granularity
    only (no kron expansion), mirroring GraphWavenet._precompute_gcn_adjs."""
    n_tot = n_nodes * batch_size
    A = jnp.zeros((n_tot, n_tot), dtype=jnp.float32)
    for i in range(batch_size):
        kk = jax.random.fold_in(key, i)
        w = jax.random.uniform(kk, (n_nodes, n_nodes), dtype=jnp.float32)
        mask = (jax.random.uniform(jax.random.fold_in(kk, 1),
                                   (n_nodes, n_nodes)) < 0.4).astype(jnp.float32)
        blk = w * mask + jnp.eye(n_nodes, dtype=jnp.float32)   # self-loops
        A = A.at[i * n_nodes:(i + 1) * n_nodes,
                 i * n_nodes:(i + 1) * n_nodes].set(blk)
    trans = A / jnp.sum(A, axis=1, keepdims=True)
    adjs = []
    for k in range(1, k_hops + 1):
        adjs.append(trans ** k)        # fwd_k (elementwise power, as in ref)
        adjs.append(trans.T ** k)      # bck_k
    return jnp.stack(adjs)             # (n_adj, n_tot, n_tot)


def init_raw_params(key, c_in, c_res, c_dil, c_skip, c_end, c_out, n_layers, n_adj):
    """Raw per-layer parameters mirroring the PyTorch parameterization."""
    def nrm(k, shape, scale=0.1):
        return scale * jax.random.normal(k, shape, dtype=jnp.float32)
    keys = iter(jax.random.split(key, 8 + 16 * n_layers))
    p = {
        'w_init': nrm(next(keys), (c_in, c_res)),
        'b_init': nrm(next(keys), (1, c_res)),
        'w_out0': nrm(next(keys), (c_skip, c_end)),
        'b_out0': nrm(next(keys), (1, c_end)),
        'w_out1': nrm(next(keys), (c_end, c_out)),
        'b_out1': nrm(next(keys), (1, c_out)),
        'layers': [],
    }
    for _ in range(n_layers):
        p['layers'].append({
            'w_f0': nrm(next(keys), (c_res, c_dil)),
            'w_f1': nrm(next(keys), (c_res, c_dil)),
            'b_f': nrm(next(keys), (1, c_dil)),
            'w_g0': nrm(next(keys), (c_res, c_dil)),
            'w_g1': nrm(next(keys), (c_res, c_dil)),
            'b_g': nrm(next(keys), (1, c_dil)),
            'w_id': nrm(next(keys), (c_dil, c_res)),
            'b_id': nrm(next(keys), (1, c_res)),
            'w_gcn': nrm(next(keys), (n_adj, c_dil, c_res)),
            'w_skip': nrm(next(keys), (c_res, c_res)),
            'b_skip': nrm(next(keys), (1, c_res)),
            'w_sc': nrm(next(keys), (c_res, c_skip)),
            'b_sc': nrm(next(keys), (1, c_skip)),
        })
    return p


def fold_params(raw):
    """Fold init_linear and each layer's skip_linear into downstream weights
    and build the concatenated matrices for the wide fused MXU matmuls.

    Carried kernel activation G_l = raw GCN output of layer l-1 (or the
    channel-padded input for l=0).  Reference activation H_l = G_l @ T_l + t_l
    with T_0 = [w_init; 0], t_0 = b_init, T_l = I + w_skip_{l-1},
    t_l = b_skip_{l-1}.  T/t are pre-multiplied into layer l's TCN weights and
    into layer l-1's skip_conv weights, so those linears never run explicitly.
    """
    c_in, c_res = raw['w_init'].shape
    layers = raw['layers']
    n_adj = layers[0]['w_gcn'].shape[0]
    eye = jnp.eye(c_res, dtype=jnp.float32)

    w_tcn, b_tcn, w_big, b_id, w_sc, b_sc = [], [], [], [], [], []
    for li, lp_ in enumerate(layers):
        if li == 0:
            T = jnp.zeros((c_res, c_res), jnp.float32).at[:c_in, :].set(raw['w_init'])
            t = raw['b_init']
        else:
            T = eye + layers[li - 1]['w_skip']
            t = layers[li - 1]['b_skip']
        wf0, wf1 = T @ lp_['w_f0'], T @ lp_['w_f1']
        wg0, wg1 = T @ lp_['w_g0'], T @ lp_['w_g1']
        bf = lp_['b_f'] + t @ lp_['w_f0'] + t @ lp_['w_f1']
        bg = lp_['b_g'] + t @ lp_['w_g0'] + t @ lp_['w_g1']
        w_tcn.append(jnp.concatenate(
            [jnp.concatenate([wf0, wg0], axis=1),
             jnp.concatenate([wf1, wg1], axis=1)], axis=0))      # (2*c_res, 2*c_dil)
        b_tcn.append(jnp.concatenate([bf, bg], axis=1))          # (1, 2*c_dil)
        w_big.append(jnp.concatenate(
            [lp_['w_id']] + [lp_['w_gcn'][k] for k in range(n_adj)], axis=1))
        b_id.append(lp_['b_id'])
        T_out = eye + lp_['w_skip']
        w_sc.append(T_out @ lp_['w_sc'])
        b_sc.append(lp_['b_sc'] + lp_['b_skip'] @ lp_['w_sc'])

    bf16 = jnp.bfloat16
    return {
        'w_tcn': jnp.stack(w_tcn).astype(bf16),   # (n_layers, 2*c_res, 2*c_dil)
        'b_tcn': jnp.stack(b_tcn),                # (n_layers, 1, 2*c_dil) f32
        'w_big': jnp.stack(w_big).astype(bf16),   # (n_layers, c_dil, (1+K)*c_res)
        'b_id': jnp.stack(b_id),                  # (n_layers, 1, c_res) f32
        'w_sc': jnp.stack(w_sc).astype(bf16),     # (n_layers, c_res, c_skip)
        'b_sc': jnp.stack(b_sc),                  # (n_layers, 1, c_skip) f32
        'w_out0': raw['w_out0'].astype(bf16), 'b_out0': raw['b_out0'],
        'w_out1': raw['w_out1'].astype(bf16), 'b_out1': raw['b_out1'],
    }


def graph_wavenet_forward(x_ncl, params, adjs, *, dilations):
    """x_ncl: (N_total_nodes, C_in, L) in the PyTorch NCL layout.
    Returns (N_total_nodes, C_out)."""
    n_tot, c_in, L = x_ncl.shape
    c_res = params['w_tcn'].shape[1] // 2
    # Time-major 2D slab, channels zero-padded to c_res (init_linear is folded
    # into layer 0's TCN weights; padded channels hit zero weight rows).
    x = jnp.transpose(x_ncl, (2, 0, 1))                   # (L, N, C_in)
    x = jnp.pad(x, ((0, 0), (0, 0), (0, c_res - c_in)))
    x2d = x.reshape(L * n_tot, c_res).astype(jnp.bfloat16)
    return gwnet_pallas(x2d, adjs.astype(jnp.bfloat16), params,
                        dilations=dilations)


# ---------------------------------------------------------------------------

if __name__ == "__main__":
    key = jax.random.PRNGKey(0)
    k_x, k_adj, k_par = jax.random.split(key, 3)

    batch_size, n_nodes = 2, 8
    n_tot = batch_size * n_nodes          # PyG-style batched node dimension
    in_channels, seq_len = 2, 8
    residual_channels = dilation_channels = 32
    skip_channels, end_channels, out_channels = 64, 128, 12
    dilations = (1, 2, 1, 2)              # n_layers = 4 (dilations_override)
    k_hops = 2
    n_adj = 2 * k_hops                    # fwd + bck diffusion

    x = jax.random.normal(k_x, (n_tot, in_channels, seq_len), dtype=jnp.float32)
    adjs = build_adjs(k_adj, n_nodes, batch_size, k_hops)
    raw = init_raw_params(k_par, in_channels, residual_channels, dilation_channels,
                          skip_channels, end_channels, out_channels,
                          len(dilations), n_adj)
    folded = fold_params(raw)

    # TODO(synk): adaptive adjacency branch (adaptive_embedding_dim/node_embeddings)
    # not exercised; defaults use fwd/bck diffusion only (adaptive_embedding_dim=None).
    fwd = jax.jit(functools.partial(graph_wavenet_forward, dilations=dilations))
    y = fwd(x, folded, adjs)
    jax.block_until_ready(y)
    assert y.shape == (n_tot, out_channels) and y.dtype == jnp.float32
    print("KERNEL_OK")
</pallas_src>

<mosaic_0001>
module attributes {stable_mosaic.version = 11 : i64} {
  func.func @_gwnet_kernel(%arg0: memref<128x32xbf16, #tpu.memory_space<vmem>>, %arg1: memref<4x16x16xbf16, #tpu.memory_space<vmem>>, %arg2: memref<4x64x64xbf16, #tpu.memory_space<vmem>>, %arg3: memref<4x1x64xf32, #tpu.memory_space<vmem>>, %arg4: memref<4x32x160xbf16, #tpu.memory_space<vmem>>, %arg5: memref<4x1x32xf32, #tpu.memory_space<vmem>>, %arg6: memref<4x32x64xbf16, #tpu.memory_space<vmem>>, %arg7: memref<4x1x64xf32, #tpu.memory_space<vmem>>, %arg8: memref<64x128xbf16, #tpu.memory_space<vmem>>, %arg9: memref<1x128xf32, #tpu.memory_space<vmem>>, %arg10: memref<128x12xbf16, #tpu.memory_space<vmem>>, %arg11: memref<1x12xf32, #tpu.memory_space<vmem>>, %arg12: memref<16x12xf32, #tpu.memory_space<vmem>>, %arg13: memref<128x32xf32, #tpu.memory_space<vmem>>, %arg14: memref<128x32xf32, #tpu.memory_space<vmem>>) attributes {dimension_semantics = [], scalar_prefetch = 0 : i64, scratch_operands = 2 : i64, tpu.core_type = #tpu.core_type<tc>} {
    %c0 = arith.constant 0 : index
    %c0_0 = arith.constant 0 : index
    %0 = vector.load %arg0[%c0, %c0_0] : memref<128x32xbf16, #tpu.memory_space<vmem>>, vector<128x32xbf16>
    %1 = arith.extf %0 : vector<128x32xbf16> to vector<128x32xf32>
    %c0_1 = arith.constant 0 : index
    %c0_2 = arith.constant 0 : index
    %2 = vector.load %arg13[%c0_1, %c0_2] : memref<128x32xf32, #tpu.memory_space<vmem>>, vector<128x32xf32>
    tpu.vector_store %arg13[%c0_1, %c0_2], %1 {strides = array<i32>} : memref<128x32xf32, #tpu.memory_space<vmem>>, vector<128x32xf32>,
    %cst = arith.constant 0.000000e+00 : f32
    %3 = vector.broadcast %cst : f32 to vector<16x64xf32>
    %c0_3 = arith.constant 0 : index
    %c0_4 = arith.constant 0 : index
    %4 = vector.load %arg13[%c0_3, %c0_4] : memref<128x32xf32, #tpu.memory_space<vmem>>, vector<112x32xf32>
    %c16 = arith.constant 16 : index
    %c0_5 = arith.constant 0 : index
    %5 = vector.load %arg13[%c16, %c0_5] : memref<128x32xf32, #tpu.memory_space<vmem>>, vector<112x32xf32>
    %6 = tpu.concatenate %4, %5 in 1 : vector<112x32xf32>, vector<112x32xf32> -> vector<112x64xf32>
    %c0_6 = arith.constant 0 : index
    %c0_7 = arith.constant 0 : index
    %c0_8 = arith.constant 0 : index
    %7 = vector.load %arg2[%c0_6, %c0_7, %c0_8] : memref<4x64x64xbf16, #tpu.memory_space<vmem>>, vector<1x64x64xbf16>
    %8 = vector.shape_cast %7 : vector<1x64x64xbf16> to vector<64x64xbf16>
    %9 = arith.truncf %6 : vector<112x64xf32> to vector<112x64xbf16>
    %cst_9 = arith.constant dense<0.000000e+00> : vector<112x64xf32>
    %10 = tpu.matmul %9, %8, %cst_9 {dimension_numbers = #tpu.dot_dimension_numbers<[1], [0], [0], [1], [0, 0, 1, 1], [], []>} : vector<112x64xbf16>, vector<64x64xbf16>, vector<112x64xf32> -> vector<112x64xf32>
    %c0_10 = arith.constant 0 : index
    %c0_11 = arith.constant 0 : index
    %c0_12 = arith.constant 0 : index
    %11 = vector.load %arg3[%c0_10, %c0_11, %c0_12] : memref<4x1x64xf32, #tpu.memory_space<vmem>>, vector<1x1x64xf32>
    %12 = vector.shape_cast %11 : vector<1x1x64xf32> to vector<1x64xf32>
    %13 = vector.broadcast %12 : vector<1x64xf32> to vector<112x64xf32>
    %14 = arith.addf %10, %13 : vector<112x64xf32>
    %15 = vector.extract_strided_slice %14 {offsets = [0, 0], sizes = [112, 32], strides = [1, 1]} : vector<112x64xf32> to vector<112x32xf32>
    %16 = math.tanh %15 : vector<112x32xf32>
    %17 = vector.extract_strided_slice %14 {offsets = [0, 32], sizes = [112, 32], strides = [1, 1]} : vector<112x64xf32> to vector<112x32xf32>
    %18 = arith.negf %17 : vector<112x32xf32>
    %19 = math.exp %18 : vector<112x32xf32>
    %cst_13 = arith.constant 1.000000e+00 : f32
    %20 = vector.broadcast %cst_13 : f32 to vector<112x32xf32>
    %21 = arith.addf %20, %19 : vector<112x32xf32>
    %22 = arith.divf %20, %21 : vector<112x32xf32>
    %23 = arith.mulf %16, %22 : vector<112x32xf32>
    %c0_14 = arith.constant 0 : index
    %c0_15 = arith.constant 0 : index
    %c0_16 = arith.constant 0 : index
    %24 = vector.load %arg4[%c0_14, %c0_15, %c0_16] : memref<4x32x160xbf16, #tpu.memory_space<vmem>>, vector<1x32x160xbf16>
    %25 = vector.shape_cast %24 : vector<1x32x160xbf16> to vector<32x160xbf16>
    %26 = arith.truncf %23 : vector<112x32xf32> to vector<112x32xbf16>
    %cst_17 = arith.constant dense<0.000000e+00> : vector<112x160xf32>
    %27 = tpu.matmul %26, %25, %cst_17 {dimension_numbers = #tpu.dot_dimension_numbers<[1], [0], [0], [1], [0, 0, 1, 1], [], []>} : vector<112x32xbf16>, vector<32x160xbf16>, vector<112x160xf32> -> vector<112x160xf32>
    %28 = vector.extract_strided_slice %27 {offsets = [0, 0], sizes = [112, 32], strides = [1, 1]} : vector<112x160xf32> to vector<112x32xf32>
    %c0_18 = arith.constant 0 : index
    %c0_19 = arith.constant 0 : index
    %c0_20 = arith.constant 0 : index
    %29 = vector.load %arg5[%c0_18, %c0_19, %c0_20] : memref<4x1x32xf32, #tpu.memory_space<vmem>>, vector<1x1x32xf32>
    %30 = vector.shape_cast %29 : vector<1x1x32xf32> to vector<1x32xf32>
    %31 = vector.broadcast %30 : vector<1x32xf32> to vector<112x32xf32>
    %32 = arith.addf %28, %31 : vector<112x32xf32>
    %33 = vector.extract_strided_slice %27 {offsets = [0, 32], sizes = [112, 32], strides = [1, 1]} : vector<112x160xf32> to vector<112x32xf32>
    %34 = vector.extract_strided_slice %27 {offsets = [0, 64], sizes = [112, 32], strides = [1, 1]} : vector<112x160xf32> to vector<112x32xf32>
    %35 = vector.extract_strided_slice %27 {offsets = [0, 96], sizes = [112, 32], strides = [1, 1]} : vector<112x160xf32> to vector<112x32xf32>
    %36 = vector.extract_strided_slice %27 {offsets = [0, 128], sizes = [112, 32], strides = [1, 1]} : vector<112x160xf32> to vector<112x32xf32>
    %37 = vector.extract_strided_slice %32 {offsets = [0, 0], sizes = [16, 32], strides = [1, 1]} : vector<112x32xf32> to vector<16x32xf32>
    %c0_21 = arith.constant 0 : index
    %c0_22 = arith.constant 0 : index
    %c0_23 = arith.constant 0 : index
    %38 = vector.load %arg1[%c0_21, %c0_22, %c0_23] : memref<4x16x16xbf16, #tpu.memory_space<vmem>>, vector<1x16x16xbf16>
    %39 = vector.shape_cast %38 : vector<1x16x16xbf16> to vector<16x16xbf16>
    %40 = vector.extract_strided_slice %33 {offsets = [0, 0], sizes = [16, 32], strides = [1, 1]} : vector<112x32xf32> to vector<16x32xf32>
    %41 = arith.truncf %40 : vector<16x32xf32> to vector<16x32xbf16>
    %cst_24 = arith.constant dense<0.000000e+00> : vector<16x32xf32>
    %42 = tpu.matmul %39, %41, %cst_24 {dimension_numbers = #tpu.dot_dimension_numbers<[1], [0], [0], [1], [0, 0, 1, 1], [], []>} : vector<16x16xbf16>, vector<16x32xbf16>, vector<16x32xf32> -> vector<16x32xf32>
    %43 = arith.addf %37, %42 : vector<16x32xf32>
    %c1 = arith.constant 1 : index
    %c0_25 = arith.constant 0 : index
    %c0_26 = arith.constant 0 : index
    %44 = vector.load %arg1[%c1, %c0_25, %c0_26] : memref<4x16x16xbf16, #tpu.memory_space<vmem>>, vector<1x16x16xbf16>
    %45 = vector.shape_cast %44 : vector<1x16x16xbf16> to vector<16x16xbf16>
    %46 = vector.extract_strided_slice %34 {offsets = [0, 0], sizes = [16, 32], strides = [1, 1]} : vector<112x32xf32> to vector<16x32xf32>
    %47 = arith.truncf %46 : vector<16x32xf32> to vector<16x32xbf16>
    %cst_27 = arith.constant dense<0.000000e+00> : vector<16x32xf32>
    %48 = tpu.matmul %45, %47, %cst_27 {dimension_numbers = #tpu.dot_dimension_numbers<[1], [0], [0], [1], [0, 0, 1, 1], [], []>} : vector<16x16xbf16>, vector<16x32xbf16>, vector<16x32xf32> -> vector<16x32xf32>
    %49 = arith.addf %43, %48 : vector<16x32xf32>
    %c2 = arith.constant 2 : index
    %c0_28 = arith.constant 0 : index
    %c0_29 = arith.constant 0 : index
    %50 = vector.load %arg1[%c2, %c0_28, %c0_29] : memref<4x16x16xbf16, #tpu.memory_space<vmem>>, vector<1x16x16xbf16>
    %51 = vector.shape_cast %50 : vector<1x16x16xbf16> to vector<16x16xbf16>
    %52 = vector.extract_strided_slice %35 {offsets = [0, 0], sizes = [16, 32], strides = [1, 1]} : vector<112x32xf32> to vector<16x32xf32>
    %53 = arith.truncf %52 : vector<16x32xf32> to vector<16x32xbf16>
    %cst_30 = arith.constant dense<0.000000e+00> : vector<16x32xf32>
    %54 = tpu.matmul %51, %53, %cst_30 {dimension_numbers = #tpu.dot_dimension_numbers<[1], [0], [0], [1], [0, 0, 1, 1], [], []>} : vector<16x16xbf16>, vector<16x32xbf16>, vector<16x32xf32> -> vector<16x32xf32>
    %55 = arith.addf %49, %54 : vector<16x32xf32>
    %c3 = arith.constant 3 : index
    %c0_31 = arith.constant 0 : index
    %c0_32 = arith.constant 0 : index
    %56 = vector.load %arg1[%c3, %c0_31, %c0_32] : memref<4x16x16xbf16, #tpu.memory_space<vmem>>, vector<1x16x16xbf16>
    %57 = vector.shape_cast %56 : vector<1x16x16xbf16> to vector<16x16xbf16>
    %58 = vector.extract_strided_slice %36 {offsets = [0, 0], sizes = [16, 32], strides = [1, 1]} : vector<112x32xf32> to vector<16x32xf32>
    %59 = arith.truncf %58 : vector<16x32xf32> to vector<16x32xbf16>
    %cst_33 = arith.constant dense<0.000000e+00> : vector<16x32xf32>
    %60 = tpu.matmul %57, %59, %cst_33 {dimension_numbers = #tpu.dot_dimension_numbers<[1], [0], [0], [1], [0, 0, 1, 1], [], []>} : vector<16x16xbf16>, vector<16x32xbf16>, vector<16x32xf32> -> vector<16x32xf32>
    %61 = arith.addf %55, %60 : vector<16x32xf32>
    %c0_34 = arith.constant 0 : index
    %c0_35 = arith.constant 0 : index
    %62 = vector.load %arg14[%c0_34, %c0_35] : memref<128x32xf32, #tpu.memory_space<vmem>>, vector<16x32xf32>
    tpu.vector_store %arg14[%c0_34, %c0_35], %61 {strides = array<i32>} : memref<128x32xf32, #tpu.memory_space<vmem>>, vector<16x32xf32>,
    %63 = vector.extract_strided_slice %32 {offsets = [16, 0], sizes = [16, 32], strides = [1, 1]} : vector<112x32xf32> to vector<16x32xf32>
    %c0_36 = arith.constant 0 : index
    %c0_37 = arith.constant 0 : index
    %c0_38 = arith.constant 0 : index
    %64 = vector.load %arg1[%c0_36, %c0_37, %c0_38] : memref<4x16x16xbf16, #tpu.memory_space<vmem>>, vector<1x16x16xbf16>
    %65 = vector.shape_cast %64 : vector<1x16x16xbf16> to vector<16x16xbf16>
    %66 = vector.extract_strided_slice %33 {offsets = [16, 0], sizes = [16, 32], strides = [1, 1]} : vector<112x32xf32> to vector<16x32xf32>
    %67 = arith.truncf %66 : vector<16x32xf32> to vector<16x32xbf16>
    %cst_39 = arith.constant dense<0.000000e+00> : vector<16x32xf32>
    %68 = tpu.matmul %65, %67, %cst_39 {dimension_numbers = #tpu.dot_dimension_numbers<[1], [0], [0], [1], [0, 0, 1, 1], [], []>} : vector<16x16xbf16>, vector<16x32xbf16>, vector<16x32xf32> -> vector<16x32xf32>
    %69 = arith.addf %63, %68 : vector<16x32xf32>
    %c1_40 = arith.constant 1 : index
    %c0_41 = arith.constant 0 : index
    %c0_42 = arith.constant 0 : index
    %70 = vector.load %arg1[%c1_40, %c0_41, %c0_42] : memref<4x16x16xbf16, #tpu.memory_space<vmem>>, vector<1x16x16xbf16>
    %71 = vector.shape_cast %70 : vector<1x16x16xbf16> to vector<16x16xbf16>
    %72 = vector.extract_strided_slice %34 {offsets = [16, 0], sizes = [16, 32], strides = [1, 1]} : vector<112x32xf32> to vector<16x32xf32>
    %73 = arith.truncf %72 : vector<16x32xf32> to vector<16x32xbf16>
    %cst_43 = arith.constant dense<0.000000e+00> : vector<16x32xf32>
    %74 = tpu.matmul %71, %73, %cst_43 {dimension_numbers = #tpu.dot_dimension_numbers<[1], [0], [0], [1], [0, 0, 1, 1], [], []>} : vector<16x16xbf16>, vector<16x32xbf16>, vector<16x32xf32> -> vector<16x32xf32>
    %75 = arith.addf %69, %74 : vector<16x32xf32>
    %c2_44 = arith.constant 2 : index
    %c0_45 = arith.constant 0 : index
    %c0_46 = arith.constant 0 : index
    %76 = vector.load %arg1[%c2_44, %c0_45, %c0_46] : memref<4x16x16xbf16, #tpu.memory_space<vmem>>, vector<1x16x16xbf16>
    %77 = vector.shape_cast %76 : vector<1x16x16xbf16> to vector<16x16xbf16>
    %78 = vector.extract_strided_slice %35 {offsets = [16, 0], sizes = [16, 32], strides = [1, 1]} : vector<112x32xf32> to vector<16x32xf32>
    %79 = arith.truncf %78 : vector<16x32xf32> to vector<16x32xbf16>
    %cst_47 = arith.constant dense<0.000000e+00> : vector<16x32xf32>
    %80 = tpu.matmul %77, %79, %cst_47 {dimension_numbers = #tpu.dot_dimension_numbers<[1], [0], [0], [1], [0, 0, 1, 1], [], []>} : vector<16x16xbf16>, vector<16x32xbf16>, vector<16x32xf32> -> vector<16x32xf32>
    %81 = arith.addf %75, %80 : vector<16x32xf32>
    %c3_48 = arith.constant 3 : index
    %c0_49 = arith.constant 0 : index
    %c0_50 = arith.constant 0 : index
    %82 = vector.load %arg1[%c3_48, %c0_49, %c0_50] : memref<4x16x16xbf16, #tpu.memory_space<vmem>>, vector<1x16x16xbf16>
    %83 = vector.shape_cast %82 : vector<1x16x16xbf16> to vector<16x16xbf16>
    %84 = vector.extract_strided_slice %36 {offsets = [16, 0], sizes = [16, 32], strides = [1, 1]} : vector<112x32xf32> to vector<16x32xf32>
    %85 = arith.truncf %84 : vector<16x32xf32> to vector<16x32xbf16>
    %cst_51 = arith.constant dense<0.000000e+00> : vector<16x32xf32>
    %86 = tpu.matmul %83, %85, %cst_51 {dimension_numbers = #tpu.dot_dimension_numbers<[1], [0], [0], [1], [0, 0, 1, 1], [], []>} : vector<16x16xbf16>, vector<16x32xbf16>, vector<16x32xf32> -> vector<16x32xf32>
    %87 = arith.addf %81, %86 : vector<16x32xf32>
    %c16_52 = arith.constant 16 : index
    %c0_53 = arith.constant 0 : index
    %88 = vector.load %arg14[%c16_52, %c0_53] : memref<128x32xf32, #tpu.memory_space<vmem>>, vector<16x32xf32>
    tpu.vector_store %arg14[%c16_52, %c0_53], %87 {strides = array<i32>} : memref<128x32xf32, #tpu.memory_space<vmem>>, vector<16x32xf32>,
    %89 = vector.extract_strided_slice %32 {offsets = [32, 0], sizes = [16, 32], strides = [1, 1]} : vector<112x32xf32> to vector<16x32xf32>
    %c0_54 = arith.constant 0 : index
    %c0_55 = arith.constant 0 : index
    %c0_56 = arith.constant 0 : index
    %90 = vector.load %arg1[%c0_54, %c0_55, %c0_56] : memref<4x16x16xbf16, #tpu.memory_space<vmem>>, vector<1x16x16xbf16>
    %91 = vector.shape_cast %90 : vector<1x16x16xbf16> to vector<16x16xbf16>
    %92 = vector.extract_strided_slice %33 {offsets = [32, 0], sizes = [16, 32], strides = [1, 1]} : vector<112x32xf32> to vector<16x32xf32>
    %93 = arith.truncf %92 : vector<16x32xf32> to vector<16x32xbf16>
    %cst_57 = arith.constant dense<0.000000e+00> : vector<16x32xf32>
    %94 = tpu.matmul %91, %93, %cst_57 {dimension_numbers = #tpu.dot_dimension_numbers<[1], [0], [0], [1], [0, 0, 1, 1], [], []>} : vector<16x16xbf16>, vector<16x32xbf16>, vector<16x32xf32> -> vector<16x32xf32>
    %95 = arith.addf %89, %94 : vector<16x32xf32>
    %c1_58 = arith.constant 1 : index
    %c0_59 = arith.constant 0 : index
    %c0_60 = arith.constant 0 : index
    %96 = vector.load %arg1[%c1_58, %c0_59, %c0_60] : memref<4x16x16xbf16, #tpu.memory_space<vmem>>, vector<1x16x16xbf16>
    %97 = vector.shape_cast %96 : vector<1x16x16xbf16> to vector<16x16xbf16>
    %98 = vector.extract_strided_slice %34 {offsets = [32, 0], sizes = [16, 32], strides = [1, 1]} : vector<112x32xf32> to vector<16x32xf32>
    %99 = arith.truncf %98 : vector<16x32xf32> to vector<16x32xbf16>
    %cst_61 = arith.constant dense<0.000000e+00> : vector<16x32xf32>
    %100 = tpu.matmul %97, %99, %cst_61 {dimension_numbers = #tpu.dot_dimension_numbers<[1], [0], [0], [1], [0, 0, 1, 1], [], []>} : vector<16x16xbf16>, vector<16x32xbf16>, vector<16x32xf32> -> vector<16x32xf32>
    %101 = arith.addf %95, %100 : vector<16x32xf32>
    %c2_62 = arith.constant 2 : index
    %c0_63 = arith.constant 0 : index
    %c0_64 = arith.constant 0 : index
    %102 = vector.load %arg1[%c2_62, %c0_63, %c0_64] : memref<4x16x16xbf16, #tpu.memory_space<vmem>>, vector<1x16x16xbf16>
    %103 = vector.shape_cast %102 : vector<1x16x16xbf16> to vector<16x16xbf16>
    %104 = vector.extract_strided_slice %35 {offsets = [32, 0], sizes = [16, 32], strides = [1, 1]} : vector<112x32xf32> to vector<16x32xf32>
    %105 = arith.truncf %104 : vector<16x32xf32> to vector<16x32xbf16>
    %cst_65 = arith.constant dense<0.000000e+00> : vector<16x32xf32>
    %106 = tpu.matmul %103, %105, %cst_65 {dimension_numbers = #tpu.dot_dimension_numbers<[1], [0], [0], [1], [0, 0, 1, 1], [], []>} : vector<16x16xbf16>, vector<16x32xbf16>, vector<16x32xf32> -> vector<16x32xf32>
    %107 = arith.addf %101, %106 : vector<16x32xf32>
    %c3_66 = arith.constant 3 : index
    %c0_67 = arith.constant 0 : index
    %c0_68 = arith.constant 0 : index
    %108 = vector.load %arg1[%c3_66, %c0_67, %c0_68] : memref<4x16x16xbf16, #tpu.memory_space<vmem>>, vector<1x16x16xbf16>
    %109 = vector.shape_cast %108 : vector<1x16x16xbf16> to vector<16x16xbf16>
    %110 = vector.extract_strided_slice %36 {offsets = [32, 0], sizes = [16, 32], strides = [1, 1]} : vector<112x32xf32> to vector<16x32xf32>
    %111 = arith.truncf %110 : vector<16x32xf32> to vector<16x32xbf16>
    %cst_69 = arith.constant dense<0.000000e+00> : vector<16x32xf32>
    %112 = tpu.matmul %109, %111, %cst_69 {dimension_numbers = #tpu.dot_dimension_numbers<[1], [0], [0], [1], [0, 0, 1, 1], [], []>} : vector<16x16xbf16>, vector<16x32xbf16>, vector<16x32xf32> -> vector<16x32xf32>
    %113 = arith.addf %107, %112 : vector<16x32xf32>
    %c32 = arith.constant 32 : index
    %c0_70 = arith.constant 0 : index
    %114 = vector.load %arg14[%c32, %c0_70] : memref<128x32xf32, #tpu.memory_space<vmem>>, vector<16x32xf32>
    tpu.vector_store %arg14[%c32, %c0_70], %113 {strides = array<i32>} : memref<128x32xf32, #tpu.memory_space<vmem>>, vector<16x32xf32>,
    %115 = vector.extract_strided_slice %32 {offsets = [48, 0], sizes = [16, 32], strides = [1, 1]} : vector<112x32xf32> to vector<16x32xf32>
    %c0_71 = arith.constant 0 : index
    %c0_72 = arith.constant 0 : index
    %c0_73 = arith.constant 0 : index
    %116 = vector.load %arg1[%c0_71, %c0_72, %c0_73] : memref<4x16x16xbf16, #tpu.memory_space<vmem>>, vector<1x16x16xbf16>
    %117 = vector.shape_cast %116 : vector<1x16x16xbf16> to vector<16x16xbf16>
    %118 = vector.extract_strided_slice %33 {offsets = [48, 0], sizes = [16, 32], strides = [1, 1]} : vector<112x32xf32> to vector<16x32xf32>
    %119 = arith.truncf %118 : vector<16x32xf32> to vector<16x32xbf16>
    %cst_74 = arith.constant dense<0.000000e+00> : vector<16x32xf32>
    %120 = tpu.matmul %117, %119, %cst_74 {dimension_numbers = #tpu.dot_dimension_numbers<[1], [0], [0], [1], [0, 0, 1, 1], [], []>} : vector<16x16xbf16>, vector<16x32xbf16>, vector<16x32xf32> -> vector<16x32xf32>
    %121 = arith.addf %115, %120 : vector<16x32xf32>
    %c1_75 = arith.constant 1 : index
    %c0_76 = arith.constant 0 : index
    %c0_77 = arith.constant 0 : index
    %122 = vector.load %arg1[%c1_75, %c0_76, %c0_77] : memref<4x16x16xbf16, #tpu.memory_space<vmem>>, vector<1x16x16xbf16>
    %123 = vector.shape_cast %122 : vector<1x16x16xbf16> to vector<16x16xbf16>
    %124 = vector.extract_strided_slice %34 {offsets = [48, 0], sizes = [16, 32], strides = [1, 1]} : vector<112x32xf32> to vector<16x32xf32>
    %125 = arith.truncf %124 : vector<16x32xf32> to vector<16x32xbf16>
    %cst_78 = arith.constant dense<0.000000e+00> : vector<16x32xf32>
    %126 = tpu.matmul %123, %125, %cst_78 {dimension_numbers = #tpu.dot_dimension_numbers<[1], [0], [0], [1], [0, 0, 1, 1], [], []>} : vector<16x16xbf16>, vector<16x32xbf16>, vector<16x32xf32> -> vector<16x32xf32>
    %127 = arith.addf %121, %126 : vector<16x32xf32>
    %c2_79 = arith.constant 2 : index
    %c0_80 = arith.constant 0 : index
    %c0_81 = arith.constant 0 : index
    %128 = vector.load %arg1[%c2_79, %c0_80, %c0_81] : memref<4x16x16xbf16, #tpu.memory_space<vmem>>, vector<1x16x16xbf16>
    %129 = vector.shape_cast %128 : vector<1x16x16xbf16> to vector<16x16xbf16>
    %130 = vector.extract_strided_slice %35 {offsets = [48, 0], sizes = [16, 32], strides = [1, 1]} : vector<112x32xf32> to vector<16x32xf32>
    %131 = arith.truncf %130 : vector<16x32xf32> to vector<16x32xbf16>
    %cst_82 = arith.constant dense<0.000000e+00> : vector<16x32xf32>
    %132 = tpu.matmul %129, %131, %cst_82 {dimension_numbers = #tpu.dot_dimension_numbers<[1], [0], [0], [1], [0, 0, 1, 1], [], []>} : vector<16x16xbf16>, vector<16x32xbf16>, vector<16x32xf32> -> vector<16x32xf32>
    %133 = arith.addf %127, %132 : vector<16x32xf32>
    %c3_83 = arith.constant 3 : index
    %c0_84 = arith.constant 0 : index
    %c0_85 = arith.constant 0 : index
    %134 = vector.load %arg1[%c3_83, %c0_84, %c0_85] : memref<4x16x16xbf16, #tpu.memory_space<vmem>>, vector<1x16x16xbf16>
    %135 = vector.shape_cast %134 : vector<1x16x16xbf16> to vector<16x16xbf16>
    %136 = vector.extract_strided_slice %36 {offsets = [48, 0], sizes = [16, 32], strides = [1, 1]} : vector<112x32xf32> to vector<16x32xf32>
    %137 = arith.truncf %136 : vector<16x32xf32> to vector<16x32xbf16>
    %cst_86 = arith.constant dense<0.000000e+00> : vector<16x32xf32>
    %138 = tpu.matmul %135, %137, %cst_86 {dimension_numbers = #tpu.dot_dimension_numbers<[1], [0], [0], [1], [0, 0, 1, 1], [], []>} : vector<16x16xbf16>, vector<16x32xbf16>, vector<16x32xf32> -> vector<16x32xf32>
    %139 = arith.addf %133, %138 : vector<16x32xf32>
    %c48 = arith.constant 48 : index
    %c0_87 = arith.constant 0 : index
    %140 = vector.load %arg14[%c48, %c0_87] : memref<128x32xf32, #tpu.memory_space<vmem>>, vector<16x32xf32>
    tpu.vector_store %arg14[%c48, %c0_87], %139 {strides = array<i32>} : memref<128x32xf32, #tpu.memory_space<vmem>>, vector<16x32xf32>,
    %141 = vector.extract_strided_slice %32 {offsets = [64, 0], sizes = [16, 32], strides = [1, 1]} : vector<112x32xf32> to vector<16x32xf32>
    %c0_88 = arith.constant 0 : index
    %c0_89 = arith.constant 0 : index
    %c0_90 = arith.constant 0 : index
    %142 = vector.load %arg1[%c0_88, %c0_89, %c0_90] : memref<4x16x16xbf16, #tpu.memory_space<vmem>>, vector<1x16x16xbf16>
    %143 = vector.shape_cast %142 : vector<1x16x16xbf16> to vector<16x16xbf16>
    %144 = vector.extract_strided_slice %33 {offsets = [64, 0], sizes = [16, 32], strides = [1, 1]} : vector<112x32xf32> to vector<16x32xf32>
    %145 = arith.truncf %144 : vector<16x32xf32> to vector<16x32xbf16>
    %cst_91 = arith.constant dense<0.000000e+00> : vector<16x32xf32>
    %146 = tpu.matmul %143, %145, %cst_91 {dimension_numbers = #tpu.dot_dimension_numbers<[1], [0], [0], [1], [0, 0, 1, 1], [], []>} : vector<16x16xbf16>, vector<16x32xbf16>, vector<16x32xf32> -> vector<16x32xf32>
    %147 = arith.addf %141, %146 : vector<16x32xf32>
    %c1_92 = arith.constant 1 : index
    %c0_93 = arith.constant 0 : index
    %c0_94 = arith.constant 0 : index
    %148 = vector.load %arg1[%c1_92, %c0_93, %c0_94] : memref<4x16x16xbf16, #tpu.memory_space<vmem>>, vector<1x16x16xbf16>
    %149 = vector.shape_cast %148 : vector<1x16x16xbf16> to vector<16x16xbf16>
    %150 = vector.extract_strided_slice %34 {offsets = [64, 0], sizes = [16, 32], strides = [1, 1]} : vector<112x32xf32> to vector<16x32xf32>
    %151 = arith.truncf %150 : vector<16x32xf32> to vector<16x32xbf16>
    %cst_95 = arith.constant dense<0.000000e+00> : vector<16x32xf32>
    %152 = tpu.matmul %149, %151, %cst_95 {dimension_numbers = #tpu.dot_dimension_numbers<[1], [0], [0], [1], [0, 0, 1, 1], [], []>} : vector<16x16xbf16>, vector<16x32xbf16>, vector<16x32xf32> -> vector<16x32xf32>
    %153 = arith.addf %147, %152 : vector<16x32xf32>
    %c2_96 = arith.constant 2 : index
    %c0_97 = arith.constant 0 : index
    %c0_98 = arith.constant 0 : index
    %154 = vector.load %arg1[%c2_96, %c0_97, %c0_98] : memref<4x16x16xbf16, #tpu.memory_space<vmem>>, vector<1x16x16xbf16>
    %155 = vector.shape_cast %154 : vector<1x16x16xbf16> to vector<16x16xbf16>
    %156 = vector.extract_strided_slice %35 {offsets = [64, 0], sizes = [16, 32], strides = [1, 1]} : vector<112x32xf32> to vector<16x32xf32>
    %157 = arith.truncf %156 : vector<16x32xf32> to vector<16x32xbf16>
    %cst_99 = arith.constant dense<0.000000e+00> : vector<16x32xf32>
    %158 = tpu.matmul %155, %157, %cst_99 {dimension_numbers = #tpu.dot_dimension_numbers<[1], [0], [0], [1], [0, 0, 1, 1], [], []>} : vector<16x16xbf16>, vector<16x32xbf16>, vector<16x32xf32> -> vector<16x32xf32>
    %159 = arith.addf %153, %158 : vector<16x32xf32>
    %c3_100 = arith.constant 3 : index
    %c0_101 = arith.constant 0 : index
    %c0_102 = arith.constant 0 : index
    %160 = vector.load %arg1[%c3_100, %c0_101, %c0_102] : memref<4x16x16xbf16, #tpu.memory_space<vmem>>, vector<1x16x16xbf16>
    %161 = vector.shape_cast %160 : vector<1x16x16xbf16> to vector<16x16xbf16>
    %162 = vector.extract_strided_slice %36 {offsets = [64, 0], sizes = [16, 32], strides = [1, 1]} : vector<112x32xf32> to vector<16x32xf32>
    %163 = arith.truncf %162 : vector<16x32xf32> to vector<16x32xbf16>
    %cst_103 = arith.constant dense<0.000000e+00> : vector<16x32xf32>
    %164 = tpu.matmul %161, %163, %cst_103 {dimension_numbers = #tpu.dot_dimension_numbers<[1], [0], [0], [1], [0, 0, 1, 1], [], []>} : vector<16x16xbf16>, vector<16x32xbf16>, vector<16x32xf32> -> vector<16x32xf32>
    %165 = arith.addf %159, %164 : vector<16x32xf32>
    %c64 = arith.constant 64 : index
    %c0_104 = arith.constant 0 : index
    %166 = vector.load %arg14[%c64, %c0_104] : memref<128x32xf32, #tpu.memory_space<vmem>>, vector<16x32xf32>
    tpu.vector_store %arg14[%c64, %c0_104], %165 {strides = array<i32>} : memref<128x32xf32, #tpu.memory_space<vmem>>, vector<16x32xf32>,
    %167 = vector.extract_strided_slice %32 {offsets = [80, 0], sizes = [16, 32], strides = [1, 1]} : vector<112x32xf32> to vector<16x32xf32>
    %c0_105 = arith.constant 0 : index
    %c0_106 = arith.constant 0 : index
    %c0_107 = arith.constant 0 : index
    %168 = vector.load %arg1[%c0_105, %c0_106, %c0_107] : memref<4x16x16xbf16, #tpu.memory_space<vmem>>, vector<1x16x16xbf16>
    %169 = vector.shape_cast %168 : vector<1x16x16xbf16> to vector<16x16xbf16>
    %170 = vector.extract_strided_slice %33 {offsets = [80, 0], sizes = [16, 32], strides = [1, 1]} : vector<112x32xf32> to vector<16x32xf32>
    %171 = arith.truncf %170 : vector<16x32xf32> to vector<16x32xbf16>
    %cst_108 = arith.constant dense<0.000000e+00> : vector<16x32xf32>
    %172 = tpu.matmul %169, %171, %cst_108 {dimension_numbers = #tpu.dot_dimension_numbers<[1], [0], [0], [1], [0, 0, 1, 1], [], []>} : vector<16x16xbf16>, vector<16x32xbf16>, vector<16x32xf32> -> vector<16x32xf32>
    %173 = arith.addf %167, %172 : vector<16x32xf32>
    %c1_109 = arith.constant 1 : index
    %c0_110 = arith.constant 0 : index
    %c0_111 = arith.constant 0 : index
    %174 = vector.load %arg1[%c1_109, %c0_110, %c0_111] : memref<4x16x16xbf16, #tpu.memory_space<vmem>>, vector<1x16x16xbf16>
    %175 = vector.shape_cast %174 : vector<1x16x16xbf16> to vector<16x16xbf16>
    %176 = vector.extract_strided_slice %34 {offsets = [80, 0], sizes = [16, 32], strides = [1, 1]} : vector<112x32xf32> to vector<16x32xf32>
    %177 = arith.truncf %176 : vector<16x32xf32> to vector<16x32xbf16>
    %cst_112 = arith.constant dense<0.000000e+00> : vector<16x32xf32>
    %178 = tpu.matmul %175, %177, %cst_112 {dimension_numbers = #tpu.dot_dimension_numbers<[1], [0], [0], [1], [0, 0, 1, 1], [], []>} : vector<16x16xbf16>, vector<16x32xbf16>, vector<16x32xf32> -> vector<16x32xf32>
    %179 = arith.addf %173, %178 : vector<16x32xf32>
    %c2_113 = arith.constant 2 : index
    %c0_114 = arith.constant 0 : index
    %c0_115 = arith.constant 0 : index
    %180 = vector.load %arg1[%c2_113, %c0_114, %c0_115] : memref<4x16x16xbf16, #tpu.memory_space<vmem>>, vector<1x16x16xbf16>
    %181 = vector.shape_cast %180 : vector<1x16x16xbf16> to vector<16x16xbf16>
    %182 = vector.extract_strided_slice %35 {offsets = [80, 0], sizes = [16, 32], strides = [1, 1]} : vector<112x32xf32> to vector<16x32xf32>
    %183 = arith.truncf %182 : vector<16x32xf32> to vector<16x32xbf16>
    %cst_116 = arith.constant dense<0.000000e+00> : vector<16x32xf32>
    %184 = tpu.matmul %181, %183, %cst_116 {dimension_numbers = #tpu.dot_dimension_numbers<[1], [0], [0], [1], [0, 0, 1, 1], [], []>} : vector<16x16xbf16>, vector<16x32xbf16>, vector<16x32xf32> -> vector<16x32xf32>
    %185 = arith.addf %179, %184 : vector<16x32xf32>
    %c3_117 = arith.constant 3 : index
    %c0_118 = arith.constant 0 : index
    %c0_119 = arith.constant 0 : index
    %186 = vector.load %arg1[%c3_117, %c0_118, %c0_119] : memref<4x16x16xbf16, #tpu.memory_space<vmem>>, vector<1x16x16xbf16>
    %187 = vector.shape_cast %186 : vector<1x16x16xbf16> to vector<16x16xbf16>
    %188 = vector.extract_strided_slice %36 {offsets = [80, 0], sizes = [16, 32], strides = [1, 1]} : vector<112x32xf32> to vector<16x32xf32>
    %189 = arith.truncf %188 : vector<16x32xf32> to vector<16x32xbf16>
    %cst_120 = arith.constant dense<0.000000e+00> : vector<16x32xf32>
    %190 = tpu.matmul %187, %189, %cst_120 {dimension_numbers = #tpu.dot_dimension_numbers<[1], [0], [0], [1], [0, 0, 1, 1], [], []>} : vector<16x16xbf16>, vector<16x32xbf16>, vector<16x32xf32> -> vector<16x32xf32>
    %191 = arith.addf %185, %190 : vector<16x32xf32>
    %c80 = arith.constant 80 : index
    %c0_121 = arith.constant 0 : index
    %192 = vector.load %arg14[%c80, %c0_121] : memref<128x32xf32, #tpu.memory_space<vmem>>, vector<16x32xf32>
    tpu.vector_store %arg14[%c80, %c0_121], %191 {strides = array<i32>} : memref<128x32xf32, #tpu.memory_space<vmem>>, vector<16x32xf32>,
    %193 = vector.extract_strided_slice %32 {offsets = [96, 0], sizes = [16, 32], strides = [1, 1]} : vector<112x32xf32> to vector<16x32xf32>
    %c0_122 = arith.constant 0 : index
    %c0_123 = arith.constant 0 : index
    %c0_124 = arith.constant 0 : index
    %194 = vector.load %arg1[%c0_122, %c0_123, %c0_124] : memref<4x16x16xbf16, #tpu.memory_space<vmem>>, vector<1x16x16xbf16>
    %195 = vector.shape_cast %194 : vector<1x16x16xbf16> to vector<16x16xbf16>
    %196 = vector.extract_strided_slice %33 {offsets = [96, 0], sizes = [16, 32], strides = [1, 1]} : vector<112x32xf32> to vector<16x32xf32>
    %197 = arith.truncf %196 : vector<16x32xf32> to vector<16x32xbf16>
    %cst_125 = arith.constant dense<0.000000e+00> : vector<16x32xf32>
    %198 = tpu.matmul %195, %197, %cst_125 {dimension_numbers = #tpu.dot_dimension_numbers<[1], [0], [0], [1], [0, 0, 1, 1], [], []>} : vector<16x16xbf16>, vector<16x32xbf16>, vector<16x32xf32> -> vector<16x32xf32>
    %199 = arith.addf %193, %198 : vector<16x32xf32>
    %c1_126 = arith.constant 1 : index
    %c0_127 = arith.constant 0 : index
    %c0_128 = arith.constant 0 : index
    %200 = vector.load %arg1[%c1_126, %c0_127, %c0_128] : memref<4x16x16xbf16, #tpu.memory_space<vmem>>, vector<1x16x16xbf16>
    %201 = vector.shape_cast %200 : vector<1x16x16xbf16> to vector<16x16xbf16>
    %202 = vector.extract_strided_slice %34 {offsets = [96, 0], sizes = [16, 32], strides = [1, 1]} : vector<112x32xf32> to vector<16x32xf32>
    %203 = arith.truncf %202 : vector<16x32xf32> to vector<16x32xbf16>
    %cst_129 = arith.constant dense<0.000000e+00> : vector<16x32xf32>
    %204 = tpu.matmul %201, %203, %cst_129 {dimension_numbers = #tpu.dot_dimension_numbers<[1], [0], [0], [1], [0, 0, 1, 1], [], []>} : vector<16x16xbf16>, vector<16x32xbf16>, vector<16x32xf32> -> vector<16x32xf32>
    %205 = arith.addf %199, %204 : vector<16x32xf32>
    %c2_130 = arith.constant 2 : index
    %c0_131 = arith.constant 0 : index
    %c0_132 = arith.constant 0 : index
    %206 = vector.load %arg1[%c2_130, %c0_131, %c0_132] : memref<4x16x16xbf16, #tpu.memory_space<vmem>>, vector<1x16x16xbf16>
    %207 = vector.shape_cast %206 : vector<1x16x16xbf16> to vector<16x16xbf16>
    %208 = vector.extract_strided_slice %35 {offsets = [96, 0], sizes = [16, 32], strides = [1, 1]} : vector<112x32xf32> to vector<16x32xf32>
    %209 = arith.truncf %208 : vector<16x32xf32> to vector<16x32xbf16>
    %cst_133 = arith.constant dense<0.000000e+00> : vector<16x32xf32>
    %210 = tpu.matmul %207, %209, %cst_133 {dimension_numbers = #tpu.dot_dimension_numbers<[1], [0], [0], [1], [0, 0, 1, 1], [], []>} : vector<16x16xbf16>, vector<16x32xbf16>, vector<16x32xf32> -> vector<16x32xf32>
    %211 = arith.addf %205, %210 : vector<16x32xf32>
    %c3_134 = arith.constant 3 : index
    %c0_135 = arith.constant 0 : index
    %c0_136 = arith.constant 0 : index
    %212 = vector.load %arg1[%c3_134, %c0_135, %c0_136] : memref<4x16x16xbf16, #tpu.memory_space<vmem>>, vector<1x16x16xbf16>
    %213 = vector.shape_cast %212 : vector<1x16x16xbf16> to vector<16x16xbf16>
    %214 = vector.extract_strided_slice %36 {offsets = [96, 0], sizes = [16, 32], strides = [1, 1]} : vector<112x32xf32> to vector<16x32xf32>
    %215 = arith.truncf %214 : vector<16x32xf32> to vector<16x32xbf16>
    %cst_137 = arith.constant dense<0.000000e+00> : vector<16x32xf32>
    %216 = tpu.matmul %213, %215, %cst_137 {dimension_numbers = #tpu.dot_dimension_numbers<[1], [0], [0], [1], [0, 0, 1, 1], [], []>} : vector<16x16xbf16>, vector<16x32xbf16>, vector<16x32xf32> -> vector<16x32xf32>
    %217 = arith.addf %211, %216 : vector<16x32xf32>
    %c96 = arith.constant 96 : index
    %c0_138 = arith.constant 0 : index
    %218 = vector.load %arg14[%c96, %c0_138] : memref<128x32xf32, #tpu.memory_space<vmem>>, vector<16x32xf32>
    tpu.vector_store %arg14[%c96, %c0_138], %217 {strides = array<i32>} : memref<128x32xf32, #tpu.memory_space<vmem>>, vector<16x32xf32>,
    %c0_139 = arith.constant 0 : index
    %c0_140 = arith.constant 0 : index
    %c0_141 = arith.constant 0 : index
    %219 = vector.load %arg6[%c0_139, %c0_140, %c0_141] : memref<4x32x64xbf16, #tpu.memory_space<vmem>>, vector<1x32x64xbf16>
    %220 = vector.shape_cast %219 : vector<1x32x64xbf16> to vector<32x64xbf16>
    %221 = arith.truncf %217 : vector<16x32xf32> to vector<16x32xbf16>
    %cst_142 = arith.constant dense<0.000000e+00> : vector<16x64xf32>
    %222 = tpu.matmul %221, %220, %cst_142 {dimension_numbers = #tpu.dot_dimension_numbers<[1], [0], [0], [1], [0, 0, 1, 1], [], []>} : vector<16x32xbf16>, vector<32x64xbf16>, vector<16x64xf32> -> vector<16x64xf32>
    %223 = arith.addf %3, %222 : vector<16x64xf32>
    %c0_143 = arith.constant 0 : index
    %c0_144 = arith.constant 0 : index
    %c0_145 = arith.constant 0 : index
    %224 = vector.load %arg7[%c0_143, %c0_144, %c0_145] : memref<4x1x64xf32, #tpu.memory_space<vmem>>, vector<1x1x64xf32>
    %225 = vector.shape_cast %224 : vector<1x1x64xf32> to vector<1x64xf32>
    %226 = vector.broadcast %225 : vector<1x64xf32> to vector<16x64xf32>
    %227 = arith.addf %223, %226 : vector<16x64xf32>
    %c0_146 = arith.constant 0 : index
    %c0_147 = arith.constant 0 : index
    %228 = vector.load %arg14[%c0_146, %c0_147] : memref<128x32xf32, #tpu.memory_space<vmem>>, vector<80x32xf32>
    %c32_148 = arith.constant 32 : index
    %c0_149 = arith.constant 0 : index
    %229 = vector.load %arg14[%c32_148, %c0_149] : memref<128x32xf32, #tpu.memory_space<vmem>>, vector<80x32xf32>
    %230 = tpu.concatenate %228, %229 in 1 : vector<80x32xf32>, vector<80x32xf32> -> vector<80x64xf32>
    %c1_150 = arith.constant 1 : index
    %c0_151 = arith.constant 0 : index
    %c0_152 = arith.constant 0 : index
    %231 = vector.load %arg2[%c1_150, %c0_151, %c0_152] : memref<4x64x64xbf16, #tpu.memory_space<vmem>>, vector<1x64x64xbf16>
    %232 = vector.shape_cast %231 : vector<1x64x64xbf16> to vector<64x64xbf16>
    %233 = arith.truncf %230 : vector<80x64xf32> to vector<80x64xbf16>
    %cst_153 = arith.constant dense<0.000000e+00> : vector<80x64xf32>
    %234 = tpu.matmul %233, %232, %cst_153 {dimension_numbers = #tpu.dot_dimension_numbers<[1], [0], [0], [1], [0, 0, 1, 1], [], []>} : vector<80x64xbf16>, vector<64x64xbf16>, vector<80x64xf32> -> vector<80x64xf32>
    %c1_154 = arith.constant 1 : index
    %c0_155 = arith.constant 0 : index
    %c0_156 = arith.constant 0 : index
    %235 = vector.load %arg3[%c1_154, %c0_155, %c0_156] : memref<4x1x64xf32, #tpu.memory_space<vmem>>, vector<1x1x64xf32>
    %236 = vector.shape_cast %235 : vector<1x1x64xf32> to vector<1x64xf32>
    %237 = vector.broadcast %236 : vector<1x64xf32> to vector<80x64xf32>
    %238 = arith.addf %234, %237 : vector<80x64xf32>
    %239 = vector.extract_strided_slice %238 {offsets = [0, 0], sizes = [80, 32], strides = [1, 1]} : vector<80x64xf32> to vector<80x32xf32>
    %240 = math.tanh %239 : vector<80x32xf32>
    %241 = vector.extract_strided_slice %238 {offsets = [0, 32], sizes = [80, 32], strides = [1, 1]} : vector<80x64xf32> to vector<80x32xf32>
    %242 = arith.negf %241 : vector<80x32xf32>
    %243 = math.exp %242 : vector<80x32xf32>
    %cst_157 = arith.constant 1.000000e+00 : f32
    %244 = vector.broadcast %cst_157 : f32 to vector<80x32xf32>
    %245 = arith.addf %244, %243 : vector<80x32xf32>
    %246 = arith.divf %244, %245 : vector<80x32xf32>
    %247 = arith.mulf %240, %246 : vector<80x32xf32>
    %c1_158 = arith.constant 1 : index
    %c0_159 = arith.constant 0 : index
    %c0_160 = arith.constant 0 : index
    %248 = vector.load %arg4[%c1_158, %c0_159, %c0_160] : memref<4x32x160xbf16, #tpu.memory_space<vmem>>, vector<1x32x160xbf16>
    %249 = vector.shape_cast %248 : vector<1x32x160xbf16> to vector<32x160xbf16>
    %250 = arith.truncf %247 : vector<80x32xf32> to vector<80x32xbf16>
    %cst_161 = arith.constant dense<0.000000e+00> : vector<80x160xf32>
    %251 = tpu.matmul %250, %249, %cst_161 {dimension_numbers = #tpu.dot_dimension_numbers<[1], [0], [0], [1], [0, 0, 1, 1], [], []>} : vector<80x32xbf16>, vector<32x160xbf16>, vector<80x160xf32> -> vector<80x160xf32>
    %252 = vector.extract_strided_slice %251 {offsets = [0, 0], sizes = [80, 32], strides = [1, 1]} : vector<80x160xf32> to vector<80x32xf32>
    %c1_162 = arith.constant 1 : index
    %c0_163 = arith.constant 0 : index
    %c0_164 = arith.constant 0 : index
    %253 = vector.load %arg5[%c1_162, %c0_163, %c0_164] : memref<4x1x32xf32, #tpu.memory_space<vmem>>, vector<1x1x32xf32>
    %254 = vector.shape_cast %253 : vector<1x1x32xf32> to vector<1x32xf32>
    %255 = vector.broadcast %254 : vector<1x32xf32> to vector<80x32xf32>
    %256 = arith.addf %252, %255 : vector<80x32xf32>
    %257 = vector.extract_strided_slice %251 {offsets = [0, 32], sizes = [80, 32], strides = [1, 1]} : vector<80x160xf32> to vector<80x32xf32>
    %258 = vector.extract_strided_slice %251 {offsets = [0, 64], sizes = [80, 32], strides = [1, 1]} : vector<80x160xf32> to vector<80x32xf32>
    %259 = vector.extract_strided_slice %251 {offsets = [0, 96], sizes = [80, 32], strides = [1, 1]} : vector<80x160xf32> to vector<80x32xf32>
    %260 = vector.extract_strided_slice %251 {offsets = [0, 128], sizes = [80, 32], strides = [1, 1]} : vector<80x160xf32> to vector<80x32xf32>
    %261 = vector.extract_strided_slice %256 {offsets = [0, 0], sizes = [16, 32], strides = [1, 1]} : vector<80x32xf32> to vector<16x32xf32>
    %c0_165 = arith.constant 0 : index
    %c0_166 = arith.constant 0 : index
    %c0_167 = arith.constant 0 : index
    %262 = vector.load %arg1[%c0_165, %c0_166, %c0_167] : memref<4x16x16xbf16, #tpu.memory_space<vmem>>, vector<1x16x16xbf16>
    %263 = vector.shape_cast %262 : vector<1x16x16xbf16> to vector<16x16xbf16>
    %264 = vector.extract_strided_slice %257 {offsets = [0, 0], sizes = [16, 32], strides = [1, 1]} : vector<80x32xf32> to vector<16x32xf32>
    %265 = arith.truncf %264 : vector<16x32xf32> to vector<16x32xbf16>
    %cst_168 = arith.constant dense<0.000000e+00> : vector<16x32xf32>
    %266 = tpu.matmul %263, %265, %cst_168 {dimension_numbers = #tpu.dot_dimension_numbers<[1], [0], [0], [1], [0, 0, 1, 1], [], []>} : vector<16x16xbf16>, vector<16x32xbf16>, vector<16x32xf32> -> vector<16x32xf32>
    %267 = arith.addf %261, %266 : vector<16x32xf32>
    %c1_169 = arith.constant 1 : index
    %c0_170 = arith.constant 0 : index
    %c0_171 = arith.constant 0 : index
    %268 = vector.load %arg1[%c1_169, %c0_170, %c0_171] : memref<4x16x16xbf16, #tpu.memory_space<vmem>>, vector<1x16x16xbf16>
    %269 = vector.shape_cast %268 : vector<1x16x16xbf16> to vector<16x16xbf16>
    %270 = vector.extract_strided_slice %258 {offsets = [0, 0], sizes = [16, 32], strides = [1, 1]} : vector<80x32xf32> to vector<16x32xf32>
    %271 = arith.truncf %270 : vector<16x32xf32> to vector<16x32xbf16>
    %cst_172 = arith.constant dense<0.000000e+00> : vector<16x32xf32>
    %272 = tpu.matmul %269, %271, %cst_172 {dimension_numbers = #tpu.dot_dimension_numbers<[1], [0], [0], [1], [0, 0, 1, 1], [], []>} : vector<16x16xbf16>, vector<16x32xbf16>, vector<16x32xf32> -> vector<16x32xf32>
    %273 = arith.addf %267, %272 : vector<16x32xf32>
    %c2_173 = arith.constant 2 : index
    %c0_174 = arith.constant 0 : index
    %c0_175 = arith.constant 0 : index
    %274 = vector.load %arg1[%c2_173, %c0_174, %c0_175] : memref<4x16x16xbf16, #tpu.memory_space<vmem>>, vector<1x16x16xbf16>
    %275 = vector.shape_cast %274 : vector<1x16x16xbf16> to vector<16x16xbf16>
    %276 = vector.extract_strided_slice %259 {offsets = [0, 0], sizes = [16, 32], strides = [1, 1]} : vector<80x32xf32> to vector<16x32xf32>
    %277 = arith.truncf %276 : vector<16x32xf32> to vector<16x32xbf16>
    %cst_176 = arith.constant dense<0.000000e+00> : vector<16x32xf32>
    %278 = tpu.matmul %275, %277, %cst_176 {dimension_numbers = #tpu.dot_dimension_numbers<[1], [0], [0], [1], [0, 0, 1, 1], [], []>} : vector<16x16xbf16>, vector<16x32xbf16>, vector<16x32xf32> -> vector<16x32xf32>
    %279 = arith.addf %273, %278 : vector<16x32xf32>
    %c3_177 = arith.constant 3 : index
    %c0_178 = arith.constant 0 : index
    %c0_179 = arith.constant 0 : index
    %280 = vector.load %arg1[%c3_177, %c0_178, %c0_179] : memref<4x16x16xbf16, #tpu.memory_space<vmem>>, vector<1x16x16xbf16>
    %281 = vector.shape_cast %280 : vector<1x16x16xbf16> to vector<16x16xbf16>
    %282 = vector.extract_strided_slice %260 {offsets = [0, 0], sizes = [16, 32], strides = [1, 1]} : vector<80x32xf32> to vector<16x32xf32>
    %283 = arith.truncf %282 : vector<16x32xf32> to vector<16x32xbf16>
    %cst_180 = arith.constant dense<0.000000e+00> : vector<16x32xf32>
    %284 = tpu.matmul %281, %283, %cst_180 {dimension_numbers = #tpu.dot_dimension_numbers<[1], [0], [0], [1], [0, 0, 1, 1], [], []>} : vector<16x16xbf16>, vector<16x32xbf16>, vector<16x32xf32> -> vector<16x32xf32>
    %285 = arith.addf %279, %284 : vector<16x32xf32>
    %c0_181 = arith.constant 0 : index
    %c0_182 = arith.constant 0 : index
    %286 = vector.load %arg13[%c0_181, %c0_182] : memref<128x32xf32, #tpu.memory_space<vmem>>, vector<16x32xf32>
    tpu.vector_store %arg13[%c0_181, %c0_182], %285 {strides = array<i32>} : memref<128x32xf32, #tpu.memory_space<vmem>>, vector<16x32xf32>,
    %287 = vector.extract_strided_slice %256 {offsets = [16, 0], sizes = [16, 32], strides = [1, 1]} : vector<80x32xf32> to vector<16x32xf32>
    %c0_183 = arith.constant 0 : index
    %c0_184 = arith.constant 0 : index
    %c0_185 = arith.constant 0 : index
    %288 = vector.load %arg1[%c0_183, %c0_184, %c0_185] : memref<4x16x16xbf16, #tpu.memory_space<vmem>>, vector<1x16x16xbf16>
    %289 = vector.shape_cast %288 : vector<1x16x16xbf16> to vector<16x16xbf16>
    %290 = vector.extract_strided_slice %257 {offsets = [16, 0], sizes = [16, 32], strides = [1, 1]} : vector<80x32xf32> to vector<16x32xf32>
    %291 = arith.truncf %290 : vector<16x32xf32> to vector<16x32xbf16>
    %cst_186 = arith.constant dense<0.000000e+00> : vector<16x32xf32>
    %292 = tpu.matmul %289, %291, %cst_186 {dimension_numbers = #tpu.dot_dimension_numbers<[1], [0], [0], [1], [0, 0, 1, 1], [], []>} : vector<16x16xbf16>, vector<16x32xbf16>, vector<16x32xf32> -> vector<16x32xf32>
    %293 = arith.addf %287, %292 : vector<16x32xf32>
    %c1_187 = arith.constant 1 : index
    %c0_188 = arith.constant 0 : index
    %c0_189 = arith.constant 0 : index
    %294 = vector.load %arg1[%c1_187, %c0_188, %c0_189] : memref<4x16x16xbf16, #tpu.memory_space<vmem>>, vector<1x16x16xbf16>
    %295 = vector.shape_cast %294 : vector<1x16x16xbf16> to vector<16x16xbf16>
    %296 = vector.extract_strided_slice %258 {offsets = [16, 0], sizes = [16, 32], strides = [1, 1]} : vector<80x32xf32> to vector<16x32xf32>
    %297 = arith.truncf %296 : vector<16x32xf32> to vector<16x32xbf16>
    %cst_190 = arith.constant dense<0.000000e+00> : vector<16x32xf32>
    %298 = tpu.matmul %295, %297, %cst_190 {dimension_numbers = #tpu.dot_dimension_numbers<[1], [0], [0], [1], [0, 0, 1, 1], [], []>} : vector<16x16xbf16>, vector<16x32xbf16>, vector<16x32xf32> -> vector<16x32xf32>
    %299 = arith.addf %293, %298 : vector<16x32xf32>
    %c2_191 = arith.constant 2 : index
    %c0_192 = arith.constant 0 : index
    %c0_193 = arith.constant 0 : index
    %300 = vector.load %arg1[%c2_191, %c0_192, %c0_193] : memref<4x16x16xbf16, #tpu.memory_space<vmem>>, vector<1x16x16xbf16>
    %301 = vector.shape_cast %300 : vector<1x16x16xbf16> to vector<16x16xbf16>
    %302 = vector.extract_strided_slice %259 {offsets = [16, 0], sizes = [16, 32], strides = [1, 1]} : vector<80x32xf32> to vector<16x32xf32>
    %303 = arith.truncf %302 : vector<16x32xf32> to vector<16x32xbf16>
    %cst_194 = arith.constant dense<0.000000e+00> : vector<16x32xf32>
    %304 = tpu.matmul %301, %303, %cst_194 {dimension_numbers = #tpu.dot_dimension_numbers<[1], [0], [0], [1], [0, 0, 1, 1], [], []>} : vector<16x16xbf16>, vector<16x32xbf16>, vector<16x32xf32> -> vector<16x32xf32>
    %305 = arith.addf %299, %304 : vector<16x32xf32>
    %c3_195 = arith.constant 3 : index
    %c0_196 = arith.constant 0 : index
    %c0_197 = arith.constant 0 : index
    %306 = vector.load %arg1[%c3_195, %c0_196, %c0_197] : memref<4x16x16xbf16, #tpu.memory_space<vmem>>, vector<1x16x16xbf16>
    %307 = vector.shape_cast %306 : vector<1x16x16xbf16> to vector<16x16xbf16>
    %308 = vector.extract_strided_slice %260 {offsets = [16, 0], sizes = [16, 32], strides = [1, 1]} : vector<80x32xf32> to vector<16x32xf32>
    %309 = arith.truncf %308 : vector<16x32xf32> to vector<16x32xbf16>
    %cst_198 = arith.constant dense<0.000000e+00> : vector<16x32xf32>
    %310 = tpu.matmul %307, %309, %cst_198 {dimension_numbers = #tpu.dot_dimension_numbers<[1], [0], [0], [1], [0, 0, 1, 1], [], []>} : vector<16x16xbf16>, vector<16x32xbf16>, vector<16x32xf32> -> vector<16x32xf32>
    %311 = arith.addf %305, %310 : vector<16x32xf32>
    %c16_199 = arith.constant 16 : index
    %c0_200 = arith.constant 0 : index
    %312 = vector.load %arg13[%c16_199, %c0_200] : memref<128x32xf32, #tpu.memory_space<vmem>>, vector<16x32xf32>
    tpu.vector_store %arg13[%c16_199, %c0_200], %311 {strides = array<i32>} : memref<128x32xf32, #tpu.memory_space<vmem>>, vector<16x32xf32>,
    %313 = vector.extract_strided_slice %256 {offsets = [32, 0], sizes = [16, 32], strides = [1, 1]} : vector<80x32xf32> to vector<16x32xf32>
    %c0_201 = arith.constant 0 : index
    %c0_202 = arith.constant 0 : index
    %c0_203 = arith.constant 0 : index
    %314 = vector.load %arg1[%c0_201, %c0_202, %c0_203] : memref<4x16x16xbf16, #tpu.memory_space<vmem>>, vector<1x16x16xbf16>
    %315 = vector.shape_cast %314 : vector<1x16x16xbf16> to vector<16x16xbf16>
    %316 = vector.extract_strided_slice %257 {offsets = [32, 0], sizes = [16, 32], strides = [1, 1]} : vector<80x32xf32> to vector<16x32xf32>
    %317 = arith.truncf %316 : vector<16x32xf32> to vector<16x32xbf16>
    %cst_204 = arith.constant dense<0.000000e+00> : vector<16x32xf32>
    %318 = tpu.matmul %315, %317, %cst_204 {dimension_numbers = #tpu.dot_dimension_numbers<[1], [0], [0], [1], [0, 0, 1, 1], [], []>} : vector<16x16xbf16>, vector<16x32xbf16>, vector<16x32xf32> -> vector<16x32xf32>
    %319 = arith.addf %313, %318 : vector<16x32xf32>
    %c1_205 = arith.constant 1 : index
    %c0_206 = arith.constant 0 : index
    %c0_207 = arith.constant 0 : index
    %320 = vector.load %arg1[%c1_205, %c0_206, %c0_207] : memref<4x16x16xbf16, #tpu.memory_space<vmem>>, vector<1x16x16xbf16>
    %321 = vector.shape_cast %320 : vector<1x16x16xbf16> to vector<16x16xbf16>
    %322 = vector.extract_strided_slice %258 {offsets = [32, 0], sizes = [16, 32], strides = [1, 1]} : vector<80x32xf32> to vector<16x32xf32>
    %323 = arith.truncf %322 : vector<16x32xf32> to vector<16x32xbf16>
    %cst_208 = arith.constant dense<0.000000e+00> : vector<16x32xf32>
    %324 = tpu.matmul %321, %323, %cst_208 {dimension_numbers = #tpu.dot_dimension_numbers<[1], [0], [0], [1], [0, 0, 1, 1], [], []>} : vector<16x16xbf16>, vector<16x32xbf16>, vector<16x32xf32> -> vector<16x32xf32>
    %325 = arith.addf %319, %324 : vector<16x32xf32>
    %c2_209 = arith.constant 2 : index
    %c0_210 = arith.constant 0 : index
    %c0_211 = arith.constant 0 : index
    %326 = vector.load %arg1[%c2_209, %c0_210, %c0_211] : memref<4x16x16xbf16, #tpu.memory_space<vmem>>, vector<1x16x16xbf16>
    %327 = vector.shape_cast %326 : vector<1x16x16xbf16> to vector<16x16xbf16>
    %328 = vector.extract_strided_slice %259 {offsets = [32, 0], sizes = [16, 32], strides = [1, 1]} : vector<80x32xf32> to vector<16x32xf32>
    %329 = arith.truncf %328 : vector<16x32xf32> to vector<16x32xbf16>
    %cst_212 = arith.constant dense<0.000000e+00> : vector<16x32xf32>
    %330 = tpu.matmul %327, %329, %cst_212 {dimension_numbers = #tpu.dot_dimension_numbers<[1], [0], [0], [1], [0, 0, 1, 1], [], []>} : vector<16x16xbf16>, vector<16x32xbf16>, vector<16x32xf32> -> vector<16x32xf32>
    %331 = arith.addf %325, %330 : vector<16x32xf32>
    %c3_213 = arith.constant 3 : index
    %c0_214 = arith.constant 0 : index
    %c0_215 = arith.constant 0 : index
    %332 = vector.load %arg1[%c3_213, %c0_214, %c0_215] : memref<4x16x16xbf16, #tpu.memory_space<vmem>>, vector<1x16x16xbf16>
    %333 = vector.shape_cast %332 : vector<1x16x16xbf16> to vector<16x16xbf16>
    %334 = vector.extract_strided_slice %260 {offsets = [32, 0], sizes = [16, 32], strides = [1, 1]} : vector<80x32xf32> to vector<16x32xf32>
    %335 = arith.truncf %334 : vector<16x32xf32> to vector<16x32xbf16>
    %cst_216 = arith.constant dense<0.000000e+00> : vector<16x32xf32>
    %336 = tpu.matmul %333, %335, %cst_216 {dimension_numbers = #tpu.dot_dimension_numbers<[1], [0], [0], [1], [0, 0, 1, 1], [], []>} : vector<16x16xbf16>, vector<16x32xbf16>, vector<16x32xf32> -> vector<16x32xf32>
    %337 = arith.addf %331, %336 : vector<16x32xf32>
    %c32_217 = arith.constant 32 : index
    %c0_218 = arith.constant 0 : index
    %338 = vector.load %arg13[%c32_217, %c0_218] : memref<128x32xf32, #tpu.memory_space<vmem>>, vector<16x32xf32>
    tpu.vector_store %arg13[%c32_217, %c0_218], %337 {strides = array<i32>} : memref<128x32xf32, #tpu.memory_space<vmem>>, vector<16x32xf32>,
    %339 = vector.extract_strided_slice %256 {offsets = [48, 0], sizes = [16, 32], strides = [1, 1]} : vector<80x32xf32> to vector<16x32xf32>
    %c0_219 = arith.constant 0 : index
    %c0_220 = arith.constant 0 : index
    %c0_221 = arith.constant 0 : index
    %340 = vector.load %arg1[%c0_219, %c0_220, %c0_221] : memref<4x16x16xbf16, #tpu.memory_space<vmem>>, vector<1x16x16xbf16>
    %341 = vector.shape_cast %340 : vector<1x16x16xbf16> to vector<16x16xbf16>
    %342 = vector.extract_strided_slice %257 {offsets = [48, 0], sizes = [16, 32], strides = [1, 1]} : vector<80x32xf32> to vector<16x32xf32>
    %343 = arith.truncf %342 : vector<16x32xf32> to vector<16x32xbf16>
    %cst_222 = arith.constant dense<0.000000e+00> : vector<16x32xf32>
    %344 = tpu.matmul %341, %343, %cst_222 {dimension_numbers = #tpu.dot_dimension_numbers<[1], [0], [0], [1], [0, 0, 1, 1], [], []>} : vector<16x16xbf16>, vector<16x32xbf16>, vector<16x32xf32> -> vector<16x32xf32>
    %345 = arith.addf %339, %344 : vector<16x32xf32>
    %c1_223 = arith.constant 1 : index
    %c0_224 = arith.constant 0 : index
    %c0_225 = arith.constant 0 : index
    %346 = vector.load %arg1[%c1_223, %c0_224, %c0_225] : memref<4x16x16xbf16, #tpu.memory_space<vmem>>, vector<1x16x16xbf16>
    %347 = vector.shape_cast %346 : vector<1x16x16xbf16> to vector<16x16xbf16>
    %348 = vector.extract_strided_slice %258 {offsets = [48, 0], sizes = [16, 32], strides = [1, 1]} : vector<80x32xf32> to vector<16x32xf32>
    %349 = arith.truncf %348 : vector<16x32xf32> to vector<16x32xbf16>
    %cst_226 = arith.constant dense<0.000000e+00> : vector<16x32xf32>
    %350 = tpu.matmul %347, %349, %cst_226 {dimension_numbers = #tpu.dot_dimension_numbers<[1], [0], [0], [1], [0, 0, 1, 1], [], []>} : vector<16x16xbf16>, vector<16x32xbf16>, vector<16x32xf32> -> vector<16x32xf32>
    %351 = arith.addf %345, %350 : vector<16x32xf32>
    %c2_227 = arith.constant 2 : index
    %c0_228 = arith.constant 0 : index
    %c0_229 = arith.constant 0 : index
    %352 = vector.load %arg1[%c2_227, %c0_228, %c0_229] : memref<4x16x16xbf16, #tpu.memory_space<vmem>>, vector<1x16x16xbf16>
    %353 = vector.shape_cast %352 : vector<1x16x16xbf16> to vector<16x16xbf16>
    %354 = vector.extract_strided_slice %259 {offsets = [48, 0], sizes = [16, 32], strides = [1, 1]} : vector<80x32xf32> to vector<16x32xf32>
    %355 = arith.truncf %354 : vector<16x32xf32> to vector<16x32xbf16>
    %cst_230 = arith.constant dense<0.000000e+00> : vector<16x32xf32>
    %356 = tpu.matmul %353, %355, %cst_230 {dimension_numbers = #tpu.dot_dimension_numbers<[1], [0], [0], [1], [0, 0, 1, 1], [], []>} : vector<16x16xbf16>, vector<16x32xbf16>, vector<16x32xf32> -> vector<16x32xf32>
    %357 = arith.addf %351, %356 : vector<16x32xf32>
    %c3_231 = arith.constant 3 : index
    %c0_232 = arith.constant 0 : index
    %c0_233 = arith.constant 0 : index
    %358 = vector.load %arg1[%c3_231, %c0_232, %c0_233] : memref<4x16x16xbf16, #tpu.memory_space<vmem>>, vector<1x16x16xbf16>
    %359 = vector.shape_cast %358 : vector<1x16x16xbf16> to vector<16x16xbf16>
    %360 = vector.extract_strided_slice %260 {offsets = [48, 0], sizes = [16, 32], strides = [1, 1]} : vector<80x32xf32> to vector<16x32xf32>
    %361 = arith.truncf %360 : vector<16x32xf32> to vector<16x32xbf16>
    %cst_234 = arith.constant dense<0.000000e+00> : vector<16x32xf32>
    %362 = tpu.matmul %359, %361, %cst_234 {dimension_numbers = #tpu.dot_dimension_numbers<[1], [0], [0], [1], [0, 0, 1, 1], [], []>} : vector<16x16xbf16>, vector<16x32xbf16>, vector<16x32xf32> -> vector<16x32xf32>
    %363 = arith.addf %357, %362 : vector<16x32xf32>
    %c48_235 = arith.constant 48 : index
    %c0_236 = arith.constant 0 : index
    %364 = vector.load %arg13[%c48_235, %c0_236] : memref<128x32xf32, #tpu.memory_space<vmem>>, vector<16x32xf32>
    tpu.vector_store %arg13[%c48_235, %c0_236], %363 {strides = array<i32>} : memref<128x32xf32, #tpu.memory_space<vmem>>, vector<16x32xf32>,
    %365 = vector.extract_strided_slice %256 {offsets = [64, 0], sizes = [16, 32], strides = [1, 1]} : vector<80x32xf32> to vector<16x32xf32>
    %c0_237 = arith.constant 0 : index
    %c0_238 = arith.constant 0 : index
    %c0_239 = arith.constant 0 : index
    %366 = vector.load %arg1[%c0_237, %c0_238, %c0_239] : memref<4x16x16xbf16, #tpu.memory_space<vmem>>, vector<1x16x16xbf16>
    %367 = vector.shape_cast %366 : vector<1x16x16xbf16> to vector<16x16xbf16>
    %368 = vector.extract_strided_slice %257 {offsets = [64, 0], sizes = [16, 32], strides = [1, 1]} : vector<80x32xf32> to vector<16x32xf32>
    %369 = arith.truncf %368 : vector<16x32xf32> to vector<16x32xbf16>
    %cst_240 = arith.constant dense<0.000000e+00> : vector<16x32xf32>
    %370 = tpu.matmul %367, %369, %cst_240 {dimension_numbers = #tpu.dot_dimension_numbers<[1], [0], [0], [1], [0, 0, 1, 1], [], []>} : vector<16x16xbf16>, vector<16x32xbf16>, vector<16x32xf32> -> vector<16x32xf32>
    %371 = arith.addf %365, %370 : vector<16x32xf32>
    %c1_241 = arith.constant 1 : index
    %c0_242 = arith.constant 0 : index
    %c0_243 = arith.constant 0 : index
    %372 = vector.load %arg1[%c1_241, %c0_242, %c0_243] : memref<4x16x16xbf16, #tpu.memory_space<vmem>>, vector<1x16x16xbf16>
    %373 = vector.shape_cast %372 : vector<1x16x16xbf16> to vector<16x16xbf16>
    %374 = vector.extract_strided_slice %258 {offsets = [64, 0], sizes = [16, 32], strides = [1, 1]} : vector<80x32xf32> to vector<16x32xf32>
    %375 = arith.truncf %374 : vector<16x32xf32> to vector<16x32xbf16>
    %cst_244 = arith.constant dense<0.000000e+00> : vector<16x32xf32>
    %376 = tpu.matmul %373, %375, %cst_244 {dimension_numbers = #tpu.dot_dimension_numbers<[1], [0], [0], [1], [0, 0, 1, 1], [], []>} : vector<16x16xbf16>, vector<16x32xbf16>, vector<16x32xf32> -> vector<16x32xf32>
    %377 = arith.addf %371, %376 : vector<16x32xf32>
    %c2_245 = arith.constant 2 : index
    %c0_246 = arith.constant 0 : index
    %c0_247 = arith.constant 0 : index
    %378 = vector.load %arg1[%c2_245, %c0_246, %c0_247] : memref<4x16x16xbf16, #tpu.memory_space<vmem>>, vector<1x16x16xbf16>
    %379 = vector.shape_cast %378 : vector<1x16x16xbf16> to vector<16x16xbf16>
    %380 = vector.extract_strided_slice %259 {offsets = [64, 0], sizes = [16, 32], strides = [1, 1]} : vector<80x32xf32> to vector<16x32xf32>
    %381 = arith.truncf %380 : vector<16x32xf32> to vector<16x32xbf16>
    %cst_248 = arith.constant dense<0.000000e+00> : vector<16x32xf32>
    %382 = tpu.matmul %379, %381, %cst_248 {dimension_numbers = #tpu.dot_dimension_numbers<[1], [0], [0], [1], [0, 0, 1, 1], [], []>} : vector<16x16xbf16>, vector<16x32xbf16>, vector<16x32xf32> -> vector<16x32xf32>
    %383 = arith.addf %377, %382 : vector<16x32xf32>
    %c3_249 = arith.constant 3 : index
    %c0_250 = arith.constant 0 : index
    %c0_251 = arith.constant 0 : index
    %384 = vector.load %arg1[%c3_249, %c0_250, %c0_251] : memref<4x16x16xbf16, #tpu.memory_space<vmem>>, vector<1x16x16xbf16>
    %385 = vector.shape_cast %384 : vector<1x16x16xbf16> to vector<16x16xbf16>
    %386 = vector.extract_strided_slice %260 {offsets = [64, 0], sizes = [16, 32], strides = [1, 1]} : vector<80x32xf32> to vector<16x32xf32>
    %387 = arith.truncf %386 : vector<16x32xf32> to vector<16x32xbf16>
    %cst_252 = arith.constant dense<0.000000e+00> : vector<16x32xf32>
    %388 = tpu.matmul %385, %387, %cst_252 {dimension_numbers = #tpu.dot_dimension_numbers<[1], [0], [0], [1], [0, 0, 1, 1], [], []>} : vector<16x16xbf16>, vector<16x32xbf16>, vector<16x32xf32> -> vector<16x32xf32>
    %389 = arith.addf %383, %388 : vector<16x32xf32>
    %c64_253 = arith.constant 64 : index
    %c0_254 = arith.constant 0 : index
    %390 = vector.load %arg13[%c64_253, %c0_254] : memref<128x32xf32, #tpu.memory_space<vmem>>, vector<16x32xf32>
    tpu.vector_store %arg13[%c64_253, %c0_254], %389 {strides = array<i32>} : memref<128x32xf32, #tpu.memory_space<vmem>>, vector<16x32xf32>,
    %c1_255 = arith.constant 1 : index
    %c0_256 = arith.constant 0 : index
    %c0_257 = arith.constant 0 : index
    %391 = vector.load %arg6[%c1_255, %c0_256, %c0_257] : memref<4x32x64xbf16, #tpu.memory_space<vmem>>, vector<1x32x64xbf16>
    %392 = vector.shape_cast %391 : vector<1x32x64xbf16> to vector<32x64xbf16>
    %393 = arith.truncf %389 : vector<16x32xf32> to vector<16x32xbf16>
    %cst_258 = arith.constant dense<0.000000e+00> : vector<16x64xf32>
    %394 = tpu.matmul %393, %392, %cst_258 {dimension_numbers = #tpu.dot_dimension_numbers<[1], [0], [0], [1], [0, 0, 1, 1], [], []>} : vector<16x32xbf16>, vector<32x64xbf16>, vector<16x64xf32> -> vector<16x64xf32>
    %395 = arith.addf %227, %394 : vector<16x64xf32>
    %c1_259 = arith.constant 1 : index
    %c0_260 = arith.constant 0 : index
    %c0_261 = arith.constant 0 : index
    %396 = vector.load %arg7[%c1_259, %c0_260, %c0_261] : memref<4x1x64xf32, #tpu.memory_space<vmem>>, vector<1x1x64xf32>
    %397 = vector.shape_cast %396 : vector<1x1x64xf32> to vector<1x64xf32>
    %398 = vector.broadcast %397 : vector<1x64xf32> to vector<16x64xf32>
    %399 = arith.addf %395, %398 : vector<16x64xf32>
    %c0_262 = arith.constant 0 : index
    %c0_263 = arith.constant 0 : index
    %400 = vector.load %arg13[%c0_262, %c0_263] : memref<128x32xf32, #tpu.memory_space<vmem>>, vector<64x32xf32>
    %c16_264 = arith.constant 16 : index
    %c0_265 = arith.constant 0 : index
    %401 = vector.load %arg13[%c16_264, %c0_265] : memref<128x32xf32, #tpu.memory_space<vmem>>, vector<64x32xf32>
    %402 = tpu.concatenate %400, %401 in 1 : vector<64x32xf32>, vector<64x32xf32> -> vector<64x64xf32>
    %c2_266 = arith.constant 2 : index
    %c0_267 = arith.constant 0 : index
    %c0_268 = arith.constant 0 : index
    %403 = vector.load %arg2[%c2_266, %c0_267, %c0_268] : memref<4x64x64xbf16, #tpu.memory_space<vmem>>, vector<1x64x64xbf16>
    %404 = vector.shape_cast %403 : vector<1x64x64xbf16> to vector<64x64xbf16>
    %405 = arith.truncf %402 : vector<64x64xf32> to vector<64x64xbf16>
    %cst_269 = arith.constant dense<0.000000e+00> : vector<64x64xf32>
    %406 = tpu.matmul %405, %404, %cst_269 {dimension_numbers = #tpu.dot_dimension_numbers<[1], [0], [0], [1], [0, 0, 1, 1], [], []>} : vector<64x64xbf16>, vector<64x64xbf16>, vector<64x64xf32> -> vector<64x64xf32>
    %c2_270 = arith.constant 2 : index
    %c0_271 = arith.constant 0 : index
    %c0_272 = arith.constant 0 : index
    %407 = vector.load %arg3[%c2_270, %c0_271, %c0_272] : memref<4x1x64xf32, #tpu.memory_space<vmem>>, vector<1x1x64xf32>
    %408 = vector.shape_cast %407 : vector<1x1x64xf32> to vector<1x64xf32>
    %409 = vector.broadcast %408 : vector<1x64xf32> to vector<64x64xf32>
    %410 = arith.addf %406, %409 : vector<64x64xf32>
    %411 = vector.extract_strided_slice %410 {offsets = [0, 0], sizes = [64, 32], strides = [1, 1]} : vector<64x64xf32> to vector<64x32xf32>
    %412 = math.tanh %411 : vector<64x32xf32>
    %413 = vector.extract_strided_slice %410 {offsets = [0, 32], sizes = [64, 32], strides = [1, 1]} : vector<64x64xf32> to vector<64x32xf32>
    %414 = arith.negf %413 : vector<64x32xf32>
    %415 = math.exp %414 : vector<64x32xf32>
    %cst_273 = arith.constant 1.000000e+00 : f32
    %416 = vector.broadcast %cst_273 : f32 to vector<64x32xf32>
    %417 = arith.addf %416, %415 : vector<64x32xf32>
    %418 = arith.divf %416, %417 : vector<64x32xf32>
    %419 = arith.mulf %412, %418 : vector<64x32xf32>
    %c2_274 = arith.constant 2 : index
    %c0_275 = arith.constant 0 : index
    %c0_276 = arith.constant 0 : index
    %420 = vector.load %arg4[%c2_274, %c0_275, %c0_276] : memref<4x32x160xbf16, #tpu.memory_space<vmem>>, vector<1x32x160xbf16>
    %421 = vector.shape_cast %420 : vector<1x32x160xbf16> to vector<32x160xbf16>
    %422 = arith.truncf %419 : vector<64x32xf32> to vector<64x32xbf16>
    %cst_277 = arith.constant dense<0.000000e+00> : vector<64x160xf32>
    %423 = tpu.matmul %422, %421, %cst_277 {dimension_numbers = #tpu.dot_dimension_numbers<[1], [0], [0], [1], [0, 0, 1, 1], [], []>} : vector<64x32xbf16>, vector<32x160xbf16>, vector<64x160xf32> -> vector<64x160xf32>
    %424 = vector.extract_strided_slice %423 {offsets = [0, 0], sizes = [64, 32], strides = [1, 1]} : vector<64x160xf32> to vector<64x32xf32>
    %c2_278 = arith.constant 2 : index
    %c0_279 = arith.constant 0 : index
    %c0_280 = arith.constant 0 : index
    %425 = vector.load %arg5[%c2_278, %c0_279, %c0_280] : memref<4x1x32xf32, #tpu.memory_space<vmem>>, vector<1x1x32xf32>
    %426 = vector.shape_cast %425 : vector<1x1x32xf32> to vector<1x32xf32>
    %427 = vector.broadcast %426 : vector<1x32xf32> to vector<64x32xf32>
    %428 = arith.addf %424, %427 : vector<64x32xf32>
    %429 = vector.extract_strided_slice %423 {offsets = [0, 32], sizes = [64, 32], strides = [1, 1]} : vector<64x160xf32> to vector<64x32xf32>
    %430 = vector.extract_strided_slice %423 {offsets = [0, 64], sizes = [64, 32], strides = [1, 1]} : vector<64x160xf32> to vector<64x32xf32>
    %431 = vector.extract_strided_slice %423 {offsets = [0, 96], sizes = [64, 32], strides = [1, 1]} : vector<64x160xf32> to vector<64x32xf32>
    %432 = vector.extract_strided_slice %423 {offsets = [0, 128], sizes = [64, 32], strides = [1, 1]} : vector<64x160xf32> to vector<64x32xf32>
    %433 = vector.extract_strided_slice %428 {offsets = [0, 0], sizes = [16, 32], strides = [1, 1]} : vector<64x32xf32> to vector<16x32xf32>
    %c0_281 = arith.constant 0 : index
    %c0_282 = arith.constant 0 : index
    %c0_283 = arith.constant 0 : index
    %434 = vector.load %arg1[%c0_281, %c0_282, %c0_283] : memref<4x16x16xbf16, #tpu.memory_space<vmem>>, vector<1x16x16xbf16>
    %435 = vector.shape_cast %434 : vector<1x16x16xbf16> to vector<16x16xbf16>
    %436 = vector.extract_strided_slice %429 {offsets = [0, 0], sizes = [16, 32], strides = [1, 1]} : vector<64x32xf32> to vector<16x32xf32>
    %437 = arith.truncf %436 : vector<16x32xf32> to vector<16x32xbf16>
    %cst_284 = arith.constant dense<0.000000e+00> : vector<16x32xf32>
    %438 = tpu.matmul %435, %437, %cst_284 {dimension_numbers = #tpu.dot_dimension_numbers<[1], [0], [0], [1], [0, 0, 1, 1], [], []>} : vector<16x16xbf16>, vector<16x32xbf16>, vector<16x32xf32> -> vector<16x32xf32>
    %439 = arith.addf %433, %438 : vector<16x32xf32>
    %c1_285 = arith.constant 1 : index
    %c0_286 = arith.constant 0 : index
    %c0_287 = arith.constant 0 : index
    %440 = vector.load %arg1[%c1_285, %c0_286, %c0_287] : memref<4x16x16xbf16, #tpu.memory_space<vmem>>, vector<1x16x16xbf16>
    %441 = vector.shape_cast %440 : vector<1x16x16xbf16> to vector<16x16xbf16>
    %442 = vector.extract_strided_slice %430 {offsets = [0, 0], sizes = [16, 32], strides = [1, 1]} : vector<64x32xf32> to vector<16x32xf32>
    %443 = arith.truncf %442 : vector<16x32xf32> to vector<16x32xbf16>
    %cst_288 = arith.constant dense<0.000000e+00> : vector<16x32xf32>
    %444 = tpu.matmul %441, %443, %cst_288 {dimension_numbers = #tpu.dot_dimension_numbers<[1], [0], [0], [1], [0, 0, 1, 1], [], []>} : vector<16x16xbf16>, vector<16x32xbf16>, vector<16x32xf32> -> vector<16x32xf32>
    %445 = arith.addf %439, %444 : vector<16x32xf32>
    %c2_289 = arith.constant 2 : index
    %c0_290 = arith.constant 0 : index
    %c0_291 = arith.constant 0 : index
    %446 = vector.load %arg1[%c2_289, %c0_290, %c0_291] : memref<4x16x16xbf16, #tpu.memory_space<vmem>>, vector<1x16x16xbf16>
    %447 = vector.shape_cast %446 : vector<1x16x16xbf16> to vector<16x16xbf16>
    %448 = vector.extract_strided_slice %431 {offsets = [0, 0], sizes = [16, 32], strides = [1, 1]} : vector<64x32xf32> to vector<16x32xf32>
    %449 = arith.truncf %448 : vector<16x32xf32> to vector<16x32xbf16>
    %cst_292 = arith.constant dense<0.000000e+00> : vector<16x32xf32>
    %450 = tpu.matmul %447, %449, %cst_292 {dimension_numbers = #tpu.dot_dimension_numbers<[1], [0], [0], [1], [0, 0, 1, 1], [], []>} : vector<16x16xbf16>, vector<16x32xbf16>, vector<16x32xf32> -> vector<16x32xf32>
    %451 = arith.addf %445, %450 : vector<16x32xf32>
    %c3_293 = arith.constant 3 : index
    %c0_294 = arith.constant 0 : index
    %c0_295 = arith.constant 0 : index
    %452 = vector.load %arg1[%c3_293, %c0_294, %c0_295] : memref<4x16x16xbf16, #tpu.memory_space<vmem>>, vector<1x16x16xbf16>
    %453 = vector.shape_cast %452 : vector<1x16x16xbf16> to vector<16x16xbf16>
    %454 = vector.extract_strided_slice %432 {offsets = [0, 0], sizes = [16, 32], strides = [1, 1]} : vector<64x32xf32> to vector<16x32xf32>
    %455 = arith.truncf %454 : vector<16x32xf32> to vector<16x32xbf16>
    %cst_296 = arith.constant dense<0.000000e+00> : vector<16x32xf32>
    %456 = tpu.matmul %453, %455, %cst_296 {dimension_numbers = #tpu.dot_dimension_numbers<[1], [0], [0], [1], [0, 0, 1, 1], [], []>} : vector<16x16xbf16>, vector<16x32xbf16>, vector<16x32xf32> -> vector<16x32xf32>
    %457 = arith.addf %451, %456 : vector<16x32xf32>
    %c0_297 = arith.constant 0 : index
    %c0_298 = arith.constant 0 : index
    %458 = vector.load %arg14[%c0_297, %c0_298] : memref<128x32xf32, #tpu.memory_space<vmem>>, vector<16x32xf32>
    tpu.vector_store %arg14[%c0_297, %c0_298], %457 {strides = array<i32>} : memref<128x32xf32, #tpu.memory_space<vmem>>, vector<16x32xf32>,
    %459 = vector.extract_strided_slice %428 {offsets = [16, 0], sizes = [16, 32], strides = [1, 1]} : vector<64x32xf32> to vector<16x32xf32>
    %c0_299 = arith.constant 0 : index
    %c0_300 = arith.constant 0 : index
    %c0_301 = arith.constant 0 : index
    %460 = vector.load %arg1[%c0_299, %c0_300, %c0_301] : memref<4x16x16xbf16, #tpu.memory_space<vmem>>, vector<1x16x16xbf16>
    %461 = vector.shape_cast %460 : vector<1x16x16xbf16> to vector<16x16xbf16>
    %462 = vector.extract_strided_slice %429 {offsets = [16, 0], sizes = [16, 32], strides = [1, 1]} : vector<64x32xf32> to vector<16x32xf32>
    %463 = arith.truncf %462 : vector<16x32xf32> to vector<16x32xbf16>
    %cst_302 = arith.constant dense<0.000000e+00> : vector<16x32xf32>
    %464 = tpu.matmul %461, %463, %cst_302 {dimension_numbers = #tpu.dot_dimension_numbers<[1], [0], [0], [1], [0, 0, 1, 1], [], []>} : vector<16x16xbf16>, vector<16x32xbf16>, vector<16x32xf32> -> vector<16x32xf32>
    %465 = arith.addf %459, %464 : vector<16x32xf32>
    %c1_303 = arith.constant 1 : index
    %c0_304 = arith.constant 0 : index
    %c0_305 = arith.constant 0 : index
    %466 = vector.load %arg1[%c1_303, %c0_304, %c0_305] : memref<4x16x16xbf16, #tpu.memory_space<vmem>>, vector<1x16x16xbf16>
    %467 = vector.shape_cast %466 : vector<1x16x16xbf16> to vector<16x16xbf16>
    %468 = vector.extract_strided_slice %430 {offsets = [16, 0], sizes = [16, 32], strides = [1, 1]} : vector<64x32xf32> to vector<16x32xf32>
    %469 = arith.truncf %468 : vector<16x32xf32> to vector<16x32xbf16>
    %cst_306 = arith.constant dense<0.000000e+00> : vector<16x32xf32>
    %470 = tpu.matmul %467, %469, %cst_306 {dimension_numbers = #tpu.dot_dimension_numbers<[1], [0], [0], [1], [0, 0, 1, 1], [], []>} : vector<16x16xbf16>, vector<16x32xbf16>, vector<16x32xf32> -> vector<16x32xf32>
    %471 = arith.addf %465, %470 : vector<16x32xf32>
    %c2_307 = arith.constant 2 : index
    %c0_308 = arith.constant 0 : index
    %c0_309 = arith.constant 0 : index
    %472 = vector.load %arg1[%c2_307, %c0_308, %c0_309] : memref<4x16x16xbf16, #tpu.memory_space<vmem>>, vector<1x16x16xbf16>
    %473 = vector.shape_cast %472 : vector<1x16x16xbf16> to vector<16x16xbf16>
    %474 = vector.extract_strided_slice %431 {offsets = [16, 0], sizes = [16, 32], strides = [1, 1]} : vector<64x32xf32> to vector<16x32xf32>
    %475 = arith.truncf %474 : vector<16x32xf32> to vector<16x32xbf16>
    %cst_310 = arith.constant dense<0.000000e+00> : vector<16x32xf32>
    %476 = tpu.matmul %473, %475, %cst_310 {dimension_numbers = #tpu.dot_dimension_numbers<[1], [0], [0], [1], [0, 0, 1, 1], [], []>} : vector<16x16xbf16>, vector<16x32xbf16>, vector<16x32xf32> -> vector<16x32xf32>
    %477 = arith.addf %471, %476 : vector<16x32xf32>
    %c3_311 = arith.constant 3 : index
    %c0_312 = arith.constant 0 : index
    %c0_313 = arith.constant 0 : index
    %478 = vector.load %arg1[%c3_311, %c0_312, %c0_313] : memref<4x16x16xbf16, #tpu.memory_space<vmem>>, vector<1x16x16xbf16>
    %479 = vector.shape_cast %478 : vector<1x16x16xbf16> to vector<16x16xbf16>
    %480 = vector.extract_strided_slice %432 {offsets = [16, 0], sizes = [16, 32], strides = [1, 1]} : vector<64x32xf32> to vector<16x32xf32>
    %481 = arith.truncf %480 : vector<16x32xf32> to vector<16x32xbf16>
    %cst_314 = arith.constant dense<0.000000e+00> : vector<16x32xf32>
    %482 = tpu.matmul %479, %481, %cst_314 {dimension_numbers = #tpu.dot_dimension_numbers<[1], [0], [0], [1], [0, 0, 1, 1], [], []>} : vector<16x16xbf16>, vector<16x32xbf16>, vector<16x32xf32> -> vector<16x32xf32>
    %483 = arith.addf %477, %482 : vector<16x32xf32>
    %c16_315 = arith.constant 16 : index
    %c0_316 = arith.constant 0 : index
    %484 = vector.load %arg14[%c16_315, %c0_316] : memref<128x32xf32, #tpu.memory_space<vmem>>, vector<16x32xf32>
    tpu.vector_store %arg14[%c16_315, %c0_316], %483 {strides = array<i32>} : memref<128x32xf32, #tpu.memory_space<vmem>>, vector<16x32xf32>,
    %485 = vector.extract_strided_slice %428 {offsets = [32, 0], sizes = [16, 32], strides = [1, 1]} : vector<64x32xf32> to vector<16x32xf32>
    %c0_317 = arith.constant 0 : index
    %c0_318 = arith.constant 0 : index
    %c0_319 = arith.constant 0 : index
    %486 = vector.load %arg1[%c0_317, %c0_318, %c0_319] : memref<4x16x16xbf16, #tpu.memory_space<vmem>>, vector<1x16x16xbf16>
    %487 = vector.shape_cast %486 : vector<1x16x16xbf16> to vector<16x16xbf16>
    %488 = vector.extract_strided_slice %429 {offsets = [32, 0], sizes = [16, 32], strides = [1, 1]} : vector<64x32xf32> to vector<16x32xf32>
    %489 = arith.truncf %488 : vector<16x32xf32> to vector<16x32xbf16>
    %cst_320 = arith.constant dense<0.000000e+00> : vector<16x32xf32>
    %490 = tpu.matmul %487, %489, %cst_320 {dimension_numbers = #tpu.dot_dimension_numbers<[1], [0], [0], [1], [0, 0, 1, 1], [], []>} : vector<16x16xbf16>, vector<16x32xbf16>, vector<16x32xf32> -> vector<16x32xf32>
    %491 = arith.addf %485, %490 : vector<16x32xf32>
    %c1_321 = arith.constant 1 : index
    %c0_322 = arith.constant 0 : index
    %c0_323 = arith.constant 0 : index
    %492 = vector.load %arg1[%c1_321, %c0_322, %c0_323] : memref<4x16x16xbf16, #tpu.memory_space<vmem>>, vector<1x16x16xbf16>
    %493 = vector.shape_cast %492 : vector<1x16x16xbf16> to vector<16x16xbf16>
    %494 = vector.extract_strided_slice %430 {offsets = [32, 0], sizes = [16, 32], strides = [1, 1]} : vector<64x32xf32> to vector<16x32xf32>
    %495 = arith.truncf %494 : vector<16x32xf32> to vector<16x32xbf16>
    %cst_324 = arith.constant dense<0.000000e+00> : vector<16x32xf32>
    %496 = tpu.matmul %493, %495, %cst_324 {dimension_numbers = #tpu.dot_dimension_numbers<[1], [0], [0], [1], [0, 0, 1, 1], [], []>} : vector<16x16xbf16>, vector<16x32xbf16>, vector<16x32xf32> -> vector<16x32xf32>
    %497 = arith.addf %491, %496 : vector<16x32xf32>
    %c2_325 = arith.constant 2 : index
    %c0_326 = arith.constant 0 : index
    %c0_327 = arith.constant 0 : index
    %498 = vector.load %arg1[%c2_325, %c0_326, %c0_327] : memref<4x16x16xbf16, #tpu.memory_space<vmem>>, vector<1x16x16xbf16>
    %499 = vector.shape_cast %498 : vector<1x16x16xbf16> to vector<16x16xbf16>
    %500 = vector.extract_strided_slice %431 {offsets = [32, 0], sizes = [16, 32], strides = [1, 1]} : vector<64x32xf32> to vector<16x32xf32>
    %501 = arith.truncf %500 : vector<16x32xf32> to vector<16x32xbf16>
    %cst_328 = arith.constant dense<0.000000e+00> : vector<16x32xf32>
    %502 = tpu.matmul %499, %501, %cst_328 {dimension_numbers = #tpu.dot_dimension_numbers<[1], [0], [0], [1], [0, 0, 1, 1], [], []>} : vector<16x16xbf16>, vector<16x32xbf16>, vector<16x32xf32> -> vector<16x32xf32>
    %503 = arith.addf %497, %502 : vector<16x32xf32>
    %c3_329 = arith.constant 3 : index
    %c0_330 = arith.constant 0 : index
    %c0_331 = arith.constant 0 : index
    %504 = vector.load %arg1[%c3_329, %c0_330, %c0_331] : memref<4x16x16xbf16, #tpu.memory_space<vmem>>, vector<1x16x16xbf16>
    %505 = vector.shape_cast %504 : vector<1x16x16xbf16> to vector<16x16xbf16>
    %506 = vector.extract_strided_slice %432 {offsets = [32, 0], sizes = [16, 32], strides = [1, 1]} : vector<64x32xf32> to vector<16x32xf32>
    %507 = arith.truncf %506 : vector<16x32xf32> to vector<16x32xbf16>
    %cst_332 = arith.constant dense<0.000000e+00> : vector<16x32xf32>
    %508 = tpu.matmul %505, %507, %cst_332 {dimension_numbers = #tpu.dot_dimension_numbers<[1], [0], [0], [1], [0, 0, 1, 1], [], []>} : vector<16x16xbf16>, vector<16x32xbf16>, vector<16x32xf32> -> vector<16x32xf32>
    %509 = arith.addf %503, %508 : vector<16x32xf32>
    %c32_333 = arith.constant 32 : index
    %c0_334 = arith.constant 0 : index
    %510 = vector.load %arg14[%c32_333, %c0_334] : memref<128x32xf32, #tpu.memory_space<vmem>>, vector<16x32xf32>
    tpu.vector_store %arg14[%c32_333, %c0_334], %509 {strides = array<i32>} : memref<128x32xf32, #tpu.memory_space<vmem>>, vector<16x32xf32>,
    %511 = vector.extract_strided_slice %428 {offsets = [48, 0], sizes = [16, 32], strides = [1, 1]} : vector<64x32xf32> to vector<16x32xf32>
    %c0_335 = arith.constant 0 : index
    %c0_336 = arith.constant 0 : index
    %c0_337 = arith.constant 0 : index
    %512 = vector.load %arg1[%c0_335, %c0_336, %c0_337] : memref<4x16x16xbf16, #tpu.memory_space<vmem>>, vector<1x16x16xbf16>
    %513 = vector.shape_cast %512 : vector<1x16x16xbf16> to vector<16x16xbf16>
    %514 = vector.extract_strided_slice %429 {offsets = [48, 0], sizes = [16, 32], strides = [1, 1]} : vector<64x32xf32> to vector<16x32xf32>
    %515 = arith.truncf %514 : vector<16x32xf32> to vector<16x32xbf16>
    %cst_338 = arith.constant dense<0.000000e+00> : vector<16x32xf32>
    %516 = tpu.matmul %513, %515, %cst_338 {dimension_numbers = #tpu.dot_dimension_numbers<[1], [0], [0], [1], [0, 0, 1, 1], [], []>} : vector<16x16xbf16>, vector<16x32xbf16>, vector<16x32xf32> -> vector<16x32xf32>
    %517 = arith.addf %511, %516 : vector<16x32xf32>
    %c1_339 = arith.constant 1 : index
    %c0_340 = arith.constant 0 : index
    %c0_341 = arith.constant 0 : index
    %518 = vector.load %arg1[%c1_339, %c0_340, %c0_341] : memref<4x16x16xbf16, #tpu.memory_space<vmem>>, vector<1x16x16xbf16>
    %519 = vector.shape_cast %518 : vector<1x16x16xbf16> to vector<16x16xbf16>
    %520 = vector.extract_strided_slice %430 {offsets = [48, 0], sizes = [16, 32], strides = [1, 1]} : vector<64x32xf32> to vector<16x32xf32>
    %521 = arith.truncf %520 : vector<16x32xf32> to vector<16x32xbf16>
    %cst_342 = arith.constant dense<0.000000e+00> : vector<16x32xf32>
    %522 = tpu.matmul %519, %521, %cst_342 {dimension_numbers = #tpu.dot_dimension_numbers<[1], [0], [0], [1], [0, 0, 1, 1], [], []>} : vector<16x16xbf16>, vector<16x32xbf16>, vector<16x32xf32> -> vector<16x32xf32>
    %523 = arith.addf %517, %522 : vector<16x32xf32>
    %c2_343 = arith.constant 2 : index
    %c0_344 = arith.constant 0 : index
    %c0_345 = arith.constant 0 : index
    %524 = vector.load %arg1[%c2_343, %c0_344, %c0_345] : memref<4x16x16xbf16, #tpu.memory_space<vmem>>, vector<1x16x16xbf16>
    %525 = vector.shape_cast %524 : vector<1x16x16xbf16> to vector<16x16xbf16>
    %526 = vector.extract_strided_slice %431 {offsets = [48, 0], sizes = [16, 32], strides = [1, 1]} : vector<64x32xf32> to vector<16x32xf32>
    %527 = arith.truncf %526 : vector<16x32xf32> to vector<16x32xbf16>
    %cst_346 = arith.constant dense<0.000000e+00> : vector<16x32xf32>
    %528 = tpu.matmul %525, %527, %cst_346 {dimension_numbers = #tpu.dot_dimension_numbers<[1], [0], [0], [1], [0, 0, 1, 1], [], []>} : vector<16x16xbf16>, vector<16x32xbf16>, vector<16x32xf32> -> vector<16x32xf32>
    %529 = arith.addf %523, %528 : vector<16x32xf32>
    %c3_347 = arith.constant 3 : index
    %c0_348 = arith.constant 0 : index
    %c0_349 = arith.constant 0 : index
    %530 = vector.load %arg1[%c3_347, %c0_348, %c0_349] : memref<4x16x16xbf16, #tpu.memory_space<vmem>>, vector<1x16x16xbf16>
    %531 = vector.shape_cast %530 : vector<1x16x16xbf16> to vector<16x16xbf16>
    %532 = vector.extract_strided_slice %432 {offsets = [48, 0], sizes = [16, 32], strides = [1, 1]} : vector<64x32xf32> to vector<16x32xf32>
    %533 = arith.truncf %532 : vector<16x32xf32> to vector<16x32xbf16>
    %cst_350 = arith.constant dense<0.000000e+00> : vector<16x32xf32>
    %534 = tpu.matmul %531, %533, %cst_350 {dimension_numbers = #tpu.dot_dimension_numbers<[1], [0], [0], [1], [0, 0, 1, 1], [], []>} : vector<16x16xbf16>, vector<16x32xbf16>, vector<16x32xf32> -> vector<16x32xf32>
    %535 = arith.addf %529, %534 : vector<16x32xf32>
    %c48_351 = arith.constant 48 : index
    %c0_352 = arith.constant 0 : index
    %536 = vector.load %arg14[%c48_351, %c0_352] : memref<128x32xf32, #tpu.memory_space<vmem>>, vector<16x32xf32>
    tpu.vector_store %arg14[%c48_351, %c0_352], %535 {strides = array<i32>} : memref<128x32xf32, #tpu.memory_space<vmem>>, vector<16x32xf32>,
    %c2_353 = arith.constant 2 : index
    %c0_354 = arith.constant 0 : index
    %c0_355 = arith.constant 0 : index
    %537 = vector.load %arg6[%c2_353, %c0_354, %c0_355] : memref<4x32x64xbf16, #tpu.memory_space<vmem>>, vector<1x32x64xbf16>
    %538 = vector.shape_cast %537 : vector<1x32x64xbf16> to vector<32x64xbf16>
    %539 = arith.truncf %535 : vector<16x32xf32> to vector<16x32xbf16>
    %cst_356 = arith.constant dense<0.000000e+00> : vector<16x64xf32>
    %540 = tpu.matmul %539, %538, %cst_356 {dimension_numbers = #tpu.dot_dimension_numbers<[1], [0], [0], [1], [0, 0, 1, 1], [], []>} : vector<16x32xbf16>, vector<32x64xbf16>, vector<16x64xf32> -> vector<16x64xf32>
    %541 = arith.addf %399, %540 : vector<16x64xf32>
    %c2_357 = arith.constant 2 : index
    %c0_358 = arith.constant 0 : index
    %c0_359 = arith.constant 0 : index
    %542 = vector.load %arg7[%c2_357, %c0_358, %c0_359] : memref<4x1x64xf32, #tpu.memory_space<vmem>>, vector<1x1x64xf32>
    %543 = vector.shape_cast %542 : vector<1x1x64xf32> to vector<1x64xf32>
    %544 = vector.broadcast %543 : vector<1x64xf32> to vector<16x64xf32>
    %545 = arith.addf %541, %544 : vector<16x64xf32>
    %c0_360 = arith.constant 0 : index
    %c0_361 = arith.constant 0 : index
    %546 = vector.load %arg14[%c0_360, %c0_361] : memref<128x32xf32, #tpu.memory_space<vmem>>, vector<32x32xf32>
    %c32_362 = arith.constant 32 : index
    %c0_363 = arith.constant 0 : index
    %547 = vector.load %arg14[%c32_362, %c0_363] : memref<128x32xf32, #tpu.memory_space<vmem>>, vector<32x32xf32>
    %548 = tpu.concatenate %546, %547 in 1 : vector<32x32xf32>, vector<32x32xf32> -> vector<32x64xf32>
    %c3_364 = arith.constant 3 : index
    %c0_365 = arith.constant 0 : index
    %c0_366 = arith.constant 0 : index
    %549 = vector.load %arg2[%c3_364, %c0_365, %c0_366] : memref<4x64x64xbf16, #tpu.memory_space<vmem>>, vector<1x64x64xbf16>
    %550 = vector.shape_cast %549 : vector<1x64x64xbf16> to vector<64x64xbf16>
    %551 = arith.truncf %548 : vector<32x64xf32> to vector<32x64xbf16>
    %cst_367 = arith.constant dense<0.000000e+00> : vector<32x64xf32>
    %552 = tpu.matmul %551, %550, %cst_367 {dimension_numbers = #tpu.dot_dimension_numbers<[1], [0], [0], [1], [0, 0, 1, 1], [], []>} : vector<32x64xbf16>, vector<64x64xbf16>, vector<32x64xf32> -> vector<32x64xf32>
    %c3_368 = arith.constant 3 : index
    %c0_369 = arith.constant 0 : index
    %c0_370 = arith.constant 0 : index
    %553 = vector.load %arg3[%c3_368, %c0_369, %c0_370] : memref<4x1x64xf32, #tpu.memory_space<vmem>>, vector<1x1x64xf32>
    %554 = vector.shape_cast %553 : vector<1x1x64xf32> to vector<1x64xf32>
    %555 = vector.broadcast %554 : vector<1x64xf32> to vector<32x64xf32>
    %556 = arith.addf %552, %555 : vector<32x64xf32>
    %557 = vector.extract_strided_slice %556 {offsets = [0, 0], sizes = [32, 32], strides = [1, 1]} : vector<32x64xf32> to vector<32x32xf32>
    %558 = math.tanh %557 : vector<32x32xf32>
    %559 = vector.extract_strided_slice %556 {offsets = [0, 32], sizes = [32, 32], strides = [1, 1]} : vector<32x64xf32> to vector<32x32xf32>
    %560 = arith.negf %559 : vector<32x32xf32>
    %561 = math.exp %560 : vector<32x32xf32>
    %cst_371 = arith.constant 1.000000e+00 : f32
    %562 = vector.broadcast %cst_371 : f32 to vector<32x32xf32>
    %563 = arith.addf %562, %561 : vector<32x32xf32>
    %564 = arith.divf %562, %563 : vector<32x32xf32>
    %565 = arith.mulf %558, %564 : vector<32x32xf32>
    %c3_372 = arith.constant 3 : index
    %c0_373 = arith.constant 0 : index
    %c0_374 = arith.constant 0 : index
    %566 = vector.load %arg4[%c3_372, %c0_373, %c0_374] : memref<4x32x160xbf16, #tpu.memory_space<vmem>>, vector<1x32x160xbf16>
    %567 = vector.shape_cast %566 : vector<1x32x160xbf16> to vector<32x160xbf16>
    %568 = arith.truncf %565 : vector<32x32xf32> to vector<32x32xbf16>
    %cst_375 = arith.constant dense<0.000000e+00> : vector<32x160xf32>
    %569 = tpu.matmul %568, %567, %cst_375 {dimension_numbers = #tpu.dot_dimension_numbers<[1], [0], [0], [1], [0, 0, 1, 1], [], []>} : vector<32x32xbf16>, vector<32x160xbf16>, vector<32x160xf32> -> vector<32x160xf32>
    %570 = vector.extract_strided_slice %569 {offsets = [0, 0], sizes = [32, 32], strides = [1, 1]} : vector<32x160xf32> to vector<32x32xf32>
    %c3_376 = arith.constant 3 : index
    %c0_377 = arith.constant 0 : index
    %c0_378 = arith.constant 0 : index
    %571 = vector.load %arg5[%c3_376, %c0_377, %c0_378] : memref<4x1x32xf32, #tpu.memory_space<vmem>>, vector<1x1x32xf32>
    %572 = vector.shape_cast %571 : vector<1x1x32xf32> to vector<1x32xf32>
    %573 = vector.broadcast %572 : vector<1x32xf32> to vector<32x32xf32>
    %574 = arith.addf %570, %573 : vector<32x32xf32>
    %575 = vector.extract_strided_slice %569 {offsets = [0, 32], sizes = [32, 32], strides = [1, 1]} : vector<32x160xf32> to vector<32x32xf32>
    %576 = vector.extract_strided_slice %569 {offsets = [0, 64], sizes = [32, 32], strides = [1, 1]} : vector<32x160xf32> to vector<32x32xf32>
    %577 = vector.extract_strided_slice %569 {offsets = [0, 96], sizes = [32, 32], strides = [1, 1]} : vector<32x160xf32> to vector<32x32xf32>
    %578 = vector.extract_strided_slice %569 {offsets = [0, 128], sizes = [32, 32], strides = [1, 1]} : vector<32x160xf32> to vector<32x32xf32>
    %579 = vector.extract_strided_slice %574 {offsets = [0, 0], sizes = [16, 32], strides = [1, 1]} : vector<32x32xf32> to vector<16x32xf32>
    %c0_379 = arith.constant 0 : index
    %c0_380 = arith.constant 0 : index
    %c0_381 = arith.constant 0 : index
    %580 = vector.load %arg1[%c0_379, %c0_380, %c0_381] : memref<4x16x16xbf16, #tpu.memory_space<vmem>>, vector<1x16x16xbf16>
    %581 = vector.shape_cast %580 : vector<1x16x16xbf16> to vector<16x16xbf16>
    %582 = vector.extract_strided_slice %575 {offsets = [0, 0], sizes = [16, 32], strides = [1, 1]} : vector<32x32xf32> to vector<16x32xf32>
    %583 = arith.truncf %582 : vector<16x32xf32> to vector<16x32xbf16>
    %cst_382 = arith.constant dense<0.000000e+00> : vector<16x32xf32>
    %584 = tpu.matmul %581, %583, %cst_382 {dimension_numbers = #tpu.dot_dimension_numbers<[1], [0], [0], [1], [0, 0, 1, 1], [], []>} : vector<16x16xbf16>, vector<16x32xbf16>, vector<16x32xf32> -> vector<16x32xf32>
    %585 = arith.addf %579, %584 : vector<16x32xf32>
    %c1_383 = arith.constant 1 : index
    %c0_384 = arith.constant 0 : index
    %c0_385 = arith.constant 0 : index
    %586 = vector.load %arg1[%c1_383, %c0_384, %c0_385] : memref<4x16x16xbf16, #tpu.memory_space<vmem>>, vector<1x16x16xbf16>
    %587 = vector.shape_cast %586 : vector<1x16x16xbf16> to vector<16x16xbf16>
    %588 = vector.extract_strided_slice %576 {offsets = [0, 0], sizes = [16, 32], strides = [1, 1]} : vector<32x32xf32> to vector<16x32xf32>
    %589 = arith.truncf %588 : vector<16x32xf32> to vector<16x32xbf16>
    %cst_386 = arith.constant dense<0.000000e+00> : vector<16x32xf32>
    %590 = tpu.matmul %587, %589, %cst_386 {dimension_numbers = #tpu.dot_dimension_numbers<[1], [0], [0], [1], [0, 0, 1, 1], [], []>} : vector<16x16xbf16>, vector<16x32xbf16>, vector<16x32xf32> -> vector<16x32xf32>
    %591 = arith.addf %585, %590 : vector<16x32xf32>
    %c2_387 = arith.constant 2 : index
    %c0_388 = arith.constant 0 : index
    %c0_389 = arith.constant 0 : index
    %592 = vector.load %arg1[%c2_387, %c0_388, %c0_389] : memref<4x16x16xbf16, #tpu.memory_space<vmem>>, vector<1x16x16xbf16>
    %593 = vector.shape_cast %592 : vector<1x16x16xbf16> to vector<16x16xbf16>
    %594 = vector.extract_strided_slice %577 {offsets = [0, 0], sizes = [16, 32], strides = [1, 1]} : vector<32x32xf32> to vector<16x32xf32>
    %595 = arith.truncf %594 : vector<16x32xf32> to vector<16x32xbf16>
    %cst_390 = arith.constant dense<0.000000e+00> : vector<16x32xf32>
    %596 = tpu.matmul %593, %595, %cst_390 {dimension_numbers = #tpu.dot_dimension_numbers<[1], [0], [0], [1], [0, 0, 1, 1], [], []>} : vector<16x16xbf16>, vector<16x32xbf16>, vector<16x32xf32> -> vector<16x32xf32>
    %597 = arith.addf %591, %596 : vector<16x32xf32>
    %c3_391 = arith.constant 3 : index
    %c0_392 = arith.constant 0 : index
    %c0_393 = arith.constant 0 : index
    %598 = vector.load %arg1[%c3_391, %c0_392, %c0_393] : memref<4x16x16xbf16, #tpu.memory_space<vmem>>, vector<1x16x16xbf16>
    %599 = vector.shape_cast %598 : vector<1x16x16xbf16> to vector<16x16xbf16>
    %600 = vector.extract_strided_slice %578 {offsets = [0, 0], sizes = [16, 32], strides = [1, 1]} : vector<32x32xf32> to vector<16x32xf32>
    %601 = arith.truncf %600 : vector<16x32xf32> to vector<16x32xbf16>
    %cst_394 = arith.constant dense<0.000000e+00> : vector<16x32xf32>
    %602 = tpu.matmul %599, %601, %cst_394 {dimension_numbers = #tpu.dot_dimension_numbers<[1], [0], [0], [1], [0, 0, 1, 1], [], []>} : vector<16x16xbf16>, vector<16x32xbf16>, vector<16x32xf32> -> vector<16x32xf32>
    %603 = arith.addf %597, %602 : vector<16x32xf32>
    %c0_395 = arith.constant 0 : index
    %c0_396 = arith.constant 0 : index
    %604 = vector.load %arg13[%c0_395, %c0_396] : memref<128x32xf32, #tpu.memory_space<vmem>>, vector<16x32xf32>
    tpu.vector_store %arg13[%c0_395, %c0_396], %603 {strides = array<i32>} : memref<128x32xf32, #tpu.memory_space<vmem>>, vector<16x32xf32>,
    %605 = vector.extract_strided_slice %574 {offsets = [16, 0], sizes = [16, 32], strides = [1, 1]} : vector<32x32xf32> to vector<16x32xf32>
    %c0_397 = arith.constant 0 : index
    %c0_398 = arith.constant 0 : index
    %c0_399 = arith.constant 0 : index
    %606 = vector.load %arg1[%c0_397, %c0_398, %c0_399] : memref<4x16x16xbf16, #tpu.memory_space<vmem>>, vector<1x16x16xbf16>
    %607 = vector.shape_cast %606 : vector<1x16x16xbf16> to vector<16x16xbf16>
    %608 = vector.extract_strided_slice %575 {offsets = [16, 0], sizes = [16, 32], strides = [1, 1]} : vector<32x32xf32> to vector<16x32xf32>
    %609 = arith.truncf %608 : vector<16x32xf32> to vector<16x32xbf16>
    %cst_400 = arith.constant dense<0.000000e+00> : vector<16x32xf32>
    %610 = tpu.matmul %607, %609, %cst_400 {dimension_numbers = #tpu.dot_dimension_numbers<[1], [0], [0], [1], [0, 0, 1, 1], [], []>} : vector<16x16xbf16>, vector<16x32xbf16>, vector<16x32xf32> -> vector<16x32xf32>
    %611 = arith.addf %605, %610 : vector<16x32xf32>
    %c1_401 = arith.constant 1 : index
    %c0_402 = arith.constant 0 : index
    %c0_403 = arith.constant 0 : index
    %612 = vector.load %arg1[%c1_401, %c0_402, %c0_403] : memref<4x16x16xbf16, #tpu.memory_space<vmem>>, vector<1x16x16xbf16>
    %613 = vector.shape_cast %612 : vector<1x16x16xbf16> to vector<16x16xbf16>
    %614 = vector.extract_strided_slice %576 {offsets = [16, 0], sizes = [16, 32], strides = [1, 1]} : vector<32x32xf32> to vector<16x32xf32>
    %615 = arith.truncf %614 : vector<16x32xf32> to vector<16x32xbf16>
    %cst_404 = arith.constant dense<0.000000e+00> : vector<16x32xf32>
    %616 = tpu.matmul %613, %615, %cst_404 {dimension_numbers = #tpu.dot_dimension_numbers<[1], [0], [0], [1], [0, 0, 1, 1], [], []>} : vector<16x16xbf16>, vector<16x32xbf16>, vector<16x32xf32> -> vector<16x32xf32>
    %617 = arith.addf %611, %616 : vector<16x32xf32>
    %c2_405 = arith.constant 2 : index
    %c0_406 = arith.constant 0 : index
    %c0_407 = arith.constant 0 : index
    %618 = vector.load %arg1[%c2_405, %c0_406, %c0_407] : memref<4x16x16xbf16, #tpu.memory_space<vmem>>, vector<1x16x16xbf16>
    %619 = vector.shape_cast %618 : vector<1x16x16xbf16> to vector<16x16xbf16>
    %620 = vector.extract_strided_slice %577 {offsets = [16, 0], sizes = [16, 32], strides = [1, 1]} : vector<32x32xf32> to vector<16x32xf32>
    %621 = arith.truncf %620 : vector<16x32xf32> to vector<16x32xbf16>
    %cst_408 = arith.constant dense<0.000000e+00> : vector<16x32xf32>
    %622 = tpu.matmul %619, %621, %cst_408 {dimension_numbers = #tpu.dot_dimension_numbers<[1], [0], [0], [1], [0, 0, 1, 1], [], []>} : vector<16x16xbf16>, vector<16x32xbf16>, vector<16x32xf32> -> vector<16x32xf32>
    %623 = arith.addf %617, %622 : vector<16x32xf32>
    %c3_409 = arith.constant 3 : index
    %c0_410 = arith.constant 0 : index
    %c0_411 = arith.constant 0 : index
    %624 = vector.load %arg1[%c3_409, %c0_410, %c0_411] : memref<4x16x16xbf16, #tpu.memory_space<vmem>>, vector<1x16x16xbf16>
    %625 = vector.shape_cast %624 : vector<1x16x16xbf16> to vector<16x16xbf16>
    %626 = vector.extract_strided_slice %578 {offsets = [16, 0], sizes = [16, 32], strides = [1, 1]} : vector<32x32xf32> to vector<16x32xf32>
    %627 = arith.truncf %626 : vector<16x32xf32> to vector<16x32xbf16>
    %cst_412 = arith.constant dense<0.000000e+00> : vector<16x32xf32>
    %628 = tpu.matmul %625, %627, %cst_412 {dimension_numbers = #tpu.dot_dimension_numbers<[1], [0], [0], [1], [0, 0, 1, 1], [], []>} : vector<16x16xbf16>, vector<16x32xbf16>, vector<16x32xf32> -> vector<16x32xf32>
    %629 = arith.addf %623, %628 : vector<16x32xf32>
    %c16_413 = arith.constant 16 : index
    %c0_414 = arith.constant 0 : index
    %630 = vector.load %arg13[%c16_413, %c0_414] : memref<128x32xf32, #tpu.memory_space<vmem>>, vector<16x32xf32>
    tpu.vector_store %arg13[%c16_413, %c0_414], %629 {strides = array<i32>} : memref<128x32xf32, #tpu.memory_space<vmem>>, vector<16x32xf32>,
    %c3_415 = arith.constant 3 : index
    %c0_416 = arith.constant 0 : index
    %c0_417 = arith.constant 0 : index
    %631 = vector.load %arg6[%c3_415, %c0_416, %c0_417] : memref<4x32x64xbf16, #tpu.memory_space<vmem>>, vector<1x32x64xbf16>
    %632 = vector.shape_cast %631 : vector<1x32x64xbf16> to vector<32x64xbf16>
    %633 = arith.truncf %629 : vector<16x32xf32> to vector<16x32xbf16>
    %cst_418 = arith.constant dense<0.000000e+00> : vector<16x64xf32>
    %634 = tpu.matmul %633, %632, %cst_418 {dimension_numbers = #tpu.dot_dimension_numbers<[1], [0], [0], [1], [0, 0, 1, 1], [], []>} : vector<16x32xbf16>, vector<32x64xbf16>, vector<16x64xf32> -> vector<16x64xf32>
    %635 = arith.addf %545, %634 : vector<16x64xf32>
    %c3_419 = arith.constant 3 : index
    %c0_420 = arith.constant 0 : index
    %c0_421 = arith.constant 0 : index
    %636 = vector.load %arg7[%c3_419, %c0_420, %c0_421] : memref<4x1x64xf32, #tpu.memory_space<vmem>>, vector<1x1x64xf32>
    %637 = vector.shape_cast %636 : vector<1x1x64xf32> to vector<1x64xf32>
    %638 = vector.broadcast %637 : vector<1x64xf32> to vector<16x64xf32>
    %639 = arith.addf %635, %638 : vector<16x64xf32>
    %cst_422 = arith.constant 0.000000e+00 : f32
    %640 = vector.broadcast %cst_422 : f32 to vector<16x64xf32>
    %641 = arith.maximumf %639, %640 : vector<16x64xf32>
    %c0_423 = arith.constant 0 : index
    %c0_424 = arith.constant 0 : index
    %642 = vector.load %arg8[%c0_423, %c0_424] : memref<64x128xbf16, #tpu.memory_space<vmem>>, vector<64x128xbf16>
    %643 = arith.truncf %641 : vector<16x64xf32> to vector<16x64xbf16>
    %cst_425 = arith.constant dense<0.000000e+00> : vector<16x128xf32>
    %644 = tpu.matmul %643, %642, %cst_425 {dimension_numbers = #tpu.dot_dimension_numbers<[1], [0], [0], [1], [0, 0, 1, 1], [], []>} : vector<16x64xbf16>, vector<64x128xbf16>, vector<16x128xf32> -> vector<16x128xf32>
    %c0_426 = arith.constant 0 : index
    %c0_427 = arith.constant 0 : index
    %645 = vector.load %arg9[%c0_426, %c0_427] : memref<1x128xf32, #tpu.memory_space<vmem>>, vector<1x128xf32>
    %646 = vector.broadcast %645 : vector<1x128xf32> to vector<16x128xf32>
    %647 = arith.addf %644, %646 : vector<16x128xf32>
    %cst_428 = arith.constant 0.000000e+00 : f32
    %648 = vector.broadcast %cst_428 : f32 to vector<16x128xf32>
    %649 = arith.maximumf %647, %648 : vector<16x128xf32>
    %c0_429 = arith.constant 0 : index
    %c0_430 = arith.constant 0 : index
    %650 = vector.load %arg10[%c0_429, %c0_430] : memref<128x12xbf16, #tpu.memory_space<vmem>>, vector<128x12xbf16>
    %651 = arith.truncf %649 : vector<16x128xf32> to vector<16x128xbf16>
    %cst_431 = arith.constant dense<0.000000e+00> : vector<16x12xf32>
    %652 = tpu.matmul %651, %650, %cst_431 {dimension_numbers = #tpu.dot_dimension_numbers<[1], [0], [0], [1], [0, 0, 1, 1], [], []>} : vector<16x128xbf16>, vector<128x12xbf16>, vector<16x12xf32> -> vector<16x12xf32>
    %c0_432 = arith.constant 0 : index
    %c0_433 = arith.constant 0 : index
    %653 = vector.load %arg11[%c0_432, %c0_433] : memref<1x12xf32, #tpu.memory_space<vmem>>, vector<1x12xf32>
    %654 = vector.broadcast %653 : vector<1x12xf32> to vector<16x12xf32>
    %655 = arith.addf %652, %654 : vector<16x12xf32>
    %c0_434 = arith.constant 0 : index
    %c0_435 = arith.constant 0 : index
    %656 = vector.load %arg12[%c0_434, %c0_435] : memref<16x12xf32, #tpu.memory_space<vmem>>, vector<16x12xf32>
    tpu.vector_store %arg12[%c0_434, %c0_435], %655 {strides = array<i32>} : memref<16x12xf32, #tpu.memory_space<vmem>>, vector<16x12xf32>,
    return
  }
}

</mosaic_0001>

<llo_original>
// kernel: graph_wavenet_forward.1
$region0: #{graph_wavenet_forward.1}
  #allocation0 [shape = 'u32[]', space=smem, size = 0x4, offset = 0x4, fixed_abs, tag = 'smem constant byte address 0x4 - core index']
  #allocation1 [shape = 'u32[144,128]{1,0:T(1,128)}', space=vmem, size = 0x12000, scoped, tag = 'internal scratch']
  #allocation2 [shape = 'f32[128,32]{1,0:T(8,128)}', space=vmem, size = 0x10000, scoped, tag = 'scratch operand']
  #allocation3 [shape = 'f32[128,32]{1,0:T(8,128)}', space=vmem, size = 0x10000, scoped, tag = 'scratch operand']
  %s0 = inlined_call_operand.vmem [shape: bf16[128,32], index: 0, kind: input, shape index: {}]
  %s1 = inlined_call_operand.vmem [shape: bf16[4,16,16], index: 1, kind: input, shape index: {}]
  %s2 = inlined_call_operand.vmem [shape: bf16[4,64,64], index: 2, kind: input, shape index: {}]
  %s3 = inlined_call_operand.vmem [shape: f32[4,1,64], index: 3, kind: input, shape index: {}]
  %s4 = inlined_call_operand.vmem [shape: bf16[4,32,160], index: 4, kind: input, shape index: {}]
  %s5 = inlined_call_operand.vmem [shape: f32[4,1,32], index: 5, kind: input, shape index: {}]
  %s6 = inlined_call_operand.vmem [shape: bf16[4,32,64], index: 6, kind: input, shape index: {}]
  %s7 = inlined_call_operand.vmem [shape: f32[4,1,64], index: 7, kind: input, shape index: {}]
  %s8 = inlined_call_operand.vmem [shape: bf16[64,128], index: 8, kind: input, shape index: {}]
  %s9 = inlined_call_operand.vmem [shape: f32[1,128], index: 9, kind: input, shape index: {}]
  %s10 = inlined_call_operand.vmem [shape: bf16[128,12], index: 10, kind: input, shape index: {}]
  %s11 = inlined_call_operand.vmem [shape: f32[1,12], index: 11, kind: input, shape index: {}]
  %s12 = inlined_call_operand.hbm [shape: f32[16,12], index: 12, kind: output, shape index: {}]
  %s13 = sld [smem:[#allocation0]]
  $region58: #{graph_wavenet_forward.1} parent=0
    _
  %s15 = ssub.s32 1, %s13
  %s16 = scalar_select 0, %s15, %s13
  $region1: #{graph_wavenet_forward.1} parent=0
    #allocation4 [shape = 'u8[8192]{0}', space=vmem, size = 0x2000, scoped, tag = 'output window, operand 0, single buffered']
    #allocation5 [shape = 's32[1]{0}', space=sflag, size = 0x4, scoped, tag = 'scoped memory for graph_wavenet_forward.1']
    %17 = vsyncpa [#allocation5], 0
    // Predicated region
    $region2: #{graph_wavenet_forward.1} parent=1 // pred_check
      _
    $region3: #{graph_wavenet_forward.1} parent=1 // pred_check_branch
      %19 = sbr.rel (0) target = $region5
    $region4: #{graph_wavenet_forward.1} parent=1 // pred_region
      _
    $region5: #{graph_wavenet_forward.1} parent=1 // pred_fallthru
      _
    // Predicated region
    $region6: #{graph_wavenet_forward.1} parent=1 // pred_check
      _
    $region7: #{graph_wavenet_forward.1} parent=1 // pred_check_branch
      %21 = sbr.rel (0) target = $region9
    $region8: #{graph_wavenet_forward.1} parent=1 // pred_region
      _
    $region9: #{graph_wavenet_forward.1} parent=1 // pred_fallthru
      _
    // Predicated region
    $region10: #{graph_wavenet_forward.1} parent=1 // pred_check
      _
    $region11: #{graph_wavenet_forward.1} parent=1 // pred_check_branch
      %23 = sbr.rel (0) target = $region13
    $region12: #{graph_wavenet_forward.1} parent=1 // pred_region
      _
    $region13: #{graph_wavenet_forward.1} parent=1 // pred_fallthru
      _
    // Predicated region
    $region14: #{graph_wavenet_forward.1} parent=1 // pred_check
      _
    $region15: #{graph_wavenet_forward.1} parent=1 // pred_check_branch
      %25 = sbr.rel (0) target = $region17
    $region16: #{graph_wavenet_forward.1} parent=1 // pred_region
      _
    $region17: #{graph_wavenet_forward.1} parent=1 // pred_fallthru
      _
    // Predicated region
    $region18: #{graph_wavenet_forward.1} parent=1 // pred_check
      _
    $region19: #{graph_wavenet_forward.1} parent=1 // pred_check_branch
      %27 = sbr.rel (0) target = $region21
    $region20: #{graph_wavenet_forward.1} parent=1 // pred_region
      _
    $region21: #{graph_wavenet_forward.1} parent=1 // pred_fallthru
      _
    // Predicated region
    $region22: #{graph_wavenet_forward.1} parent=1 // pred_check
      _
    $region23: #{graph_wavenet_forward.1} parent=1 // pred_check_branch
      %29 = sbr.rel (0) target = $region25
    $region24: #{graph_wavenet_forward.1} parent=1 // pred_region
      _
    $region25: #{graph_wavenet_forward.1} parent=1 // pred_fallthru
      _
    // Predicated region
    $region26: #{graph_wavenet_forward.1} parent=1 // pred_check
      _
    $region27: #{graph_wavenet_forward.1} parent=1 // pred_check_branch
      %31 = sbr.rel (0) target = $region29
    $region28: #{graph_wavenet_forward.1} parent=1 // pred_region
      _
    $region29: #{graph_wavenet_forward.1} parent=1 // pred_fallthru
      _
    // Predicated region
    $region30: #{graph_wavenet_forward.1} parent=1 // pred_check
      _
    $region31: #{graph_wavenet_forward.1} parent=1 // pred_check_branch
      %33 = sbr.rel (0) target = $region33
    $region32: #{graph_wavenet_forward.1} parent=1 // pred_region
      _
    $region33: #{graph_wavenet_forward.1} parent=1 // pred_fallthru
      _
    // Predicated region
    $region34: #{graph_wavenet_forward.1} parent=1 // pred_check
      _
    $region35: #{graph_wavenet_forward.1} parent=1 // pred_check_branch
      %35 = sbr.rel (0) target = $region37
    $region36: #{graph_wavenet_forward.1} parent=1 // pred_region
      _
    $region37: #{graph_wavenet_forward.1} parent=1 // pred_fallthru
      _
    // Predicated region
    $region38: #{graph_wavenet_forward.1} parent=1 // pred_check
      _
    $region39: #{graph_wavenet_forward.1} parent=1 // pred_check_branch
      %37 = sbr.rel (0) target = $region41
    $region40: #{graph_wavenet_forward.1} parent=1 // pred_region
      _
    $region41: #{graph_wavenet_forward.1} parent=1 // pred_fallthru
      _
    // Predicated region
    $region42: #{graph_wavenet_forward.1} parent=1 // pred_check
      _
    $region43: #{graph_wavenet_forward.1} parent=1 // pred_check_branch
      %39 = sbr.rel (0) target = $region45
    $region44: #{graph_wavenet_forward.1} parent=1 // pred_region
      _
    $region45: #{graph_wavenet_forward.1} parent=1 // pred_fallthru
      _
    // Predicated region
    $region46: #{graph_wavenet_forward.1} parent=1 // pred_check
      _
    $region47: #{graph_wavenet_forward.1} parent=1 // pred_check_branch
      %41 = sbr.rel (0) target = $region49
    $region48: #{graph_wavenet_forward.1} parent=1 // pred_region
      _
    $region49: #{graph_wavenet_forward.1} parent=1 // pred_fallthru
      _
    %v43 = vld [vmem:[%s0] sm:$0xf]
    %v44 = vld [vmem:[%s0 + $0x4] sm:$0xf]
    %v45 = vld [vmem:[%s0 + $0x8] sm:$0xf]
    %v46 = vld [vmem:[%s0 + $0xc] sm:$0xf]
    %v47 = vld [vmem:[%s0 + $0x10] sm:$0xf]
    %v48 = vld [vmem:[%s0 + $0x14] sm:$0xf]
    %v49 = vld [vmem:[%s0 + $0x18] sm:$0xf]
    %v50 = vld [vmem:[%s0 + $0x1c] sm:$0xf]
    %v51 = vld [vmem:[%s0 + $0x20] sm:$0xf]
    %v52 = vld [vmem:[%s0 + $0x24] sm:$0xf]
    %v53 = vld [vmem:[%s0 + $0x28] sm:$0xf]
    %v54 = vld [vmem:[%s0 + $0x2c] sm:$0xf]
    %v55 = vld [vmem:[%s0 + $0x30] sm:$0xf]
    %v56 = vld [vmem:[%s0 + $0x34] sm:$0xf]
    %v57 = vld [vmem:[%s0 + $0x38] sm:$0xf]
    %v58 = vld [vmem:[%s0 + $0x3c] sm:$0xf]
    %v59 = vunpack.c.l.bf16 %v43
    %v60 = vunpack.c.l.bf16 %v44
    %v61 = vunpack.c.l.bf16 %v45
    %v62 = vunpack.c.l.bf16 %v46
    %v63 = vunpack.c.l.bf16 %v47
    %v64 = vunpack.c.l.bf16 %v48
    %v65 = vunpack.c.l.bf16 %v49
    %v66 = vunpack.c.l.bf16 %v50
    %v67 = vunpack.c.l.bf16 %v51
    %v68 = vunpack.c.l.bf16 %v52
    %v69 = vunpack.c.l.bf16 %v53
    %v70 = vunpack.c.l.bf16 %v54
    %v71 = vunpack.c.l.bf16 %v55
    %v72 = vunpack.c.l.bf16 %v56
    %v73 = vunpack.c.l.bf16 %v57
    %v74 = vunpack.c.l.bf16 %v58
    %vm75 = vcmask 261120
    %76 = vst.msk [vmem:[#allocation2] sm:$0xff] %vm75, %v59
    %77 = vst.msk [vmem:[#allocation2 + $0x8] sm:$0xff] %vm75, %v60
    %78 = vst.msk [vmem:[#allocation2 + $0x10] sm:$0xff] %vm75, %v61
    %79 = vst.msk [vmem:[#allocation2 + $0x18] sm:$0xff] %vm75, %v62
    %80 = vst.msk [vmem:[#allocation2 + $0x20] sm:$0xff] %vm75, %v63
    %81 = vst.msk [vmem:[#allocation2 + $0x28] sm:$0xff] %vm75, %v64
    %82 = vst.msk [vmem:[#allocation2 + $0x30] sm:$0xff] %vm75, %v65
    %83 = vst.msk [vmem:[#allocation2 + $0x38] sm:$0xff] %vm75, %v66
    %84 = vst.msk [vmem:[#allocation2 + $0x40] sm:$0xff] %vm75, %v67
    %85 = vst.msk [vmem:[#allocation2 + $0x48] sm:$0xff] %vm75, %v68
    %86 = vst.msk [vmem:[#allocation2 + $0x50] sm:$0xff] %vm75, %v69
    %87 = vst.msk [vmem:[#allocation2 + $0x58] sm:$0xff] %vm75, %v70
    %88 = vst.msk [vmem:[#allocation2 + $0x60] sm:$0xff] %vm75, %v71
    %89 = vst.msk [vmem:[#allocation2 + $0x68] sm:$0xff] %vm75, %v72
    %90 = vst.msk [vmem:[#allocation2 + $0x70] sm:$0xff] %vm75, %v73
    %91 = vst.msk [vmem:[#allocation2 + $0x78] sm:$0xff] %vm75, %v74
    %v92 = vld [vmem:[#allocation2] sm:$0xff]
    %v93 = vld [vmem:[#allocation2 + $0x8] sm:$0xff]
    %v94 = vld [vmem:[#allocation2 + $0x10] sm:$0xff]
    %v95 = vld [vmem:[#allocation2 + $0x18] sm:$0xff]
    %v96 = vld [vmem:[#allocation2 + $0x20] sm:$0xff]
    %v97 = vld [vmem:[#allocation2 + $0x28] sm:$0xff]
    %v98 = vld [vmem:[#allocation2 + $0x30] sm:$0xff]
    %v99 = vld [vmem:[#allocation2 + $0x38] sm:$0xff]
    %v100 = vld [vmem:[#allocation2 + $0x40] sm:$0xff]
    %v101 = vld [vmem:[#allocation2 + $0x48] sm:$0xff]
    %v102 = vld [vmem:[#allocation2 + $0x50] sm:$0xff]
    %v103 = vld [vmem:[#allocation2 + $0x58] sm:$0xff]
    %v104 = vld [vmem:[#allocation2 + $0x60] sm:$0xff]
    %v105 = vld [vmem:[#allocation2 + $0x68] sm:$0xff]
    %v106 = vld [vmem:[#allocation2 + $0x70] sm:$0xff]
    %v107 = vld [vmem:[#allocation2 + $0x78] sm:$0xff]
    %122 = vrot.lane.b32.xlu0 %v94, 32
    %v123 = vpop.permute.xlu0 %122
    %124 = vrot.lane.b32.xlu0 %v95, 32
    %v125 = vpop.permute.xlu0 %124
    %126 = vrot.lane.b32.xlu0 %v96, 32
    %v127 = vpop.permute.xlu0 %126
    %128 = vrot.lane.b32.xlu0 %v97, 32
    %v129 = vpop.permute.xlu0 %128
    %130 = vrot.lane.b32.xlu0 %v98, 32
    %v131 = vpop.permute.xlu0 %130
    %132 = vrot.lane.b32.xlu0 %v99, 32
    %v133 = vpop.permute.xlu0 %132
    %134 = vrot.lane.b32.xlu0 %v100, 32
    %v135 = vpop.permute.xlu0 %134
    %136 = vrot.lane.b32.xlu0 %v101, 32
    %v137 = vpop.permute.xlu0 %136
    %138 = vrot.lane.b32.xlu0 %v102, 32
    %v139 = vpop.permute.xlu0 %138
    %140 = vrot.lane.b32.xlu0 %v103, 32
    %v141 = vpop.permute.xlu0 %140
    %142 = vrot.lane.b32.xlu0 %v104, 32
    %v143 = vpop.permute.xlu0 %142
    %144 = vrot.lane.b32.xlu0 %v105, 32
    %v145 = vpop.permute.xlu0 %144
    %146 = vrot.lane.b32.xlu0 %v106, 32
    %v147 = vpop.permute.xlu0 %146
    %148 = vrot.lane.b32.xlu0 %v107, 32
    %v149 = vpop.permute.xlu0 %148
    %v164 = vsel %vm75, %v92, %v123
    %v165 = vsel %vm75, %v93, %v125
    %v166 = vsel %vm75, %v94, %v127
    %v167 = vsel %vm75, %v95, %v129
    %v168 = vsel %vm75, %v96, %v131
    %v169 = vsel %vm75, %v97, %v133
    %v170 = vsel %vm75, %v98, %v135
    %v171 = vsel %vm75, %v99, %v137
    %v172 = vsel %vm75, %v100, %v139
    %v173 = vsel %vm75, %v101, %v141
    %v174 = vsel %vm75, %v102, %v143
    %v175 = vsel %vm75, %v103, %v145
    %v176 = vsel %vm75, %v104, %v147
    %v177 = vsel %vm75, %v105, %v149
    %v178 = vld [vmem:[%s2] sm:$0xf]
    %v179 = vld [vmem:[%s2 + $0x4] sm:$0xf]
    %v180 = vld [vmem:[%s2 + $0x8] sm:$0xf]
    %v181 = vld [vmem:[%s2 + $0xc] sm:$0xf]
    %v182 = vld [vmem:[%s2 + $0x10] sm:$0xf]
    %v183 = vld [vmem:[%s2 + $0x14] sm:$0xf]
    %v184 = vld [vmem:[%s2 + $0x18] sm:$0xf]
    %v185 = vld [vmem:[%s2 + $0x1c] sm:$0xf]
    %v186 = vpack.c.bf16 %v165, %v164
    %v187 = vpack.c.bf16 %v167, %v166
    %v188 = vpack.c.bf16 %v169, %v168
    %v189 = vpack.c.bf16 %v171, %v170
    %v190 = vpack.c.bf16 %v173, %v172
    %v191 = vpack.c.bf16 %v175, %v174
    %v192 = vpack.c.bf16 %v177, %v176
    %v193 = vld [vmem:[%s3] sm:$0x1]
    %v195 = vlaneseq
    %v196 = vshrl.u32 %v195, 7
    %v197 = vsub.s32 0, %v196
    %v198 = vrot.slane %v193, %v197
    %v208 = vunpack.c.l.b16 %v178
    %v209 = vunpack.c.l.b16 %v179
    %v210 = vunpack.c.l.b16 %v180
    %v211 = vunpack.c.l.b16 %v181
    %v212 = vunpack.c.l.b16 %v182
    %v213 = vunpack.c.l.b16 %v183
    %v214 = vunpack.c.l.b16 %v184
    %v215 = vunpack.c.l.b16 %v185
    %v216 = vpack.c.b16 %v209, %v208
    %v217 = vpack.c.b16 %v211, %v210
    %v218 = vpack.c.b16 %v213, %v212
    %v219 = vpack.c.b16 %v215, %v214
    %vm224 = vcmask 523264
    %v226 = vsel %vm224, %v186, 0
    %v229 = vsel %vm224, %v187, 0
    %v232 = vsel %vm224, %v188, 0
    %v235 = vsel %vm224, %v189, 0
    %v238 = vsel %vm224, %v190, 0
    %v241 = vsel %vm224, %v191, 0
    %v244 = vsel %vm224, %v192, 0
    %246 = vmatprep.subr.bf16.mxu0 0
    %247 = vmatpush1.bf16.msra.mxu0 0
    %248 = vmatprep.subr.bf16.mxu0 0
    %249 = vmatpush1.bf16.msra.mxu0 0
    %250 = vmatprep.subr.bf16.mxu0 0
    %251 = vmatpush1.bf16.msra.mxu0 0
    %252 = vmatprep.subr.bf16.mxu0 0
    %253 = vmatpush1.bf16.msra.mxu0 0
    %254 = vmatprep.subr.bf16.mxu0 0
    %255 = vmatpush1.bf16.msra.mxu0 %v219
    %256 = vmatprep.subr.bf16.mxu0 0
    %257 = vmatpush1.bf16.msra.mxu0 %v218
    %258 = vmatprep.subr.bf16.mxu0 0
    %259 = vmatpush1.bf16.msra.mxu0 %v217
    %260 = vmatprep.subr.bf16.mxu0 0
    %261 = vmatpush1.bf16.msra.mxu0 %v216
    %262 = vmatprep.subr.bf16.mxu0 0
    %263 = vmatpush2.bf16.msra.mxu0 0
    %264 = vmatprep.subr.bf16.mxu0 0
    %265 = vmatpush2.bf16.msra.mxu0 0
    %266 = vmatprep.subr.bf16.mxu0 0
    %267 = vmatpush2.bf16.msra.mxu0 0
    %268 = vmatprep.subr.bf16.mxu0 0
    %269 = vmatpush2.bf16.msra.mxu0 0
    %270 = vmatprep.subr.bf16.mxu0 0
    %271 = vmatpush2.bf16.msra.mxu0 0
    %272 = vmatprep.subr.bf16.mxu0 0
    %273 = vmatpush2.bf16.msra.mxu0 0
    %274 = vmatprep.subr.bf16.mxu0 0
    %275 = vmatpush2.bf16.msra.mxu0 0
    %276 = vmatprep.subr.bf16.mxu0 0
    %277 = vmatpush2.bf16.msra.mxu0 0
    %278 = vmatprep.mubr.bf16.mxu0 0
    %279 = vmatmul.mubr.bf16.gmra.mxu0 %v226
    %v280 = vpop.f32.mrf.mxu0
    %v281 = vadd.f32 %v198, %v280
    %v282 = vpop.f32.mrf.mxu0
    %v283 = vpop.f32.mrf.mxu0
    %v284 = vadd.f32 %v198, %v283
    %v285 = vpop.f32.mrf.mxu0
    %286 = vmatprep.mubr.bf16.mxu0 0
    %287 = vmatmul.mubr.bf16.gmra.mxu0 %v229
    %v288 = vpop.f32.mrf.mxu0
    %v289 = vadd.f32 %v198, %v288
    %v290 = vpop.f32.mrf.mxu0
    %v291 = vpop.f32.mrf.mxu0
    %v292 = vadd.f32 %v198, %v291
    %v293 = vpop.f32.mrf.mxu0
    %294 = vmatprep.mubr.bf16.mxu0 0
    %295 = vmatmul.mubr.bf16.gmra.mxu0 %v232
    %v296 = vpop.f32.mrf.mxu0
    %v297 = vadd.f32 %v198, %v296
    %v298 = vpop.f32.mrf.mxu0
    %v299 = vpop.f32.mrf.mxu0
    %v300 = vadd.f32 %v198, %v299
    %v301 = vpop.f32.mrf.mxu0
    %302 = vmatprep.mubr.bf16.mxu0 0
    %303 = vmatmul.mubr.bf16.gmra.mxu0 %v235
    %v304 = vpop.f32.mrf.mxu0
    %v305 = vadd.f32 %v198, %v304
    %v306 = vpop.f32.mrf.mxu0
    %v307 = vpop.f32.mrf.mxu0
    %v308 = vadd.f32 %v198, %v307
    %v309 = vpop.f32.mrf.mxu0
    %310 = vmatprep.mubr.bf16.mxu0 0
    %311 = vmatmul.mubr.bf16.gmra.mxu0 %v238
    %v312 = vpop.f32.mrf.mxu0
    %v313 = vadd.f32 %v198, %v312
    %v314 = vpop.f32.mrf.mxu0
    %v315 = vpop.f32.mrf.mxu0
    %v316 = vadd.f32 %v198, %v315
    %v317 = vpop.f32.mrf.mxu0
    %318 = vmatprep.mubr.bf16.mxu0 0
    %319 = vmatmul.mubr.bf16.gmra.mxu0 %v241
    %v320 = vpop.f32.mrf.mxu0
    %v321 = vadd.f32 %v198, %v320
    %v322 = vpop.f32.mrf.mxu0
    %v323 = vpop.f32.mrf.mxu0
    %v324 = vadd.f32 %v198, %v323
    %v325 = vpop.f32.mrf.mxu0
    %326 = vmatprep.mubr.bf16.mxu0 0
    %327 = vmatmul.mubr.bf16.gmra.mxu0 %v244
    %v328 = vpop.f32.mrf.mxu0
    %v329 = vadd.f32 %v198, %v328
    %v330 = vpop.f32.mrf.mxu0
    %v331 = vpop.f32.mrf.mxu0
    %v332 = vadd.f32 %v198, %v331
    %v333 = vpop.f32.mrf.mxu0
    %334 = vdwg.mxu0
    %v335 = vtanh.pop %v281
    %v336 = vtanh.pop %v284
    %v337 = vtanh.pop %v289
    %v338 = vtanh.pop %v292
    %v339 = vtanh.pop %v297
    %v340 = vtanh.pop %v300
    %v341 = vtanh.pop %v305
    %v342 = vtanh.pop %v308
    %v343 = vtanh.pop %v313
    %v344 = vtanh.pop %v316
    %v345 = vtanh.pop %v321
    %v346 = vtanh.pop %v324
    %v347 = vtanh.pop %v329
    %v348 = vtanh.pop %v332
    %v349 = vxor.u32 %v281, 2147483648
    %v350 = vxor.u32 %v284, 2147483648
    %v351 = vxor.u32 %v289, 2147483648
    %v352 = vxor.u32 %v292, 2147483648
    %v353 = vxor.u32 %v297, 2147483648
    %v354 = vxor.u32 %v300, 2147483648
    %v355 = vxor.u32 %v305, 2147483648
    %v356 = vxor.u32 %v308, 2147483648
    %v357 = vxor.u32 %v313, 2147483648
    %v358 = vxor.u32 %v316, 2147483648
    %v359 = vxor.u32 %v321, 2147483648
    %v360 = vxor.u32 %v324, 2147483648
    %v361 = vxor.u32 %v329, 2147483648
    %v362 = vxor.u32 %v332, 2147483648
    %v363 = vmul.f32 %v349, 1.442695
    %v364 = vpow.pop %v363
    %v365 = vmul.f32 %v350, 1.442695
    %v366 = vpow.pop %v365
    %v367 = vmul.f32 %v351, 1.442695
    %v368 = vpow.pop %v367
    %v369 = vmul.f32 %v352, 1.442695
    %v370 = vpow.pop %v369
    %v371 = vmul.f32 %v353, 1.442695
    %v372 = vpow.pop %v371
    %v373 = vmul.f32 %v354, 1.442695
    %v374 = vpow.pop %v373
    %v375 = vmul.f32 %v355, 1.442695
    %v376 = vpow.pop %v375
    %v377 = vmul.f32 %v356, 1.442695
    %v378 = vpow.pop %v377
    %v379 = vmul.f32 %v357, 1.442695
    %v380 = vpow.pop %v379
    %v381 = vmul.f32 %v358, 1.442695
    %v382 = vpow.pop %v381
    %v383 = vmul.f32 %v359, 1.442695
    %v384 = vpow.pop %v383
    %v385 = vmul.f32 %v360, 1.442695
    %v386 = vpow.pop %v385
    %v387 = vmul.f32 %v361, 1.442695
    %v388 = vpow.pop %v387
    %v389 = vmul.f32 %v362, 1.442695
    %v390 = vpow.pop %v389
    %v391 = vadd.f32 %v364, 1.0
    %v392 = vadd.f32 %v366, 1.0
    %v393 = vadd.f32 %v368, 1.0
    %v394 = vadd.f32 %v370, 1.0
    %v395 = vadd.f32 %v372, 1.0
    %v396 = vadd.f32 %v374, 1.0
    %v397 = vadd.f32 %v376, 1.0
    %v398 = vadd.f32 %v378, 1.0
    %v399 = vadd.f32 %v380, 1.0
    %v400 = vadd.f32 %v382, 1.0
    %v401 = vadd.f32 %v384, 1.0
    %v402 = vadd.f32 %v386, 1.0
    %v403 = vadd.f32 %v388, 1.0
    %v404 = vadd.f32 %v390, 1.0
    %v405 = vrcp.pop %v391
    %v406 = vmul.f32 1.0, %v405
    %v407 = vrcp.pop %v392
    %v408 = vmul.f32 1.0, %v407
    %v409 = vrcp.pop %v393
    %v410 = vmul.f32 1.0, %v409
    %v411 = vrcp.pop %v394
    %v412 = vmul.f32 1.0, %v411
    %v413 = vrcp.pop %v395
    %v414 = vmul.f32 1.0, %v413
    %v415 = vrcp.pop %v396
    %v416 = vmul.f32 1.0, %v415
    %v417 = vrcp.pop %v397
    %v418 = vmul.f32 1.0, %v417
    %v419 = vrcp.pop %v398
    %v420 = vmul.f32 1.0, %v419
    %v421 = vrcp.pop %v399
    %v422 = vmul.f32 1.0, %v421
    %v423 = vrcp.pop %v400
    %v424 = vmul.f32 1.0, %v423
    %v425 = vrcp.pop %v401
    %v426 = vmul.f32 1.0, %v425
    %v427 = vrcp.pop %v402
    %v428 = vmul.f32 1.0, %v427
    %v429 = vrcp.pop %v403
    %v430 = vmul.f32 1.0, %v429
    %v431 = vrcp.pop %v404
    %v432 = vmul.f32 1.0, %v431
    %447 = vrot.lane.b32.xlu0 %v406, 96
    %v448 = vpop.permute.xlu0 %447
    %449 = vrot.lane.b32.xlu0 %v408, 96
    %v450 = vpop.permute.xlu0 %449
    %451 = vrot.lane.b32.xlu0 %v410, 96
    %v452 = vpop.permute.xlu0 %451
    %453 = vrot.lane.b32.xlu0 %v412, 96
    %v454 = vpop.permute.xlu0 %453
    %455 = vrot.lane.b32.xlu0 %v414, 96
    %v456 = vpop.permute.xlu0 %455
    %457 = vrot.lane.b32.xlu0 %v416, 96
    %v458 = vpop.permute.xlu0 %457
    %459 = vrot.lane.b32.xlu0 %v418, 96
    %v460 = vpop.permute.xlu0 %459
    %461 = vrot.lane.b32.xlu0 %v420, 96
    %v462 = vpop.permute.xlu0 %461
    %463 = vrot.lane.b32.xlu0 %v422, 96
    %v464 = vpop.permute.xlu0 %463
    %465 = vrot.lane.b32.xlu0 %v424, 96
    %v466 = vpop.permute.xlu0 %465
    %467 = vrot.lane.b32.xlu0 %v426, 96
    %v468 = vpop.permute.xlu0 %467
    %469 = vrot.lane.b32.xlu0 %v428, 96
    %v470 = vpop.permute.xlu0 %469
    %471 = vrot.lane.b32.xlu0 %v430, 96
    %v472 = vpop.permute.xlu0 %471
    %473 = vrot.lane.b32.xlu0 %v432, 96
    %v474 = vpop.permute.xlu0 %473
    %v489 = vmul.f32 %v335, %v448
    %v490 = vmul.f32 %v336, %v450
    %v491 = vmul.f32 %v337, %v452
    %v492 = vmul.f32 %v338, %v454
    %v493 = vmul.f32 %v339, %v456
    %v494 = vmul.f32 %v340, %v458
    %v495 = vmul.f32 %v341, %v460
    %v496 = vmul.f32 %v342, %v462
    %v497 = vmul.f32 %v343, %v464
    %v498 = vmul.f32 %v344, %v466
    %v499 = vmul.f32 %v345, %v468
    %v500 = vmul.f32 %v346, %v470
    %v501 = vmul.f32 %v347, %v472
    %v502 = vmul.f32 %v348, %v474
    %v503 = vld [vmem:[%s4] sm:$0xff]
    %v504 = vld [vmem:[%s4 + $0x8] sm:$0xff]
    %v505 = vld [vmem:[%s4 + $0x10] sm:$0xff]
    %v506 = vld [vmem:[%s4 + $0x18] sm:$0xff]
    %v507 = vpack.c.bf16 %v490, %v489
    %v508 = vpack.c.bf16 %v492, %v491
    %v509 = vpack.c.bf16 %v494, %v493
    %v510 = vpack.c.bf16 %v496, %v495
    %v511 = vpack.c.bf16 %v498, %v497
    %v512 = vpack.c.bf16 %v500, %v499
    %v513 = vpack.c.bf16 %v502, %v501
    %v518 = vunpack.c.l.b16 %v503
    %v519 = vunpack.c.h.b16 %v503
    %v520 = vunpack.c.l.b16 %v504
    %v521 = vunpack.c.h.b16 %v504
    %v522 = vunpack.c.l.b16 %v505
    %v523 = vunpack.c.h.b16 %v505
    %v524 = vunpack.c.l.b16 %v506
    %v525 = vunpack.c.h.b16 %v506
    %v526 = vpack.c.b16 %v520, %v518
    %v527 = vpack.c.b16 %v521, %v519
    %v528 = vpack.c.b16 %v524, %v522
    %v529 = vpack.c.b16 %v525, %v523
    %v535 = vsel %vm75, %v507, 0
    %v538 = vsel %vm75, %v508, 0
    %v541 = vsel %vm75, %v509, 0
    %v544 = vsel %vm75, %v510, 0
    %v547 = vsel %vm75, %v511, 0
    %v550 = vsel %vm75, %v512, 0
    %v553 = vsel %vm75, %v513, 0
    %555 = vmatprep.subr.bf16.mxu0 0
    %556 = vmatpush1.bf16.msra.mxu0 0
    %557 = vmatprep.subr.bf16.mxu0 0
    %558 = vmatpush1.bf16.msra.mxu0 0
    %559 = vmatprep.subr.bf16.mxu0 0
    %560 = vmatpush1.bf16.msra.mxu0 0
    %561 = vmatprep.subr.bf16.mxu0 0
    %562 = vmatpush1.bf16.msra.mxu0 0
    %563 = vmatprep.subr.bf16.mxu0 0
    %564 = vmatpush1.bf16.msra.mxu0 0
    %565 = vmatprep.subr.bf16.mxu0 0
    %566 = vmatpush1.bf16.msra.mxu0 0
    %567 = vmatprep.subr.bf16.mxu0 %v529
    %568 = vmatpush1.bf16.msra.mxu0 %v528
    %569 = vmatprep.subr.bf16.mxu0 %v527
    %570 = vmatpush1.bf16.msra.mxu0 %v526
    %571 = vmatprep.subr.bf16.mxu0 0
    %572 = vmatpush2.bf16.msra.mxu0 0
    %573 = vmatprep.subr.bf16.mxu0 0
    %574 = vmatpush2.bf16.msra.mxu0 0
    %575 = vmatprep.subr.bf16.mxu0 0
    %576 = vmatpush2.bf16.msra.mxu0 0
    %577 = vmatprep.subr.bf16.mxu0 0
    %578 = vmatpush2.bf16.msra.mxu0 0
    %579 = vmatprep.subr.bf16.mxu0 0
    %580 = vmatpush2.bf16.msra.mxu0 0
    %581 = vmatprep.subr.bf16.mxu0 0
    %582 = vmatpush2.bf16.msra.mxu0 0
    %583 = vmatprep.subr.bf16.mxu0 0
    %584 = vmatpush2.bf16.msra.mxu0 0
    %585 = vmatprep.subr.bf16.mxu0 0
    %586 = vmatpush2.bf16.msra.mxu0 0
    %587 = vmatprep.mubr.bf16.mxu0 0
    %588 = vmatmul.mubr.bf16.gmra.mxu0 %v535
    %v589 = vpop.f32.mrf.mxu0
    %v590 = vadd.f32 0.0, %v589
    %v591 = vpop.f32.mrf.mxu0
    %v592 = vadd.f32 0.0, %v591
    %v593 = vpop.f32.mrf.mxu0
    %v594 = vadd.f32 0.0, %v593
    %v595 = vpop.f32.mrf.mxu0
    %v596 = vadd.f32 0.0, %v595
    %597 = vmatprep.mubr.bf16.mxu0 0
    %598 = vmatmul.mubr.bf16.gmra.mxu0 %v538
    %v599 = vpop.f32.mrf.mxu0
    %v600 = vadd.f32 0.0, %v599
    %v601 = vpop.f32.mrf.mxu0
    %v602 = vadd.f32 0.0, %v601
    %v603 = vpop.f32.mrf.mxu0
    %v604 = vadd.f32 0.0, %v603
    %v605 = vpop.f32.mrf.mxu0
    %v606 = vadd.f32 0.0, %v605
    %607 = vmatprep.mubr.bf16.mxu0 0
    %608 = vmatmul.mubr.bf16.gmra.mxu0 %v541
    %v609 = vpop.f32.mrf.mxu0
    %v610 = vadd.f32 0.0, %v609
    %v611 = vpop.f32.mrf.mxu0
    %v612 = vadd.f32 0.0, %v611
    %v613 = vpop.f32.mrf.mxu0
    %v614 = vadd.f32 0.0, %v613
    %v615 = vpop.f32.mrf.mxu0
    %v616 = vadd.f32 0.0, %v615
    %617 = vmatprep.mubr.bf16.mxu0 0
    %618 = vmatmul.mubr.bf16.gmra.mxu0 %v544
    %v619 = vpop.f32.mrf.mxu0
    %v620 = vadd.f32 0.0, %v619
    %v621 = vpop.f32.mrf.mxu0
    %v622 = vadd.f32 0.0, %v621
    %v623 = vpop.f32.mrf.mxu0
    %v624 = vadd.f32 0.0, %v623
    %v625 = vpop.f32.mrf.mxu0
    %v626 = vadd.f32 0.0, %v625
    %627 = vmatprep.mubr.bf16.mxu0 0
    %628 = vmatmul.mubr.bf16.gmra.mxu0 %v547
    %v629 = vpop.f32.mrf.mxu0
    %v630 = vadd.f32 0.0, %v629
    %v631 = vpop.f32.mrf.mxu0
    %v632 = vadd.f32 0.0, %v631
    %v633 = vpop.f32.mrf.mxu0
    %v634 = vadd.f32 0.0, %v633
    %v635 = vpop.f32.mrf.mxu0
    %v636 = vadd.f32 0.0, %v635
    %637 = vmatprep.mubr.bf16.mxu0 0
    %638 = vmatmul.mubr.bf16.gmra.mxu0 %v550
    %v639 = vpop.f32.mrf.mxu0
    %v640 = vadd.f32 0.0, %v639
    %v641 = vpop.f32.mrf.mxu0
    %v642 = vadd.f32 0.0, %v641
    %v643 = vpop.f32.mrf.mxu0
    %v644 = vadd.f32 0.0, %v643
    %v645 = vpop.f32.mrf.mxu0
    %v646 = vadd.f32 0.0, %v645
    %647 = vmatprep.mubr.bf16.mxu0 0
    %648 = vmatmul.mubr.bf16.gmra.mxu0 %v553
    %v649 = vpop.f32.mrf.mxu0
    %v650 = vadd.f32 0.0, %v649
    %v651 = vpop.f32.mrf.mxu0
    %v652 = vadd.f32 0.0, %v651
    %v653 = vpop.f32.mrf.mxu0
    %v654 = vadd.f32 0.0, %v653
    %v655 = vpop.f32.mrf.mxu0
    %v656 = vadd.f32 0.0, %v655
    %657 = vdwg.mxu0
    %v658 = vld [vmem:[%s5] sm:$0x1]
    %v660 = vlaneseq
    %v661 = vshrl.u32 %v660, 7
    %v662 = vsub.s32 0, %v661
    %v663 = vrot.slane %v658, %v662
    %v665 = vadd.f32 %v590, %v663
    %v666 = vadd.f32 %v594, %v663
    %v667 = vadd.f32 %v600, %v663
    %v668 = vadd.f32 %v604, %v663
    %v669 = vadd.f32 %v610, %v663
    %v670 = vadd.f32 %v614, %v663
    %v671 = vadd.f32 %v620, %v663
    %v672 = vadd.f32 %v624, %v663
    %v673 = vadd.f32 %v630, %v663
    %v674 = vadd.f32 %v634, %v663
    %v675 = vadd.f32 %v640, %v663
    %v676 = vadd.f32 %v644, %v663
    %v677 = vadd.f32 %v650, %v663
    %v678 = vadd.f32 %v654, %v663
    %v679 = vld [vmem:[%s1] sm:$0xf]
    %v680 = vld [vmem:[%s1 + $0x4] sm:$0xf]
    %v681 = vpack.c.bf16 %v594, %v590
    %v684 = vunpack.c.l.b16 %v679
    %v685 = vunpack.c.l.b16 %v680
    %v686 = vpack.c.b16 %v685, %v684
    %688 = vrot.lane.b32.xlu0 %v681, 96
    %v689 = vpop.permute.xlu0 %688
    %vm691 = vcmask 130048
    %v693 = vsel %vm691, %v686, 0
    %695 = vmatprep.subr.bf16.mxu0 0
    %696 = vmatpush1.bf16.msra.mxu0 0
    %697 = vmatprep.subr.bf16.mxu0 0
    %698 = vmatpush1.bf16.msra.mxu0 0
    %699 = vmatprep.subr.bf16.mxu0 0
    %700 = vmatpush1.bf16.msra.mxu0 0
    %701 = vmatprep.subr.bf16.mxu0 0
    %702 = vmatpush1.bf16.msra.mxu0 0
    %703 = vmatprep.subr.bf16.mxu0 0
    %704 = vmatpush1.bf16.msra.mxu0 0
    %705 = vmatprep.subr.bf16.mxu0 0
    %706 = vmatpush1.bf16.msra.mxu0 0
    %707 = vmatprep.subr.bf16.mxu0 0
    %708 = vmatpush1.bf16.msra.mxu0 0
    %709 = vmatprep.subr.bf16.mxu0 0
    %710 = vmatpush1.bf16.msra.mxu0 %v689
    %711 = vmatprep.subr.bf16.mxu0 0
    %712 = vmatpush2.bf16.msra.mxu0 0
    %713 = vmatprep.subr.bf16.mxu0 0
    %714 = vmatpush2.bf16.msra.mxu0 0
    %715 = vmatprep.subr.bf16.mxu0 0
    %716 = vmatpush2.bf16.msra.mxu0 0
    %717 = vmatprep.subr.bf16.mxu0 0
    %718 = vmatpush2.bf16.msra.mxu0 0
    %719 = vmatprep.subr.bf16.mxu0 0
    %720 = vmatpush2.bf16.msra.mxu0 0
    %721 = vmatprep.subr.bf16.mxu0 0
    %722 = vmatpush2.bf16.msra.mxu0 0
    %723 = vmatprep.subr.bf16.mxu0 0
    %724 = vmatpush2.bf16.msra.mxu0 0
    %725 = vmatprep.subr.bf16.mxu0 0
    %726 = vmatpush2.bf16.msra.mxu0 0
    %727 = vmatprep.mubr.bf16.mxu0 0
    %728 = vmatmul.mubr.bf16.gmra.mxu0 %v693
    %v729 = vpop.f32.mrf.mxu0
    %v730 = vadd.f32 0.0, %v729
    %v731 = vpop.f32.mrf.mxu0
    %v732 = vpop.f32.mrf.mxu0
    %v733 = vadd.f32 0.0, %v732
    %v734 = vpop.f32.mrf.mxu0
    %735 = vdwg.mxu0
    %v736 = vadd.f32 %v665, %v730
    %v737 = vadd.f32 %v666, %v733
    %s738 = scalar_lea.vmem %s1, 8
    %v739 = vld [vmem:[%s738] sm:$0xf]
    %v740 = vld [vmem:[%s738 + $0x4] sm:$0xf]
    %v743 = vunpack.c.l.b16 %v739
    %v744 = vunpack.c.l.b16 %v740
    %v745 = vpack.c.b16 %v744, %v743
    %746 = vrot.lane.b32.xlu0 %v681, 64
    %v747 = vpop.permute.xlu0 %746
    %v750 = vsel %vm691, %v745, 0
    %752 = vmatprep.subr.bf16.mxu0 0
    %753 = vmatpush1.bf16.msra.mxu0 0
    %754 = vmatprep.subr.bf16.mxu0 0
    %755 = vmatpush1.bf16.msra.mxu0 0
    %756 = vmatprep.subr.bf16.mxu0 0
    %757 = vmatpush1.bf16.msra.mxu0 0
    %758 = vmatprep.subr.bf16.mxu0 0
    %759 = vmatpush1.bf16.msra.mxu0 0
    %760 = vmatprep.subr.bf16.mxu0 0
    %761 = vmatpush1.bf16.msra.mxu0 0
    %762 = vmatprep.subr.bf16.mxu0 0
    %763 = vmatpush1.bf16.msra.mxu0 0
    %764 = vmatprep.subr.bf16.mxu0 0
    %765 = vmatpush1.bf16.msra.mxu0 0
    %766 = vmatprep.subr.bf16.mxu0 0
    %767 = vmatpush1.bf16.msra.mxu0 %v747
    %768 = vmatprep.subr.bf16.mxu0 0
    %769 = vmatpush2.bf16.msra.mxu0 0
    %770 = vmatprep.subr.bf16.mxu0 0
    %771 = vmatpush2.bf16.msra.mxu0 0
    %772 = vmatprep.subr.bf16.mxu0 0
    %773 = vmatpush2.bf16.msra.mxu0 0
    %774 = vmatprep.subr.bf16.mxu0 0
    %775 = vmatpush2.bf16.msra.mxu0 0
    %776 = vmatprep.subr.bf16.mxu0 0
    %777 = vmatpush2.bf16.msra.mxu0 0
    %778 = vmatprep.subr.bf16.mxu0 0
    %779 = vmatpush2.bf16.msra.mxu0 0
    %780 = vmatprep.subr.bf16.mxu0 0
    %781 = vmatpush2.bf16.msra.mxu0 0
    %782 = vmatprep.subr.bf16.mxu0 0
    %783 = vmatpush2.bf16.msra.mxu0 0
    %784 = vmatprep.mubr.bf16.mxu0 0
    %785 = vmatmul.mubr.bf16.gmra.mxu0 %v750
    %v786 = vpop.f32.mrf.mxu0
    %v787 = vadd.f32 0.0, %v786
    %v788 = vpop.f32.mrf.mxu0
    %v789 = vpop.f32.mrf.mxu0
    %v790 = vadd.f32 0.0, %v789
    %v791 = vpop.f32.mrf.mxu0
    %792 = vdwg.mxu0
    %v793 = vadd.f32 %v736, %v787
    %v794 = vadd.f32 %v737, %v790
    %s795 = scalar_lea.vmem %s1, 16
    %v796 = vld [vmem:[%s795] sm:$0xf]
    %v797 = vld [vmem:[%s795 + $0x4] sm:$0xf]
    %v800 = vunpack.c.l.b16 %v796
    %v801 = vunpack.c.l.b16 %v797
    %v802 = vpack.c.b16 %v801, %v800
    %803 = vrot.lane.b32.xlu0 %v681, 32
    %v804 = vpop.permute.xlu0 %803
    %v807 = vsel %vm691, %v802, 0
    %809 = vmatprep.subr.bf16.mxu0 0
    %810 = vmatpush1.bf16.msra.mxu0 0
    %811 = vmatprep.subr.bf16.mxu0 0
    %812 = vmatpush1.bf16.msra.mxu0 0
    %813 = vmatprep.subr.bf16.mxu0 0
    %814 = vmatpush1.bf16.msra.mxu0 0
    %815 = vmatprep.subr.bf16.mxu0 0
    %816 = vmatpush1.bf16.msra.mxu0 0
    %817 = vmatprep.subr.bf16.mxu0 0
    %818 = vmatpush1.bf16.msra.mxu0 0
    %819 = vmatprep.subr.bf16.mxu0 0
    %820 = vmatpush1.bf16.msra.mxu0 0
    %821 = vmatprep.subr.bf16.mxu0 0
    %822 = vmatpush1.bf16.msra.mxu0 0
    %823 = vmatprep.subr.bf16.mxu0 0
    %824 = vmatpush1.bf16.msra.mxu0 %v804
    %825 = vmatprep.subr.bf16.mxu0 0
    %826 = vmatpush2.bf16.msra.mxu0 0
    %827 = vmatprep.subr.bf16.mxu0 0
    %828 = vmatpush2.bf16.msra.mxu0 0
    %829 = vmatprep.subr.bf16.mxu0 0
    %830 = vmatpush2.bf16.msra.mxu0 0
    %831 = vmatprep.subr.bf16.mxu0 0
    %832 = vmatpush2.bf16.msra.mxu0 0
    %833 = vmatprep.subr.bf16.mxu0 0
    %834 = vmatpush2.bf16.msra.mxu0 0
    %835 = vmatprep.subr.bf16.mxu0 0
    %836 = vmatpush2.bf16.msra.mxu0 0
    %837 = vmatprep.subr.bf16.mxu0 0
    %838 = vmatpush2.bf16.msra.mxu0 0
    %839 = vmatprep.subr.bf16.mxu0 0
    %840 = vmatpush2.bf16.msra.mxu0 0
    %841 = vmatprep.mubr.bf16.mxu0 0
    %842 = vmatmul.mubr.bf16.gmra.mxu0 %v807
    %v843 = vpop.f32.mrf.mxu0
    %v844 = vadd.f32 0.0, %v843
    %v845 = vpop.f32.mrf.mxu0
    %v846 = vpop.f32.mrf.mxu0
    %v847 = vadd.f32 0.0, %v846
    %v848 = vpop.f32.mrf.mxu0
    %849 = vdwg.mxu0
    %v850 = vadd.f32 %v793, %v844
    %v851 = vadd.f32 %v794, %v847
    %s852 = scalar_lea.vmem %s1, 24
    %v853 = vld [vmem:[%s852] sm:$0xf]
    %v854 = vld [vmem:[%s852 + $0x4] sm:$0xf]
    %v855 = vpack.c.bf16 %v596, %v592
    %v858 = vunpack.c.l.b16 %v853
    %v859 = vunpack.c.l.b16 %v854
    %v860 = vpack.c.b16 %v859, %v858
    %v862 = vsel %vm691, %v860, 0
    %864 = vmatprep.subr.bf16.mxu0 0
    %865 = vmatpush1.bf16.msra.mxu0 0
    %866 = vmatprep.subr.bf16.mxu0 0
    %867 = vmatpush1.bf16.msra.mxu0 0
    %868 = vmatprep.subr.bf16.mxu0 0
    %869 = vmatpush1.bf16.msra.mxu0 0
    %870 = vmatprep.subr.bf16.mxu0 0
    %871 = vmatpush1.bf16.msra.mxu0 0
    %872 = vmatprep.subr.bf16.mxu0 0
    %873 = vmatpush1.bf16.msra.mxu0 0
    %874 = vmatprep.subr.bf16.mxu0 0
    %875 = vmatpush1.bf16.msra.mxu0 0
    %876 = vmatprep.subr.bf16.mxu0 0
    %877 = vmatpush1.bf16.msra.mxu0 0
    %878 = vmatprep.subr.bf16.mxu0 0
    %879 = vmatpush1.bf16.msra.mxu0 %v855
    %880 = vmatprep.subr.bf16.mxu0 0
    %881 = vmatpush2.bf16.msra.mxu0 0
    %882 = vmatprep.subr.bf16.mxu0 0
    %883 = vmatpush2.bf16.msra.mxu0 0
    %884 = vmatprep.subr.bf16.mxu0 0
    %885 = vmatpush2.bf16.msra.mxu0 0
    %886 = vmatprep.subr.bf16.mxu0 0
    %887 = vmatpush2.bf16.msra.mxu0 0
    %888 = vmatprep.subr.bf16.mxu0 0
    %889 = vmatpush2.bf16.msra.mxu0 0
    %890 = vmatprep.subr.bf16.mxu0 0
    %891 = vmatpush2.bf16.msra.mxu0 0
    %892 = vmatprep.subr.bf16.mxu0 0
    %893 = vmatpush2.bf16.msra.mxu0 0
    %894 = vmatprep.subr.bf16.mxu0 0
    %895 = vmatpush2.bf16.msra.mxu0 0
    %896 = vmatprep.mubr.bf16.mxu0 0
    %897 = vmatmul.mubr.bf16.gmra.mxu0 %v862
    %v898 = vpop.f32.mrf.mxu0
    %v899 = vadd.f32 0.0, %v898
    %v900 = vpop.f32.mrf.mxu0
    %v901 = vpop.f32.mrf.mxu0
    %v902 = vadd.f32 0.0, %v901
    %v903 = vpop.f32.mrf.mxu0
    %904 = vdwg.mxu0
    %v905 = vadd.f32 %v850, %v899
    %v906 = vadd.f32 %v851, %v902
    %907 = vst.msk [vmem:[#allocation3] sm:$0xff] %vm75, %v905
    %908 = vst.msk [vmem:[#allocation3 + $0x8] sm:$0xff] %vm75, %v906
    %v909 = vld [vmem:[%s1] sm:$0xf]
    %v910 = vld [vmem:[%s1 + $0x4] sm:$0xf]
    %v911 = vpack.c.bf16 %v604, %v600
    %v914 = vunpack.c.l.b16 %v909
    %v915 = vunpack.c.l.b16 %v910
    %v916 = vpack.c.b16 %v915, %v914
    %918 = vrot.lane.b32.xlu0 %v911, 96
    %v919 = vpop.permute.xlu0 %918
    %v922 = vsel %vm691, %v916, 0
    %924 = vmatprep.subr.bf16.mxu0 0
    %925 = vmatpush1.bf16.msra.mxu0 0
    %926 = vmatprep.subr.bf16.mxu0 0
    %927 = vmatpush1.bf16.msra.mxu0 0
    %928 = vmatprep.subr.bf16.mxu0 0
    %929 = vmatpush1.bf16.msra.mxu0 0
    %930 = vmatprep.subr.bf16.mxu0 0
    %931 = vmatpush1.bf16.msra.mxu0 0
    %932 = vmatprep.subr.bf16.mxu0 0
    %933 = vmatpush1.bf16.msra.mxu0 0
    %934 = vmatprep.subr.bf16.mxu0 0
    %935 = vmatpush1.bf16.msra.mxu0 0
    %936 = vmatprep.subr.bf16.mxu0 0
    %937 = vmatpush1.bf16.msra.mxu0 0
    %938 = vmatprep.subr.bf16.mxu0 0
    %939 = vmatpush1.bf16.msra.mxu0 %v919
    %940 = vmatprep.subr.bf16.mxu0 0
    %941 = vmatpush2.bf16.msra.mxu0 0
    %942 = vmatprep.subr.bf16.mxu0 0
    %943 = vmatpush2.bf16.msra.mxu0 0
    %944 = vmatprep.subr.bf16.mxu0 0
    %945 = vmatpush2.bf16.msra.mxu0 0
    %946 = vmatprep.subr.bf16.mxu0 0
    %947 = vmatpush2.bf16.msra.mxu0 0
    %948 = vmatprep.subr.bf16.mxu0 0
    %949 = vmatpush2.bf16.msra.mxu0 0
    %950 = vmatprep.subr.bf16.mxu0 0
    %951 = vmatpush2.bf16.msra.mxu0 0
    %952 = vmatprep.subr.bf16.mxu0 0
    %953 = vmatpush2.bf16.msra.mxu0 0
    %954 = vmatprep.subr.bf16.mxu0 0
    %955 = vmatpush2.bf16.msra.mxu0 0
    %956 = vmatprep.mubr.bf16.mxu0 0
    %957 = vmatmul.mubr.bf16.gmra.mxu0 %v922
    %v958 = vpop.f32.mrf.mxu0
    %v959 = vadd.f32 0.0, %v958
    %v960 = vpop.f32.mrf.mxu0
    %v961 = vpop.f32.mrf.mxu0
    %v962 = vadd.f32 0.0, %v961
    %v963 = vpop.f32.mrf.mxu0
    %964 = vdwg.mxu0
    %v965 = vadd.f32 %v667, %v959
    %v966 = vadd.f32 %v668, %v962
    %v967 = vld [vmem:[%s738] sm:$0xf]
    %v968 = vld [vmem:[%s738 + $0x4] sm:$0xf]
    %v971 = vunpack.c.l.b16 %v967
    %v972 = vunpack.c.l.b16 %v968
    %v973 = vpack.c.b16 %v972, %v971
    %974 = vrot.lane.b32.xlu0 %v911, 64
    %v975 = vpop.permute.xlu0 %974
    %v978 = vsel %vm691, %v973, 0
    %980 = vmatprep.subr.bf16.mxu0 0
    %981 = vmatpush1.bf16.msra.mxu0 0
    %982 = vmatprep.subr.bf16.mxu0 0
    %983 = vmatpush1.bf16.msra.mxu0 0
    %984 = vmatprep.subr.bf16.mxu0 0
    %985 = vmatpush1.bf16.msra.mxu0 0
    %986 = vmatprep.subr.bf16.mxu0 0
    %987 = vmatpush1.bf16.msra.mxu0 0
    %988 = vmatprep.subr.bf16.mxu0 0
    %989 = vmatpush1.bf16.msra.mxu0 0
    %990 = vmatprep.subr.bf16.mxu0 0
    %991 = vmatpush1.bf16.msra.mxu0 0
    %992 = vmatprep.subr.bf16.mxu0 0
    %993 = vmatpush1.bf16.msra.mxu0 0
    %994 = vmatprep.subr.bf16.mxu0 0
    %995 = vmatpush1.bf16.msra.mxu0 %v975
    %996 = vmatprep.subr.bf16.mxu0 0
    %997 = vmatpush2.bf16.msra.mxu0 0
    %998 = vmatprep.subr.bf16.mxu0 0
    %999 = vmatpush2.bf16.msra.mxu0 0
    %1000 = vmatprep.subr.bf16.mxu0 0
    %1001 = vmatpush2.bf16.msra.mxu0 0
    %1002 = vmatprep.subr.bf16.mxu0 0
    %1003 = vmatpush2.bf16.msra.mxu0 0
    %1004 = vmatprep.subr.bf16.mxu0 0
    %1005 = vmatpush2.bf16.msra.mxu0 0
    %1006 = vmatprep.subr.bf16.mxu0 0
    %1007 = vmatpush2.bf16.msra.mxu0 0
    %1008 = vmatprep.subr.bf16.mxu0 0
    %1009 = vmatpush2.bf16.msra.mxu0 0
    %1010 = vmatprep.subr.bf16.mxu0 0
    %1011 = vmatpush2.bf16.msra.mxu0 0
    %1012 = vmatprep.mubr.bf16.mxu0 0
    %1013 = vmatmul.mubr.bf16.gmra.mxu0 %v978
    %v1014 = vpop.f32.mrf.mxu0
    %v1015 = vadd.f32 0.0, %v1014
    %v1016 = vpop.f32.mrf.mxu0
    %v1017 = vpop.f32.mrf.mxu0
    %v1018 = vadd.f32 0.0, %v1017
    %v1019 = vpop.f32.mrf.mxu0
    %1020 = vdwg.mxu0
    %v1021 = vadd.f32 %v965, %v1015
    %v1022 = vadd.f32 %v966, %v1018
    %v1023 = vld [vmem:[%s795] sm:$0xf]
    %v1024 = vld [vmem:[%s795 + $0x4] sm:$0xf]
    %v1027 = vunpack.c.l.b16 %v1023
    %v1028 = vunpack.c.l.b16 %v1024
    %v1029 = vpack.c.b16 %v1028, %v1027
    %1030 = vrot.lane.b32.xlu0 %v911, 32
    %v1031 = vpop.permute.xlu0 %1030
    %v1034 = vsel %vm691, %v1029, 0
    %1036 = vmatprep.subr.bf16.mxu0 0
    %1037 = vmatpush1.bf16.msra.mxu0 0
    %1038 = vmatprep.subr.bf16.mxu0 0
    %1039 = vmatpush1.bf16.msra.mxu0 0
    %1040 = vmatprep.subr.bf16.mxu0 0
    %1041 = vmatpush1.bf16.msra.mxu0 0
    %1042 = vmatprep.subr.bf16.mxu0 0
    %1043 = vmatpush1.bf16.msra.mxu0 0
    %1044 = vmatprep.subr.bf16.mxu0 0
    %1045 = vmatpush1.bf16.msra.mxu0 0
    %1046 = vmatprep.subr.bf16.mxu0 0
    %1047 = vmatpush1.bf16.msra.mxu0 0
    %1048 = vmatprep.subr.bf16.mxu0 0
    %1049 = vmatpush1.bf16.msra.mxu0 0
    %1050 = vmatprep.subr.bf16.mxu0 0
    %1051 = vmatpush1.bf16.msra.mxu0 %v1031
    %1052 = vmatprep.subr.bf16.mxu0 0
    %1053 = vmatpush2.bf16.msra.mxu0 0
    %1054 = vmatprep.subr.bf16.mxu0 0
    %1055 = vmatpush2.bf16.msra.mxu0 0
    %1056 = vmatprep.subr.bf16.mxu0 0
    %1057 = vmatpush2.bf16.msra.mxu0 0
    %1058 = vmatprep.subr.bf16.mxu0 0
    %1059 = vmatpush2.bf16.msra.mxu0 0
    %1060 = vmatprep.subr.bf16.mxu0 0
    %1061 = vmatpush2.bf16.msra.mxu0 0
    %1062 = vmatprep.subr.bf16.mxu0 0
    %1063 = vmatpush2.bf16.msra.mxu0 0
    %1064 = vmatprep.subr.bf16.mxu0 0
    %1065 = vmatpush2.bf16.msra.mxu0 0
    %1066 = vmatprep.subr.bf16.mxu0 0
    %1067 = vmatpush2.bf16.msra.mxu0 0
    %1068 = vmatprep.mubr.bf16.mxu0 0
    %1069 = vmatmul.mubr.bf16.gmra.mxu0 %v1034
    %v1070 = vpop.f32.mrf.mxu0
    %v1071 = vadd.f32 0.0, %v1070
    %v1072 = vpop.f32.mrf.mxu0
    %v1073 = vpop.f32.mrf.mxu0
    %v1074 = vadd.f32 0.0, %v1073
    %v1075 = vpop.f32.mrf.mxu0
    %1076 = vdwg.mxu0
    %v1077 = vadd.f32 %v1021, %v1071
    %v1078 = vadd.f32 %v1022, %v1074
    %v1079 = vld [vmem:[%s852] sm:$0xf]
    %v1080 = vld [vmem:[%s852 + $0x4] sm:$0xf]
    %v1081 = vpack.c.bf16 %v606, %v602
    %v1084 = vunpack.c.l.b16 %v1079
    %v1085 = vunpack.c.l.b16 %v1080
    %v1086 = vpack.c.b16 %v1085, %v1084
    %v1088 = vsel %vm691, %v1086, 0
    %1090 = vmatprep.subr.bf16.mxu0 0
    %1091 = vmatpush1.bf16.msra.mxu0 0
    %1092 = vmatprep.subr.bf16.mxu0 0
    %1093 = vmatpush1.bf16.msra.mxu0 0
    %1094 = vmatprep.subr.bf16.mxu0 0
    %1095 = vmatpush1.bf16.msra.mxu0 0
    %1096 = vmatprep.subr.bf16.mxu0 0
    %1097 = vmatpush1.bf16.msra.mxu0 0
    %1098 = vmatprep.subr.bf16.mxu0 0
    %1099 = vmatpush1.bf16.msra.mxu0 0
    %1100 = vmatprep.subr.bf16.mxu0 0
    %1101 = vmatpush1.bf16.msra.mxu0 0
    %1102 = vmatprep.subr.bf16.mxu0 0
    %1103 = vmatpush1.bf16.msra.mxu0 0
    %1104 = vmatprep.subr.bf16.mxu0 0
    %1105 = vmatpush1.bf16.msra.mxu0 %v1081
    %1106 = vmatprep.subr.bf16.mxu0 0
    %1107 = vmatpush2.bf16.msra.mxu0 0
    %1108 = vmatprep.subr.bf16.mxu0 0
    %1109 = vmatpush2.bf16.msra.mxu0 0
    %1110 = vmatprep.subr.bf16.mxu0 0
    %1111 = vmatpush2.bf16.msra.mxu0 0
    %1112 = vmatprep.subr.bf16.mxu0 0
    %1113 = vmatpush2.bf16.msra.mxu0 0
    %1114 = vmatprep.subr.bf16.mxu0 0
    %1115 = vmatpush2.bf16.msra.mxu0 0
    %1116 = vmatprep.subr.bf16.mxu0 0
    %1117 = vmatpush2.bf16.msra.mxu0 0
    %1118 = vmatprep.subr.bf16.mxu0 0
    %1119 = vmatpush2.bf16.msra.mxu0 0
    %1120 = vmatprep.subr.bf16.mxu0 0
    %1121 = vmatpush2.bf16.msra.mxu0 0
    %1122 = vmatprep.mubr.bf16.mxu0 0
    %1123 = vmatmul.mubr.bf16.gmra.mxu0 %v1088
    %v1124 = vpop.f32.mrf.mxu0
    %v1125 = vadd.f32 0.0, %v1124
    %v1126 = vpop.f32.mrf.mxu0
    %v1127 = vpop.f32.mrf.mxu0
    %v1128 = vadd.f32 0.0, %v1127
    %v1129 = vpop.f32.mrf.mxu0
    %1130 = vdwg.mxu0
    %v1131 = vadd.f32 %v1077, %v1125
    %v1132 = vadd.f32 %v1078, %v1128
    %1133 = vst.msk [vmem:[#allocation3 + $0x10] sm:$0xff] %vm75, %v1131
    %1134 = vst.msk [vmem:[#allocation3 + $0x18] sm:$0xff] %vm75, %v1132
    %v1135 = vld [vmem:[%s1] sm:$0xf]
    %v1136 = vld [vmem:[%s1 + $0x4] sm:$0xf]
    %v1137 = vpack.c.bf16 %v614, %v610
    %v1140 = vunpack.c.l.b16 %v1135
    %v1141 = vunpack.c.l.b16 %v1136
    %v1142 = vpack.c.b16 %v1141, %v1140
    %1144 = vrot.lane.b32.xlu0 %v1137, 96
    %v1145 = vpop.permute.xlu0 %1144
    %v1148 = vsel %vm691, %v1142, 0
    %1150 = vmatprep.subr.bf16.mxu0 0
    %1151 = vmatpush1.bf16.msra.mxu0 0
    %1152 = vmatprep.subr.bf16.mxu0 0
    %1153 = vmatpush1.bf16.msra.mxu0 0
    %1154 = vmatprep.subr.bf16.mxu0 0
    %1155 = vmatpush1.bf16.msra.mxu0 0
    %1156 = vmatprep.subr.bf16.mxu0 0
    %1157 = vmatpush1.bf16.msra.mxu0 0
    %1158 = vmatprep.subr.bf16.mxu0 0
    %1159 = vmatpush1.bf16.msra.mxu0 0
    %1160 = vmatprep.subr.bf16.mxu0 0
    %1161 = vmatpush1.bf16.msra.mxu0 0
    %1162 = vmatprep.subr.bf16.mxu0 0
    %1163 = vmatpush1.bf16.msra.mxu0 0
    %1164 = vmatprep.subr.bf16.mxu0 0
    %1165 = vmatpush1.bf16.msra.mxu0 %v1145
    %1166 = vmatprep.subr.bf16.mxu0 0
    %1167 = vmatpush2.bf16.msra.mxu0 0
    %1168 = vmatprep.subr.bf16.mxu0 0
    %1169 = vmatpush2.bf16.msra.mxu0 0
    %1170 = vmatprep.subr.bf16.mxu0 0
    %1171 = vmatpush2.bf16.msra.mxu0 0
    %1172 = vmatprep.subr.bf16.mxu0 0
    %1173 = vmatpush2.bf16.msra.mxu0 0
    %1174 = vmatprep.subr.bf16.mxu0 0
    %1175 = vmatpush2.bf16.msra.mxu0 0
    %1176 = vmatprep.subr.bf16.mxu0 0
    %1177 = vmatpush2.bf16.msra.mxu0 0
    %1178 = vmatprep.subr.bf16.mxu0 0
    %1179 = vmatpush2.bf16.msra.mxu0 0
    %1180 = vmatprep.subr.bf16.mxu0 0
    %1181 = vmatpush2.bf16.msra.mxu0 0
    %1182 = vmatprep.mubr.bf16.mxu0 0
    %1183 = vmatmul.mubr.bf16.gmra.mxu0 %v1148
    %v1184 = vpop.f32.mrf.mxu0
    %v1185 = vadd.f32 0.0, %v1184
    %v1186 = vpop.f32.mrf.mxu0
    %v1187 = vpop.f32.mrf.mxu0
    %v1188 = vadd.f32 0.0, %v1187
    %v1189 = vpop.f32.mrf.mxu0
    %1190 = vdwg.mxu0
    %v1191 = vadd.f32 %v669, %v1185
    %v1192 = vadd.f32 %v670, %v1188
    %v1193 = vld [vmem:[%s738] sm:$0xf]
    %v1194 = vld [vmem:[%s738 + $0x4] sm:$0xf]
    %v1197 = vunpack.c.l.b16 %v1193
    %v1198 = vunpack.c.l.b16 %v1194
    %v1199 = vpack.c.b16 %v1198, %v1197
    %1200 = vrot.lane.b32.xlu0 %v1137, 64
    %v1201 = vpop.permute.xlu0 %1200
    %v1204 = vsel %vm691, %v1199, 0
    %1206 = vmatprep.subr.bf16.mxu0 0
    %1207 = vmatpush1.bf16.msra.mxu0 0
    %1208 = vmatprep.subr.bf16.mxu0 0
    %1209 = vmatpush1.bf16.msra.mxu0 0
    %1210 = vmatprep.subr.bf16.mxu0 0
    %1211 = vmatpush1.bf16.msra.mxu0 0
    %1212 = vmatprep.subr.bf16.mxu0 0
    %1213 = vmatpush1.bf16.msra.mxu0 0
    %1214 = vmatprep.subr.bf16.mxu0 0
    %1215 = vmatpush1.bf16.msra.mxu0 0
    %1216 = vmatprep.subr.bf16.mxu0 0
    %1217 = vmatpush1.bf16.msra.mxu0 0
    %1218 = vmatprep.subr.bf16.mxu0 0
    %1219 = vmatpush1.bf16.msra.mxu0 0
    %1220 = vmatprep.subr.bf16.mxu0 0
    %1221 = vmatpush1.bf16.msra.mxu0 %v1201
    %1222 = vmatprep.subr.bf16.mxu0 0
    %1223 = vmatpush2.bf16.msra.mxu0 0
    %1224 = vmatprep.subr.bf16.mxu0 0
    %1225 = vmatpush2.bf16.msra.mxu0 0
    %1226 = vmatprep.subr.bf16.mxu0 0
    %1227 = vmatpush2.bf16.msra.mxu0 0
    %1228 = vmatprep.subr.bf16.mxu0 0
    %1229 = vmatpush2.bf16.msra.mxu0 0
    %1230 = vmatprep.subr.bf16.mxu0 0
    %1231 = vmatpush2.bf16.msra.mxu0 0
    %1232 = vmatprep.subr.bf16.mxu0 0
    %1233 = vmatpush2.bf16.msra.mxu0 0
    %1234 = vmatprep.subr.bf16.mxu0 0
    %1235 = vmatpush2.bf16.msra.mxu0 0
    %1236 = vmatprep.subr.bf16.mxu0 0
    %1237 = vmatpush2.bf16.msra.mxu0 0
    %1238 = vmatprep.mubr.bf16.mxu0 0
    %1239 = vmatmul.mubr.bf16.gmra.mxu0 %v1204
    %v1240 = vpop.f32.mrf.mxu0
    %v1241 = vadd.f32 0.0, %v1240
    %v1242 = vpop.f32.mrf.mxu0
    %v1243 = vpop.f32.mrf.mxu0
    %v1244 = vadd.f32 0.0, %v1243
    %v1245 = vpop.f32.mrf.mxu0
    %1246 = vdwg.mxu0
    %v1247 = vadd.f32 %v1191, %v1241
    %v1248 = vadd.f32 %v1192, %v1244
    %v1249 = vld [vmem:[%s795] sm:$0xf]
    %v1250 = vld [vmem:[%s795 + $0x4] sm:$0xf]
    %v1253 = vunpack.c.l.b16 %v1249
    %v1254 = vunpack.c.l.b16 %v1250
    %v1255 = vpack.c.b16 %v1254, %v1253
    %1256 = vrot.lane.b32.xlu0 %v1137, 32
    %v1257 = vpop.permute.xlu0 %1256
    %v1260 = vsel %vm691, %v1255, 0
    %1262 = vmatprep.subr.bf16.mxu0 0
    %1263 = vmatpush1.bf16.msra.mxu0 0
    %1264 = vmatprep.subr.bf16.mxu0 0
    %1265 = vmatpush1.bf16.msra.mxu0 0
    %1266 = vmatprep.subr.bf16.mxu0 0
    %1267 = vmatpush1.bf16.msra.mxu0 0
    %1268 = vmatprep.subr.bf16.mxu0 0
    %1269 = vmatpush1.bf16.msra.mxu0 0
    %1270 = vmatprep.subr.bf16.mxu0 0
    %1271 = vmatpush1.bf16.msra.mxu0 0
    %1272 = vmatprep.subr.bf16.mxu0 0
    %1273 = vmatpush1.bf16.msra.mxu0 0
    %1274 = vmatprep.subr.bf16.mxu0 0
    %1275 = vmatpush1.bf16.msra.mxu0 0
    %1276 = vmatprep.subr.bf16.mxu0 0
    %1277 = vmatpush1.bf16.msra.mxu0 %v1257
    %1278 = vmatprep.subr.bf16.mxu0 0
    %1279 = vmatpush2.bf16.msra.mxu0 0
    %1280 = vmatprep.subr.bf16.mxu0 0
    %1281 = vmatpush2.bf16.msra.mxu0 0
    %1282 = vmatprep.subr.bf16.mxu0 0
    %1283 = vmatpush2.bf16.msra.mxu0 0
    %1284 = vmatprep.subr.bf16.mxu0 0
    %1285 = vmatpush2.bf16.msra.mxu0 0
    %1286 = vmatprep.subr.bf16.mxu0 0
    %1287 = vmatpush2.bf16.msra.mxu0 0
    %1288 = vmatprep.subr.bf16.mxu0 0
    %1289 = vmatpush2.bf16.msra.mxu0 0
    %1290 = vmatprep.subr.bf16.mxu0 0
    %1291 = vmatpush2.bf16.msra.mxu0 0
    %1292 = vmatprep.subr.bf16.mxu0 0
    %1293 = vmatpush2.bf16.msra.mxu0 0
    %1294 = vmatprep.mubr.bf16.mxu0 0
    %1295 = vmatmul.mubr.bf16.gmra.mxu0 %v1260
    %v1296 = vpop.f32.mrf.mxu0
    %v1297 = vadd.f32 0.0, %v1296
    %v1298 = vpop.f32.mrf.mxu0
    %v1299 = vpop.f32.mrf.mxu0
    %v1300 = vadd.f32 0.0, %v1299
    %v1301 = vpop.f32.mrf.mxu0
    %1302 = vdwg.mxu0
    %v1303 = vadd.f32 %v1247, %v1297
    %v1304 = vadd.f32 %v1248, %v1300
    %v1305 = vld [vmem:[%s852] sm:$0xf]
    %v1306 = vld [vmem:[%s852 + $0x4] sm:$0xf]
    %v1307 = vpack.c.bf16 %v616, %v612
    %v1310 = vunpack.c.l.b16 %v1305
    %v1311 = vunpack.c.l.b16 %v1306
    %v1312 = vpack.c.b16 %v1311, %v1310
    %v1314 = vsel %vm691, %v1312, 0
    %1316 = vmatprep.subr.bf16.mxu0 0
    %1317 = vmatpush1.bf16.msra.mxu0 0
    %1318 = vmatprep.subr.bf16.mxu0 0
    %1319 = vmatpush1.bf16.msra.mxu0 0
    %1320 = vmatprep.subr.bf16.mxu0 0
    %1321 = vmatpush1.bf16.msra.mxu0 0
    %1322 = vmatprep.subr.bf16.mxu0 0
    %1323 = vmatpush1.bf16.msra.mxu0 0
    %1324 = vmatprep.subr.bf16.mxu0 0
    %1325 = vmatpush1.bf16.msra.mxu0 0
    %1326 = vmatprep.subr.bf16.mxu0 0
    %1327 = vmatpush1.bf16.msra.mxu0 0
    %1328 = vmatprep.subr.bf16.mxu0 0
    %1329 = vmatpush1.bf16.msra.mxu0 0
    %1330 = vmatprep.subr.bf16.mxu0 0
    %1331 = vmatpush1.bf16.msra.mxu0 %v1307
    %1332 = vmatprep.subr.bf16.mxu0 0
    %1333 = vmatpush2.bf16.msra.mxu0 0
    %1334 = vmatprep.subr.bf16.mxu0 0
    %1335 = vmatpush2.bf16.msra.mxu0 0
    %1336 = vmatprep.subr.bf16.mxu0 0
    %1337 = vmatpush2.bf16.msra.mxu0 0
    %1338 = vmatprep.subr.bf16.mxu0 0
    %1339 = vmatpush2.bf16.msra.mxu0 0
    %1340 = vmatprep.subr.bf16.mxu0 0
    %1341 = vmatpush2.bf16.msra.mxu0 0
    %1342 = vmatprep.subr.bf16.mxu0 0
    %1343 = vmatpush2.bf16.msra.mxu0 0
    %1344 = vmatprep.subr.bf16.mxu0 0
    %1345 = vmatpush2.bf16.msra.mxu0 0
    %1346 = vmatprep.subr.bf16.mxu0 0
    %1347 = vmatpush2.bf16.msra.mxu0 0
    %1348 = vmatprep.mubr.bf16.mxu0 0
    %1349 = vmatmul.mubr.bf16.gmra.mxu0 %v1314
    %v1350 = vpop.f32.mrf.mxu0
    %v1351 = vadd.f32 0.0, %v1350
    %v1352 = vpop.f32.mrf.mxu0
    %v1353 = vpop.f32.mrf.mxu0
    %v1354 = vadd.f32 0.0, %v1353
    %v1355 = vpop.f32.mrf.mxu0
    %1356 = vdwg.mxu0
    %v1357 = vadd.f32 %v1303, %v1351
    %v1358 = vadd.f32 %v1304, %v1354
    %1359 = vst.msk [vmem:[#allocation3 + $0x20] sm:$0xff] %vm75, %v1357
    %1360 = vst.msk [vmem:[#allocation3 + $0x28] sm:$0xff] %vm75, %v1358
    %v1361 = vld [vmem:[%s1] sm:$0xf]
    %v1362 = vld [vmem:[%s1 + $0x4] sm:$0xf]
    %v1363 = vpack.c.bf16 %v624, %v620
    %v1366 = vunpack.c.l.b16 %v1361
    %v1367 = vunpack.c.l.b16 %v1362
    %v1368 = vpack.c.b16 %v1367, %v1366
    %1370 = vrot.lane.b32.xlu0 %v1363, 96
    %v1371 = vpop.permute.xlu0 %1370
    %v1374 = vsel %vm691, %v1368, 0
    %1376 = vmatprep.subr.bf16.mxu0 0
    %1377 = vmatpush1.bf16.msra.mxu0 0
    %1378 = vmatprep.subr.bf16.mxu0 0
    %1379 = vmatpush1.bf16.msra.mxu0 0
    %1380 = vmatprep.subr.bf16.mxu0 0
    %1381 = vmatpush1.bf16.msra.mxu0 0
    %1382 = vmatprep.subr.bf16.mxu0 0
    %1383 = vmatpush1.bf16.msra.mxu0 0
    %1384 = vmatprep.subr.bf16.mxu0 0
    %1385 = vmatpush1.bf16.msra.mxu0 0
    %1386 = vmatprep.subr.bf16.mxu0 0
    %1387 = vmatpush1.bf16.msra.mxu0 0
    %1388 = vmatprep.subr.bf16.mxu0 0
    %1389 = vmatpush1.bf16.msra.mxu0 0
    %1390 = vmatprep.subr.bf16.mxu0 0
    %1391 = vmatpush1.bf16.msra.mxu0 %v1371
    %1392 = vmatprep.subr.bf16.mxu0 0
    %1393 = vmatpush2.bf16.msra.mxu0 0
    %1394 = vmatprep.subr.bf16.mxu0 0
    %1395 = vmatpush2.bf16.msra.mxu0 0
    %1396 = vmatprep.subr.bf16.mxu0 0
    %1397 = vmatpush2.bf16.msra.mxu0 0
    %1398 = vmatprep.subr.bf16.mxu0 0
    %1399 = vmatpush2.bf16.msra.mxu0 0
    %1400 = vmatprep.subr.bf16.mxu0 0
    %1401 = vmatpush2.bf16.msra.mxu0 0
    %1402 = vmatprep.subr.bf16.mxu0 0
    %1403 = vmatpush2.bf16.msra.mxu0 0
    %1404 = vmatprep.subr.bf16.mxu0 0
    %1405 = vmatpush2.bf16.msra.mxu0 0
    %1406 = vmatprep.subr.bf16.mxu0 0
    %1407 = vmatpush2.bf16.msra.mxu0 0
    %1408 = vmatprep.mubr.bf16.mxu0 0
    %1409 = vmatmul.mubr.bf16.gmra.mxu0 %v1374
    %v1410 = vpop.f32.mrf.mxu0
    %v1411 = vadd.f32 0.0, %v1410
    %v1412 = vpop.f32.mrf.mxu0
    %v1413 = vpop.f32.mrf.mxu0
    %v1414 = vadd.f32 0.0, %v1413
    %v1415 = vpop.f32.mrf.mxu0
    %1416 = vdwg.mxu0
    %v1417 = vadd.f32 %v671, %v1411
    %v1418 = vadd.f32 %v672, %v1414
    %v1419 = vld [vmem:[%s738] sm:$0xf]
    %v1420 = vld [vmem:[%s738 + $0x4] sm:$0xf]
    %v1423 = vunpack.c.l.b16 %v1419
    %v1424 = vunpack.c.l.b16 %v1420
    %v1425 = vpack.c.b16 %v1424, %v1423
    %1426 = vrot.lane.b32.xlu0 %v1363, 64
    %v1427 = vpop.permute.xlu0 %1426
    %v1430 = vsel %vm691, %v1425, 0
    %1432 = vmatprep.subr.bf16.mxu0 0
    %1433 = vmatpush1.bf16.msra.mxu0 0
    %1434 = vmatprep.subr.bf16.mxu0 0
    %1435 = vmatpush1.bf16.msra.mxu0 0
    %1436 = vmatprep.subr.bf16.mxu0 0
    %1437 = vmatpush1.bf16.msra.mxu0 0
    %1438 = vmatprep.subr.bf16.mxu0 0
    %1439 = vmatpush1.bf16.msra.mxu0 0
    %1440 = vmatprep.subr.bf16.mxu0 0
    %1441 = vmatpush1.bf16.msra.mxu0 0
    %1442 = vmatprep.subr.bf16.mxu0 0
    %1443 = vmatpush1.bf16.msra.mxu0 0
    %1444 = vmatprep.subr.bf16.mxu0 0
    %1445 = vmatpush1.bf16.msra.mxu0 0
    %1446 = vmatprep.subr.bf16.mxu0 0
    %1447 = vmatpush1.bf16.msra.mxu0 %v1427
    %1448 = vmatprep.subr.bf16.mxu0 0
    %1449 = vmatpush2.bf16.msra.mxu0 0
    %1450 = vmatprep.subr.bf16.mxu0 0
    %1451 = vmatpush2.bf16.msra.mxu0 0
    %1452 = vmatprep.subr.bf16.mxu0 0
    %1453 = vmatpush2.bf16.msra.mxu0 0
    %1454 = vmatprep.subr.bf16.mxu0 0
    %1455 = vmatpush2.bf16.msra.mxu0 0
    %1456 = vmatprep.subr.bf16.mxu0 0
    %1457 = vmatpush2.bf16.msra.mxu0 0
    %1458 = vmatprep.subr.bf16.mxu0 0
    %1459 = vmatpush2.bf16.msra.mxu0 0
    %1460 = vmatprep.subr.bf16.mxu0 0
    %1461 = vmatpush2.bf16.msra.mxu0 0
    %1462 = vmatprep.subr.bf16.mxu0 0
    %1463 = vmatpush2.bf16.msra.mxu0 0
    %1464 = vmatprep.mubr.bf16.mxu0 0
    %1465 = vmatmul.mubr.bf16.gmra.mxu0 %v1430
    %v1466 = vpop.f32.mrf.mxu0
    %v1467 = vadd.f32 0.0, %v1466
    %v1468 = vpop.f32.mrf.mxu0
    %v1469 = vpop.f32.mrf.mxu0
    %v1470 = vadd.f32 0.0, %v1469
    %v1471 = vpop.f32.mrf.mxu0
    %1472 = vdwg.mxu0
    %v1473 = vadd.f32 %v1417, %v1467
    %v1474 = vadd.f32 %v1418, %v1470
    %v1475 = vld [vmem:[%s795] sm:$0xf]
    %v1476 = vld [vmem:[%s795 + $0x4] sm:$0xf]
    %v1479 = vunpack.c.l.b16 %v1475
    %v1480 = vunpack.c.l.b16 %v1476
    %v1481 = vpack.c.b16 %v1480, %v1479
    %1482 = vrot.lane.b32.xlu0 %v1363, 32
    %v1483 = vpop.permute.xlu0 %1482
    %v1486 = vsel %vm691, %v1481, 0
    %1488 = vmatprep.subr.bf16.mxu0 0
    %1489 = vmatpush1.bf16.msra.mxu0 0
    %1490 = vmatprep.subr.bf16.mxu0 0
    %1491 = vmatpush1.bf16.msra.mxu0 0
    %1492 = vmatprep.subr.bf16.mxu0 0
    %1493 = vmatpush1.bf16.msra.mxu0 0
    %1494 = vmatprep.subr.bf16.mxu0 0
    %1495 = vmatpush1.bf16.msra.mxu0 0
    %1496 = vmatprep.subr.bf16.mxu0 0
    %1497 = vmatpush1.bf16.msra.mxu0 0
    %1498 = vmatprep.subr.bf16.mxu0 0
    %1499 = vmatpush1.bf16.msra.mxu0 0
    %1500 = vmatprep.subr.bf16.mxu0 0
    %1501 = vmatpush1.bf16.msra.mxu0 0
    %1502 = vmatprep.subr.bf16.mxu0 0
    %1503 = vmatpush1.bf16.msra.mxu0 %v1483
    %1504 = vmatprep.subr.bf16.mxu0 0
    %1505 = vmatpush2.bf16.msra.mxu0 0
    %1506 = vmatprep.subr.bf16.mxu0 0
    %1507 = vmatpush2.bf16.msra.mxu0 0
    %1508 = vmatprep.subr.bf16.mxu0 0
    %1509 = vmatpush2.bf16.msra.mxu0 0
    %1510 = vmatprep.subr.bf16.mxu0 0
    %1511 = vmatpush2.bf16.msra.mxu0 0
    %1512 = vmatprep.subr.bf16.mxu0 0
    %1513 = vmatpush2.bf16.msra.mxu0 0
    %1514 = vmatprep.subr.bf16.mxu0 0
    %1515 = vmatpush2.bf16.msra.mxu0 0
    %1516 = vmatprep.subr.bf16.mxu0 0
    %1517 = vmatpush2.bf16.msra.mxu0 0
    %1518 = vmatprep.subr.bf16.mxu0 0
    %1519 = vmatpush2.bf16.msra.mxu0 0
    %1520 = vmatprep.mubr.bf16.mxu0 0
    %1521 = vmatmul.mubr.bf16.gmra.mxu0 %v1486
    %v1522 = vpop.f32.mrf.mxu0
    %v1523 = vadd.f32 0.0, %v1522
    %v1524 = vpop.f32.mrf.mxu0
    %v1525 = vpop.f32.mrf.mxu0
    %v1526 = vadd.f32 0.0, %v1525
    %v1527 = vpop.f32.mrf.mxu0
    %1528 = vdwg.mxu0
    %v1529 = vadd.f32 %v1473, %v1523
    %v1530 = vadd.f32 %v1474, %v1526
    %v1531 = vld [vmem:[%s852] sm:$0xf]
    %v1532 = vld [vmem:[%s852 + $0x4] sm:$0xf]
    %v1533 = vpack.c.bf16 %v626, %v622
    %v1536 = vunpack.c.l.b16 %v1531
    %v1537 = vunpack.c.l.b16 %v1532
    %v1538 = vpack.c.b16 %v1537, %v1536
    %v1540 = vsel %vm691, %v1538, 0
    %1542 = vmatprep.subr.bf16.mxu0 0
    %1543 = vmatpush1.bf16.msra.mxu0 0
    %1544 = vmatprep.subr.bf16.mxu0 0
    %1545 = vmatpush1.bf16.msra.mxu0 0
    %1546 = vmatprep.subr.bf16.mxu0 0
    %1547 = vmatpush1.bf16.msra.mxu0 0
    %1548 = vmatprep.subr.bf16.mxu0 0
    %1549 = vmatpush1.bf16.msra.mxu0 0
    %1550 = vmatprep.subr.bf16.mxu0 0
    %1551 = vmatpush1.bf16.msra.mxu0 0
    %1552 = vmatprep.subr.bf16.mxu0 0
    %1553 = vmatpush1.bf16.msra.mxu0 0
    %1554 = vmatprep.subr.bf16.mxu0 0
    %1555 = vmatpush1.bf16.msra.mxu0 0
    %1556 = vmatprep.subr.bf16.mxu0 0
    %1557 = vmatpush1.bf16.msra.mxu0 %v1533
    %1558 = vmatprep.subr.bf16.mxu0 0
    %1559 = vmatpush2.bf16.msra.mxu0 0
    %1560 = vmatprep.subr.bf16.mxu0 0
    %1561 = vmatpush2.bf16.msra.mxu0 0
    %1562 = vmatprep.subr.bf16.mxu0 0
    %1563 = vmatpush2.bf16.msra.mxu0 0
    %1564 = vmatprep.subr.bf16.mxu0 0
    %1565 = vmatpush2.bf16.msra.mxu0 0
    %1566 = vmatprep.subr.bf16.mxu0 0
    %1567 = vmatpush2.bf16.msra.mxu0 0
    %1568 = vmatprep.subr.bf16.mxu0 0
    %1569 = vmatpush2.bf16.msra.mxu0 0
    %1570 = vmatprep.subr.bf16.mxu0 0
    %1571 = vmatpush2.bf16.msra.mxu0 0
    %1572 = vmatprep.subr.bf16.mxu0 0
    %1573 = vmatpush2.bf16.msra.mxu0 0
    %1574 = vmatprep.mubr.bf16.mxu0 0
    %1575 = vmatmul.mubr.bf16.gmra.mxu0 %v1540
    %v1576 = vpop.f32.mrf.mxu0
    %v1577 = vadd.f32 0.0, %v1576
    %v1578 = vpop.f32.mrf.mxu0
    %v1579 = vpop.f32.mrf.mxu0
    %v1580 = vadd.f32 0.0, %v1579
    %v1581 = vpop.f32.mrf.mxu0
    %1582 = vdwg.mxu0
    %v1583 = vadd.f32 %v1529, %v1577
    %v1584 = vadd.f32 %v1530, %v1580
    %1585 = vst.msk [vmem:[#allocation3 + $0x30] sm:$0xff] %vm75, %v1583
    %1586 = vst.msk [vmem:[#allocation3 + $0x38] sm:$0xff] %vm75, %v1584
    %v1587 = vld [vmem:[%s1] sm:$0xf]
    %v1588 = vld [vmem:[%s1 + $0x4] sm:$0xf]
    %v1589 = vpack.c.bf16 %v634, %v630
    %v1592 = vunpack.c.l.b16 %v1587
    %v1593 = vunpack.c.l.b16 %v1588
    %v1594 = vpack.c.b16 %v1593, %v1592
    %1596 = vrot.lane.b32.xlu0 %v1589, 96
    %v1597 = vpop.permute.xlu0 %1596
    %v1600 = vsel %vm691, %v1594, 0
    %1602 = vmatprep.subr.bf16.mxu0 0
    %1603 = vmatpush1.bf16.msra.mxu0 0
    %1604 = vmatprep.subr.bf16.mxu0 0
    %1605 = vmatpush1.bf16.msra.mxu0 0
    %1606 = vmatprep.subr.bf16.mxu0 0
    %1607 = vmatpush1.bf16.msra.mxu0 0
    %1608 = vmatprep.subr.bf16.mxu0 0
    %1609 = vmatpush1.bf16.msra.mxu0 0
    %1610 = vmatprep.subr.bf16.mxu0 0
    %1611 = vmatpush1.bf16.msra.mxu0 0
    %1612 = vmatprep.subr.bf16.mxu0 0
    %1613 = vmatpush1.bf16.msra.mxu0 0
    %1614 = vmatprep.subr.bf16.mxu0 0
    %1615 = vmatpush1.bf16.msra.mxu0 0
    %1616 = vmatprep.subr.bf16.mxu0 0
    %1617 = vmatpush1.bf16.msra.mxu0 %v1597
    %1618 = vmatprep.subr.bf16.mxu0 0
    %1619 = vmatpush2.bf16.msra.mxu0 0
    %1620 = vmatprep.subr.bf16.mxu0 0
    %1621 = vmatpush2.bf16.msra.mxu0 0
    %1622 = vmatprep.subr.bf16.mxu0 0
    %1623 = vmatpush2.bf16.msra.mxu0 0
    %1624 = vmatprep.subr.bf16.mxu0 0
    %1625 = vmatpush2.bf16.msra.mxu0 0
    %1626 = vmatprep.subr.bf16.mxu0 0
    %1627 = vmatpush2.bf16.msra.mxu0 0
    %1628 = vmatprep.subr.bf16.mxu0 0
    %1629 = vmatpush2.bf16.msra.mxu0 0
    %1630 = vmatprep.subr.bf16.mxu0 0
    %1631 = vmatpush2.bf16.msra.mxu0 0
    %1632 = vmatprep.subr.bf16.mxu0 0
    %1633 = vmatpush2.bf16.msra.mxu0 0
    %1634 = vmatprep.mubr.bf16.mxu0 0
    %1635 = vmatmul.mubr.bf16.gmra.mxu0 %v1600
    %v1636 = vpop.f32.mrf.mxu0
    %v1637 = vadd.f32 0.0, %v1636
    %v1638 = vpop.f32.mrf.mxu0
    %v1639 = vpop.f32.mrf.mxu0
    %v1640 = vadd.f32 0.0, %v1639
    %v1641 = vpop.f32.mrf.mxu0
    %1642 = vdwg.mxu0
    %v1643 = vadd.f32 %v673, %v1637
    %v1644 = vadd.f32 %v674, %v1640
    %v1645 = vld [vmem:[%s738] sm:$0xf]
    %v1646 = vld [vmem:[%s738 + $0x4] sm:$0xf]
    %v1649 = vunpack.c.l.b16 %v1645
    %v1650 = vunpack.c.l.b16 %v1646
    %v1651 = vpack.c.b16 %v1650, %v1649
    %1652 = vrot.lane.b32.xlu0 %v1589, 64
    %v1653 = vpop.permute.xlu0 %1652
    %v1656 = vsel %vm691, %v1651, 0
    %1658 = vmatprep.subr.bf16.mxu0 0
    %1659 = vmatpush1.bf16.msra.mxu0 0
    %1660 = vmatprep.subr.bf16.mxu0 0
    %1661 = vmatpush1.bf16.msra.mxu0 0
    %1662 = vmatprep.subr.bf16.mxu0 0
    %1663 = vmatpush1.bf16.msra.mxu0 0
    %1664 = vmatprep.subr.bf16.mxu0 0
    %1665 = vmatpush1.bf16.msra.mxu0 0
    %1666 = vmatprep.subr.bf16.mxu0 0
    %1667 = vmatpush1.bf16.msra.mxu0 0
    %1668 = vmatprep.subr.bf16.mxu0 0
    %1669 = vmatpush1.bf16.msra.mxu0 0
    %1670 = vmatprep.subr.bf16.mxu0 0
    %1671 = vmatpush1.bf16.msra.mxu0 0
    %1672 = vmatprep.subr.bf16.mxu0 0
    %1673 = vmatpush1.bf16.msra.mxu0 %v1653
    %1674 = vmatprep.subr.bf16.mxu0 0
    %1675 = vmatpush2.bf16.msra.mxu0 0
    %1676 = vmatprep.subr.bf16.mxu0 0
    %1677 = vmatpush2.bf16.msra.mxu0 0
    %1678 = vmatprep.subr.bf16.mxu0 0
    %1679 = vmatpush2.bf16.msra.mxu0 0
    %1680 = vmatprep.subr.bf16.mxu0 0
    %1681 = vmatpush2.bf16.msra.mxu0 0
    %1682 = vmatprep.subr.bf16.mxu0 0
    %1683 = vmatpush2.bf16.msra.mxu0 0
    %1684 = vmatprep.subr.bf16.mxu0 0
    %1685 = vmatpush2.bf16.msra.mxu0 0
    %1686 = vmatprep.subr.bf16.mxu0 0
    %1687 = vmatpush2.bf16.msra.mxu0 0
    %1688 = vmatprep.subr.bf16.mxu0 0
    %1689 = vmatpush2.bf16.msra.mxu0 0
    %1690 = vmatprep.mubr.bf16.mxu0 0
    %1691 = vmatmul.mubr.bf16.gmra.mxu0 %v1656
    %v1692 = vpop.f32.mrf.mxu0
    %v1693 = vadd.f32 0.0, %v1692
    %v1694 = vpop.f32.mrf.mxu0
    %v1695 = vpop.f32.mrf.mxu0
    %v1696 = vadd.f32 0.0, %v1695
    %v1697 = vpop.f32.mrf.mxu0
    %1698 = vdwg.mxu0
    %v1699 = vadd.f32 %v1643, %v1693
    %v1700 = vadd.f32 %v1644, %v1696
    %v1701 = vld [vmem:[%s795] sm:$0xf]
    %v1702 = vld [vmem:[%s795 + $0x4] sm:$0xf]
    %v1705 = vunpack.c.l.b16 %v1701
    %v1706 = vunpack.c.l.b16 %v1702
    %v1707 = vpack.c.b16 %v1706, %v1705
    %1708 = vrot.lane.b32.xlu0 %v1589, 32
    %v1709 = vpop.permute.xlu0 %1708
    %v1712 = vsel %vm691, %v1707, 0
    %1714 = vmatprep.subr.bf16.mxu0 0
    %1715 = vmatpush1.bf16.msra.mxu0 0
    %1716 = vmatprep.subr.bf16.mxu0 0
    %1717 = vmatpush1.bf16.msra.mxu0 0
    %1718 = vmatprep.subr.bf16.mxu0 0
    %1719 = vmatpush1.bf16.msra.mxu0 0
    %1720 = vmatprep.subr.bf16.mxu0 0
    %1721 = vmatpush1.bf16.msra.mxu0 0
    %1722 = vmatprep.subr.bf16.mxu0 0
    %1723 = vmatpush1.bf16.msra.mxu0 0
    %1724 = vmatprep.subr.bf16.mxu0 0
    %1725 = vmatpush1.bf16.msra.mxu0 0
    %1726 = vmatprep.subr.bf16.mxu0 0
    %1727 = vmatpush1.bf16.msra.mxu0 0
    %1728 = vmatprep.subr.bf16.mxu0 0
    %1729 = vmatpush1.bf16.msra.mxu0 %v1709
    %1730 = vmatprep.subr.bf16.mxu0 0
    %1731 = vmatpush2.bf16.msra.mxu0 0
    %1732 = vmatprep.subr.bf16.mxu0 0
    %1733 = vmatpush2.bf16.msra.mxu0 0
    %1734 = vmatprep.subr.bf16.mxu0 0
    %1735 = vmatpush2.bf16.msra.mxu0 0
    %1736 = vmatprep.subr.bf16.mxu0 0
    %1737 = vmatpush2.bf16.msra.mxu0 0
    %1738 = vmatprep.subr.bf16.mxu0 0
    %1739 = vmatpush2.bf16.msra.mxu0 0
    %1740 = vmatprep.subr.bf16.mxu0 0
    %1741 = vmatpush2.bf16.msra.mxu0 0
    %1742 = vmatprep.subr.bf16.mxu0 0
    %1743 = vmatpush2.bf16.msra.mxu0 0
    %1744 = vmatprep.subr.bf16.mxu0 0
    %1745 = vmatpush2.bf16.msra.mxu0 0
    %1746 = vmatprep.mubr.bf16.mxu0 0
    %1747 = vmatmul.mubr.bf16.gmra.mxu0 %v1712
    %v1748 = vpop.f32.mrf.mxu0
    %v1749 = vadd.f32 0.0, %v1748
    %v1750 = vpop.f32.mrf.mxu0
    %v1751 = vpop.f32.mrf.mxu0
    %v1752 = vadd.f32 0.0, %v1751
    %v1753 = vpop.f32.mrf.mxu0
    %1754 = vdwg.mxu0
    %v1755 = vadd.f32 %v1699, %v1749
    %v1756 = vadd.f32 %v1700, %v1752
    %v1757 = vld [vmem:[%s852] sm:$0xf]
    %v1758 = vld [vmem:[%s852 + $0x4] sm:$0xf]
    %v1759 = vpack.c.bf16 %v636, %v632
    %v1762 = vunpack.c.l.b16 %v1757
    %v1763 = vunpack.c.l.b16 %v1758
    %v1764 = vpack.c.b16 %v1763, %v1762
    %v1766 = vsel %vm691, %v1764, 0
    %1768 = vmatprep.subr.bf16.mxu0 0
    %1769 = vmatpush1.bf16.msra.mxu0 0
    %1770 = vmatprep.subr.bf16.mxu0 0
    %1771 = vmatpush1.bf16.msra.mxu0 0
    %1772 = vmatprep.subr.bf16.mxu0 0
    %1773 = vmatpush1.bf16.msra.mxu0 0
    %1774 = vmatprep.subr.bf16.mxu0 0
    %1775 = vmatpush1.bf16.msra.mxu0 0
    %1776 = vmatprep.subr.bf16.mxu0 0
    %1777 = vmatpush1.bf16.msra.mxu0 0
    %1778 = vmatprep.subr.bf16.mxu0 0
    %1779 = vmatpush1.bf16.msra.mxu0 0
    %1780 = vmatprep.subr.bf16.mxu0 0
    %1781 = vmatpush1.bf16.msra.mxu0 0
    %1782 = vmatprep.subr.bf16.mxu0 0
    %1783 = vmatpush1.bf16.msra.mxu0 %v1759
    %1784 = vmatprep.subr.bf16.mxu0 0
    %1785 = vmatpush2.bf16.msra.mxu0 0
    %1786 = vmatprep.subr.bf16.mxu0 0
    %1787 = vmatpush2.bf16.msra.mxu0 0
    %1788 = vmatprep.subr.bf16.mxu0 0
    %1789 = vmatpush2.bf16.msra.mxu0 0
    %1790 = vmatprep.subr.bf16.mxu0 0
    %1791 = vmatpush2.bf16.msra.mxu0 0
    %1792 = vmatprep.subr.bf16.mxu0 0
    %1793 = vmatpush2.bf16.msra.mxu0 0
    %1794 = vmatprep.subr.bf16.mxu0 0
    %1795 = vmatpush2.bf16.msra.mxu0 0
    %1796 = vmatprep.subr.bf16.mxu0 0
    %1797 = vmatpush2.bf16.msra.mxu0 0
    %1798 = vmatprep.subr.bf16.mxu0 0
    %1799 = vmatpush2.bf16.msra.mxu0 0
    %1800 = vmatprep.mubr.bf16.mxu0 0
    %1801 = vmatmul.mubr.bf16.gmra.mxu0 %v1766
    %v1802 = vpop.f32.mrf.mxu0
    %v1803 = vadd.f32 0.0, %v1802
    %v1804 = vpop.f32.mrf.mxu0
    %v1805 = vpop.f32.mrf.mxu0
    %v1806 = vadd.f32 0.0, %v1805
    %v1807 = vpop.f32.mrf.mxu0
    %1808 = vdwg.mxu0
    %v1809 = vadd.f32 %v1755, %v1803
    %v1810 = vadd.f32 %v1756, %v1806
    %1811 = vst.msk [vmem:[#allocation3 + $0x40] sm:$0xff] %vm75, %v1809
    %1812 = vst.msk [vmem:[#allocation3 + $0x48] sm:$0xff] %vm75, %v1810
    %v1813 = vld [vmem:[%s1] sm:$0xf]
    %v1814 = vld [vmem:[%s1 + $0x4] sm:$0xf]
    %v1815 = vpack.c.bf16 %v644, %v640
    %v1818 = vunpack.c.l.b16 %v1813
    %v1819 = vunpack.c.l.b16 %v1814
    %v1820 = vpack.c.b16 %v1819, %v1818
    %1822 = vrot.lane.b32.xlu0 %v1815, 96
    %v1823 = vpop.permute.xlu0 %1822
    %v1826 = vsel %vm691, %v1820, 0
    %1828 = vmatprep.subr.bf16.mxu0 0
    %1829 = vmatpush1.bf16.msra.mxu0 0
    %1830 = vmatprep.subr.bf16.mxu0 0
    %1831 = vmatpush1.bf16.msra.mxu0 0
    %1832 = vmatprep.subr.bf16.mxu0 0
    %1833 = vmatpush1.bf16.msra.mxu0 0
    %1834 = vmatprep.subr.bf16.mxu0 0
    %1835 = vmatpush1.bf16.msra.mxu0 0
    %1836 = vmatprep.subr.bf16.mxu0 0
    %1837 = vmatpush1.bf16.msra.mxu0 0
    %1838 = vmatprep.subr.bf16.mxu0 0
    %1839 = vmatpush1.bf16.msra.mxu0 0
    %1840 = vmatprep.subr.bf16.mxu0 0
    %1841 = vmatpush1.bf16.msra.mxu0 0
    %1842 = vmatprep.subr.bf16.mxu0 0
    %1843 = vmatpush1.bf16.msra.mxu0 %v1823
    %1844 = vmatprep.subr.bf16.mxu0 0
    %1845 = vmatpush2.bf16.msra.mxu0 0
    %1846 = vmatprep.subr.bf16.mxu0 0
    %1847 = vmatpush2.bf16.msra.mxu0 0
    %1848 = vmatprep.subr.bf16.mxu0 0
    %1849 = vmatpush2.bf16.msra.mxu0 0
    %1850 = vmatprep.subr.bf16.mxu0 0
    %1851 = vmatpush2.bf16.msra.mxu0 0
    %1852 = vmatprep.subr.bf16.mxu0 0
    %1853 = vmatpush2.bf16.msra.mxu0 0
    %1854 = vmatprep.subr.bf16.mxu0 0
    %1855 = vmatpush2.bf16.msra.mxu0 0
    %1856 = vmatprep.subr.bf16.mxu0 0
    %1857 = vmatpush2.bf16.msra.mxu0 0
    %1858 = vmatprep.subr.bf16.mxu0 0
    %1859 = vmatpush2.bf16.msra.mxu0 0
    %1860 = vmatprep.mubr.bf16.mxu0 0
    %1861 = vmatmul.mubr.bf16.gmra.mxu0 %v1826
    %v1862 = vpop.f32.mrf.mxu0
    %v1863 = vadd.f32 0.0, %v1862
    %v1864 = vpop.f32.mrf.mxu0
    %v1865 = vpop.f32.mrf.mxu0
    %v1866 = vadd.f32 0.0, %v1865
    %v1867 = vpop.f32.mrf.mxu0
    %1868 = vdwg.mxu0
    %v1869 = vadd.f32 %v675, %v1863
    %v1870 = vadd.f32 %v676, %v1866
    %v1871 = vld [vmem:[%s738] sm:$0xf]
    %v1872 = vld [vmem:[%s738 + $0x4] sm:$0xf]
    %v1875 = vunpack.c.l.b16 %v1871
    %v1876 = vunpack.c.l.b16 %v1872
    %v1877 = vpack.c.b16 %v1876, %v1875
    %1878 = vrot.lane.b32.xlu0 %v1815, 64
    %v1879 = vpop.permute.xlu0 %1878
    %v1882 = vsel %vm691, %v1877, 0
    %1884 = vmatprep.subr.bf16.mxu0 0
    %1885 = vmatpush1.bf16.msra.mxu0 0
    %1886 = vmatprep.subr.bf16.mxu0 0
    %1887 = vmatpush1.bf16.msra.mxu0 0
    %1888 = vmatprep.subr.bf16.mxu0 0
    %1889 = vmatpush1.bf16.msra.mxu0 0
    %1890 = vmatprep.subr.bf16.mxu0 0
    %1891 = vmatpush1.bf16.msra.mxu0 0
    %1892 = vmatprep.subr.bf16.mxu0 0
    %1893 = vmatpush1.bf16.msra.mxu0 0
    %1894 = vmatprep.subr.bf16.mxu0 0
    %1895 = vmatpush1.bf16.msra.mxu0 0
    %1896 = vmatprep.subr.bf16.mxu0 0
    %1897 = vmatpush1.bf16.msra.mxu0 0
    %1898 = vmatprep.subr.bf16.mxu0 0
    %1899 = vmatpush1.bf16.msra.mxu0 %v1879
    %1900 = vmatprep.subr.bf16.mxu0 0
    %1901 = vmatpush2.bf16.msra.mxu0 0
    %1902 = vmatprep.subr.bf16.mxu0 0
    %1903 = vmatpush2.bf16.msra.mxu0 0
    %1904 = vmatprep.subr.bf16.mxu0 0
    %1905 = vmatpush2.bf16.msra.mxu0 0
    %1906 = vmatprep.subr.bf16.mxu0 0
    %1907 = vmatpush2.bf16.msra.mxu0 0
    %1908 = vmatprep.subr.bf16.mxu0 0
    %1909 = vmatpush2.bf16.msra.mxu0 0
    %1910 = vmatprep.subr.bf16.mxu0 0
    %1911 = vmatpush2.bf16.msra.mxu0 0
    %1912 = vmatprep.subr.bf16.mxu0 0
    %1913 = vmatpush2.bf16.msra.mxu0 0
    %1914 = vmatprep.subr.bf16.mxu0 0
    %1915 = vmatpush2.bf16.msra.mxu0 0
    %1916 = vmatprep.mubr.bf16.mxu0 0
    %1917 = vmatmul.mubr.bf16.gmra.mxu0 %v1882
    %v1918 = vpop.f32.mrf.mxu0
    %v1919 = vadd.f32 0.0, %v1918
    %v1920 = vpop.f32.mrf.mxu0
    %v1921 = vpop.f32.mrf.mxu0
    %v1922 = vadd.f32 0.0, %v1921
    %v1923 = vpop.f32.mrf.mxu0
    %1924 = vdwg.mxu0
    %v1925 = vadd.f32 %v1869, %v1919
    %v1926 = vadd.f32 %v1870, %v1922
    %v1927 = vld [vmem:[%s795] sm:$0xf]
    %v1928 = vld [vmem:[%s795 + $0x4] sm:$0xf]
    %v1931 = vunpack.c.l.b16 %v1927
    %v1932 = vunpack.c.l.b16 %v1928
    %v1933 = vpack.c.b16 %v1932, %v1931
    %1934 = vrot.lane.b32.xlu0 %v1815, 32
    %v1935 = vpop.permute.xlu0 %1934
    %v1938 = vsel %vm691, %v1933, 0
    %1940 = vmatprep.subr.bf16.mxu0 0
    %1941 = vmatpush1.bf16.msra.mxu0 0
    %1942 = vmatprep.subr.bf16.mxu0 0
    %1943 = vmatpush1.bf16.msra.mxu0 0
    %1944 = vmatprep.subr.bf16.mxu0 0
    %1945 = vmatpush1.bf16.msra.mxu0 0
    %1946 = vmatprep.subr.bf16.mxu0 0
    %1947 = vmatpush1.bf16.msra.mxu0 0
    %1948 = vmatprep.subr.bf16.mxu0 0
    %1949 = vmatpush1.bf16.msra.mxu0 0
    %1950 = vmatprep.subr.bf16.mxu0 0
    %1951 = vmatpush1.bf16.msra.mxu0 0
    %1952 = vmatprep.subr.bf16.mxu0 0
    %1953 = vmatpush1.bf16.msra.mxu0 0
    %1954 = vmatprep.subr.bf16.mxu0 0
    %1955 = vmatpush1.bf16.msra.mxu0 %v1935
    %1956 = vmatprep.subr.bf16.mxu0 0
    %1957 = vmatpush2.bf16.msra.mxu0 0
    %1958 = vmatprep.subr.bf16.mxu0 0
    %1959 = vmatpush2.bf16.msra.mxu0 0
    %1960 = vmatprep.subr.bf16.mxu0 0
    %1961 = vmatpush2.bf16.msra.mxu0 0
    %1962 = vmatprep.subr.bf16.mxu0 0
    %1963 = vmatpush2.bf16.msra.mxu0 0
    %1964 = vmatprep.subr.bf16.mxu0 0
    %1965 = vmatpush2.bf16.msra.mxu0 0
    %1966 = vmatprep.subr.bf16.mxu0 0
    %1967 = vmatpush2.bf16.msra.mxu0 0
    %1968 = vmatprep.subr.bf16.mxu0 0
    %1969 = vmatpush2.bf16.msra.mxu0 0
    %1970 = vmatprep.subr.bf16.mxu0 0
    %1971 = vmatpush2.bf16.msra.mxu0 0
    %1972 = vmatprep.mubr.bf16.mxu0 0
    %1973 = vmatmul.mubr.bf16.gmra.mxu0 %v1938
    %v1974 = vpop.f32.mrf.mxu0
    %v1975 = vadd.f32 0.0, %v1974
    %v1976 = vpop.f32.mrf.mxu0
    %v1977 = vpop.f32.mrf.mxu0
    %v1978 = vadd.f32 0.0, %v1977
    %v1979 = vpop.f32.mrf.mxu0
    %1980 = vdwg.mxu0
    %v1981 = vadd.f32 %v1925, %v1975
    %v1982 = vadd.f32 %v1926, %v1978
    %v1983 = vld [vmem:[%s852] sm:$0xf]
    %v1984 = vld [vmem:[%s852 + $0x4] sm:$0xf]
    %v1985 = vpack.c.bf16 %v646, %v642
    %v1988 = vunpack.c.l.b16 %v1983
    %v1989 = vunpack.c.l.b16 %v1984
    %v1990 = vpack.c.b16 %v1989, %v1988
    %v1992 = vsel %vm691, %v1990, 0
    %1994 = vmatprep.subr.bf16.mxu0 0
    %1995 = vmatpush1.bf16.msra.mxu0 0
    %1996 = vmatprep.subr.bf16.mxu0 0
    %1997 = vmatpush1.bf16.msra.mxu0 0
    %1998 = vmatprep.subr.bf16.mxu0 0
    %1999 = vmatpush1.bf16.msra.mxu0 0
    %2000 = vmatprep.subr.bf16.mxu0 0
    %2001 = vmatpush1.bf16.msra.mxu0 0
    %2002 = vmatprep.subr.bf16.mxu0 0
    %2003 = vmatpush1.bf16.msra.mxu0 0
    %2004 = vmatprep.subr.bf16.mxu0 0
    %2005 = vmatpush1.bf16.msra.mxu0 0
    %2006 = vmatprep.subr.bf16.mxu0 0
    %2007 = vmatpush1.bf16.msra.mxu0 0
    %2008 = vmatprep.subr.bf16.mxu0 0
    %2009 = vmatpush1.bf16.msra.mxu0 %v1985
    %2010 = vmatprep.subr.bf16.mxu0 0
    %2011 = vmatpush2.bf16.msra.mxu0 0
    %2012 = vmatprep.subr.bf16.mxu0 0
    %2013 = vmatpush2.bf16.msra.mxu0 0
    %2014 = vmatprep.subr.bf16.mxu0 0
    %2015 = vmatpush2.bf16.msra.mxu0 0
    %2016 = vmatprep.subr.bf16.mxu0 0
    %2017 = vmatpush2.bf16.msra.mxu0 0
    %2018 = vmatprep.subr.bf16.mxu0 0
    %2019 = vmatpush2.bf16.msra.mxu0 0
    %2020 = vmatprep.subr.bf16.mxu0 0
    %2021 = vmatpush2.bf16.msra.mxu0 0
    %2022 = vmatprep.subr.bf16.mxu0 0
    %2023 = vmatpush2.bf16.msra.mxu0 0
    %2024 = vmatprep.subr.bf16.mxu0 0
    %2025 = vmatpush2.bf16.msra.mxu0 0
    %2026 = vmatprep.mubr.bf16.mxu0 0
    %2027 = vmatmul.mubr.bf16.gmra.mxu0 %v1992
    %v2028 = vpop.f32.mrf.mxu0
    %v2029 = vadd.f32 0.0, %v2028
    %v2030 = vpop.f32.mrf.mxu0
    %v2031 = vpop.f32.mrf.mxu0
    %v2032 = vadd.f32 0.0, %v2031
    %v2033 = vpop.f32.mrf.mxu0
    %2034 = vdwg.mxu0
    %v2035 = vadd.f32 %v1981, %v2029
    %v2036 = vadd.f32 %v1982, %v2032
    %2037 = vst.msk [vmem:[#allocation3 + $0x50] sm:$0xff] %vm75, %v2035
    %2038 = vst.msk [vmem:[#allocation3 + $0x58] sm:$0xff] %vm75, %v2036
    %v2039 = vld [vmem:[%s1] sm:$0xf]
    %v2040 = vld [vmem:[%s1 + $0x4] sm:$0xf]
    %v2041 = vpack.c.bf16 %v654, %v650
    %v2044 = vunpack.c.l.b16 %v2039
    %v2045 = vunpack.c.l.b16 %v2040
    %v2046 = vpack.c.b16 %v2045, %v2044
    %2048 = vrot.lane.b32.xlu0 %v2041, 96
    %v2049 = vpop.permute.xlu0 %2048
    %v2052 = vsel %vm691, %v2046, 0
    %2054 = vmatprep.subr.bf16.mxu0 0
    %2055 = vmatpush1.bf16.msra.mxu0 0
    %2056 = vmatprep.subr.bf16.mxu0 0
    %2057 = vmatpush1.bf16.msra.mxu0 0
    %2058 = vmatprep.subr.bf16.mxu0 0
    %2059 = vmatpush1.bf16.msra.mxu0 0
    %2060 = vmatprep.subr.bf16.mxu0 0
    %2061 = vmatpush1.bf16.msra.mxu0 0
    %2062 = vmatprep.subr.bf16.mxu0 0
    %2063 = vmatpush1.bf16.msra.mxu0 0
    %2064 = vmatprep.subr.bf16.mxu0 0
    %2065 = vmatpush1.bf16.msra.mxu0 0
    %2066 = vmatprep.subr.bf16.mxu0 0
    %2067 = vmatpush1.bf16.msra.mxu0 0
    %2068 = vmatprep.subr.bf16.mxu0 0
    %2069 = vmatpush1.bf16.msra.mxu0 %v2049
    %2070 = vmatprep.subr.bf16.mxu0 0
    %2071 = vmatpush2.bf16.msra.mxu0 0
    %2072 = vmatprep.subr.bf16.mxu0 0
    %2073 = vmatpush2.bf16.msra.mxu0 0
    %2074 = vmatprep.subr.bf16.mxu0 0
    %2075 = vmatpush2.bf16.msra.mxu0 0
    %2076 = vmatprep.subr.bf16.mxu0 0
    %2077 = vmatpush2.bf16.msra.mxu0 0
    %2078 = vmatprep.subr.bf16.mxu0 0
    %2079 = vmatpush2.bf16.msra.mxu0 0
    %2080 = vmatprep.subr.bf16.mxu0 0
    %2081 = vmatpush2.bf16.msra.mxu0 0
    %2082 = vmatprep.subr.bf16.mxu0 0
    %2083 = vmatpush2.bf16.msra.mxu0 0
    %2084 = vmatprep.subr.bf16.mxu0 0
    %2085 = vmatpush2.bf16.msra.mxu0 0
    %2086 = vmatprep.mubr.bf16.mxu0 0
    %2087 = vmatmul.mubr.bf16.gmra.mxu0 %v2052
    %v2088 = vpop.f32.mrf.mxu0
    %v2089 = vadd.f32 0.0, %v2088
    %v2090 = vpop.f32.mrf.mxu0
    %v2091 = vpop.f32.mrf.mxu0
    %v2092 = vadd.f32 0.0, %v2091
    %v2093 = vpop.f32.mrf.mxu0
    %2094 = vdwg.mxu0
    %v2095 = vadd.f32 %v677, %v2089
    %v2096 = vadd.f32 %v678, %v2092
    %v2097 = vld [vmem:[%s738] sm:$0xf]
    %v2098 = vld [vmem:[%s738 + $0x4] sm:$0xf]
    %v2101 = vunpack.c.l.b16 %v2097
    %v2102 = vunpack.c.l.b16 %v2098
    %v2103 = vpack.c.b16 %v2102, %v2101
    %2104 = vrot.lane.b32.xlu0 %v2041, 64
    %v2105 = vpop.permute.xlu0 %2104
    %v2108 = vsel %vm691, %v2103, 0
    %2110 = vmatprep.subr.bf16.mxu0 0
    %2111 = vmatpush1.bf16.msra.mxu0 0
    %2112 = vmatprep.subr.bf16.mxu0 0
    %2113 = vmatpush1.bf16.msra.mxu0 0
    %2114 = vmatprep.subr.bf16.mxu0 0
    %2115 = vmatpush1.bf16.msra.mxu0 0
    %2116 = vmatprep.subr.bf16.mxu0 0
    %2117 = vmatpush1.bf16.msra.mxu0 0
    %2118 = vmatprep.subr.bf16.mxu0 0
    %2119 = vmatpush1.bf16.msra.mxu0 0
    %2120 = vmatprep.subr.bf16.mxu0 0
    %2121 = vmatpush1.bf16.msra.mxu0 0
    %2122 = vmatprep.subr.bf16.mxu0 0
    %2123 = vmatpush1.bf16.msra.mxu0 0
    %2124 = vmatprep.subr.bf16.mxu0 0
    %2125 = vmatpush1.bf16.msra.mxu0 %v2105
    %2126 = vmatprep.subr.bf16.mxu0 0
    %2127 = vmatpush2.bf16.msra.mxu0 0
    %2128 = vmatprep.subr.bf16.mxu0 0
    %2129 = vmatpush2.bf16.msra.mxu0 0
    %2130 = vmatprep.subr.bf16.mxu0 0
    %2131 = vmatpush2.bf16.msra.mxu0 0
    %2132 = vmatprep.subr.bf16.mxu0 0
    %2133 = vmatpush2.bf16.msra.mxu0 0
    %2134 = vmatprep.subr.bf16.mxu0 0
    %2135 = vmatpush2.bf16.msra.mxu0 0
    %2136 = vmatprep.subr.bf16.mxu0 0
    %2137 = vmatpush2.bf16.msra.mxu0 0
    %2138 = vmatprep.subr.bf16.mxu0 0
    %2139 = vmatpush2.bf16.msra.mxu0 0
    %2140 = vmatprep.subr.bf16.mxu0 0
    %2141 = vmatpush2.bf16.msra.mxu0 0
    %2142 = vmatprep.mubr.bf16.mxu0 0
    %2143 = vmatmul.mubr.bf16.gmra.mxu0 %v2108
    %v2144 = vpop.f32.mrf.mxu0
    %v2145 = vadd.f32 0.0, %v2144
    %v2146 = vpop.f32.mrf.mxu0
    %v2147 = vpop.f32.mrf.mxu0
    %v2148 = vadd.f32 0.0, %v2147
    %v2149 = vpop.f32.mrf.mxu0
    %2150 = vdwg.mxu0
    %v2151 = vadd.f32 %v2095, %v2145
    %v2152 = vadd.f32 %v2096, %v2148
    %v2153 = vld [vmem:[%s795] sm:$0xf]
    %v2154 = vld [vmem:[%s795 + $0x4] sm:$0xf]
    %v2157 = vunpack.c.l.b16 %v2153
    %v2158 = vunpack.c.l.b16 %v2154
    %v2159 = vpack.c.b16 %v2158, %v2157
    %2160 = vrot.lane.b32.xlu0 %v2041, 32
    %v2161 = vpop.permute.xlu0 %2160
    %v2164 = vsel %vm691, %v2159, 0
    %2166 = vmatprep.subr.bf16.mxu0 0
    %2167 = vmatpush1.bf16.msra.mxu0 0
    %2168 = vmatprep.subr.bf16.mxu0 0
    %2169 = vmatpush1.bf16.msra.mxu0 0
    %2170 = vmatprep.subr.bf16.mxu0 0
    %2171 = vmatpush1.bf16.msra.mxu0 0
    %2172 = vmatprep.subr.bf16.mxu0 0
    %2173 = vmatpush1.bf16.msra.mxu0 0
    %2174 = vmatprep.subr.bf16.mxu0 0
    %2175 = vmatpush1.bf16.msra.mxu0 0
    %2176 = vmatprep.subr.bf16.mxu0 0
    %2177 = vmatpush1.bf16.msra.mxu0 0
    %2178 = vmatprep.subr.bf16.mxu0 0
    %2179 = vmatpush1.bf16.msra.mxu0 0
    %2180 = vmatprep.subr.bf16.mxu0 0
    %2181 = vmatpush1.bf16.msra.mxu0 %v2161
    %2182 = vmatprep.subr.bf16.mxu0 0
    %2183 = vmatpush2.bf16.msra.mxu0 0
    %2184 = vmatprep.subr.bf16.mxu0 0
    %2185 = vmatpush2.bf16.msra.mxu0 0
    %2186 = vmatprep.subr.bf16.mxu0 0
    %2187 = vmatpush2.bf16.msra.mxu0 0
    %2188 = vmatprep.subr.bf16.mxu0 0
    %2189 = vmatpush2.bf16.msra.mxu0 0
    %2190 = vmatprep.subr.bf16.mxu0 0
    %2191 = vmatpush2.bf16.msra.mxu0 0
    %2192 = vmatprep.subr.bf16.mxu0 0
    %2193 = vmatpush2.bf16.msra.mxu0 0
    %2194 = vmatprep.subr.bf16.mxu0 0
    %2195 = vmatpush2.bf16.msra.mxu0 0
    %2196 = vmatprep.subr.bf16.mxu0 0
    %2197 = vmatpush2.bf16.msra.mxu0 0
    %2198 = vmatprep.mubr.bf16.mxu0 0
    %2199 = vmatmul.mubr.bf16.gmra.mxu0 %v2164
    %v2200 = vpop.f32.mrf.mxu0
    %v2201 = vadd.f32 0.0, %v2200
    %v2202 = vpop.f32.mrf.mxu0
    %v2203 = vpop.f32.mrf.mxu0
    %v2204 = vadd.f32 0.0, %v2203
    %v2205 = vpop.f32.mrf.mxu0
    %2206 = vdwg.mxu0
    %v2207 = vadd.f32 %v2151, %v2201
    %v2208 = vadd.f32 %v2152, %v2204
    %v2209 = vld [vmem:[%s852] sm:$0xf]
    %v2210 = vld [vmem:[%s852 + $0x4] sm:$0xf]
    %v2211 = vpack.c.bf16 %v656, %v652
    %v2214 = vunpack.c.l.b16 %v2209
    %v2215 = vunpack.c.l.b16 %v2210
    %v2216 = vpack.c.b16 %v2215, %v2214
    %v2218 = vsel %vm691, %v2216, 0
    %2220 = vmatprep.subr.bf16.mxu0 0
    %2221 = vmatpush1.bf16.msra.mxu0 0
    %2222 = vmatprep.subr.bf16.mxu0 0
    %2223 = vmatpush1.bf16.msra.mxu0 0
    %2224 = vmatprep.subr.bf16.mxu0 0
    %2225 = vmatpush1.bf16.msra.mxu0 0
    %2226 = vmatprep.subr.bf16.mxu0 0
    %2227 = vmatpush1.bf16.msra.mxu0 0
    %2228 = vmatprep.subr.bf16.mxu0 0
    %2229 = vmatpush1.bf16.msra.mxu0 0
    %2230 = vmatprep.subr.bf16.mxu0 0
    %2231 = vmatpush1.bf16.msra.mxu0 0
    %2232 = vmatprep.subr.bf16.mxu0 0
    %2233 = vmatpush1.bf16.msra.mxu0 0
    %2234 = vmatprep.subr.bf16.mxu0 0
    %2235 = vmatpush1.bf16.msra.mxu0 %v2211
    %2236 = vmatprep.subr.bf16.mxu0 0
    %2237 = vmatpush2.bf16.msra.mxu0 0
    %2238 = vmatprep.subr.bf16.mxu0 0
    %2239 = vmatpush2.bf16.msra.mxu0 0
    %2240 = vmatprep.subr.bf16.mxu0 0
    %2241 = vmatpush2.bf16.msra.mxu0 0
    %2242 = vmatprep.subr.bf16.mxu0 0
    %2243 = vmatpush2.bf16.msra.mxu0 0
    %2244 = vmatprep.subr.bf16.mxu0 0
    %2245 = vmatpush2.bf16.msra.mxu0 0
    %2246 = vmatprep.subr.bf16.mxu0 0
    %2247 = vmatpush2.bf16.msra.mxu0 0
    %2248 = vmatprep.subr.bf16.mxu0 0
    %2249 = vmatpush2.bf16.msra.mxu0 0
    %2250 = vmatprep.subr.bf16.mxu0 0
    %2251 = vmatpush2.bf16.msra.mxu0 0
    %2252 = vmatprep.mubr.bf16.mxu0 0
    %2253 = vmatmul.mubr.bf16.gmra.mxu0 %v2218
    %v2254 = vpop.f32.mrf.mxu0
    %v2255 = vadd.f32 0.0, %v2254
    %v2256 = vpop.f32.mrf.mxu0
    %v2257 = vpop.f32.mrf.mxu0
    %v2258 = vadd.f32 0.0, %v2257
    %v2259 = vpop.f32.mrf.mxu0
    %2260 = vdwg.mxu0
    %v2261 = vadd.f32 %v2207, %v2255
    %v2262 = vadd.f32 %v2208, %v2258
    %2263 = vst.msk [vmem:[#allocation3 + $0x60] sm:$0xff] %vm75, %v2261
    %2264 = vst.msk [vmem:[#allocation3 + $0x68] sm:$0xff] %vm75, %v2262
    %v2265 = vld [vmem:[%s6] sm:$0xf]
    %v2266 = vld [vmem:[%s6 + $0x4] sm:$0xf]
    %v2267 = vld [vmem:[%s6 + $0x8] sm:$0xf]
    %v2268 = vld [vmem:[%s6 + $0xc] sm:$0xf]
    %v2269 = vpack.c.bf16 %v2262, %v2261
    %v2270 = vld [vmem:[%s7] sm:$0x1]
    %v2272 = vlaneseq
    %v2273 = vshrl.u32 %v2272, 7
    %v2274 = vsub.s32 0, %v2273
    %v2275 = vrot.slane %v2270, %v2274
    %v2281 = vunpack.c.l.b16 %v2265
    %v2282 = vunpack.c.l.b16 %v2266
    %v2283 = vunpack.c.l.b16 %v2267
    %v2284 = vunpack.c.l.b16 %v2268
    %v2285 = vpack.c.b16 %v2282, %v2281
    %v2286 = vpack.c.b16 %v2284, %v2283
    %v2290 = vsel %vm75, %v2269, 0
    %2292 = vmatprep.subr.bf16.mxu0 0
    %2293 = vmatpush1.bf16.msra.mxu0 0
    %2294 = vmatprep.subr.bf16.mxu0 0
    %2295 = vmatpush1.bf16.msra.mxu0 0
    %2296 = vmatprep.subr.bf16.mxu0 0
    %2297 = vmatpush1.bf16.msra.mxu0 0
    %2298 = vmatprep.subr.bf16.mxu0 0
    %2299 = vmatpush1.bf16.msra.mxu0 0
    %2300 = vmatprep.subr.bf16.mxu0 0
    %2301 = vmatpush1.bf16.msra.mxu0 0
    %2302 = vmatprep.subr.bf16.mxu0 0
    %2303 = vmatpush1.bf16.msra.mxu0 0
    %2304 = vmatprep.subr.bf16.mxu0 0
    %2305 = vmatpush1.bf16.msra.mxu0 %v2286
    %2306 = vmatprep.subr.bf16.mxu0 0
    %2307 = vmatpush1.bf16.msra.mxu0 %v2285
    %2308 = vmatprep.subr.bf16.mxu0 0
    %2309 = vmatpush2.bf16.msra.mxu0 0
    %2310 = vmatprep.subr.bf16.mxu0 0
    %2311 = vmatpush2.bf16.msra.mxu0 0
    %2312 = vmatprep.subr.bf16.mxu0 0
    %2313 = vmatpush2.bf16.msra.mxu0 0
    %2314 = vmatprep.subr.bf16.mxu0 0
    %2315 = vmatpush2.bf16.msra.mxu0 0
    %2316 = vmatprep.subr.bf16.mxu0 0
    %2317 = vmatpush2.bf16.msra.mxu0 0
    %2318 = vmatprep.subr.bf16.mxu0 0
    %2319 = vmatpush2.bf16.msra.mxu0 0
    %2320 = vmatprep.subr.bf16.mxu0 0
    %2321 = vmatpush2.bf16.msra.mxu0 0
    %2322 = vmatprep.subr.bf16.mxu0 0
    %2323 = vmatpush2.bf16.msra.mxu0 0
    %2324 = vmatprep.mubr.bf16.mxu0 0
    %2325 = vmatmul.mubr.bf16.gmra.mxu0 %v2290
    %v2326 = vpop.f32.mrf.mxu0
    %v2327 = vadd.f32 %v2275, %v2326
    %v2328 = vpop.f32.mrf.mxu0
    %v2329 = vpop.f32.mrf.mxu0
    %v2330 = vadd.f32 %v2275, %v2329
    %v2331 = vpop.f32.mrf.mxu0
    %2332 = vdwg.mxu0
    %v2333 = vld [vmem:[#allocation3] sm:$0xff]
    %v2334 = vld [vmem:[#allocation3 + $0x8] sm:$0xff]
    %v2335 = vld [vmem:[#allocation3 + $0x10] sm:$0xff]
    %v2336 = vld [vmem:[#allocation3 + $0x18] sm:$0xff]
    %v2337 = vld [vmem:[#allocation3 + $0x20] sm:$0xff]
    %v2338 = vld [vmem:[#allocation3 + $0x28] sm:$0xff]
    %v2339 = vld [vmem:[#allocation3 + $0x30] sm:$0xff]
    %v2340 = vld [vmem:[#allocation3 + $0x38] sm:$0xff]
    %v2341 = vld [vmem:[#allocation3 + $0x40] sm:$0xff]
    %v2342 = vld [vmem:[#allocation3 + $0x48] sm:$0xff]
    %v2343 = vld [vmem:[#allocation3 + $0x50] sm:$0xff]
    %v2344 = vld [vmem:[#allocation3 + $0x58] sm:$0xff]
    %v2345 = vld [vmem:[#allocation3 + $0x60] sm:$0xff]
    %v2346 = vld [vmem:[#allocation3 + $0x68] sm:$0xff]
    %2357 = vrot.lane.b32.xlu0 %v2337, 32
    %v2358 = vpop.permute.xlu0 %2357
    %2359 = vrot.lane.b32.xlu0 %v2338, 32
    %v2360 = vpop.permute.xlu0 %2359
    %2361 = vrot.lane.b32.xlu0 %v2339, 32
    %v2362 = vpop.permute.xlu0 %2361
    %2363 = vrot.lane.b32.xlu0 %v2340, 32
    %v2364 = vpop.permute.xlu0 %2363
    %2365 = vrot.lane.b32.xlu0 %v2341, 32
    %v2366 = vpop.permute.xlu0 %2365
    %2367 = vrot.lane.b32.xlu0 %v2342, 32
    %v2368 = vpop.permute.xlu0 %2367
    %2369 = vrot.lane.b32.xlu0 %v2343, 32
    %v2370 = vpop.permute.xlu0 %2369
    %2371 = vrot.lane.b32.xlu0 %v2344, 32
    %v2372 = vpop.permute.xlu0 %2371
    %2373 = vrot.lane.b32.xlu0 %v2345, 32
    %v2374 = vpop.permute.xlu0 %2373
    %2375 = vrot.lane.b32.xlu0 %v2346, 32
    %v2376 = vpop.permute.xlu0 %2375
    %v2387 = vsel %vm75, %v2333, %v2358
    %v2388 = vsel %vm75, %v2334, %v2360
    %v2389 = vsel %vm75, %v2335, %v2362
    %v2390 = vsel %vm75, %v2336, %v2364
    %v2391 = vsel %vm75, %v2337, %v2366
    %v2392 = vsel %vm75, %v2338, %v2368
    %v2393 = vsel %vm75, %v2339, %v2370
    %v2394 = vsel %vm75, %v2340, %v2372
    %v2395 = vsel %vm75, %v2341, %v2374
    %v2396 = vsel %vm75, %v2342, %v2376
    %s2397 = scalar_lea.vmem %s2, 32
    %v2398 = vld [vmem:[%s2397] sm:$0xf]
    %v2399 = vld [vmem:[%s2397 + $0x4] sm:$0xf]
    %v2400 = vld [vmem:[%s2397 + $0x8] sm:$0xf]
    %v2401 = vld [vmem:[%s2397 + $0xc] sm:$0xf]
    %v2402 = vld [vmem:[%s2397 + $0x10] sm:$0xf]
    %v2403 = vld [vmem:[%s2397 + $0x14] sm:$0xf]
    %v2404 = vld [vmem:[%s2397 + $0x18] sm:$0xf]
    %v2405 = vld [vmem:[%s2397 + $0x1c] sm:$0xf]
    %v2406 = vpack.c.bf16 %v2388, %v2387
    %v2407 = vpack.c.bf16 %v2390, %v2389
    %v2408 = vpack.c.bf16 %v2392, %v2391
    %v2409 = vpack.c.bf16 %v2394, %v2393
    %v2410 = vpack.c.bf16 %v2396, %v2395
    %s2411 = scalar_lea.vmem %s3, 1
    %v2412 = vld [vmem:[%s2411] sm:$0x1]
    %v2414 = vlaneseq
    %v2415 = vshrl.u32 %v2414, 7
    %v2416 = vsub.s32 0, %v2415
    %v2417 = vrot.slane %v2412, %v2416
    %v2427 = vunpack.c.l.b16 %v2398
    %v2428 = vunpack.c.l.b16 %v2399
    %v2429 = vunpack.c.l.b16 %v2400
    %v2430 = vunpack.c.l.b16 %v2401
    %v2431 = vunpack.c.l.b16 %v2402
    %v2432 = vunpack.c.l.b16 %v2403
    %v2433 = vunpack.c.l.b16 %v2404
    %v2434 = vunpack.c.l.b16 %v2405
    %v2435 = vpack.c.b16 %v2428, %v2427
    %v2436 = vpack.c.b16 %v2430, %v2429
    %v2437 = vpack.c.b16 %v2432, %v2431
    %v2438 = vpack.c.b16 %v2434, %v2433
    %v2444 = vsel %vm224, %v2406, 0
    %v2447 = vsel %vm224, %v2407, 0
    %v2450 = vsel %vm224, %v2408, 0
    %v2453 = vsel %vm224, %v2409, 0
    %v2456 = vsel %vm224, %v2410, 0
    %2458 = vmatprep.subr.bf16.mxu0 0
    %2459 = vmatpush1.bf16.msra.mxu0 0
    %2460 = vmatprep.subr.bf16.mxu0 0
    %2461 = vmatpush1.bf16.msra.mxu0 0
    %2462 = vmatprep.subr.bf16.mxu0 0
    %2463 = vmatpush1.bf16.msra.mxu0 0
    %2464 = vmatprep.subr.bf16.mxu0 0
    %2465 = vmatpush1.bf16.msra.mxu0 0
    %2466 = vmatprep.subr.bf16.mxu0 0
    %2467 = vmatpush1.bf16.msra.mxu0 %v2438
    %2468 = vmatprep.subr.bf16.mxu0 0
    %2469 = vmatpush1.bf16.msra.mxu0 %v2437
    %2470 = vmatprep.subr.bf16.mxu0 0
    %2471 = vmatpush1.bf16.msra.mxu0 %v2436
    %2472 = vmatprep.subr.bf16.mxu0 0
    %2473 = vmatpush1.bf16.msra.mxu0 %v2435
    %2474 = vmatprep.subr.bf16.mxu0 0
    %2475 = vmatpush2.bf16.msra.mxu0 0
    %2476 = vmatprep.subr.bf16.mxu0 0
    %2477 = vmatpush2.bf16.msra.mxu0 0
    %2478 = vmatprep.subr.bf16.mxu0 0
    %2479 = vmatpush2.bf16.msra.mxu0 0
    %2480 = vmatprep.subr.bf16.mxu0 0
    %2481 = vmatpush2.bf16.msra.mxu0 0
    %2482 = vmatprep.subr.bf16.mxu0 0
    %2483 = vmatpush2.bf16.msra.mxu0 0
    %2484 = vmatprep.subr.bf16.mxu0 0
    %2485 = vmatpush2.bf16.msra.mxu0 0
    %2486 = vmatprep.subr.bf16.mxu0 0
    %2487 = vmatpush2.bf16.msra.mxu0 0
    %2488 = vmatprep.subr.bf16.mxu0 0
    %2489 = vmatpush2.bf16.msra.mxu0 0
    %2490 = vmatprep.mubr.bf16.mxu0 0
    %2491 = vmatmul.mubr.bf16.gmra.mxu0 %v2444
    %v2492 = vpop.f32.mrf.mxu0
    %v2493 = vadd.f32 %v2417, %v2492
    %v2494 = vpop.f32.mrf.mxu0
    %v2495 = vpop.f32.mrf.mxu0
    %v2496 = vadd.f32 %v2417, %v2495
    %v2497 = vpop.f32.mrf.mxu0
    %2498 = vmatprep.mubr.bf16.mxu0 0
    %2499 = vmatmul.mubr.bf16.gmra.mxu0 %v2447
    %v2500 = vpop.f32.mrf.mxu0
    %v2501 = vadd.f32 %v2417, %v2500
    %v2502 = vpop.f32.mrf.mxu0
    %v2503 = vpop.f32.mrf.mxu0
    %v2504 = vadd.f32 %v2417, %v2503
    %v2505 = vpop.f32.mrf.mxu0
    %2506 = vmatprep.mubr.bf16.mxu0 0
    %2507 = vmatmul.mubr.bf16.gmra.mxu0 %v2450
    %v2508 = vpop.f32.mrf.mxu0
    %v2509 = vadd.f32 %v2417, %v2508
    %v2510 = vpop.f32.mrf.mxu0
    %v2511 = vpop.f32.mrf.mxu0
    %v2512 = vadd.f32 %v2417, %v2511
    %v2513 = vpop.f32.mrf.mxu0
    %2514 = vmatprep.mubr.bf16.mxu0 0
    %2515 = vmatmul.mubr.bf16.gmra.mxu0 %v2453
    %v2516 = vpop.f32.mrf.mxu0
    %v2517 = vadd.f32 %v2417, %v2516
    %v2518 = vpop.f32.mrf.mxu0
    %v2519 = vpop.f32.mrf.mxu0
    %v2520 = vadd.f32 %v2417, %v2519
    %v2521 = vpop.f32.mrf.mxu0
    %2522 = vmatprep.mubr.bf16.mxu0 0
    %2523 = vmatmul.mubr.bf16.gmra.mxu0 %v2456
    %v2524 = vpop.f32.mrf.mxu0
    %v2525 = vadd.f32 %v2417, %v2524
    %v2526 = vpop.f32.mrf.mxu0
    %v2527 = vpop.f32.mrf.mxu0
    %v2528 = vadd.f32 %v2417, %v2527
    %v2529 = vpop.f32.mrf.mxu0
    %2530 = vdwg.mxu0
    %v2531 = vtanh.pop %v2493
    %v2532 = vtanh.pop %v2496
    %v2533 = vtanh.pop %v2501
    %v2534 = vtanh.pop %v2504
    %v2535 = vtanh.pop %v2509
    %v2536 = vtanh.pop %v2512
    %v2537 = vtanh.pop %v2517
    %v2538 = vtanh.pop %v2520
    %v2539 = vtanh.pop %v2525
    %v2540 = vtanh.pop %v2528
    %v2541 = vxor.u32 %v2493, 2147483648
    %v2542 = vxor.u32 %v2496, 2147483648
    %v2543 = vxor.u32 %v2501, 2147483648
    %v2544 = vxor.u32 %v2504, 2147483648
    %v2545 = vxor.u32 %v2509, 2147483648
    %v2546 = vxor.u32 %v2512, 2147483648
    %v2547 = vxor.u32 %v2517, 2147483648
    %v2548 = vxor.u32 %v2520, 2147483648
    %v2549 = vxor.u32 %v2525, 2147483648
    %v2550 = vxor.u32 %v2528, 2147483648
    %v2551 = vmul.f32 %v2541, 1.442695
    %v2552 = vpow.pop %v2551
    %v2553 = vmul.f32 %v2542, 1.442695
    %v2554 = vpow.pop %v2553
    %v2555 = vmul.f32 %v2543, 1.442695
    %v2556 = vpow.pop %v2555
    %v2557 = vmul.f32 %v2544, 1.442695
    %v2558 = vpow.pop %v2557
    %v2559 = vmul.f32 %v2545, 1.442695
    %v2560 = vpow.pop %v2559
    %v2561 = vmul.f32 %v2546, 1.442695
    %v2562 = vpow.pop %v2561
    %v2563 = vmul.f32 %v2547, 1.442695
    %v2564 = vpow.pop %v2563
    %v2565 = vmul.f32 %v2548, 1.442695
    %v2566 = vpow.pop %v2565
    %v2567 = vmul.f32 %v2549, 1.442695
    %v2568 = vpow.pop %v2567
    %v2569 = vmul.f32 %v2550, 1.442695
    %v2570 = vpow.pop %v2569
    %v2571 = vadd.f32 %v2552, 1.0
    %v2572 = vadd.f32 %v2554, 1.0
    %v2573 = vadd.f32 %v2556, 1.0
    %v2574 = vadd.f32 %v2558, 1.0
    %v2575 = vadd.f32 %v2560, 1.0
    %v2576 = vadd.f32 %v2562, 1.0
    %v2577 = vadd.f32 %v2564, 1.0
    %v2578 = vadd.f32 %v2566, 1.0
    %v2579 = vadd.f32 %v2568, 1.0
    %v2580 = vadd.f32 %v2570, 1.0
    %v2581 = vrcp.pop %v2571
    %v2582 = vmul.f32 1.0, %v2581
    %v2583 = vrcp.pop %v2572
    %v2584 = vmul.f32 1.0, %v2583
    %v2585 = vrcp.pop %v2573
    %v2586 = vmul.f32 1.0, %v2585
    %v2587 = vrcp.pop %v2574
    %v2588 = vmul.f32 1.0, %v2587
    %v2589 = vrcp.pop %v2575
    %v2590 = vmul.f32 1.0, %v2589
    %v2591 = vrcp.pop %v2576
    %v2592 = vmul.f32 1.0, %v2591
    %v2593 = vrcp.pop %v2577
    %v2594 = vmul.f32 1.0, %v2593
    %v2595 = vrcp.pop %v2578
    %v2596 = vmul.f32 1.0, %v2595
    %v2597 = vrcp.pop %v2579
    %v2598 = vmul.f32 1.0, %v2597
    %v2599 = vrcp.pop %v2580
    %v2600 = vmul.f32 1.0, %v2599
    %2611 = vrot.lane.b32.xlu0 %v2582, 96
    %v2612 = vpop.permute.xlu0 %2611
    %2613 = vrot.lane.b32.xlu0 %v2584, 96
    %v2614 = vpop.permute.xlu0 %2613
    %2615 = vrot.lane.b32.xlu0 %v2586, 96
    %v2616 = vpop.permute.xlu0 %2615
    %2617 = vrot.lane.b32.xlu0 %v2588, 96
    %v2618 = vpop.permute.xlu0 %2617
    %2619 = vrot.lane.b32.xlu0 %v2590, 96
    %v2620 = vpop.permute.xlu0 %2619
    %2621 = vrot.lane.b32.xlu0 %v2592, 96
    %v2622 = vpop.permute.xlu0 %2621
    %2623 = vrot.lane.b32.xlu0 %v2594, 96
    %v2624 = vpop.permute.xlu0 %2623
    %2625 = vrot.lane.b32.xlu0 %v2596, 96
    %v2626 = vpop.permute.xlu0 %2625
    %2627 = vrot.lane.b32.xlu0 %v2598, 96
    %v2628 = vpop.permute.xlu0 %2627
    %2629 = vrot.lane.b32.xlu0 %v2600, 96
    %v2630 = vpop.permute.xlu0 %2629
    %v2641 = vmul.f32 %v2531, %v2612
    %v2642 = vmul.f32 %v2532, %v2614
    %v2643 = vmul.f32 %v2533, %v2616
    %v2644 = vmul.f32 %v2534, %v2618
    %v2645 = vmul.f32 %v2535, %v2620
    %v2646 = vmul.f32 %v2536, %v2622
    %v2647 = vmul.f32 %v2537, %v2624
    %v2648 = vmul.f32 %v2538, %v2626
    %v2649 = vmul.f32 %v2539, %v2628
    %v2650 = vmul.f32 %v2540, %v2630
    %s2651 = scalar_lea.vmem %s4, 32
    %v2652 = vld [vmem:[%s2651] sm:$0xff]
    %v2653 = vld [vmem:[%s2651 + $0x8] sm:$0xff]
    %v2654 = vld [vmem:[%s2651 + $0x10] sm:$0xff]
    %v2655 = vld [vmem:[%s2651 + $0x18] sm:$0xff]
    %v2656 = vpack.c.bf16 %v2642, %v2641
    %v2657 = vpack.c.bf16 %v2644, %v2643
    %v2658 = vpack.c.bf16 %v2646, %v2645
    %v2659 = vpack.c.bf16 %v2648, %v2647
    %v2660 = vpack.c.bf16 %v2650, %v2649
    %v2665 = vunpack.c.l.b16 %v2652
    %v2666 = vunpack.c.h.b16 %v2652
    %v2667 = vunpack.c.l.b16 %v2653
    %v2668 = vunpack.c.h.b16 %v2653
    %v2669 = vunpack.c.l.b16 %v2654
    %v2670 = vunpack.c.h.b16 %v2654
    %v2671 = vunpack.c.l.b16 %v2655
    %v2672 = vunpack.c.h.b16 %v2655
    %v2673 = vpack.c.b16 %v2667, %v2665
    %v2674 = vpack.c.b16 %v2668, %v2666
    %v2675 = vpack.c.b16 %v2671, %v2669
    %v2676 = vpack.c.b16 %v2672, %v2670
    %v2682 = vsel %vm75, %v2656, 0
    %v2685 = vsel %vm75, %v2657, 0
    %v2688 = vsel %vm75, %v2658, 0
    %v2691 = vsel %vm75, %v2659, 0
    %v2694 = vsel %vm75, %v2660, 0
    %2696 = vmatprep.subr.bf16.mxu0 0
    %2697 = vmatpush1.bf16.msra.mxu0 0
    %2698 = vmatprep.subr.bf16.mxu0 0
    %2699 = vmatpush1.bf16.msra.mxu0 0
    %2700 = vmatprep.subr.bf16.mxu0 0
    %2701 = vmatpush1.bf16.msra.mxu0 0
    %2702 = vmatprep.subr.bf16.mxu0 0
    %2703 = vmatpush1.bf16.msra.mxu0 0
    %2704 = vmatprep.subr.bf16.mxu0 0
    %2705 = vmatpush1.bf16.msra.mxu0 0
    %2706 = vmatprep.subr.bf16.mxu0 0
    %2707 = vmatpush1.bf16.msra.mxu0 0
    %2708 = vmatprep.subr.bf16.mxu0 %v2676
    %2709 = vmatpush1.bf16.msra.mxu0 %v2675
    %2710 = vmatprep.subr.bf16.mxu0 %v2674
    %2711 = vmatpush1.bf16.msra.mxu0 %v2673
    %2712 = vmatprep.subr.bf16.mxu0 0
    %2713 = vmatpush2.bf16.msra.mxu0 0
    %2714 = vmatprep.subr.bf16.mxu0 0
    %2715 = vmatpush2.bf16.msra.mxu0 0
    %2716 = vmatprep.subr.bf16.mxu0 0
    %2717 = vmatpush2.bf16.msra.mxu0 0
    %2718 = vmatprep.subr.bf16.mxu0 0
    %2719 = vmatpush2.bf16.msra.mxu0 0
    %2720 = vmatprep.subr.bf16.mxu0 0
    %2721 = vmatpush2.bf16.msra.mxu0 0
    %2722 = vmatprep.subr.bf16.mxu0 0
    %2723 = vmatpush2.bf16.msra.mxu0 0
    %2724 = vmatprep.subr.bf16.mxu0 0
    %2725 = vmatpush2.bf16.msra.mxu0 0
    %2726 = vmatprep.subr.bf16.mxu0 0
    %2727 = vmatpush2.bf16.msra.mxu0 0
    %2728 = vmatprep.mubr.bf16.mxu0 0
    %2729 = vmatmul.mubr.bf16.gmra.mxu0 %v2682
    %v2730 = vpop.f32.mrf.mxu0
    %v2731 = vadd.f32 0.0, %v2730
    %v2732 = vpop.f32.mrf.mxu0
    %v2733 = vadd.f32 0.0, %v2732
    %v2734 = vpop.f32.mrf.mxu0
    %v2735 = vadd.f32 0.0, %v2734
    %v2736 = vpop.f32.mrf.mxu0
    %v2737 = vadd.f32 0.0, %v2736
    %2738 = vmatprep.mubr.bf16.mxu0 0
    %2739 = vmatmul.mubr.bf16.gmra.mxu0 %v2685
    %v2740 = vpop.f32.mrf.mxu0
    %v2741 = vadd.f32 0.0, %v2740
    %v2742 = vpop.f32.mrf.mxu0
    %v2743 = vadd.f32 0.0, %v2742
    %v2744 = vpop.f32.mrf.mxu0
    %v2745 = vadd.f32 0.0, %v2744
    %v2746 = vpop.f32.mrf.mxu0
    %v2747 = vadd.f32 0.0, %v2746
    %2748 = vmatprep.mubr.bf16.mxu0 0
    %2749 = vmatmul.mubr.bf16.gmra.mxu0 %v2688
    %v2750 = vpop.f32.mrf.mxu0
    %v2751 = vadd.f32 0.0, %v2750
    %v2752 = vpop.f32.mrf.mxu0
    %v2753 = vadd.f32 0.0, %v2752
    %v2754 = vpop.f32.mrf.mxu0
    %v2755 = vadd.f32 0.0, %v2754
    %v2756 = vpop.f32.mrf.mxu0
    %v2757 = vadd.f32 0.0, %v2756
    %2758 = vmatprep.mubr.bf16.mxu0 0
    %2759 = vmatmul.mubr.bf16.gmra.mxu0 %v2691
    %v2760 = vpop.f32.mrf.mxu0
    %v2761 = vadd.f32 0.0, %v2760
    %v2762 = vpop.f32.mrf.mxu0
    %v2763 = vadd.f32 0.0, %v2762
    %v2764 = vpop.f32.mrf.mxu0
    %v2765 = vadd.f32 0.0, %v2764
    %v2766 = vpop.f32.mrf.mxu0
    %v2767 = vadd.f32 0.0, %v2766
    %2768 = vmatprep.mubr.bf16.mxu0 0
    %2769 = vmatmul.mubr.bf16.gmra.mxu0 %v2694
    %v2770 = vpop.f32.mrf.mxu0
    %v2771 = vadd.f32 0.0, %v2770
    %v2772 = vpop.f32.mrf.mxu0
    %v2773 = vadd.f32 0.0, %v2772
    %v2774 = vpop.f32.mrf.mxu0
    %v2775 = vadd.f32 0.0, %v2774
    %v2776 = vpop.f32.mrf.mxu0
    %v2777 = vadd.f32 0.0, %v2776
    %2778 = vdwg.mxu0
    %s2779 = scalar_lea.vmem %s5, 1
    %v2780 = vld [vmem:[%s2779] sm:$0x1]
    %v2782 = vlaneseq
    %v2783 = vshrl.u32 %v2782, 7
    %v2784 = vsub.s32 0, %v2783
    %v2785 = vrot.slane %v2780, %v2784
    %v2787 = vadd.f32 %v2731, %v2785
    %v2788 = vadd.f32 %v2735, %v2785
    %v2789 = vadd.f32 %v2741, %v2785
    %v2790 = vadd.f32 %v2745, %v2785
    %v2791 = vadd.f32 %v2751, %v2785
    %v2792 = vadd.f32 %v2755, %v2785
    %v2793 = vadd.f32 %v2761, %v2785
    %v2794 = vadd.f32 %v2765, %v2785
    %v2795 = vadd.f32 %v2771, %v2785
    %v2796 = vadd.f32 %v2775, %v2785
    %v2797 = vld [vmem:[%s1] sm:$0xf]
    %v2798 = vld [vmem:[%s1 + $0x4] sm:$0xf]
    %v2799 = vpack.c.bf16 %v2735, %v2731
    %v2802 = vunpack.c.l.b16 %v2797
    %v2803 = vunpack.c.l.b16 %v2798
    %v2804 = vpack.c.b16 %v2803, %v2802
    %2806 = vrot.lane.b32.xlu0 %v2799, 96
    %v2807 = vpop.permute.xlu0 %2806
    %v2810 = vsel %vm691, %v2804, 0
    %2812 = vmatprep.subr.bf16.mxu0 0
    %2813 = vmatpush1.bf16.msra.mxu0 0
    %2814 = vmatprep.subr.bf16.mxu0 0
    %2815 = vmatpush1.bf16.msra.mxu0 0
    %2816 = vmatprep.subr.bf16.mxu0 0
    %2817 = vmatpush1.bf16.msra.mxu0 0
    %2818 = vmatprep.subr.bf16.mxu0 0
    %2819 = vmatpush1.bf16.msra.mxu0 0
    %2820 = vmatprep.subr.bf16.mxu0 0
    %2821 = vmatpush1.bf16.msra.mxu0 0
    %2822 = vmatprep.subr.bf16.mxu0 0
    %2823 = vmatpush1.bf16.msra.mxu0 0
    %2824 = vmatprep.subr.bf16.mxu0 0
    %2825 = vmatpush1.bf16.msra.mxu0 0
    %2826 = vmatprep.subr.bf16.mxu0 0
    %2827 = vmatpush1.bf16.msra.mxu0 %v2807
    %2828 = vmatprep.subr.bf16.mxu0 0
    %2829 = vmatpush2.bf16.msra.mxu0 0
    %2830 = vmatprep.subr.bf16.mxu0 0
    %2831 = vmatpush2.bf16.msra.mxu0 0
    %2832 = vmatprep.subr.bf16.mxu0 0
    %2833 = vmatpush2.bf16.msra.mxu0 0
    %2834 = vmatprep.subr.bf16.mxu0 0
    %2835 = vmatpush2.bf16.msra.mxu0 0
    %2836 = vmatprep.subr.bf16.mxu0 0
    %2837 = vmatpush2.bf16.msra.mxu0 0
    %2838 = vmatprep.subr.bf16.mxu0 0
    %2839 = vmatpush2.bf16.msra.mxu0 0
    %2840 = vmatprep.subr.bf16.mxu0 0
    %2841 = vmatpush2.bf16.msra.mxu0 0
    %2842 = vmatprep.subr.bf16.mxu0 0
    %2843 = vmatpush2.bf16.msra.mxu0 0
    %2844 = vmatprep.mubr.bf16.mxu0 0
    %2845 = vmatmul.mubr.bf16.gmra.mxu0 %v2810
    %v2846 = vpop.f32.mrf.mxu0
    %v2847 = vadd.f32 0.0, %v2846
    %v2848 = vpop.f32.mrf.mxu0
    %v2849 = vpop.f32.mrf.mxu0
    %v2850 = vadd.f32 0.0, %v2849
    %v2851 = vpop.f32.mrf.mxu0
    %2852 = vdwg.mxu0
    %v2853 = vadd.f32 %v2787, %v2847
    %v2854 = vadd.f32 %v2788, %v2850
    %v2855 = vld [vmem:[%s738] sm:$0xf]
    %v2856 = vld [vmem:[%s738 + $0x4] sm:$0xf]
    %v2859 = vunpack.c.l.b16 %v2855
    %v2860 = vunpack.c.l.b16 %v2856
    %v2861 = vpack.c.b16 %v2860, %v2859
    %2862 = vrot.lane.b32.xlu0 %v2799, 64
    %v2863 = vpop.permute.xlu0 %2862
    %v2866 = vsel %vm691, %v2861, 0
    %2868 = vmatprep.subr.bf16.mxu0 0
    %2869 = vmatpush1.bf16.msra.mxu0 0
    %2870 = vmatprep.subr.bf16.mxu0 0
    %2871 = vmatpush1.bf16.msra.mxu0 0
    %2872 = vmatprep.subr.bf16.mxu0 0
    %2873 = vmatpush1.bf16.msra.mxu0 0
    %2874 = vmatprep.subr.bf16.mxu0 0
    %2875 = vmatpush1.bf16.msra.mxu0 0
    %2876 = vmatprep.subr.bf16.mxu0 0
    %2877 = vmatpush1.bf16.msra.mxu0 0
    %2878 = vmatprep.subr.bf16.mxu0 0
    %2879 = vmatpush1.bf16.msra.mxu0 0
    %2880 = vmatprep.subr.bf16.mxu0 0
    %2881 = vmatpush1.bf16.msra.mxu0 0
    %2882 = vmatprep.subr.bf16.mxu0 0
    %2883 = vmatpush1.bf16.msra.mxu0 %v2863
    %2884 = vmatprep.subr.bf16.mxu0 0
    %2885 = vmatpush2.bf16.msra.mxu0 0
    %2886 = vmatprep.subr.bf16.mxu0 0
    %2887 = vmatpush2.bf16.msra.mxu0 0
    %2888 = vmatprep.subr.bf16.mxu0 0
    %2889 = vmatpush2.bf16.msra.mxu0 0
    %2890 = vmatprep.subr.bf16.mxu0 0
    %2891 = vmatpush2.bf16.msra.mxu0 0
    %2892 = vmatprep.subr.bf16.mxu0 0
    %2893 = vmatpush2.bf16.msra.mxu0 0
    %2894 = vmatprep.subr.bf16.mxu0 0
    %2895 = vmatpush2.bf16.msra.mxu0 0
    %2896 = vmatprep.subr.bf16.mxu0 0
    %2897 = vmatpush2.bf16.msra.mxu0 0
    %2898 = vmatprep.subr.bf16.mxu0 0
    %2899 = vmatpush2.bf16.msra.mxu0 0
    %2900 = vmatprep.mubr.bf16.mxu0 0
    %2901 = vmatmul.mubr.bf16.gmra.mxu0 %v2866
    %v2902 = vpop.f32.mrf.mxu0
    %v2903 = vadd.f32 0.0, %v2902
    %v2904 = vpop.f32.mrf.mxu0
    %v2905 = vpop.f32.mrf.mxu0
    %v2906 = vadd.f32 0.0, %v2905
    %v2907 = vpop.f32.mrf.mxu0
    %2908 = vdwg.mxu0
    %v2909 = vadd.f32 %v2853, %v2903
    %v2910 = vadd.f32 %v2854, %v2906
    %v2911 = vld [vmem:[%s795] sm:$0xf]
    %v2912 = vld [vmem:[%s795 + $0x4] sm:$0xf]
    %v2915 = vunpack.c.l.b16 %v2911
    %v2916 = vunpack.c.l.b16 %v2912
    %v2917 = vpack.c.b16 %v2916, %v2915
    %2918 = vrot.lane.b32.xlu0 %v2799, 32
    %v2919 = vpop.permute.xlu0 %2918
    %v2922 = vsel %vm691, %v2917, 0
    %2924 = vmatprep.subr.bf16.mxu0 0
    %2925 = vmatpush1.bf16.msra.mxu0 0
    %2926 = vmatprep.subr.bf16.mxu0 0
    %2927 = vmatpush1.bf16.msra.mxu0 0
    %2928 = vmatprep.subr.bf16.mxu0 0
    %2929 = vmatpush1.bf16.msra.mxu0 0
    %2930 = vmatprep.subr.bf16.mxu0 0
    %2931 = vmatpush1.bf16.msra.mxu0 0
    %2932 = vmatprep.subr.bf16.mxu0 0
    %2933 = vmatpush1.bf16.msra.mxu0 0
    %2934 = vmatprep.subr.bf16.mxu0 0
    %2935 = vmatpush1.bf16.msra.mxu0 0
    %2936 = vmatprep.subr.bf16.mxu0 0
    %2937 = vmatpush1.bf16.msra.mxu0 0
    %2938 = vmatprep.subr.bf16.mxu0 0
    %2939 = vmatpush1.bf16.msra.mxu0 %v2919
    %2940 = vmatprep.subr.bf16.mxu0 0
    %2941 = vmatpush2.bf16.msra.mxu0 0
    %2942 = vmatprep.subr.bf16.mxu0 0
    %2943 = vmatpush2.bf16.msra.mxu0 0
    %2944 = vmatprep.subr.bf16.mxu0 0
    %2945 = vmatpush2.bf16.msra.mxu0 0
    %2946 = vmatprep.subr.bf16.mxu0 0
    %2947 = vmatpush2.bf16.msra.mxu0 0
    %2948 = vmatprep.subr.bf16.mxu0 0
    %2949 = vmatpush2.bf16.msra.mxu0 0
    %2950 = vmatprep.subr.bf16.mxu0 0
    %2951 = vmatpush2.bf16.msra.mxu0 0
    %2952 = vmatprep.subr.bf16.mxu0 0
    %2953 = vmatpush2.bf16.msra.mxu0 0
    %2954 = vmatprep.subr.bf16.mxu0 0
    %2955 = vmatpush2.bf16.msra.mxu0 0
    %2956 = vmatprep.mubr.bf16.mxu0 0
    %2957 = vmatmul.mubr.bf16.gmra.mxu0 %v2922
    %v2958 = vpop.f32.mrf.mxu0
    %v2959 = vadd.f32 0.0, %v2958
    %v2960 = vpop.f32.mrf.mxu0
    %v2961 = vpop.f32.mrf.mxu0
    %v2962 = vadd.f32 0.0, %v2961
    %v2963 = vpop.f32.mrf.mxu0
    %2964 = vdwg.mxu0
    %v2965 = vadd.f32 %v2909, %v2959
    %v2966 = vadd.f32 %v2910, %v2962
    %v2967 = vld [vmem:[%s852] sm:$0xf]
    %v2968 = vld [vmem:[%s852 + $0x4] sm:$0xf]
    %v2969 = vpack.c.bf16 %v2737, %v2733
    %v2972 = vunpack.c.l.b16 %v2967
    %v2973 = vunpack.c.l.b16 %v2968
    %v2974 = vpack.c.b16 %v2973, %v2972
    %v2976 = vsel %vm691, %v2974, 0
    %2978 = vmatprep.subr.bf16.mxu0 0
    %2979 = vmatpush1.bf16.msra.mxu0 0
    %2980 = vmatprep.subr.bf16.mxu0 0
    %2981 = vmatpush1.bf16.msra.mxu0 0
    %2982 = vmatprep.subr.bf16.mxu0 0
    %2983 = vmatpush1.bf16.msra.mxu0 0
    %2984 = vmatprep.subr.bf16.mxu0 0
    %2985 = vmatpush1.bf16.msra.mxu0 0
    %2986 = vmatprep.subr.bf16.mxu0 0
    %2987 = vmatpush1.bf16.msra.mxu0 0
    %2988 = vmatprep.subr.bf16.mxu0 0
    %2989 = vmatpush1.bf16.msra.mxu0 0
    %2990 = vmatprep.subr.bf16.mxu0 0
    %2991 = vmatpush1.bf16.msra.mxu0 0
    %2992 = vmatprep.subr.bf16.mxu0 0
    %2993 = vmatpush1.bf16.msra.mxu0 %v2969
    %2994 = vmatprep.subr.bf16.mxu0 0
    %2995 = vmatpush2.bf16.msra.mxu0 0
    %2996 = vmatprep.subr.bf16.mxu0 0
    %2997 = vmatpush2.bf16.msra.mxu0 0
    %2998 = vmatprep.subr.bf16.mxu0 0
    %2999 = vmatpush2.bf16.msra.mxu0 0
    %3000 = vmatprep.subr.bf16.mxu0 0
    %3001 = vmatpush2.bf16.msra.mxu0 0
    %3002 = vmatprep.subr.bf16.mxu0 0
    %3003 = vmatpush2.bf16.msra.mxu0 0
    %3004 = vmatprep.subr.bf16.mxu0 0
    %3005 = vmatpush2.bf16.msra.mxu0 0
    %3006 = vmatprep.subr.bf16.mxu0 0
    %3007 = vmatpush2.bf16.msra.mxu0 0
    %3008 = vmatprep.subr.bf16.mxu0 0
    %3009 = vmatpush2.bf16.msra.mxu0 0
    %3010 = vmatprep.mubr.bf16.mxu0 0
    %3011 = vmatmul.mubr.bf16.gmra.mxu0 %v2976
    %v3012 = vpop.f32.mrf.mxu0
    %v3013 = vadd.f32 0.0, %v3012
    %v3014 = vpop.f32.mrf.mxu0
    %v3015 = vpop.f32.mrf.mxu0
    %v3016 = vadd.f32 0.0, %v3015
    %v3017 = vpop.f32.mrf.mxu0
    %3018 = vdwg.mxu0
    %v3019 = vadd.f32 %v2965, %v3013
    %v3020 = vadd.f32 %v2966, %v3016
    %3021 = vst.msk [vmem:[#allocation2] sm:$0xff] %vm75, %v3019
    %3022 = vst.msk [vmem:[#allocation2 + $0x8] sm:$0xff] %vm75, %v3020
    %v3023 = vld [vmem:[%s1] sm:$0xf]
    %v3024 = vld [vmem:[%s1 + $0x4] sm:$0xf]
    %v3025 = vpack.c.bf16 %v2745, %v2741
    %v3028 = vunpack.c.l.b16 %v3023
    %v3029 = vunpack.c.l.b16 %v3024
    %v3030 = vpack.c.b16 %v3029, %v3028
    %3032 = vrot.lane.b32.xlu0 %v3025, 96
    %v3033 = vpop.permute.xlu0 %3032
    %v3036 = vsel %vm691, %v3030, 0
    %3038 = vmatprep.subr.bf16.mxu0 0
    %3039 = vmatpush1.bf16.msra.mxu0 0
    %3040 = vmatprep.subr.bf16.mxu0 0
    %3041 = vmatpush1.bf16.msra.mxu0 0
    %3042 = vmatprep.subr.bf16.mxu0 0
    %3043 = vmatpush1.bf16.msra.mxu0 0
    %3044 = vmatprep.subr.bf16.mxu0 0
    %3045 = vmatpush1.bf16.msra.mxu0 0
    %3046 = vmatprep.subr.bf16.mxu0 0
    %3047 = vmatpush1.bf16.msra.mxu0 0
    %3048 = vmatprep.subr.bf16.mxu0 0
    %3049 = vmatpush1.bf16.msra.mxu0 0
    %3050 = vmatprep.subr.bf16.mxu0 0
    %3051 = vmatpush1.bf16.msra.mxu0 0
    %3052 = vmatprep.subr.bf16.mxu0 0
    %3053 = vmatpush1.bf16.msra.mxu0 %v3033
    %3054 = vmatprep.subr.bf16.mxu0 0
    %3055 = vmatpush2.bf16.msra.mxu0 0
    %3056 = vmatprep.subr.bf16.mxu0 0
    %3057 = vmatpush2.bf16.msra.mxu0 0
    %3058 = vmatprep.subr.bf16.mxu0 0
    %3059 = vmatpush2.bf16.msra.mxu0 0
    %3060 = vmatprep.subr.bf16.mxu0 0
    %3061 = vmatpush2.bf16.msra.mxu0 0
    %3062 = vmatprep.subr.bf16.mxu0 0
    %3063 = vmatpush2.bf16.msra.mxu0 0
    %3064 = vmatprep.subr.bf16.mxu0 0
    %3065 = vmatpush2.bf16.msra.mxu0 0
    %3066 = vmatprep.subr.bf16.mxu0 0
    %3067 = vmatpush2.bf16.msra.mxu0 0
    %3068 = vmatprep.subr.bf16.mxu0 0
    %3069 = vmatpush2.bf16.msra.mxu0 0
    %3070 = vmatprep.mubr.bf16.mxu0 0
    %3071 = vmatmul.mubr.bf16.gmra.mxu0 %v3036
    %v3072 = vpop.f32.mrf.mxu0
    %v3073 = vadd.f32 0.0, %v3072
    %v3074 = vpop.f32.mrf.mxu0
    %v3075 = vpop.f32.mrf.mxu0
    %v3076 = vadd.f32 0.0, %v3075
    %v3077 = vpop.f32.mrf.mxu0
    %3078 = vdwg.mxu0
    %v3079 = vadd.f32 %v2789, %v3073
    %v3080 = vadd.f32 %v2790, %v3076
    %v3081 = vld [vmem:[%s738] sm:$0xf]
    %v3082 = vld [vmem:[%s738 + $0x4] sm:$0xf]
    %v3085 = vunpack.c.l.b16 %v3081
    %v3086 = vunpack.c.l.b16 %v3082
    %v3087 = vpack.c.b16 %v3086, %v3085
    %3088 = vrot.lane.b32.xlu0 %v3025, 64
    %v3089 = vpop.permute.xlu0 %3088
    %v3092 = vsel %vm691, %v3087, 0
    %3094 = vmatprep.subr.bf16.mxu0 0
    %3095 = vmatpush1.bf16.msra.mxu0 0
    %3096 = vmatprep.subr.bf16.mxu0 0
    %3097 = vmatpush1.bf16.msra.mxu0 0
    %3098 = vmatprep.subr.bf16.mxu0 0
    %3099 = vmatpush1.bf16.msra.mxu0 0
    %3100 = vmatprep.subr.bf16.mxu0 0
    %3101 = vmatpush1.bf16.msra.mxu0 0
    %3102 = vmatprep.subr.bf16.mxu0 0
    %3103 = vmatpush1.bf16.msra.mxu0 0
    %3104 = vmatprep.subr.bf16.mxu0 0
    %3105 = vmatpush1.bf16.msra.mxu0 0
    %3106 = vmatprep.subr.bf16.mxu0 0
    %3107 = vmatpush1.bf16.msra.mxu0 0
    %3108 = vmatprep.subr.bf16.mxu0 0
    %3109 = vmatpush1.bf16.msra.mxu0 %v3089
    %3110 = vmatprep.subr.bf16.mxu0 0
    %3111 = vmatpush2.bf16.msra.mxu0 0
    %3112 = vmatprep.subr.bf16.mxu0 0
    %3113 = vmatpush2.bf16.msra.mxu0 0
    %3114 = vmatprep.subr.bf16.mxu0 0
    %3115 = vmatpush2.bf16.msra.mxu0 0
    %3116 = vmatprep.subr.bf16.mxu0 0
    %3117 = vmatpush2.bf16.msra.mxu0 0
    %3118 = vmatprep.subr.bf16.mxu0 0
    %3119 = vmatpush2.bf16.msra.mxu0 0
    %3120 = vmatprep.subr.bf16.mxu0 0
    %3121 = vmatpush2.bf16.msra.mxu0 0
    %3122 = vmatprep.subr.bf16.mxu0 0
    %3123 = vmatpush2.bf16.msra.mxu0 0
    %3124 = vmatprep.subr.bf16.mxu0 0
    %3125 = vmatpush2.bf16.msra.mxu0 0
    %3126 = vmatprep.mubr.bf16.mxu0 0
    %3127 = vmatmul.mubr.bf16.gmra.mxu0 %v3092
    %v3128 = vpop.f32.mrf.mxu0
    %v3129 = vadd.f32 0.0, %v3128
    %v3130 = vpop.f32.mrf.mxu0
    %v3131 = vpop.f32.mrf.mxu0
    %v3132 = vadd.f32 0.0, %v3131
    %v3133 = vpop.f32.mrf.mxu0
    %3134 = vdwg.mxu0
    %v3135 = vadd.f32 %v3079, %v3129
    %v3136 = vadd.f32 %v3080, %v3132
    %v3137 = vld [vmem:[%s795] sm:$0xf]
    %v3138 = vld [vmem:[%s795 + $0x4] sm:$0xf]
    %v3141 = vunpack.c.l.b16 %v3137
    %v3142 = vunpack.c.l.b16 %v3138
    %v3143 = vpack.c.b16 %v3142, %v3141
    %3144 = vrot.lane.b32.xlu0 %v3025, 32
    %v3145 = vpop.permute.xlu0 %3144
    %v3148 = vsel %vm691, %v3143, 0
    %3150 = vmatprep.subr.bf16.mxu0 0
    %3151 = vmatpush1.bf16.msra.mxu0 0
    %3152 = vmatprep.subr.bf16.mxu0 0
    %3153 = vmatpush1.bf16.msra.mxu0 0
    %3154 = vmatprep.subr.bf16.mxu0 0
    %3155 = vmatpush1.bf16.msra.mxu0 0
    %3156 = vmatprep.subr.bf16.mxu0 0
    %3157 = vmatpush1.bf16.msra.mxu0 0
    %3158 = vmatprep.subr.bf16.mxu0 0
    %3159 = vmatpush1.bf16.msra.mxu0 0
    %3160 = vmatprep.subr.bf16.mxu0 0
    %3161 = vmatpush1.bf16.msra.mxu0 0
    %3162 = vmatprep.subr.bf16.mxu0 0
    %3163 = vmatpush1.bf16.msra.mxu0 0
    %3164 = vmatprep.subr.bf16.mxu0 0
    %3165 = vmatpush1.bf16.msra.mxu0 %v3145
    %3166 = vmatprep.subr.bf16.mxu0 0
    %3167 = vmatpush2.bf16.msra.mxu0 0
    %3168 = vmatprep.subr.bf16.mxu0 0
    %3169 = vmatpush2.bf16.msra.mxu0 0
    %3170 = vmatprep.subr.bf16.mxu0 0
    %3171 = vmatpush2.bf16.msra.mxu0 0
    %3172 = vmatprep.subr.bf16.mxu0 0
    %3173 = vmatpush2.bf16.msra.mxu0 0
    %3174 = vmatprep.subr.bf16.mxu0 0
    %3175 = vmatpush2.bf16.msra.mxu0 0
    %3176 = vmatprep.subr.bf16.mxu0 0
    %3177 = vmatpush2.bf16.msra.mxu0 0
    %3178 = vmatprep.subr.bf16.mxu0 0
    %3179 = vmatpush2.bf16.msra.mxu0 0
    %3180 = vmatprep.subr.bf16.mxu0 0
    %3181 = vmatpush2.bf16.msra.mxu0 0
    %3182 = vmatprep.mubr.bf16.mxu0 0
    %3183 = vmatmul.mubr.bf16.gmra.mxu0 %v3148
    %v3184 = vpop.f32.mrf.mxu0
    %v3185 = vadd.f32 0.0, %v3184
    %v3186 = vpop.f32.mrf.mxu0
    %v3187 = vpop.f32.mrf.mxu0
    %v3188 = vadd.f32 0.0, %v3187
    %v3189 = vpop.f32.mrf.mxu0
    %3190 = vdwg.mxu0
    %v3191 = vadd.f32 %v3135, %v3185
    %v3192 = vadd.f32 %v3136, %v3188
    %v3193 = vld [vmem:[%s852] sm:$0xf]
    %v3194 = vld [vmem:[%s852 + $0x4] sm:$0xf]
    %v3195 = vpack.c.bf16 %v2747, %v2743
    %v3198 = vunpack.c.l.b16 %v3193
    %v3199 = vunpack.c.l.b16 %v3194
    %v3200 = vpack.c.b16 %v3199, %v3198
    %v3202 = vsel %vm691, %v3200, 0
    %3204 = vmatprep.subr.bf16.mxu0 0
    %3205 = vmatpush1.bf16.msra.mxu0 0
    %3206 = vmatprep.subr.bf16.mxu0 0
    %3207 = vmatpush1.bf16.msra.mxu0 0
    %3208 = vmatprep.subr.bf16.mxu0 0
    %3209 = vmatpush1.bf16.msra.mxu0 0
    %3210 = vmatprep.subr.bf16.mxu0 0
    %3211 = vmatpush1.bf16.msra.mxu0 0
    %3212 = vmatprep.subr.bf16.mxu0 0
    %3213 = vmatpush1.bf16.msra.mxu0 0
    %3214 = vmatprep.subr.bf16.mxu0 0
    %3215 = vmatpush1.bf16.msra.mxu0 0
    %3216 = vmatprep.subr.bf16.mxu0 0
    %3217 = vmatpush1.bf16.msra.mxu0 0
    %3218 = vmatprep.subr.bf16.mxu0 0
    %3219 = vmatpush1.bf16.msra.mxu0 %v3195
    %3220 = vmatprep.subr.bf16.mxu0 0
    %3221 = vmatpush2.bf16.msra.mxu0 0
    %3222 = vmatprep.subr.bf16.mxu0 0
    %3223 = vmatpush2.bf16.msra.mxu0 0
    %3224 = vmatprep.subr.bf16.mxu0 0
    %3225 = vmatpush2.bf16.msra.mxu0 0
    %3226 = vmatprep.subr.bf16.mxu0 0
    %3227 = vmatpush2.bf16.msra.mxu0 0
    %3228 = vmatprep.subr.bf16.mxu0 0
    %3229 = vmatpush2.bf16.msra.mxu0 0
    %3230 = vmatprep.subr.bf16.mxu0 0
    %3231 = vmatpush2.bf16.msra.mxu0 0
    %3232 = vmatprep.subr.bf16.mxu0 0
    %3233 = vmatpush2.bf16.msra.mxu0 0
    %3234 = vmatprep.subr.bf16.mxu0 0
    %3235 = vmatpush2.bf16.msra.mxu0 0
    %3236 = vmatprep.mubr.bf16.mxu0 0
    %3237 = vmatmul.mubr.bf16.gmra.mxu0 %v3202
    %v3238 = vpop.f32.mrf.mxu0
    %v3239 = vadd.f32 0.0, %v3238
    %v3240 = vpop.f32.mrf.mxu0
    %v3241 = vpop.f32.mrf.mxu0
    %v3242 = vadd.f32 0.0, %v3241
    %v3243 = vpop.f32.mrf.mxu0
    %3244 = vdwg.mxu0
    %v3245 = vadd.f32 %v3191, %v3239
    %v3246 = vadd.f32 %v3192, %v3242
    %3247 = vst.msk [vmem:[#allocation2 + $0x10] sm:$0xff] %vm75, %v3245
    %3248 = vst.msk [vmem:[#allocation2 + $0x18] sm:$0xff] %vm75, %v3246
    %v3249 = vld [vmem:[%s1] sm:$0xf]
    %v3250 = vld [vmem:[%s1 + $0x4] sm:$0xf]
    %v3251 = vpack.c.bf16 %v2755, %v2751
    %v3254 = vunpack.c.l.b16 %v3249
    %v3255 = vunpack.c.l.b16 %v3250
    %v3256 = vpack.c.b16 %v3255, %v3254
    %3258 = vrot.lane.b32.xlu0 %v3251, 96
    %v3259 = vpop.permute.xlu0 %3258
    %v3262 = vsel %vm691, %v3256, 0
    %3264 = vmatprep.subr.bf16.mxu0 0
    %3265 = vmatpush1.bf16.msra.mxu0 0
    %3266 = vmatprep.subr.bf16.mxu0 0
    %3267 = vmatpush1.bf16.msra.mxu0 0
    %3268 = vmatprep.subr.bf16.mxu0 0
    %3269 = vmatpush1.bf16.msra.mxu0 0
    %3270 = vmatprep.subr.bf16.mxu0 0
    %3271 = vmatpush1.bf16.msra.mxu0 0
    %3272 = vmatprep.subr.bf16.mxu0 0
    %3273 = vmatpush1.bf16.msra.mxu0 0
    %3274 = vmatprep.subr.bf16.mxu0 0
    %3275 = vmatpush1.bf16.msra.mxu0 0
    %3276 = vmatprep.subr.bf16.mxu0 0
    %3277 = vmatpush1.bf16.msra.mxu0 0
    %3278 = vmatprep.subr.bf16.mxu0 0
    %3279 = vmatpush1.bf16.msra.mxu0 %v3259
    %3280 = vmatprep.subr.bf16.mxu0 0
    %3281 = vmatpush2.bf16.msra.mxu0 0
    %3282 = vmatprep.subr.bf16.mxu0 0
    %3283 = vmatpush2.bf16.msra.mxu0 0
    %3284 = vmatprep.subr.bf16.mxu0 0
    %3285 = vmatpush2.bf16.msra.mxu0 0
    %3286 = vmatprep.subr.bf16.mxu0 0
    %3287 = vmatpush2.bf16.msra.mxu0 0
    %3288 = vmatprep.subr.bf16.mxu0 0
    %3289 = vmatpush2.bf16.msra.mxu0 0
    %3290 = vmatprep.subr.bf16.mxu0 0
    %3291 = vmatpush2.bf16.msra.mxu0 0
    %3292 = vmatprep.subr.bf16.mxu0 0
    %3293 = vmatpush2.bf16.msra.mxu0 0
    %3294 = vmatprep.subr.bf16.mxu0 0
    %3295 = vmatpush2.bf16.msra.mxu0 0
    %3296 = vmatprep.mubr.bf16.mxu0 0
    %3297 = vmatmul.mubr.bf16.gmra.mxu0 %v3262
    %v3298 = vpop.f32.mrf.mxu0
    %v3299 = vadd.f32 0.0, %v3298
    %v3300 = vpop.f32.mrf.mxu0
    %v3301 = vpop.f32.mrf.mxu0
    %v3302 = vadd.f32 0.0, %v3301
    %v3303 = vpop.f32.mrf.mxu0
    %3304 = vdwg.mxu0
    %v3305 = vadd.f32 %v2791, %v3299
    %v3306 = vadd.f32 %v2792, %v3302
    %v3307 = vld [vmem:[%s738] sm:$0xf]
    %v3308 = vld [vmem:[%s738 + $0x4] sm:$0xf]
    %v3311 = vunpack.c.l.b16 %v3307
    %v3312 = vunpack.c.l.b16 %v3308
    %v3313 = vpack.c.b16 %v3312, %v3311
    %3314 = vrot.lane.b32.xlu0 %v3251, 64
    %v3315 = vpop.permute.xlu0 %3314
    %v3318 = vsel %vm691, %v3313, 0
    %3320 = vmatprep.subr.bf16.mxu0 0
    %3321 = vmatpush1.bf16.msra.mxu0 0
    %3322 = vmatprep.subr.bf16.mxu0 0
    %3323 = vmatpush1.bf16.msra.mxu0 0
    %3324 = vmatprep.subr.bf16.mxu0 0
    %3325 = vmatpush1.bf16.msra.mxu0 0
    %3326 = vmatprep.subr.bf16.mxu0 0
    %3327 = vmatpush1.bf16.msra.mxu0 0
    %3328 = vmatprep.subr.bf16.mxu0 0
    %3329 = vmatpush1.bf16.msra.mxu0 0
    %3330 = vmatprep.subr.bf16.mxu0 0
    %3331 = vmatpush1.bf16.msra.mxu0 0
    %3332 = vmatprep.subr.bf16.mxu0 0
    %3333 = vmatpush1.bf16.msra.mxu0 0
    %3334 = vmatprep.subr.bf16.mxu0 0
    %3335 = vmatpush1.bf16.msra.mxu0 %v3315
    %3336 = vmatprep.subr.bf16.mxu0 0
    %3337 = vmatpush2.bf16.msra.mxu0 0
    %3338 = vmatprep.subr.bf16.mxu0 0
    %3339 = vmatpush2.bf16.msra.mxu0 0
    %3340 = vmatprep.subr.bf16.mxu0 0
    %3341 = vmatpush2.bf16.msra.mxu0 0
    %3342 = vmatprep.subr.bf16.mxu0 0
    %3343 = vmatpush2.bf16.msra.mxu0 0
    %3344 = vmatprep.subr.bf16.mxu0 0
    %3345 = vmatpush2.bf16.msra.mxu0 0
    %3346 = vmatprep.subr.bf16.mxu0 0
    %3347 = vmatpush2.bf16.msra.mxu0 0
    %3348 = vmatprep.subr.bf16.mxu0 0
    %3349 = vmatpush2.bf16.msra.mxu0 0
    %3350 = vmatprep.subr.bf16.mxu0 0
    %3351 = vmatpush2.bf16.msra.mxu0 0
    %3352 = vmatprep.mubr.bf16.mxu0 0
    %3353 = vmatmul.mubr.bf16.gmra.mxu0 %v3318
    %v3354 = vpop.f32.mrf.mxu0
    %v3355 = vadd.f32 0.0, %v3354
    %v3356 = vpop.f32.mrf.mxu0
    %v3357 = vpop.f32.mrf.mxu0
    %v3358 = vadd.f32 0.0, %v3357
    %v3359 = vpop.f32.mrf.mxu0
    %3360 = vdwg.mxu0
    %v3361 = vadd.f32 %v3305, %v3355
    %v3362 = vadd.f32 %v3306, %v3358
    %v3363 = vld [vmem:[%s795] sm:$0xf]
    %v3364 = vld [vmem:[%s795 + $0x4] sm:$0xf]
    %v3367 = vunpack.c.l.b16 %v3363
    %v3368 = vunpack.c.l.b16 %v3364
    %v3369 = vpack.c.b16 %v3368, %v3367
    %3370 = vrot.lane.b32.xlu0 %v3251, 32
    %v3371 = vpop.permute.xlu0 %3370
    %v3374 = vsel %vm691, %v3369, 0
    %3376 = vmatprep.subr.bf16.mxu0 0
    %3377 = vmatpush1.bf16.msra.mxu0 0
    %3378 = vmatprep.subr.bf16.mxu0 0
    %3379 = vmatpush1.bf16.msra.mxu0 0
    %3380 = vmatprep.subr.bf16.mxu0 0
    %3381 = vmatpush1.bf16.msra.mxu0 0
    %3382 = vmatprep.subr.bf16.mxu0 0
    %3383 = vmatpush1.bf16.msra.mxu0 0
    %3384 = vmatprep.subr.bf16.mxu0 0
    %3385 = vmatpush1.bf16.msra.mxu0 0
    %3386 = vmatprep.subr.bf16.mxu0 0
    %3387 = vmatpush1.bf16.msra.mxu0 0
    %3388 = vmatprep.subr.bf16.mxu0 0
    %3389 = vmatpush1.bf16.msra.mxu0 0
    %3390 = vmatprep.subr.bf16.mxu0 0
    %3391 = vmatpush1.bf16.msra.mxu0 %v3371
    %3392 = vmatprep.subr.bf16.mxu0 0
    %3393 = vmatpush2.bf16.msra.mxu0 0
    %3394 = vmatprep.subr.bf16.mxu0 0
    %3395 = vmatpush2.bf16.msra.mxu0 0
    %3396 = vmatprep.subr.bf16.mxu0 0
    %3397 = vmatpush2.bf16.msra.mxu0 0
    %3398 = vmatprep.subr.bf16.mxu0 0
    %3399 = vmatpush2.bf16.msra.mxu0 0
    %3400 = vmatprep.subr.bf16.mxu0 0
    %3401 = vmatpush2.bf16.msra.mxu0 0
    %3402 = vmatprep.subr.bf16.mxu0 0
    %3403 = vmatpush2.bf16.msra.mxu0 0
    %3404 = vmatprep.subr.bf16.mxu0 0
    %3405 = vmatpush2.bf16.msra.mxu0 0
    %3406 = vmatprep.subr.bf16.mxu0 0
    %3407 = vmatpush2.bf16.msra.mxu0 0
    %3408 = vmatprep.mubr.bf16.mxu0 0
    %3409 = vmatmul.mubr.bf16.gmra.mxu0 %v3374
    %v3410 = vpop.f32.mrf.mxu0
    %v3411 = vadd.f32 0.0, %v3410
    %v3412 = vpop.f32.mrf.mxu0
    %v3413 = vpop.f32.mrf.mxu0
    %v3414 = vadd.f32 0.0, %v3413
    %v3415 = vpop.f32.mrf.mxu0
    %3416 = vdwg.mxu0
    %v3417 = vadd.f32 %v3361, %v3411
    %v3418 = vadd.f32 %v3362, %v3414
    %v3419 = vld [vmem:[%s852] sm:$0xf]
    %v3420 = vld [vmem:[%s852 + $0x4] sm:$0xf]
    %v3421 = vpack.c.bf16 %v2757, %v2753
    %v3424 = vunpack.c.l.b16 %v3419
    %v3425 = vunpack.c.l.b16 %v3420
    %v3426 = vpack.c.b16 %v3425, %v3424
    %v3428 = vsel %vm691, %v3426, 0
    %3430 = vmatprep.subr.bf16.mxu0 0
    %3431 = vmatpush1.bf16.msra.mxu0 0
    %3432 = vmatprep.subr.bf16.mxu0 0
    %3433 = vmatpush1.bf16.msra.mxu0 0
    %3434 = vmatprep.subr.bf16.mxu0 0
    %3435 = vmatpush1.bf16.msra.mxu0 0
    %3436 = vmatprep.subr.bf16.mxu0 0
    %3437 = vmatpush1.bf16.msra.mxu0 0
    %3438 = vmatprep.subr.bf16.mxu0 0
    %3439 = vmatpush1.bf16.msra.mxu0 0
    %3440 = vmatprep.subr.bf16.mxu0 0
    %3441 = vmatpush1.bf16.msra.mxu0 0
    %3442 = vmatprep.subr.bf16.mxu0 0
    %3443 = vmatpush1.bf16.msra.mxu0 0
    %3444 = vmatprep.subr.bf16.mxu0 0
    %3445 = vmatpush1.bf16.msra.mxu0 %v3421
    %3446 = vmatprep.subr.bf16.mxu0 0
    %3447 = vmatpush2.bf16.msra.mxu0 0
    %3448 = vmatprep.subr.bf16.mxu0 0
    %3449 = vmatpush2.bf16.msra.mxu0 0
    %3450 = vmatprep.subr.bf16.mxu0 0
    %3451 = vmatpush2.bf16.msra.mxu0 0
    %3452 = vmatprep.subr.bf16.mxu0 0
    %3453 = vmatpush2.bf16.msra.mxu0 0
    %3454 = vmatprep.subr.bf16.mxu0 0
    %3455 = vmatpush2.bf16.msra.mxu0 0
    %3456 = vmatprep.subr.bf16.mxu0 0
    %3457 = vmatpush2.bf16.msra.mxu0 0
    %3458 = vmatprep.subr.bf16.mxu0 0
    %3459 = vmatpush2.bf16.msra.mxu0 0
    %3460 = vmatprep.subr.bf16.mxu0 0
    %3461 = vmatpush2.bf16.msra.mxu0 0
    %3462 = vmatprep.mubr.bf16.mxu0 0
    %3463 = vmatmul.mubr.bf16.gmra.mxu0 %v3428
    %v3464 = vpop.f32.mrf.mxu0
    %v3465 = vadd.f32 0.0, %v3464
    %v3466 = vpop.f32.mrf.mxu0
    %v3467 = vpop.f32.mrf.mxu0
    %v3468 = vadd.f32 0.0, %v3467
    %v3469 = vpop.f32.mrf.mxu0
    %3470 = vdwg.mxu0
    %v3471 = vadd.f32 %v3417, %v3465
    %v3472 = vadd.f32 %v3418, %v3468
    %3473 = vst.msk [vmem:[#allocation2 + $0x20] sm:$0xff] %vm75, %v3471
    %3474 = vst.msk [vmem:[#allocation2 + $0x28] sm:$0xff] %vm75, %v3472
    %v3475 = vld [vmem:[%s1] sm:$0xf]
    %v3476 = vld [vmem:[%s1 + $0x4] sm:$0xf]
    %v3477 = vpack.c.bf16 %v2765, %v2761
    %v3480 = vunpack.c.l.b16 %v3475
    %v3481 = vunpack.c.l.b16 %v3476
    %v3482 = vpack.c.b16 %v3481, %v3480
    %3484 = vrot.lane.b32.xlu0 %v3477, 96
    %v3485 = vpop.permute.xlu0 %3484
    %v3488 = vsel %vm691, %v3482, 0
    %3490 = vmatprep.subr.bf16.mxu0 0
    %3491 = vmatpush1.bf16.msra.mxu0 0
    %3492 = vmatprep.subr.bf16.mxu0 0
    %3493 = vmatpush1.bf16.msra.mxu0 0
    %3494 = vmatprep.subr.bf16.mxu0 0
    %3495 = vmatpush1.bf16.msra.mxu0 0
    %3496 = vmatprep.subr.bf16.mxu0 0
    %3497 = vmatpush1.bf16.msra.mxu0 0
    %3498 = vmatprep.subr.bf16.mxu0 0
    %3499 = vmatpush1.bf16.msra.mxu0 0
    %3500 = vmatprep.subr.bf16.mxu0 0
    %3501 = vmatpush1.bf16.msra.mxu0 0
    %3502 = vmatprep.subr.bf16.mxu0 0
    %3503 = vmatpush1.bf16.msra.mxu0 0
    %3504 = vmatprep.subr.bf16.mxu0 0
    %3505 = vmatpush1.bf16.msra.mxu0 %v3485
    %3506 = vmatprep.subr.bf16.mxu0 0
    %3507 = vmatpush2.bf16.msra.mxu0 0
    %3508 = vmatprep.subr.bf16.mxu0 0
    %3509 = vmatpush2.bf16.msra.mxu0 0
    %3510 = vmatprep.subr.bf16.mxu0 0
    %3511 = vmatpush2.bf16.msra.mxu0 0
    %3512 = vmatprep.subr.bf16.mxu0 0
    %3513 = vmatpush2.bf16.msra.mxu0 0
    %3514 = vmatprep.subr.bf16.mxu0 0
    %3515 = vmatpush2.bf16.msra.mxu0 0
    %3516 = vmatprep.subr.bf16.mxu0 0
    %3517 = vmatpush2.bf16.msra.mxu0 0
    %3518 = vmatprep.subr.bf16.mxu0 0
    %3519 = vmatpush2.bf16.msra.mxu0 0
    %3520 = vmatprep.subr.bf16.mxu0 0
    %3521 = vmatpush2.bf16.msra.mxu0 0
    %3522 = vmatprep.mubr.bf16.mxu0 0
    %3523 = vmatmul.mubr.bf16.gmra.mxu0 %v3488
    %v3524 = vpop.f32.mrf.mxu0
    %v3525 = vadd.f32 0.0, %v3524
    %v3526 = vpop.f32.mrf.mxu0
    %v3527 = vpop.f32.mrf.mxu0
    %v3528 = vadd.f32 0.0, %v3527
    %v3529 = vpop.f32.mrf.mxu0
    %3530 = vdwg.mxu0
    %v3531 = vadd.f32 %v2793, %v3525
    %v3532 = vadd.f32 %v2794, %v3528
    %v3533 = vld [vmem:[%s738] sm:$0xf]
    %v3534 = vld [vmem:[%s738 + $0x4] sm:$0xf]
    %v3537 = vunpack.c.l.b16 %v3533
    %v3538 = vunpack.c.l.b16 %v3534
    %v3539 = vpack.c.b16 %v3538, %v3537
    %3540 = vrot.lane.b32.xlu0 %v3477, 64
    %v3541 = vpop.permute.xlu0 %3540
    %v3544 = vsel %vm691, %v3539, 0
    %3546 = vmatprep.subr.bf16.mxu0 0
    %3547 = vmatpush1.bf16.msra.mxu0 0
    %3548 = vmatprep.subr.bf16.mxu0 0
    %3549 = vmatpush1.bf16.msra.mxu0 0
    %3550 = vmatprep.subr.bf16.mxu0 0
    %3551 = vmatpush1.bf16.msra.mxu0 0
    %3552 = vmatprep.subr.bf16.mxu0 0
    %3553 = vmatpush1.bf16.msra.mxu0 0
    %3554 = vmatprep.subr.bf16.mxu0 0
    %3555 = vmatpush1.bf16.msra.mxu0 0
    %3556 = vmatprep.subr.bf16.mxu0 0
    %3557 = vmatpush1.bf16.msra.mxu0 0
    %3558 = vmatprep.subr.bf16.mxu0 0
    %3559 = vmatpush1.bf16.msra.mxu0 0
    %3560 = vmatprep.subr.bf16.mxu0 0
    %3561 = vmatpush1.bf16.msra.mxu0 %v3541
    %3562 = vmatprep.subr.bf16.mxu0 0
    %3563 = vmatpush2.bf16.msra.mxu0 0
    %3564 = vmatprep.subr.bf16.mxu0 0
    %3565 = vmatpush2.bf16.msra.mxu0 0
    %3566 = vmatprep.subr.bf16.mxu0 0
    %3567 = vmatpush2.bf16.msra.mxu0 0
    %3568 = vmatprep.subr.bf16.mxu0 0
    %3569 = vmatpush2.bf16.msra.mxu0 0
    %3570 = vmatprep.subr.bf16.mxu0 0
    %3571 = vmatpush2.bf16.msra.mxu0 0
    %3572 = vmatprep.subr.bf16.mxu0 0
    %3573 = vmatpush2.bf16.msra.mxu0 0
    %3574 = vmatprep.subr.bf16.mxu0 0
    %3575 = vmatpush2.bf16.msra.mxu0 0
    %3576 = vmatprep.subr.bf16.mxu0 0
    %3577 = vmatpush2.bf16.msra.mxu0 0
    %3578 = vmatprep.mubr.bf16.mxu0 0
    %3579 = vmatmul.mubr.bf16.gmra.mxu0 %v3544
    %v3580 = vpop.f32.mrf.mxu0
    %v3581 = vadd.f32 0.0, %v3580
    %v3582 = vpop.f32.mrf.mxu0
    %v3583 = vpop.f32.mrf.mxu0
    %v3584 = vadd.f32 0.0, %v3583
    %v3585 = vpop.f32.mrf.mxu0
    %3586 = vdwg.mxu0
    %v3587 = vadd.f32 %v3531, %v3581
    %v3588 = vadd.f32 %v3532, %v3584
    %v3589 = vld [vmem:[%s795] sm:$0xf]
    %v3590 = vld [vmem:[%s795 + $0x4] sm:$0xf]
    %v3593 = vunpack.c.l.b16 %v3589
    %v3594 = vunpack.c.l.b16 %v3590
    %v3595 = vpack.c.b16 %v3594, %v3593
    %3596 = vrot.lane.b32.xlu0 %v3477, 32
    %v3597 = vpop.permute.xlu0 %3596
    %v3600 = vsel %vm691, %v3595, 0
    %3602 = vmatprep.subr.bf16.mxu0 0
    %3603 = vmatpush1.bf16.msra.mxu0 0
    %3604 = vmatprep.subr.bf16.mxu0 0
    %3605 = vmatpush1.bf16.msra.mxu0 0
    %3606 = vmatprep.subr.bf16.mxu0 0
    %3607 = vmatpush1.bf16.msra.mxu0 0
    %3608 = vmatprep.subr.bf16.mxu0 0
    %3609 = vmatpush1.bf16.msra.mxu0 0
    %3610 = vmatprep.subr.bf16.mxu0 0
    %3611 = vmatpush1.bf16.msra.mxu0 0
    %3612 = vmatprep.subr.bf16.mxu0 0
    %3613 = vmatpush1.bf16.msra.mxu0 0
    %3614 = vmatprep.subr.bf16.mxu0 0
    %3615 = vmatpush1.bf16.msra.mxu0 0
    %3616 = vmatprep.subr.bf16.mxu0 0
    %3617 = vmatpush1.bf16.msra.mxu0 %v3597
    %3618 = vmatprep.subr.bf16.mxu0 0
    %3619 = vmatpush2.bf16.msra.mxu0 0
    %3620 = vmatprep.subr.bf16.mxu0 0
    %3621 = vmatpush2.bf16.msra.mxu0 0
    %3622 = vmatprep.subr.bf16.mxu0 0
    %3623 = vmatpush2.bf16.msra.mxu0 0
    %3624 = vmatprep.subr.bf16.mxu0 0
    %3625 = vmatpush2.bf16.msra.mxu0 0
    %3626 = vmatprep.subr.bf16.mxu0 0
    %3627 = vmatpush2.bf16.msra.mxu0 0
    %3628 = vmatprep.subr.bf16.mxu0 0
    %3629 = vmatpush2.bf16.msra.mxu0 0
    %3630 = vmatprep.subr.bf16.mxu0 0
    %3631 = vmatpush2.bf16.msra.mxu0 0
    %3632 = vmatprep.subr.bf16.mxu0 0
    %3633 = vmatpush2.bf16.msra.mxu0 0
    %3634 = vmatprep.mubr.bf16.mxu0 0
    %3635 = vmatmul.mubr.bf16.gmra.mxu0 %v3600
    %v3636 = vpop.f32.mrf.mxu0
    %v3637 = vadd.f32 0.0, %v3636
    %v3638 = vpop.f32.mrf.mxu0
    %v3639 = vpop.f32.mrf.mxu0
    %v3640 = vadd.f32 0.0, %v3639
    %v3641 = vpop.f32.mrf.mxu0
    %3642 = vdwg.mxu0
    %v3643 = vadd.f32 %v3587, %v3637
    %v3644 = vadd.f32 %v3588, %v3640
    %v3645 = vld [vmem:[%s852] sm:$0xf]
    %v3646 = vld [vmem:[%s852 + $0x4] sm:$0xf]
    %v3647 = vpack.c.bf16 %v2767, %v2763
    %v3650 = vunpack.c.l.b16 %v3645
    %v3651 = vunpack.c.l.b16 %v3646
    %v3652 = vpack.c.b16 %v3651, %v3650
    %v3654 = vsel %vm691, %v3652, 0
    %3656 = vmatprep.subr.bf16.mxu0 0
    %3657 = vmatpush1.bf16.msra.mxu0 0
    %3658 = vmatprep.subr.bf16.mxu0 0
    %3659 = vmatpush1.bf16.msra.mxu0 0
    %3660 = vmatprep.subr.bf16.mxu0 0
    %3661 = vmatpush1.bf16.msra.mxu0 0
    %3662 = vmatprep.subr.bf16.mxu0 0
    %3663 = vmatpush1.bf16.msra.mxu0 0
    %3664 = vmatprep.subr.bf16.mxu0 0
    %3665 = vmatpush1.bf16.msra.mxu0 0
    %3666 = vmatprep.subr.bf16.mxu0 0
    %3667 = vmatpush1.bf16.msra.mxu0 0
    %3668 = vmatprep.subr.bf16.mxu0 0
    %3669 = vmatpush1.bf16.msra.mxu0 0
    %3670 = vmatprep.subr.bf16.mxu0 0
    %3671 = vmatpush1.bf16.msra.mxu0 %v3647
    %3672 = vmatprep.subr.bf16.mxu0 0
    %3673 = vmatpush2.bf16.msra.mxu0 0
    %3674 = vmatprep.subr.bf16.mxu0 0
    %3675 = vmatpush2.bf16.msra.mxu0 0
    %3676 = vmatprep.subr.bf16.mxu0 0
    %3677 = vmatpush2.bf16.msra.mxu0 0
    %3678 = vmatprep.subr.bf16.mxu0 0
    %3679 = vmatpush2.bf16.msra.mxu0 0
    %3680 = vmatprep.subr.bf16.mxu0 0
    %3681 = vmatpush2.bf16.msra.mxu0 0
    %3682 = vmatprep.subr.bf16.mxu0 0
    %3683 = vmatpush2.bf16.msra.mxu0 0
    %3684 = vmatprep.subr.bf16.mxu0 0
    %3685 = vmatpush2.bf16.msra.mxu0 0
    %3686 = vmatprep.subr.bf16.mxu0 0
    %3687 = vmatpush2.bf16.msra.mxu0 0
    %3688 = vmatprep.mubr.bf16.mxu0 0
    %3689 = vmatmul.mubr.bf16.gmra.mxu0 %v3654
    %v3690 = vpop.f32.mrf.mxu0
    %v3691 = vadd.f32 0.0, %v3690
    %v3692 = vpop.f32.mrf.mxu0
    %v3693 = vpop.f32.mrf.mxu0
    %v3694 = vadd.f32 0.0, %v3693
    %v3695 = vpop.f32.mrf.mxu0
    %3696 = vdwg.mxu0
    %v3697 = vadd.f32 %v3643, %v3691
    %v3698 = vadd.f32 %v3644, %v3694
    %3699 = vst.msk [vmem:[#allocation2 + $0x30] sm:$0xff] %vm75, %v3697
    %3700 = vst.msk [vmem:[#allocation2 + $0x38] sm:$0xff] %vm75, %v3698
    %v3701 = vld [vmem:[%s1] sm:$0xf]
    %v3702 = vld [vmem:[%s1 + $0x4] sm:$0xf]
    %v3703 = vpack.c.bf16 %v2775, %v2771
    %v3706 = vunpack.c.l.b16 %v3701
    %v3707 = vunpack.c.l.b16 %v3702
    %v3708 = vpack.c.b16 %v3707, %v3706
    %3710 = vrot.lane.b32.xlu0 %v3703, 96
    %v3711 = vpop.permute.xlu0 %3710
    %v3714 = vsel %vm691, %v3708, 0
    %3716 = vmatprep.subr.bf16.mxu0 0
    %3717 = vmatpush1.bf16.msra.mxu0 0
    %3718 = vmatprep.subr.bf16.mxu0 0
    %3719 = vmatpush1.bf16.msra.mxu0 0
    %3720 = vmatprep.subr.bf16.mxu0 0
    %3721 = vmatpush1.bf16.msra.mxu0 0
    %3722 = vmatprep.subr.bf16.mxu0 0
    %3723 = vmatpush1.bf16.msra.mxu0 0
    %3724 = vmatprep.subr.bf16.mxu0 0
    %3725 = vmatpush1.bf16.msra.mxu0 0
    %3726 = vmatprep.subr.bf16.mxu0 0
    %3727 = vmatpush1.bf16.msra.mxu0 0
    %3728 = vmatprep.subr.bf16.mxu0 0
    %3729 = vmatpush1.bf16.msra.mxu0 0
    %3730 = vmatprep.subr.bf16.mxu0 0
    %3731 = vmatpush1.bf16.msra.mxu0 %v3711
    %3732 = vmatprep.subr.bf16.mxu0 0
    %3733 = vmatpush2.bf16.msra.mxu0 0
    %3734 = vmatprep.subr.bf16.mxu0 0
    %3735 = vmatpush2.bf16.msra.mxu0 0
    %3736 = vmatprep.subr.bf16.mxu0 0
    %3737 = vmatpush2.bf16.msra.mxu0 0
    %3738 = vmatprep.subr.bf16.mxu0 0
    %3739 = vmatpush2.bf16.msra.mxu0 0
    %3740 = vmatprep.subr.bf16.mxu0 0
    %3741 = vmatpush2.bf16.msra.mxu0 0
    %3742 = vmatprep.subr.bf16.mxu0 0
    %3743 = vmatpush2.bf16.msra.mxu0 0
    %3744 = vmatprep.subr.bf16.mxu0 0
    %3745 = vmatpush2.bf16.msra.mxu0 0
    %3746 = vmatprep.subr.bf16.mxu0 0
    %3747 = vmatpush2.bf16.msra.mxu0 0
    %3748 = vmatprep.mubr.bf16.mxu0 0
    %3749 = vmatmul.mubr.bf16.gmra.mxu0 %v3714
    %v3750 = vpop.f32.mrf.mxu0
    %v3751 = vadd.f32 0.0, %v3750
    %v3752 = vpop.f32.mrf.mxu0
    %v3753 = vpop.f32.mrf.mxu0
    %v3754 = vadd.f32 0.0, %v3753
    %v3755 = vpop.f32.mrf.mxu0
    %3756 = vdwg.mxu0
    %v3757 = vadd.f32 %v2795, %v3751
    %v3758 = vadd.f32 %v2796, %v3754
    %v3759 = vld [vmem:[%s738] sm:$0xf]
    %v3760 = vld [vmem:[%s738 + $0x4] sm:$0xf]
    %v3763 = vunpack.c.l.b16 %v3759
    %v3764 = vunpack.c.l.b16 %v3760
    %v3765 = vpack.c.b16 %v3764, %v3763
    %3766 = vrot.lane.b32.xlu0 %v3703, 64
    %v3767 = vpop.permute.xlu0 %3766
    %v3770 = vsel %vm691, %v3765, 0
    %3772 = vmatprep.subr.bf16.mxu0 0
    %3773 = vmatpush1.bf16.msra.mxu0 0
    %3774 = vmatprep.subr.bf16.mxu0 0
    %3775 = vmatpush1.bf16.msra.mxu0 0
    %3776 = vmatprep.subr.bf16.mxu0 0
    %3777 = vmatpush1.bf16.msra.mxu0 0
    %3778 = vmatprep.subr.bf16.mxu0 0
    %3779 = vmatpush1.bf16.msra.mxu0 0
    %3780 = vmatprep.subr.bf16.mxu0 0
    %3781 = vmatpush1.bf16.msra.mxu0 0
    %3782 = vmatprep.subr.bf16.mxu0 0
    %3783 = vmatpush1.bf16.msra.mxu0 0
    %3784 = vmatprep.subr.bf16.mxu0 0
    %3785 = vmatpush1.bf16.msra.mxu0 0
    %3786 = vmatprep.subr.bf16.mxu0 0
    %3787 = vmatpush1.bf16.msra.mxu0 %v3767
    %3788 = vmatprep.subr.bf16.mxu0 0
    %3789 = vmatpush2.bf16.msra.mxu0 0
    %3790 = vmatprep.subr.bf16.mxu0 0
    %3791 = vmatpush2.bf16.msra.mxu0 0
    %3792 = vmatprep.subr.bf16.mxu0 0
    %3793 = vmatpush2.bf16.msra.mxu0 0
    %3794 = vmatprep.subr.bf16.mxu0 0
    %3795 = vmatpush2.bf16.msra.mxu0 0
    %3796 = vmatprep.subr.bf16.mxu0 0
    %3797 = vmatpush2.bf16.msra.mxu0 0
    %3798 = vmatprep.subr.bf16.mxu0 0
    %3799 = vmatpush2.bf16.msra.mxu0 0
    %3800 = vmatprep.subr.bf16.mxu0 0
    %3801 = vmatpush2.bf16.msra.mxu0 0
    %3802 = vmatprep.subr.bf16.mxu0 0
    %3803 = vmatpush2.bf16.msra.mxu0 0
    %3804 = vmatprep.mubr.bf16.mxu0 0
    %3805 = vmatmul.mubr.bf16.gmra.mxu0 %v3770
    %v3806 = vpop.f32.mrf.mxu0
    %v3807 = vadd.f32 0.0, %v3806
    %v3808 = vpop.f32.mrf.mxu0
    %v3809 = vpop.f32.mrf.mxu0
    %v3810 = vadd.f32 0.0, %v3809
    %v3811 = vpop.f32.mrf.mxu0
    %3812 = vdwg.mxu0
    %v3813 = vadd.f32 %v3757, %v3807
    %v3814 = vadd.f32 %v3758, %v3810
    %v3815 = vld [vmem:[%s795] sm:$0xf]
    %v3816 = vld [vmem:[%s795 + $0x4] sm:$0xf]
    %v3819 = vunpack.c.l.b16 %v3815
    %v3820 = vunpack.c.l.b16 %v3816
    %v3821 = vpack.c.b16 %v3820, %v3819
    %3822 = vrot.lane.b32.xlu0 %v3703, 32
    %v3823 = vpop.permute.xlu0 %3822
    %v3826 = vsel %vm691, %v3821, 0
    %3828 = vmatprep.subr.bf16.mxu0 0
    %3829 = vmatpush1.bf16.msra.mxu0 0
    %3830 = vmatprep.subr.bf16.mxu0 0
    %3831 = vmatpush1.bf16.msra.mxu0 0
    %3832 = vmatprep.subr.bf16.mxu0 0
    %3833 = vmatpush1.bf16.msra.mxu0 0
    %3834 = vmatprep.subr.bf16.mxu0 0
    %3835 = vmatpush1.bf16.msra.mxu0 0
    %3836 = vmatprep.subr.bf16.mxu0 0
    %3837 = vmatpush1.bf16.msra.mxu0 0
    %3838 = vmatprep.subr.bf16.mxu0 0
    %3839 = vmatpush1.bf16.msra.mxu0 0
    %3840 = vmatprep.subr.bf16.mxu0 0
    %3841 = vmatpush1.bf16.msra.mxu0 0
    %3842 = vmatprep.subr.bf16.mxu0 0
    %3843 = vmatpush1.bf16.msra.mxu0 %v3823
    %3844 = vmatprep.subr.bf16.mxu0 0
    %3845 = vmatpush2.bf16.msra.mxu0 0
    %3846 = vmatprep.subr.bf16.mxu0 0
    %3847 = vmatpush2.bf16.msra.mxu0 0
    %3848 = vmatprep.subr.bf16.mxu0 0
    %3849 = vmatpush2.bf16.msra.mxu0 0
    %3850 = vmatprep.subr.bf16.mxu0 0
    %3851 = vmatpush2.bf16.msra.mxu0 0
    %3852 = vmatprep.subr.bf16.mxu0 0
    %3853 = vmatpush2.bf16.msra.mxu0 0
    %3854 = vmatprep.subr.bf16.mxu0 0
    %3855 = vmatpush2.bf16.msra.mxu0 0
    %3856 = vmatprep.subr.bf16.mxu0 0
    %3857 = vmatpush2.bf16.msra.mxu0 0
    %3858 = vmatprep.subr.bf16.mxu0 0
    %3859 = vmatpush2.bf16.msra.mxu0 0
    %3860 = vmatprep.mubr.bf16.mxu0 0
    %3861 = vmatmul.mubr.bf16.gmra.mxu0 %v3826
    %v3862 = vpop.f32.mrf.mxu0
    %v3863 = vadd.f32 0.0, %v3862
    %v3864 = vpop.f32.mrf.mxu0
    %v3865 = vpop.f32.mrf.mxu0
    %v3866 = vadd.f32 0.0, %v3865
    %v3867 = vpop.f32.mrf.mxu0
    %3868 = vdwg.mxu0
    %v3869 = vadd.f32 %v3813, %v3863
    %v3870 = vadd.f32 %v3814, %v3866
    %v3871 = vld [vmem:[%s852] sm:$0xf]
    %v3872 = vld [vmem:[%s852 + $0x4] sm:$0xf]
    %v3873 = vpack.c.bf16 %v2777, %v2773
    %v3876 = vunpack.c.l.b16 %v3871
    %v3877 = vunpack.c.l.b16 %v3872
    %v3878 = vpack.c.b16 %v3877, %v3876
    %v3880 = vsel %vm691, %v3878, 0
    %3882 = vmatprep.subr.bf16.mxu0 0
    %3883 = vmatpush1.bf16.msra.mxu0 0
    %3884 = vmatprep.subr.bf16.mxu0 0
    %3885 = vmatpush1.bf16.msra.mxu0 0
    %3886 = vmatprep.subr.bf16.mxu0 0
    %3887 = vmatpush1.bf16.msra.mxu0 0
    %3888 = vmatprep.subr.bf16.mxu0 0
    %3889 = vmatpush1.bf16.msra.mxu0 0
    %3890 = vmatprep.subr.bf16.mxu0 0
    %3891 = vmatpush1.bf16.msra.mxu0 0
    %3892 = vmatprep.subr.bf16.mxu0 0
    %3893 = vmatpush1.bf16.msra.mxu0 0
    %3894 = vmatprep.subr.bf16.mxu0 0
    %3895 = vmatpush1.bf16.msra.mxu0 0
    %3896 = vmatprep.subr.bf16.mxu0 0
    %3897 = vmatpush1.bf16.msra.mxu0 %v3873
    %3898 = vmatprep.subr.bf16.mxu0 0
    %3899 = vmatpush2.bf16.msra.mxu0 0
    %3900 = vmatprep.subr.bf16.mxu0 0
    %3901 = vmatpush2.bf16.msra.mxu0 0
    %3902 = vmatprep.subr.bf16.mxu0 0
    %3903 = vmatpush2.bf16.msra.mxu0 0
    %3904 = vmatprep.subr.bf16.mxu0 0
    %3905 = vmatpush2.bf16.msra.mxu0 0
    %3906 = vmatprep.subr.bf16.mxu0 0
    %3907 = vmatpush2.bf16.msra.mxu0 0
    %3908 = vmatprep.subr.bf16.mxu0 0
    %3909 = vmatpush2.bf16.msra.mxu0 0
    %3910 = vmatprep.subr.bf16.mxu0 0
    %3911 = vmatpush2.bf16.msra.mxu0 0
    %3912 = vmatprep.subr.bf16.mxu0 0
    %3913 = vmatpush2.bf16.msra.mxu0 0
    %3914 = vmatprep.mubr.bf16.mxu0 0
    %3915 = vmatmul.mubr.bf16.gmra.mxu0 %v3880
    %v3916 = vpop.f32.mrf.mxu0
    %v3917 = vadd.f32 0.0, %v3916
    %v3918 = vpop.f32.mrf.mxu0
    %v3919 = vpop.f32.mrf.mxu0
    %v3920 = vadd.f32 0.0, %v3919
    %v3921 = vpop.f32.mrf.mxu0
    %3922 = vdwg.mxu0
    %v3923 = vadd.f32 %v3869, %v3917
    %v3924 = vadd.f32 %v3870, %v3920
    %3925 = vst.msk [vmem:[#allocation2 + $0x40] sm:$0xff] %vm75, %v3923
    %3926 = vst.msk [vmem:[#allocation2 + $0x48] sm:$0xff] %vm75, %v3924
    %s3927 = scalar_lea.vmem %s6, 16
    %v3928 = vld [vmem:[%s3927] sm:$0xf]
    %v3929 = vld [vmem:[%s3927 + $0x4] sm:$0xf]
    %v3930 = vld [vmem:[%s3927 + $0x8] sm:$0xf]
    %v3931 = vld [vmem:[%s3927 + $0xc] sm:$0xf]
    %v3932 = vpack.c.bf16 %v3924, %v3923
    %v3937 = vunpack.c.l.b16 %v3928
    %v3938 = vunpack.c.l.b16 %v3929
    %v3939 = vunpack.c.l.b16 %v3930
    %v3940 = vunpack.c.l.b16 %v3931
    %v3941 = vpack.c.b16 %v3938, %v3937
    %v3942 = vpack.c.b16 %v3940, %v3939
    %v3946 = vsel %vm75, %v3932, 0
    %3948 = vmatprep.subr.bf16.mxu0 0
    %3949 = vmatpush1.bf16.msra.mxu0 0
    %3950 = vmatprep.subr.bf16.mxu0 0
    %3951 = vmatpush1.bf16.msra.mxu0 0
    %3952 = vmatprep.subr.bf16.mxu0 0
    %3953 = vmatpush1.bf16.msra.mxu0 0
    %3954 = vmatprep.subr.bf16.mxu0 0
    %3955 = vmatpush1.bf16.msra.mxu0 0
    %3956 = vmatprep.subr.bf16.mxu0 0
    %3957 = vmatpush1.bf16.msra.mxu0 0
    %3958 = vmatprep.subr.bf16.mxu0 0
    %3959 = vmatpush1.bf16.msra.mxu0 0
    %3960 = vmatprep.subr.bf16.mxu0 0
    %3961 = vmatpush1.bf16.msra.mxu0 %v3942
    %3962 = vmatprep.subr.bf16.mxu0 0
    %3963 = vmatpush1.bf16.msra.mxu0 %v3941
    %3964 = vmatprep.subr.bf16.mxu0 0
    %3965 = vmatpush2.bf16.msra.mxu0 0
    %3966 = vmatprep.subr.bf16.mxu0 0
    %3967 = vmatpush2.bf16.msra.mxu0 0
    %3968 = vmatprep.subr.bf16.mxu0 0
    %3969 = vmatpush2.bf16.msra.mxu0 0
    %3970 = vmatprep.subr.bf16.mxu0 0
    %3971 = vmatpush2.bf16.msra.mxu0 0
    %3972 = vmatprep.subr.bf16.mxu0 0
    %3973 = vmatpush2.bf16.msra.mxu0 0
    %3974 = vmatprep.subr.bf16.mxu0 0
    %3975 = vmatpush2.bf16.msra.mxu0 0
    %3976 = vmatprep.subr.bf16.mxu0 0
    %3977 = vmatpush2.bf16.msra.mxu0 0
    %3978 = vmatprep.subr.bf16.mxu0 0
    %3979 = vmatpush2.bf16.msra.mxu0 0
    %3980 = vmatprep.mubr.bf16.mxu0 0
    %3981 = vmatmul.mubr.bf16.gmra.mxu0 %v3946
    %v3982 = vpop.f32.mrf.mxu0
    %v3983 = vadd.f32 0.0, %v3982
    %v3984 = vpop.f32.mrf.mxu0
    %v3985 = vpop.f32.mrf.mxu0
    %v3986 = vadd.f32 0.0, %v3985
    %v3987 = vpop.f32.mrf.mxu0
    %3988 = vdwg.mxu0
    %v3989 = vadd.f32 %v2327, %v3983
    %v3990 = vadd.f32 %v2330, %v3986
    %s3991 = scalar_lea.vmem %s7, 1
    %v3992 = vld [vmem:[%s3991] sm:$0x1]
    %v3994 = vlaneseq
    %v3995 = vshrl.u32 %v3994, 7
    %v3996 = vsub.s32 0, %v3995
    %v3997 = vrot.slane %v3992, %v3996
    %v3999 = vadd.f32 %v3989, %v3997
    %v4000 = vadd.f32 %v3990, %v3997
    %v4001 = vld [vmem:[#allocation2] sm:$0xff]
    %v4002 = vld [vmem:[#allocation2 + $0x8] sm:$0xff]
    %v4003 = vld [vmem:[#allocation2 + $0x10] sm:$0xff]
    %v4004 = vld [vmem:[#allocation2 + $0x18] sm:$0xff]
    %v4005 = vld [vmem:[#allocation2 + $0x20] sm:$0xff]
    %v4006 = vld [vmem:[#allocation2 + $0x28] sm:$0xff]
    %v4007 = vld [vmem:[#allocation2 + $0x30] sm:$0xff]
    %v4008 = vld [vmem:[#allocation2 + $0x38] sm:$0xff]
    %v4009 = vld [vmem:[#allocation2 + $0x40] sm:$0xff]
    %v4010 = vld [vmem:[#allocation2 + $0x48] sm:$0xff]
    %4019 = vrot.lane.b32.xlu0 %v4003, 32
    %v4020 = vpop.permute.xlu0 %4019
    %4021 = vrot.lane.b32.xlu0 %v4004, 32
    %v4022 = vpop.permute.xlu0 %4021
    %4023 = vrot.lane.b32.xlu0 %v4005, 32
    %v4024 = vpop.permute.xlu0 %4023
    %4025 = vrot.lane.b32.xlu0 %v4006, 32
    %v4026 = vpop.permute.xlu0 %4025
    %4027 = vrot.lane.b32.xlu0 %v4007, 32
    %v4028 = vpop.permute.xlu0 %4027
    %4029 = vrot.lane.b32.xlu0 %v4008, 32
    %v4030 = vpop.permute.xlu0 %4029
    %4031 = vrot.lane.b32.xlu0 %v4009, 32
    %v4032 = vpop.permute.xlu0 %4031
    %4033 = vrot.lane.b32.xlu0 %v4010, 32
    %v4034 = vpop.permute.xlu0 %4033
    %v4043 = vsel %vm75, %v4001, %v4020
    %v4044 = vsel %vm75, %v4002, %v4022
    %v4045 = vsel %vm75, %v4003, %v4024
    %v4046 = vsel %vm75, %v4004, %v4026
    %v4047 = vsel %vm75, %v4005, %v4028
    %v4048 = vsel %vm75, %v4006, %v4030
    %v4049 = vsel %vm75, %v4007, %v4032
    %v4050 = vsel %vm75, %v4008, %v4034
    %s4051 = scalar_lea.vmem %s2, 64
    %v4052 = vld [vmem:[%s4051] sm:$0xf]
    %v4053 = vld [vmem:[%s4051 + $0x4] sm:$0xf]
    %v4054 = vld [vmem:[%s4051 + $0x8] sm:$0xf]
    %v4055 = vld [vmem:[%s4051 + $0xc] sm:$0xf]
    %v4056 = vld [vmem:[%s4051 + $0x10] sm:$0xf]
    %v4057 = vld [vmem:[%s4051 + $0x14] sm:$0xf]
    %v4058 = vld [vmem:[%s4051 + $0x18] sm:$0xf]
    %v4059 = vld [vmem:[%s4051 + $0x1c] sm:$0xf]
    %v4060 = vpack.c.bf16 %v4044, %v4043
    %v4061 = vpack.c.bf16 %v4046, %v4045
    %v4062 = vpack.c.bf16 %v4048, %v4047
    %v4063 = vpack.c.bf16 %v4050, %v4049
    %s4064 = scalar_lea.vmem %s3, 2
    %v4065 = vld [vmem:[%s4064] sm:$0x1]
    %v4067 = vlaneseq
    %v4068 = vshrl.u32 %v4067, 7
    %v4069 = vsub.s32 0, %v4068
    %v4070 = vrot.slane %v4065, %v4069
    %v4080 = vunpack.c.l.b16 %v4052
    %v4081 = vunpack.c.l.b16 %v4053
    %v4082 = vunpack.c.l.b16 %v4054
    %v4083 = vunpack.c.l.b16 %v4055
    %v4084 = vunpack.c.l.b16 %v4056
    %v4085 = vunpack.c.l.b16 %v4057
    %v4086 = vunpack.c.l.b16 %v4058
    %v4087 = vunpack.c.l.b16 %v4059
    %v4088 = vpack.c.b16 %v4081, %v4080
    %v4089 = vpack.c.b16 %v4083, %v4082
    %v4090 = vpack.c.b16 %v4085, %v4084
    %v4091 = vpack.c.b16 %v4087, %v4086
    %v4097 = vsel %vm224, %v4060, 0
    %v4100 = vsel %vm224, %v4061, 0
    %v4103 = vsel %vm224, %v4062, 0
    %v4106 = vsel %vm224, %v4063, 0
    %4108 = vmatprep.subr.bf16.mxu0 0
    %4109 = vmatpush1.bf16.msra.mxu0 0
    %4110 = vmatprep.subr.bf16.mxu0 0
    %4111 = vmatpush1.bf16.msra.mxu0 0
    %4112 = vmatprep.subr.bf16.mxu0 0
    %4113 = vmatpush1.bf16.msra.mxu0 0
    %4114 = vmatprep.subr.bf16.mxu0 0
    %4115 = vmatpush1.bf16.msra.mxu0 0
    %4116 = vmatprep.subr.bf16.mxu0 0
    %4117 = vmatpush1.bf16.msra.mxu0 %v4091
    %4118 = vmatprep.subr.bf16.mxu0 0
    %4119 = vmatpush1.bf16.msra.mxu0 %v4090
    %4120 = vmatprep.subr.bf16.mxu0 0
    %4121 = vmatpush1.bf16.msra.mxu0 %v4089
    %4122 = vmatprep.subr.bf16.mxu0 0
    %4123 = vmatpush1.bf16.msra.mxu0 %v4088
    %4124 = vmatprep.subr.bf16.mxu0 0
    %4125 = vmatpush2.bf16.msra.mxu0 0
    %4126 = vmatprep.subr.bf16.mxu0 0
    %4127 = vmatpush2.bf16.msra.mxu0 0
    %4128 = vmatprep.subr.bf16.mxu0 0
    %4129 = vmatpush2.bf16.msra.mxu0 0
    %4130 = vmatprep.subr.bf16.mxu0 0
    %4131 = vmatpush2.bf16.msra.mxu0 0
    %4132 = vmatprep.subr.bf16.mxu0 0
    %4133 = vmatpush2.bf16.msra.mxu0 0
    %4134 = vmatprep.subr.bf16.mxu0 0
    %4135 = vmatpush2.bf16.msra.mxu0 0
    %4136 = vmatprep.subr.bf16.mxu0 0
    %4137 = vmatpush2.bf16.msra.mxu0 0
    %4138 = vmatprep.subr.bf16.mxu0 0
    %4139 = vmatpush2.bf16.msra.mxu0 0
    %4140 = vmatprep.mubr.bf16.mxu0 0
    %4141 = vmatmul.mubr.bf16.gmra.mxu0 %v4097
    %v4142 = vpop.f32.mrf.mxu0
    %v4143 = vadd.f32 %v4070, %v4142
    %v4144 = vpop.f32.mrf.mxu0
    %v4145 = vpop.f32.mrf.mxu0
    %v4146 = vadd.f32 %v4070, %v4145
    %v4147 = vpop.f32.mrf.mxu0
    %4148 = vmatprep.mubr.bf16.mxu0 0
    %4149 = vmatmul.mubr.bf16.gmra.mxu0 %v4100
    %v4150 = vpop.f32.mrf.mxu0
    %v4151 = vadd.f32 %v4070, %v4150
    %v4152 = vpop.f32.mrf.mxu0
    %v4153 = vpop.f32.mrf.mxu0
    %v4154 = vadd.f32 %v4070, %v4153
    %v4155 = vpop.f32.mrf.mxu0
    %4156 = vmatprep.mubr.bf16.mxu0 0
    %4157 = vmatmul.mubr.bf16.gmra.mxu0 %v4103
    %v4158 = vpop.f32.mrf.mxu0
    %v4159 = vadd.f32 %v4070, %v4158
    %v4160 = vpop.f32.mrf.mxu0
    %v4161 = vpop.f32.mrf.mxu0
    %v4162 = vadd.f32 %v4070, %v4161
    %v4163 = vpop.f32.mrf.mxu0
    %4164 = vmatprep.mubr.bf16.mxu0 0
    %4165 = vmatmul.mubr.bf16.gmra.mxu0 %v4106
    %v4166 = vpop.f32.mrf.mxu0
    %v4167 = vadd.f32 %v4070, %v4166
    %v4168 = vpop.f32.mrf.mxu0
    %v4169 = vpop.f32.mrf.mxu0
    %v4170 = vadd.f32 %v4070, %v4169
    %v4171 = vpop.f32.mrf.mxu0
    %4172 = vdwg.mxu0
    %v4173 = vtanh.pop %v4143
    %v4174 = vtanh.pop %v4146
    %v4175 = vtanh.pop %v4151
    %v4176 = vtanh.pop %v4154
    %v4177 = vtanh.pop %v4159
    %v4178 = vtanh.pop %v4162
    %v4179 = vtanh.pop %v4167
    %v4180 = vtanh.pop %v4170
    %v4181 = vxor.u32 %v4143, 2147483648
    %v4182 = vxor.u32 %v4146, 2147483648
    %v4183 = vxor.u32 %v4151, 2147483648
    %v4184 = vxor.u32 %v4154, 2147483648
    %v4185 = vxor.u32 %v4159, 2147483648
    %v4186 = vxor.u32 %v4162, 2147483648
    %v4187 = vxor.u32 %v4167, 2147483648
    %v4188 = vxor.u32 %v4170, 2147483648
    %v4189 = vmul.f32 %v4181, 1.442695
    %v4190 = vpow.pop %v4189
    %v4191 = vmul.f32 %v4182, 1.442695
    %v4192 = vpow.pop %v4191
    %v4193 = vmul.f32 %v4183, 1.442695
    %v4194 = vpow.pop %v4193
    %v4195 = vmul.f32 %v4184, 1.442695
    %v4196 = vpow.pop %v4195
    %v4197 = vmul.f32 %v4185, 1.442695
    %v4198 = vpow.pop %v4197
    %v4199 = vmul.f32 %v4186, 1.442695
    %v4200 = vpow.pop %v4199
    %v4201 = vmul.f32 %v4187, 1.442695
    %v4202 = vpow.pop %v4201
    %v4203 = vmul.f32 %v4188, 1.442695
    %v4204 = vpow.pop %v4203
    %v4205 = vadd.f32 %v4190, 1.0
    %v4206 = vadd.f32 %v4192, 1.0
    %v4207 = vadd.f32 %v4194, 1.0
    %v4208 = vadd.f32 %v4196, 1.0
    %v4209 = vadd.f32 %v4198, 1.0
    %v4210 = vadd.f32 %v4200, 1.0
    %v4211 = vadd.f32 %v4202, 1.0
    %v4212 = vadd.f32 %v4204, 1.0
    %v4213 = vrcp.pop %v4205
    %v4214 = vmul.f32 1.0, %v4213
    %v4215 = vrcp.pop %v4206
    %v4216 = vmul.f32 1.0, %v4215
    %v4217 = vrcp.pop %v4207
    %v4218 = vmul.f32 1.0, %v4217
    %v4219 = vrcp.pop %v4208
    %v4220 = vmul.f32 1.0, %v4219
    %v4221 = vrcp.pop %v4209
    %v4222 = vmul.f32 1.0, %v4221
    %v4223 = vrcp.pop %v4210
    %v4224 = vmul.f32 1.0, %v4223
    %v4225 = vrcp.pop %v4211
    %v4226 = vmul.f32 1.0, %v4225
    %v4227 = vrcp.pop %v4212
    %v4228 = vmul.f32 1.0, %v4227
    %4237 = vrot.lane.b32.xlu0 %v4214, 96
    %v4238 = vpop.permute.xlu0 %4237
    %4239 = vrot.lane.b32.xlu0 %v4216, 96
    %v4240 = vpop.permute.xlu0 %4239
    %4241 = vrot.lane.b32.xlu0 %v4218, 96
    %v4242 = vpop.permute.xlu0 %4241
    %4243 = vrot.lane.b32.xlu0 %v4220, 96
    %v4244 = vpop.permute.xlu0 %4243
    %4245 = vrot.lane.b32.xlu0 %v4222, 96
    %v4246 = vpop.permute.xlu0 %4245
    %4247 = vrot.lane.b32.xlu0 %v4224, 96
    %v4248 = vpop.permute.xlu0 %4247
    %4249 = vrot.lane.b32.xlu0 %v4226, 96
    %v4250 = vpop.permute.xlu0 %4249
    %4251 = vrot.lane.b32.xlu0 %v4228, 96
    %v4252 = vpop.permute.xlu0 %4251
    %v4261 = vmul.f32 %v4173, %v4238
    %v4262 = vmul.f32 %v4174, %v4240
    %v4263 = vmul.f32 %v4175, %v4242
    %v4264 = vmul.f32 %v4176, %v4244
    %v4265 = vmul.f32 %v4177, %v4246
    %v4266 = vmul.f32 %v4178, %v4248
    %v4267 = vmul.f32 %v4179, %v4250
    %v4268 = vmul.f32 %v4180, %v4252
    %s4269 = scalar_lea.vmem %s4, 64
    %v4270 = vld [vmem:[%s4269] sm:$0xff]
    %v4271 = vld [vmem:[%s4269 + $0x8] sm:$0xff]
    %v4272 = vld [vmem:[%s4269 + $0x10] sm:$0xff]
    %v4273 = vld [vmem:[%s4269 + $0x18] sm:$0xff]
    %v4274 = vpack.c.bf16 %v4262, %v4261
    %v4275 = vpack.c.bf16 %v4264, %v4263
    %v4276 = vpack.c.bf16 %v4266, %v4265
    %v4277 = vpack.c.bf16 %v4268, %v4267
    %v4282 = vunpack.c.l.b16 %v4270
    %v4283 = vunpack.c.h.b16 %v4270
    %v4284 = vunpack.c.l.b16 %v4271
    %v4285 = vunpack.c.h.b16 %v4271
    %v4286 = vunpack.c.l.b16 %v4272
    %v4287 = vunpack.c.h.b16 %v4272
    %v4288 = vunpack.c.l.b16 %v4273
    %v4289 = vunpack.c.h.b16 %v4273
    %v4290 = vpack.c.b16 %v4284, %v4282
    %v4291 = vpack.c.b16 %v4285, %v4283
    %v4292 = vpack.c.b16 %v4288, %v4286
    %v4293 = vpack.c.b16 %v4289, %v4287
    %v4299 = vsel %vm75, %v4274, 0
    %v4302 = vsel %vm75, %v4275, 0
    %v4305 = vsel %vm75, %v4276, 0
    %v4308 = vsel %vm75, %v4277, 0
    %4310 = vmatprep.subr.bf16.mxu0 0
    %4311 = vmatpush1.bf16.msra.mxu0 0
    %4312 = vmatprep.subr.bf16.mxu0 0
    %4313 = vmatpush1.bf16.msra.mxu0 0
    %4314 = vmatprep.subr.bf16.mxu0 0
    %4315 = vmatpush1.bf16.msra.mxu0 0
    %4316 = vmatprep.subr.bf16.mxu0 0
    %4317 = vmatpush1.bf16.msra.mxu0 0
    %4318 = vmatprep.subr.bf16.mxu0 0
    %4319 = vmatpush1.bf16.msra.mxu0 0
    %4320 = vmatprep.subr.bf16.mxu0 0
    %4321 = vmatpush1.bf16.msra.mxu0 0
    %4322 = vmatprep.subr.bf16.mxu0 %v4293
    %4323 = vmatpush1.bf16.msra.mxu0 %v4292
    %4324 = vmatprep.subr.bf16.mxu0 %v4291
    %4325 = vmatpush1.bf16.msra.mxu0 %v4290
    %4326 = vmatprep.subr.bf16.mxu0 0
    %4327 = vmatpush2.bf16.msra.mxu0 0
    %4328 = vmatprep.subr.bf16.mxu0 0
    %4329 = vmatpush2.bf16.msra.mxu0 0
    %4330 = vmatprep.subr.bf16.mxu0 0
    %4331 = vmatpush2.bf16.msra.mxu0 0
    %4332 = vmatprep.subr.bf16.mxu0 0
    %4333 = vmatpush2.bf16.msra.mxu0 0
    %4334 = vmatprep.subr.bf16.mxu0 0
    %4335 = vmatpush2.bf16.msra.mxu0 0
    %4336 = vmatprep.subr.bf16.mxu0 0
    %4337 = vmatpush2.bf16.msra.mxu0 0
    %4338 = vmatprep.subr.bf16.mxu0 0
    %4339 = vmatpush2.bf16.msra.mxu0 0
    %4340 = vmatprep.subr.bf16.mxu0 0
    %4341 = vmatpush2.bf16.msra.mxu0 0
    %4342 = vmatprep.mubr.bf16.mxu0 0
    %4343 = vmatmul.mubr.bf16.gmra.mxu0 %v4299
    %v4344 = vpop.f32.mrf.mxu0
    %v4345 = vadd.f32 0.0, %v4344
    %v4346 = vpop.f32.mrf.mxu0
    %v4347 = vadd.f32 0.0, %v4346
    %v4348 = vpop.f32.mrf.mxu0
    %v4349 = vadd.f32 0.0, %v4348
    %v4350 = vpop.f32.mrf.mxu0
    %v4351 = vadd.f32 0.0, %v4350
    %4352 = vmatprep.mubr.bf16.mxu0 0
    %4353 = vmatmul.mubr.bf16.gmra.mxu0 %v4302
    %v4354 = vpop.f32.mrf.mxu0
    %v4355 = vadd.f32 0.0, %v4354
    %v4356 = vpop.f32.mrf.mxu0
    %v4357 = vadd.f32 0.0, %v4356
    %v4358 = vpop.f32.mrf.mxu0
    %v4359 = vadd.f32 0.0, %v4358
    %v4360 = vpop.f32.mrf.mxu0
    %v4361 = vadd.f32 0.0, %v4360
    %4362 = vmatprep.mubr.bf16.mxu0 0
    %4363 = vmatmul.mubr.bf16.gmra.mxu0 %v4305
    %v4364 = vpop.f32.mrf.mxu0
    %v4365 = vadd.f32 0.0, %v4364
    %v4366 = vpop.f32.mrf.mxu0
    %v4367 = vadd.f32 0.0, %v4366
    %v4368 = vpop.f32.mrf.mxu0
    %v4369 = vadd.f32 0.0, %v4368
    %v4370 = vpop.f32.mrf.mxu0
    %v4371 = vadd.f32 0.0, %v4370
    %4372 = vmatprep.mubr.bf16.mxu0 0
    %4373 = vmatmul.mubr.bf16.gmra.mxu0 %v4308
    %v4374 = vpop.f32.mrf.mxu0
    %v4375 = vadd.f32 0.0, %v4374
    %v4376 = vpop.f32.mrf.mxu0
    %v4377 = vadd.f32 0.0, %v4376
    %v4378 = vpop.f32.mrf.mxu0
    %v4379 = vadd.f32 0.0, %v4378
    %v4380 = vpop.f32.mrf.mxu0
    %v4381 = vadd.f32 0.0, %v4380
    %4382 = vdwg.mxu0
    %s4383 = scalar_lea.vmem %s5, 2
    %v4384 = vld [vmem:[%s4383] sm:$0x1]
    %v4386 = vlaneseq
    %v4387 = vshrl.u32 %v4386, 7
    %v4388 = vsub.s32 0, %v4387
    %v4389 = vrot.slane %v4384, %v4388
    %v4391 = vadd.f32 %v4345, %v4389
    %v4392 = vadd.f32 %v4349, %v4389
    %v4393 = vadd.f32 %v4355, %v4389
    %v4394 = vadd.f32 %v4359, %v4389
    %v4395 = vadd.f32 %v4365, %v4389
    %v4396 = vadd.f32 %v4369, %v4389
    %v4397 = vadd.f32 %v4375, %v4389
    %v4398 = vadd.f32 %v4379, %v4389
    %v4399 = vld [vmem:[%s1] sm:$0xf]
    %v4400 = vld [vmem:[%s1 + $0x4] sm:$0xf]
    %v4401 = vpack.c.bf16 %v4349, %v4345
    %v4404 = vunpack.c.l.b16 %v4399
    %v4405 = vunpack.c.l.b16 %v4400
    %v4406 = vpack.c.b16 %v4405, %v4404
    %4408 = vrot.lane.b32.xlu0 %v4401, 96
    %v4409 = vpop.permute.xlu0 %4408
    %v4412 = vsel %vm691, %v4406, 0
    %4414 = vmatprep.subr.bf16.mxu0 0
    %4415 = vmatpush1.bf16.msra.mxu0 0
    %4416 = vmatprep.subr.bf16.mxu0 0
    %4417 = vmatpush1.bf16.msra.mxu0 0
    %4418 = vmatprep.subr.bf16.mxu0 0
    %4419 = vmatpush1.bf16.msra.mxu0 0
    %4420 = vmatprep.subr.bf16.mxu0 0
    %4421 = vmatpush1.bf16.msra.mxu0 0
    %4422 = vmatprep.subr.bf16.mxu0 0
    %4423 = vmatpush1.bf16.msra.mxu0 0
    %4424 = vmatprep.subr.bf16.mxu0 0
    %4425 = vmatpush1.bf16.msra.mxu0 0
    %4426 = vmatprep.subr.bf16.mxu0 0
    %4427 = vmatpush1.bf16.msra.mxu0 0
    %4428 = vmatprep.subr.bf16.mxu0 0
    %4429 = vmatpush1.bf16.msra.mxu0 %v4409
    %4430 = vmatprep.subr.bf16.mxu0 0
    %4431 = vmatpush2.bf16.msra.mxu0 0
    %4432 = vmatprep.subr.bf16.mxu0 0
    %4433 = vmatpush2.bf16.msra.mxu0 0
    %4434 = vmatprep.subr.bf16.mxu0 0
    %4435 = vmatpush2.bf16.msra.mxu0 0
    %4436 = vmatprep.subr.bf16.mxu0 0
    %4437 = vmatpush2.bf16.msra.mxu0 0
    %4438 = vmatprep.subr.bf16.mxu0 0
    %4439 = vmatpush2.bf16.msra.mxu0 0
    %4440 = vmatprep.subr.bf16.mxu0 0
    %4441 = vmatpush2.bf16.msra.mxu0 0
    %4442 = vmatprep.subr.bf16.mxu0 0
    %4443 = vmatpush2.bf16.msra.mxu0 0
    %4444 = vmatprep.subr.bf16.mxu0 0
    %4445 = vmatpush2.bf16.msra.mxu0 0
    %4446 = vmatprep.mubr.bf16.mxu0 0
    %4447 = vmatmul.mubr.bf16.gmra.mxu0 %v4412
    %v4448 = vpop.f32.mrf.mxu0
    %v4449 = vadd.f32 0.0, %v4448
    %v4450 = vpop.f32.mrf.mxu0
    %v4451 = vpop.f32.mrf.mxu0
    %v4452 = vadd.f32 0.0, %v4451
    %v4453 = vpop.f32.mrf.mxu0
    %4454 = vdwg.mxu0
    %v4455 = vadd.f32 %v4391, %v4449
    %v4456 = vadd.f32 %v4392, %v4452
    %v4457 = vld [vmem:[%s738] sm:$0xf]
    %v4458 = vld [vmem:[%s738 + $0x4] sm:$0xf]
    %v4461 = vunpack.c.l.b16 %v4457
    %v4462 = vunpack.c.l.b16 %v4458
    %v4463 = vpack.c.b16 %v4462, %v4461
    %4464 = vrot.lane.b32.xlu0 %v4401, 64
    %v4465 = vpop.permute.xlu0 %4464
    %v4468 = vsel %vm691, %v4463, 0
    %4470 = vmatprep.subr.bf16.mxu0 0
    %4471 = vmatpush1.bf16.msra.mxu0 0
    %4472 = vmatprep.subr.bf16.mxu0 0
    %4473 = vmatpush1.bf16.msra.mxu0 0
    %4474 = vmatprep.subr.bf16.mxu0 0
    %4475 = vmatpush1.bf16.msra.mxu0 0
    %4476 = vmatprep.subr.bf16.mxu0 0
    %4477 = vmatpush1.bf16.msra.mxu0 0
    %4478 = vmatprep.subr.bf16.mxu0 0
    %4479 = vmatpush1.bf16.msra.mxu0 0
    %4480 = vmatprep.subr.bf16.mxu0 0
    %4481 = vmatpush1.bf16.msra.mxu0 0
    %4482 = vmatprep.subr.bf16.mxu0 0
    %4483 = vmatpush1.bf16.msra.mxu0 0
    %4484 = vmatprep.subr.bf16.mxu0 0
    %4485 = vmatpush1.bf16.msra.mxu0 %v4465
    %4486 = vmatprep.subr.bf16.mxu0 0
    %4487 = vmatpush2.bf16.msra.mxu0 0
    %4488 = vmatprep.subr.bf16.mxu0 0
    %4489 = vmatpush2.bf16.msra.mxu0 0
    %4490 = vmatprep.subr.bf16.mxu0 0
    %4491 = vmatpush2.bf16.msra.mxu0 0
    %4492 = vmatprep.subr.bf16.mxu0 0
    %4493 = vmatpush2.bf16.msra.mxu0 0
    %4494 = vmatprep.subr.bf16.mxu0 0
    %4495 = vmatpush2.bf16.msra.mxu0 0
    %4496 = vmatprep.subr.bf16.mxu0 0
    %4497 = vmatpush2.bf16.msra.mxu0 0
    %4498 = vmatprep.subr.bf16.mxu0 0
    %4499 = vmatpush2.bf16.msra.mxu0 0
    %4500 = vmatprep.subr.bf16.mxu0 0
    %4501 = vmatpush2.bf16.msra.mxu0 0
    %4502 = vmatprep.mubr.bf16.mxu0 0
    %4503 = vmatmul.mubr.bf16.gmra.mxu0 %v4468
    %v4504 = vpop.f32.mrf.mxu0
    %v4505 = vadd.f32 0.0, %v4504
    %v4506 = vpop.f32.mrf.mxu0
    %v4507 = vpop.f32.mrf.mxu0
    %v4508 = vadd.f32 0.0, %v4507
    %v4509 = vpop.f32.mrf.mxu0
    %4510 = vdwg.mxu0
    %v4511 = vadd.f32 %v4455, %v4505
    %v4512 = vadd.f32 %v4456, %v4508
    %v4513 = vld [vmem:[%s795] sm:$0xf]
    %v4514 = vld [vmem:[%s795 + $0x4] sm:$0xf]
    %v4517 = vunpack.c.l.b16 %v4513
    %v4518 = vunpack.c.l.b16 %v4514
    %v4519 = vpack.c.b16 %v4518, %v4517
    %4520 = vrot.lane.b32.xlu0 %v4401, 32
    %v4521 = vpop.permute.xlu0 %4520
    %v4524 = vsel %vm691, %v4519, 0
    %4526 = vmatprep.subr.bf16.mxu0 0
    %4527 = vmatpush1.bf16.msra.mxu0 0
    %4528 = vmatprep.subr.bf16.mxu0 0
    %4529 = vmatpush1.bf16.msra.mxu0 0
    %4530 = vmatprep.subr.bf16.mxu0 0
    %4531 = vmatpush1.bf16.msra.mxu0 0
    %4532 = vmatprep.subr.bf16.mxu0 0
    %4533 = vmatpush1.bf16.msra.mxu0 0
    %4534 = vmatprep.subr.bf16.mxu0 0
    %4535 = vmatpush1.bf16.msra.mxu0 0
    %4536 = vmatprep.subr.bf16.mxu0 0
    %4537 = vmatpush1.bf16.msra.mxu0 0
    %4538 = vmatprep.subr.bf16.mxu0 0
    %4539 = vmatpush1.bf16.msra.mxu0 0
    %4540 = vmatprep.subr.bf16.mxu0 0
    %4541 = vmatpush1.bf16.msra.mxu0 %v4521
    %4542 = vmatprep.subr.bf16.mxu0 0
    %4543 = vmatpush2.bf16.msra.mxu0 0
    %4544 = vmatprep.subr.bf16.mxu0 0
    %4545 = vmatpush2.bf16.msra.mxu0 0
    %4546 = vmatprep.subr.bf16.mxu0 0
    %4547 = vmatpush2.bf16.msra.mxu0 0
    %4548 = vmatprep.subr.bf16.mxu0 0
    %4549 = vmatpush2.bf16.msra.mxu0 0
    %4550 = vmatprep.subr.bf16.mxu0 0
    %4551 = vmatpush2.bf16.msra.mxu0 0
    %4552 = vmatprep.subr.bf16.mxu0 0
    %4553 = vmatpush2.bf16.msra.mxu0 0
    %4554 = vmatprep.subr.bf16.mxu0 0
    %4555 = vmatpush2.bf16.msra.mxu0 0
    %4556 = vmatprep.subr.bf16.mxu0 0
    %4557 = vmatpush2.bf16.msra.mxu0 0
    %4558 = vmatprep.mubr.bf16.mxu0 0
    %4559 = vmatmul.mubr.bf16.gmra.mxu0 %v4524
    %v4560 = vpop.f32.mrf.mxu0
    %v4561 = vadd.f32 0.0, %v4560
    %v4562 = vpop.f32.mrf.mxu0
    %v4563 = vpop.f32.mrf.mxu0
    %v4564 = vadd.f32 0.0, %v4563
    %v4565 = vpop.f32.mrf.mxu0
    %4566 = vdwg.mxu0
    %v4567 = vadd.f32 %v4511, %v4561
    %v4568 = vadd.f32 %v4512, %v4564
    %v4569 = vld [vmem:[%s852] sm:$0xf]
    %v4570 = vld [vmem:[%s852 + $0x4] sm:$0xf]
    %v4571 = vpack.c.bf16 %v4351, %v4347
    %v4574 = vunpack.c.l.b16 %v4569
    %v4575 = vunpack.c.l.b16 %v4570
    %v4576 = vpack.c.b16 %v4575, %v4574
    %v4578 = vsel %vm691, %v4576, 0
    %4580 = vmatprep.subr.bf16.mxu0 0
    %4581 = vmatpush1.bf16.msra.mxu0 0
    %4582 = vmatprep.subr.bf16.mxu0 0
    %4583 = vmatpush1.bf16.msra.mxu0 0
    %4584 = vmatprep.subr.bf16.mxu0 0
    %4585 = vmatpush1.bf16.msra.mxu0 0
    %4586 = vmatprep.subr.bf16.mxu0 0
    %4587 = vmatpush1.bf16.msra.mxu0 0
    %4588 = vmatprep.subr.bf16.mxu0 0
    %4589 = vmatpush1.bf16.msra.mxu0 0
    %4590 = vmatprep.subr.bf16.mxu0 0
    %4591 = vmatpush1.bf16.msra.mxu0 0
    %4592 = vmatprep.subr.bf16.mxu0 0
    %4593 = vmatpush1.bf16.msra.mxu0 0
    %4594 = vmatprep.subr.bf16.mxu0 0
    %4595 = vmatpush1.bf16.msra.mxu0 %v4571
    %4596 = vmatprep.subr.bf16.mxu0 0
    %4597 = vmatpush2.bf16.msra.mxu0 0
    %4598 = vmatprep.subr.bf16.mxu0 0
    %4599 = vmatpush2.bf16.msra.mxu0 0
    %4600 = vmatprep.subr.bf16.mxu0 0
    %4601 = vmatpush2.bf16.msra.mxu0 0
    %4602 = vmatprep.subr.bf16.mxu0 0
    %4603 = vmatpush2.bf16.msra.mxu0 0
    %4604 = vmatprep.subr.bf16.mxu0 0
    %4605 = vmatpush2.bf16.msra.mxu0 0
    %4606 = vmatprep.subr.bf16.mxu0 0
    %4607 = vmatpush2.bf16.msra.mxu0 0
    %4608 = vmatprep.subr.bf16.mxu0 0
    %4609 = vmatpush2.bf16.msra.mxu0 0
    %4610 = vmatprep.subr.bf16.mxu0 0
    %4611 = vmatpush2.bf16.msra.mxu0 0
    %4612 = vmatprep.mubr.bf16.mxu0 0
    %4613 = vmatmul.mubr.bf16.gmra.mxu0 %v4578
    %v4614 = vpop.f32.mrf.mxu0
    %v4615 = vadd.f32 0.0, %v4614
    %v4616 = vpop.f32.mrf.mxu0
    %v4617 = vpop.f32.mrf.mxu0
    %v4618 = vadd.f32 0.0, %v4617
    %v4619 = vpop.f32.mrf.mxu0
    %4620 = vdwg.mxu0
    %v4621 = vadd.f32 %v4567, %v4615
    %v4622 = vadd.f32 %v4568, %v4618
    %4623 = vst.msk [vmem:[#allocation3] sm:$0xff] %vm75, %v4621
    %4624 = vst.msk [vmem:[#allocation3 + $0x8] sm:$0xff] %vm75, %v4622
    %v4625 = vld [vmem:[%s1] sm:$0xf]
    %v4626 = vld [vmem:[%s1 + $0x4] sm:$0xf]
    %v4627 = vpack.c.bf16 %v4359, %v4355
    %v4630 = vunpack.c.l.b16 %v4625
    %v4631 = vunpack.c.l.b16 %v4626
    %v4632 = vpack.c.b16 %v4631, %v4630
    %4634 = vrot.lane.b32.xlu0 %v4627, 96
    %v4635 = vpop.permute.xlu0 %4634
    %v4638 = vsel %vm691, %v4632, 0
    %4640 = vmatprep.subr.bf16.mxu0 0
    %4641 = vmatpush1.bf16.msra.mxu0 0
    %4642 = vmatprep.subr.bf16.mxu0 0
    %4643 = vmatpush1.bf16.msra.mxu0 0
    %4644 = vmatprep.subr.bf16.mxu0 0
    %4645 = vmatpush1.bf16.msra.mxu0 0
    %4646 = vmatprep.subr.bf16.mxu0 0
    %4647 = vmatpush1.bf16.msra.mxu0 0
    %4648 = vmatprep.subr.bf16.mxu0 0
    %4649 = vmatpush1.bf16.msra.mxu0 0
    %4650 = vmatprep.subr.bf16.mxu0 0
    %4651 = vmatpush1.bf16.msra.mxu0 0
    %4652 = vmatprep.subr.bf16.mxu0 0
    %4653 = vmatpush1.bf16.msra.mxu0 0
    %4654 = vmatprep.subr.bf16.mxu0 0
    %4655 = vmatpush1.bf16.msra.mxu0 %v4635
    %4656 = vmatprep.subr.bf16.mxu0 0
    %4657 = vmatpush2.bf16.msra.mxu0 0
    %4658 = vmatprep.subr.bf16.mxu0 0
    %4659 = vmatpush2.bf16.msra.mxu0 0
    %4660 = vmatprep.subr.bf16.mxu0 0
    %4661 = vmatpush2.bf16.msra.mxu0 0
    %4662 = vmatprep.subr.bf16.mxu0 0
    %4663 = vmatpush2.bf16.msra.mxu0 0
    %4664 = vmatprep.subr.bf16.mxu0 0
    %4665 = vmatpush2.bf16.msra.mxu0 0
    %4666 = vmatprep.subr.bf16.mxu0 0
    %4667 = vmatpush2.bf16.msra.mxu0 0
    %4668 = vmatprep.subr.bf16.mxu0 0
    %4669 = vmatpush2.bf16.msra.mxu0 0
    %4670 = vmatprep.subr.bf16.mxu0 0
    %4671 = vmatpush2.bf16.msra.mxu0 0
    %4672 = vmatprep.mubr.bf16.mxu0 0
    %4673 = vmatmul.mubr.bf16.gmra.mxu0 %v4638
    %v4674 = vpop.f32.mrf.mxu0
    %v4675 = vadd.f32 0.0, %v4674
    %v4676 = vpop.f32.mrf.mxu0
    %v4677 = vpop.f32.mrf.mxu0
    %v4678 = vadd.f32 0.0, %v4677
    %v4679 = vpop.f32.mrf.mxu0
    %4680 = vdwg.mxu0
    %v4681 = vadd.f32 %v4393, %v4675
    %v4682 = vadd.f32 %v4394, %v4678
    %v4683 = vld [vmem:[%s738] sm:$0xf]
    %v4684 = vld [vmem:[%s738 + $0x4] sm:$0xf]
    %v4687 = vunpack.c.l.b16 %v4683
    %v4688 = vunpack.c.l.b16 %v4684
    %v4689 = vpack.c.b16 %v4688, %v4687
    %4690 = vrot.lane.b32.xlu0 %v4627, 64
    %v4691 = vpop.permute.xlu0 %4690
    %v4694 = vsel %vm691, %v4689, 0
    %4696 = vmatprep.subr.bf16.mxu0 0
    %4697 = vmatpush1.bf16.msra.mxu0 0
    %4698 = vmatprep.subr.bf16.mxu0 0
    %4699 = vmatpush1.bf16.msra.mxu0 0
    %4700 = vmatprep.subr.bf16.mxu0 0
    %4701 = vmatpush1.bf16.msra.mxu0 0
    %4702 = vmatprep.subr.bf16.mxu0 0
    %4703 = vmatpush1.bf16.msra.mxu0 0
    %4704 = vmatprep.subr.bf16.mxu0 0
    %4705 = vmatpush1.bf16.msra.mxu0 0
    %4706 = vmatprep.subr.bf16.mxu0 0
    %4707 = vmatpush1.bf16.msra.mxu0 0
    %4708 = vmatprep.subr.bf16.mxu0 0
    %4709 = vmatpush1.bf16.msra.mxu0 0
    %4710 = vmatprep.subr.bf16.mxu0 0
    %4711 = vmatpush1.bf16.msra.mxu0 %v4691
    %4712 = vmatprep.subr.bf16.mxu0 0
    %4713 = vmatpush2.bf16.msra.mxu0 0
    %4714 = vmatprep.subr.bf16.mxu0 0
    %4715 = vmatpush2.bf16.msra.mxu0 0
    %4716 = vmatprep.subr.bf16.mxu0 0
    %4717 = vmatpush2.bf16.msra.mxu0 0
    %4718 = vmatprep.subr.bf16.mxu0 0
    %4719 = vmatpush2.bf16.msra.mxu0 0
    %4720 = vmatprep.subr.bf16.mxu0 0
    %4721 = vmatpush2.bf16.msra.mxu0 0
    %4722 = vmatprep.subr.bf16.mxu0 0
    %4723 = vmatpush2.bf16.msra.mxu0 0
    %4724 = vmatprep.subr.bf16.mxu0 0
    %4725 = vmatpush2.bf16.msra.mxu0 0
    %4726 = vmatprep.subr.bf16.mxu0 0
    %4727 = vmatpush2.bf16.msra.mxu0 0
    %4728 = vmatprep.mubr.bf16.mxu0 0
    %4729 = vmatmul.mubr.bf16.gmra.mxu0 %v4694
    %v4730 = vpop.f32.mrf.mxu0
    %v4731 = vadd.f32 0.0, %v4730
    %v4732 = vpop.f32.mrf.mxu0
    %v4733 = vpop.f32.mrf.mxu0
    %v4734 = vadd.f32 0.0, %v4733
    %v4735 = vpop.f32.mrf.mxu0
    %4736 = vdwg.mxu0
    %v4737 = vadd.f32 %v4681, %v4731
    %v4738 = vadd.f32 %v4682, %v4734
    %v4739 = vld [vmem:[%s795] sm:$0xf]
    %v4740 = vld [vmem:[%s795 + $0x4] sm:$0xf]
    %v4743 = vunpack.c.l.b16 %v4739
    %v4744 = vunpack.c.l.b16 %v4740
    %v4745 = vpack.c.b16 %v4744, %v4743
    %4746 = vrot.lane.b32.xlu0 %v4627, 32
    %v4747 = vpop.permute.xlu0 %4746
    %v4750 = vsel %vm691, %v4745, 0
    %4752 = vmatprep.subr.bf16.mxu0 0
    %4753 = vmatpush1.bf16.msra.mxu0 0
    %4754 = vmatprep.subr.bf16.mxu0 0
    %4755 = vmatpush1.bf16.msra.mxu0 0
    %4756 = vmatprep.subr.bf16.mxu0 0
    %4757 = vmatpush1.bf16.msra.mxu0 0
    %4758 = vmatprep.subr.bf16.mxu0 0
    %4759 = vmatpush1.bf16.msra.mxu0 0
    %4760 = vmatprep.subr.bf16.mxu0 0
    %4761 = vmatpush1.bf16.msra.mxu0 0
    %4762 = vmatprep.subr.bf16.mxu0 0
    %4763 = vmatpush1.bf16.msra.mxu0 0
    %4764 = vmatprep.subr.bf16.mxu0 0
    %4765 = vmatpush1.bf16.msra.mxu0 0
    %4766 = vmatprep.subr.bf16.mxu0 0
    %4767 = vmatpush1.bf16.msra.mxu0 %v4747
    %4768 = vmatprep.subr.bf16.mxu0 0
    %4769 = vmatpush2.bf16.msra.mxu0 0
    %4770 = vmatprep.subr.bf16.mxu0 0
    %4771 = vmatpush2.bf16.msra.mxu0 0
    %4772 = vmatprep.subr.bf16.mxu0 0
    %4773 = vmatpush2.bf16.msra.mxu0 0
    %4774 = vmatprep.subr.bf16.mxu0 0
    %4775 = vmatpush2.bf16.msra.mxu0 0
    %4776 = vmatprep.subr.bf16.mxu0 0
    %4777 = vmatpush2.bf16.msra.mxu0 0
    %4778 = vmatprep.subr.bf16.mxu0 0
    %4779 = vmatpush2.bf16.msra.mxu0 0
    %4780 = vmatprep.subr.bf16.mxu0 0
    %4781 = vmatpush2.bf16.msra.mxu0 0
    %4782 = vmatprep.subr.bf16.mxu0 0
    %4783 = vmatpush2.bf16.msra.mxu0 0
    %4784 = vmatprep.mubr.bf16.mxu0 0
    %4785 = vmatmul.mubr.bf16.gmra.mxu0 %v4750
    %v4786 = vpop.f32.mrf.mxu0
    %v4787 = vadd.f32 0.0, %v4786
    %v4788 = vpop.f32.mrf.mxu0
    %v4789 = vpop.f32.mrf.mxu0
    %v4790 = vadd.f32 0.0, %v4789
    %v4791 = vpop.f32.mrf.mxu0
    %4792 = vdwg.mxu0
    %v4793 = vadd.f32 %v4737, %v4787
    %v4794 = vadd.f32 %v4738, %v4790
    %v4795 = vld [vmem:[%s852] sm:$0xf]
    %v4796 = vld [vmem:[%s852 + $0x4] sm:$0xf]
    %v4797 = vpack.c.bf16 %v4361, %v4357
    %v4800 = vunpack.c.l.b16 %v4795
    %v4801 = vunpack.c.l.b16 %v4796
    %v4802 = vpack.c.b16 %v4801, %v4800
    %v4804 = vsel %vm691, %v4802, 0
    %4806 = vmatprep.subr.bf16.mxu0 0
    %4807 = vmatpush1.bf16.msra.mxu0 0
    %4808 = vmatprep.subr.bf16.mxu0 0
    %4809 = vmatpush1.bf16.msra.mxu0 0
    %4810 = vmatprep.subr.bf16.mxu0 0
    %4811 = vmatpush1.bf16.msra.mxu0 0
    %4812 = vmatprep.subr.bf16.mxu0 0
    %4813 = vmatpush1.bf16.msra.mxu0 0
    %4814 = vmatprep.subr.bf16.mxu0 0
    %4815 = vmatpush1.bf16.msra.mxu0 0
    %4816 = vmatprep.subr.bf16.mxu0 0
    %4817 = vmatpush1.bf16.msra.mxu0 0
    %4818 = vmatprep.subr.bf16.mxu0 0
    %4819 = vmatpush1.bf16.msra.mxu0 0
    %4820 = vmatprep.subr.bf16.mxu0 0
    %4821 = vmatpush1.bf16.msra.mxu0 %v4797
    %4822 = vmatprep.subr.bf16.mxu0 0
    %4823 = vmatpush2.bf16.msra.mxu0 0
    %4824 = vmatprep.subr.bf16.mxu0 0
    %4825 = vmatpush2.bf16.msra.mxu0 0
    %4826 = vmatprep.subr.bf16.mxu0 0
    %4827 = vmatpush2.bf16.msra.mxu0 0
    %4828 = vmatprep.subr.bf16.mxu0 0
    %4829 = vmatpush2.bf16.msra.mxu0 0
    %4830 = vmatprep.subr.bf16.mxu0 0
    %4831 = vmatpush2.bf16.msra.mxu0 0
    %4832 = vmatprep.subr.bf16.mxu0 0
    %4833 = vmatpush2.bf16.msra.mxu0 0
    %4834 = vmatprep.subr.bf16.mxu0 0
    %4835 = vmatpush2.bf16.msra.mxu0 0
    %4836 = vmatprep.subr.bf16.mxu0 0
    %4837 = vmatpush2.bf16.msra.mxu0 0
    %4838 = vmatprep.mubr.bf16.mxu0 0
    %4839 = vmatmul.mubr.bf16.gmra.mxu0 %v4804
    %v4840 = vpop.f32.mrf.mxu0
    %v4841 = vadd.f32 0.0, %v4840
    %v4842 = vpop.f32.mrf.mxu0
    %v4843 = vpop.f32.mrf.mxu0
    %v4844 = vadd.f32 0.0, %v4843
    %v4845 = vpop.f32.mrf.mxu0
    %4846 = vdwg.mxu0
    %v4847 = vadd.f32 %v4793, %v4841
    %v4848 = vadd.f32 %v4794, %v4844
    %4849 = vst.msk [vmem:[#allocation3 + $0x10] sm:$0xff] %vm75, %v4847
    %4850 = vst.msk [vmem:[#allocation3 + $0x18] sm:$0xff] %vm75, %v4848
    %v4851 = vld [vmem:[%s1] sm:$0xf]
    %v4852 = vld [vmem:[%s1 + $0x4] sm:$0xf]
    %v4853 = vpack.c.bf16 %v4369, %v4365
    %v4856 = vunpack.c.l.b16 %v4851
    %v4857 = vunpack.c.l.b16 %v4852
    %v4858 = vpack.c.b16 %v4857, %v4856
    %4860 = vrot.lane.b32.xlu0 %v4853, 96
    %v4861 = vpop.permute.xlu0 %4860
    %v4864 = vsel %vm691, %v4858, 0
    %4866 = vmatprep.subr.bf16.mxu0 0
    %4867 = vmatpush1.bf16.msra.mxu0 0
    %4868 = vmatprep.subr.bf16.mxu0 0
    %4869 = vmatpush1.bf16.msra.mxu0 0
    %4870 = vmatprep.subr.bf16.mxu0 0
    %4871 = vmatpush1.bf16.msra.mxu0 0
    %4872 = vmatprep.subr.bf16.mxu0 0
    %4873 = vmatpush1.bf16.msra.mxu0 0
    %4874 = vmatprep.subr.bf16.mxu0 0
    %4875 = vmatpush1.bf16.msra.mxu0 0
    %4876 = vmatprep.subr.bf16.mxu0 0
    %4877 = vmatpush1.bf16.msra.mxu0 0
    %4878 = vmatprep.subr.bf16.mxu0 0
    %4879 = vmatpush1.bf16.msra.mxu0 0
    %4880 = vmatprep.subr.bf16.mxu0 0
    %4881 = vmatpush1.bf16.msra.mxu0 %v4861
    %4882 = vmatprep.subr.bf16.mxu0 0
    %4883 = vmatpush2.bf16.msra.mxu0 0
    %4884 = vmatprep.subr.bf16.mxu0 0
    %4885 = vmatpush2.bf16.msra.mxu0 0
    %4886 = vmatprep.subr.bf16.mxu0 0
    %4887 = vmatpush2.bf16.msra.mxu0 0
    %4888 = vmatprep.subr.bf16.mxu0 0
    %4889 = vmatpush2.bf16.msra.mxu0 0
    %4890 = vmatprep.subr.bf16.mxu0 0
    %4891 = vmatpush2.bf16.msra.mxu0 0
    %4892 = vmatprep.subr.bf16.mxu0 0
    %4893 = vmatpush2.bf16.msra.mxu0 0
    %4894 = vmatprep.subr.bf16.mxu0 0
    %4895 = vmatpush2.bf16.msra.mxu0 0
    %4896 = vmatprep.subr.bf16.mxu0 0
    %4897 = vmatpush2.bf16.msra.mxu0 0
    %4898 = vmatprep.mubr.bf16.mxu0 0
    %4899 = vmatmul.mubr.bf16.gmra.mxu0 %v4864
    %v4900 = vpop.f32.mrf.mxu0
    %v4901 = vadd.f32 0.0, %v4900
    %v4902 = vpop.f32.mrf.mxu0
    %v4903 = vpop.f32.mrf.mxu0
    %v4904 = vadd.f32 0.0, %v4903
    %v4905 = vpop.f32.mrf.mxu0
    %4906 = vdwg.mxu0
    %v4907 = vadd.f32 %v4395, %v4901
    %v4908 = vadd.f32 %v4396, %v4904
    %v4909 = vld [vmem:[%s738] sm:$0xf]
    %v4910 = vld [vmem:[%s738 + $0x4] sm:$0xf]
    %v4913 = vunpack.c.l.b16 %v4909
    %v4914 = vunpack.c.l.b16 %v4910
    %v4915 = vpack.c.b16 %v4914, %v4913
    %4916 = vrot.lane.b32.xlu0 %v4853, 64
    %v4917 = vpop.permute.xlu0 %4916
    %v4920 = vsel %vm691, %v4915, 0
    %4922 = vmatprep.subr.bf16.mxu0 0
    %4923 = vmatpush1.bf16.msra.mxu0 0
    %4924 = vmatprep.subr.bf16.mxu0 0
    %4925 = vmatpush1.bf16.msra.mxu0 0
    %4926 = vmatprep.subr.bf16.mxu0 0
    %4927 = vmatpush1.bf16.msra.mxu0 0
    %4928 = vmatprep.subr.bf16.mxu0 0
    %4929 = vmatpush1.bf16.msra.mxu0 0
    %4930 = vmatprep.subr.bf16.mxu0 0
    %4931 = vmatpush1.bf16.msra.mxu0 0
    %4932 = vmatprep.subr.bf16.mxu0 0
    %4933 = vmatpush1.bf16.msra.mxu0 0
    %4934 = vmatprep.subr.bf16.mxu0 0
    %4935 = vmatpush1.bf16.msra.mxu0 0
    %4936 = vmatprep.subr.bf16.mxu0 0
    %4937 = vmatpush1.bf16.msra.mxu0 %v4917
    %4938 = vmatprep.subr.bf16.mxu0 0
    %4939 = vmatpush2.bf16.msra.mxu0 0
    %4940 = vmatprep.subr.bf16.mxu0 0
    %4941 = vmatpush2.bf16.msra.mxu0 0
    %4942 = vmatprep.subr.bf16.mxu0 0
    %4943 = vmatpush2.bf16.msra.mxu0 0
    %4944 = vmatprep.subr.bf16.mxu0 0
    %4945 = vmatpush2.bf16.msra.mxu0 0
    %4946 = vmatprep.subr.bf16.mxu0 0
    %4947 = vmatpush2.bf16.msra.mxu0 0
    %4948 = vmatprep.subr.bf16.mxu0 0
    %4949 = vmatpush2.bf16.msra.mxu0 0
    %4950 = vmatprep.subr.bf16.mxu0 0
    %4951 = vmatpush2.bf16.msra.mxu0 0
    %4952 = vmatprep.subr.bf16.mxu0 0
    %4953 = vmatpush2.bf16.msra.mxu0 0
    %4954 = vmatprep.mubr.bf16.mxu0 0
    %4955 = vmatmul.mubr.bf16.gmra.mxu0 %v4920
    %v4956 = vpop.f32.mrf.mxu0
    %v4957 = vadd.f32 0.0, %v4956
    %v4958 = vpop.f32.mrf.mxu0
    %v4959 = vpop.f32.mrf.mxu0
    %v4960 = vadd.f32 0.0, %v4959
    %v4961 = vpop.f32.mrf.mxu0
    %4962 = vdwg.mxu0
    %v4963 = vadd.f32 %v4907, %v4957
    %v4964 = vadd.f32 %v4908, %v4960
    %v4965 = vld [vmem:[%s795] sm:$0xf]
    %v4966 = vld [vmem:[%s795 + $0x4] sm:$0xf]
    %v4969 = vunpack.c.l.b16 %v4965
    %v4970 = vunpack.c.l.b16 %v4966
    %v4971 = vpack.c.b16 %v4970, %v4969
    %4972 = vrot.lane.b32.xlu0 %v4853, 32
    %v4973 = vpop.permute.xlu0 %4972
    %v4976 = vsel %vm691, %v4971, 0
    %4978 = vmatprep.subr.bf16.mxu0 0
    %4979 = vmatpush1.bf16.msra.mxu0 0
    %4980 = vmatprep.subr.bf16.mxu0 0
    %4981 = vmatpush1.bf16.msra.mxu0 0
    %4982 = vmatprep.subr.bf16.mxu0 0
    %4983 = vmatpush1.bf16.msra.mxu0 0
    %4984 = vmatprep.subr.bf16.mxu0 0
    %4985 = vmatpush1.bf16.msra.mxu0 0
    %4986 = vmatprep.subr.bf16.mxu0 0
    %4987 = vmatpush1.bf16.msra.mxu0 0
    %4988 = vmatprep.subr.bf16.mxu0 0
    %4989 = vmatpush1.bf16.msra.mxu0 0
    %4990 = vmatprep.subr.bf16.mxu0 0
    %4991 = vmatpush1.bf16.msra.mxu0 0
    %4992 = vmatprep.subr.bf16.mxu0 0
    %4993 = vmatpush1.bf16.msra.mxu0 %v4973
    %4994 = vmatprep.subr.bf16.mxu0 0
    %4995 = vmatpush2.bf16.msra.mxu0 0
    %4996 = vmatprep.subr.bf16.mxu0 0
    %4997 = vmatpush2.bf16.msra.mxu0 0
    %4998 = vmatprep.subr.bf16.mxu0 0
    %4999 = vmatpush2.bf16.msra.mxu0 0
    %5000 = vmatprep.subr.bf16.mxu0 0
    %5001 = vmatpush2.bf16.msra.mxu0 0
    %5002 = vmatprep.subr.bf16.mxu0 0
    %5003 = vmatpush2.bf16.msra.mxu0 0
    %5004 = vmatprep.subr.bf16.mxu0 0
    %5005 = vmatpush2.bf16.msra.mxu0 0
    %5006 = vmatprep.subr.bf16.mxu0 0
    %5007 = vmatpush2.bf16.msra.mxu0 0
    %5008 = vmatprep.subr.bf16.mxu0 0
    %5009 = vmatpush2.bf16.msra.mxu0 0
    %5010 = vmatprep.mubr.bf16.mxu0 0
    %5011 = vmatmul.mubr.bf16.gmra.mxu0 %v4976
    %v5012 = vpop.f32.mrf.mxu0
    %v5013 = vadd.f32 0.0, %v5012
    %v5014 = vpop.f32.mrf.mxu0
    %v5015 = vpop.f32.mrf.mxu0
    %v5016 = vadd.f32 0.0, %v5015
    %v5017 = vpop.f32.mrf.mxu0
    %5018 = vdwg.mxu0
    %v5019 = vadd.f32 %v4963, %v5013
    %v5020 = vadd.f32 %v4964, %v5016
    %v5021 = vld [vmem:[%s852] sm:$0xf]
    %v5022 = vld [vmem:[%s852 + $0x4] sm:$0xf]
    %v5023 = vpack.c.bf16 %v4371, %v4367
    %v5026 = vunpack.c.l.b16 %v5021
    %v5027 = vunpack.c.l.b16 %v5022
    %v5028 = vpack.c.b16 %v5027, %v5026
    %v5030 = vsel %vm691, %v5028, 0
    %5032 = vmatprep.subr.bf16.mxu0 0
    %5033 = vmatpush1.bf16.msra.mxu0 0
    %5034 = vmatprep.subr.bf16.mxu0 0
    %5035 = vmatpush1.bf16.msra.mxu0 0
    %5036 = vmatprep.subr.bf16.mxu0 0
    %5037 = vmatpush1.bf16.msra.mxu0 0
    %5038 = vmatprep.subr.bf16.mxu0 0
    %5039 = vmatpush1.bf16.msra.mxu0 0
    %5040 = vmatprep.subr.bf16.mxu0 0
    %5041 = vmatpush1.bf16.msra.mxu0 0
    %5042 = vmatprep.subr.bf16.mxu0 0
    %5043 = vmatpush1.bf16.msra.mxu0 0
    %5044 = vmatprep.subr.bf16.mxu0 0
    %5045 = vmatpush1.bf16.msra.mxu0 0
    %5046 = vmatprep.subr.bf16.mxu0 0
    %5047 = vmatpush1.bf16.msra.mxu0 %v5023
    %5048 = vmatprep.subr.bf16.mxu0 0
    %5049 = vmatpush2.bf16.msra.mxu0 0
    %5050 = vmatprep.subr.bf16.mxu0 0
    %5051 = vmatpush2.bf16.msra.mxu0 0
    %5052 = vmatprep.subr.bf16.mxu0 0
    %5053 = vmatpush2.bf16.msra.mxu0 0
    %5054 = vmatprep.subr.bf16.mxu0 0
    %5055 = vmatpush2.bf16.msra.mxu0 0
    %5056 = vmatprep.subr.bf16.mxu0 0
    %5057 = vmatpush2.bf16.msra.mxu0 0
    %5058 = vmatprep.subr.bf16.mxu0 0
    %5059 = vmatpush2.bf16.msra.mxu0 0
    %5060 = vmatprep.subr.bf16.mxu0 0
    %5061 = vmatpush2.bf16.msra.mxu0 0
    %5062 = vmatprep.subr.bf16.mxu0 0
    %5063 = vmatpush2.bf16.msra.mxu0 0
    %5064 = vmatprep.mubr.bf16.mxu0 0
    %5065 = vmatmul.mubr.bf16.gmra.mxu0 %v5030
    %v5066 = vpop.f32.mrf.mxu0
    %v5067 = vadd.f32 0.0, %v5066
    %v5068 = vpop.f32.mrf.mxu0
    %v5069 = vpop.f32.mrf.mxu0
    %v5070 = vadd.f32 0.0, %v5069
    %v5071 = vpop.f32.mrf.mxu0
    %5072 = vdwg.mxu0
    %v5073 = vadd.f32 %v5019, %v5067
    %v5074 = vadd.f32 %v5020, %v5070
    %5075 = vst.msk [vmem:[#allocation3 + $0x20] sm:$0xff] %vm75, %v5073
    %5076 = vst.msk [vmem:[#allocation3 + $0x28] sm:$0xff] %vm75, %v5074
    %v5077 = vld [vmem:[%s1] sm:$0xf]
    %v5078 = vld [vmem:[%s1 + $0x4] sm:$0xf]
    %v5079 = vpack.c.bf16 %v4379, %v4375
    %v5082 = vunpack.c.l.b16 %v5077
    %v5083 = vunpack.c.l.b16 %v5078
    %v5084 = vpack.c.b16 %v5083, %v5082
    %5086 = vrot.lane.b32.xlu0 %v5079, 96
    %v5087 = vpop.permute.xlu0 %5086
    %v5090 = vsel %vm691, %v5084, 0
    %5092 = vmatprep.subr.bf16.mxu0 0
    %5093 = vmatpush1.bf16.msra.mxu0 0
    %5094 = vmatprep.subr.bf16.mxu0 0
    %5095 = vmatpush1.bf16.msra.mxu0 0
    %5096 = vmatprep.subr.bf16.mxu0 0
    %5097 = vmatpush1.bf16.msra.mxu0 0
    %5098 = vmatprep.subr.bf16.mxu0 0
    %5099 = vmatpush1.bf16.msra.mxu0 0
    %5100 = vmatprep.subr.bf16.mxu0 0
    %5101 = vmatpush1.bf16.msra.mxu0 0
    %5102 = vmatprep.subr.bf16.mxu0 0
    %5103 = vmatpush1.bf16.msra.mxu0 0
    %5104 = vmatprep.subr.bf16.mxu0 0
    %5105 = vmatpush1.bf16.msra.mxu0 0
    %5106 = vmatprep.subr.bf16.mxu0 0
    %5107 = vmatpush1.bf16.msra.mxu0 %v5087
    %5108 = vmatprep.subr.bf16.mxu0 0
    %5109 = vmatpush2.bf16.msra.mxu0 0
    %5110 = vmatprep.subr.bf16.mxu0 0
    %5111 = vmatpush2.bf16.msra.mxu0 0
    %5112 = vmatprep.subr.bf16.mxu0 0
    %5113 = vmatpush2.bf16.msra.mxu0 0
    %5114 = vmatprep.subr.bf16.mxu0 0
    %5115 = vmatpush2.bf16.msra.mxu0 0
    %5116 = vmatprep.subr.bf16.mxu0 0
    %5117 = vmatpush2.bf16.msra.mxu0 0
    %5118 = vmatprep.subr.bf16.mxu0 0
    %5119 = vmatpush2.bf16.msra.mxu0 0
    %5120 = vmatprep.subr.bf16.mxu0 0
    %5121 = vmatpush2.bf16.msra.mxu0 0
    %5122 = vmatprep.subr.bf16.mxu0 0
    %5123 = vmatpush2.bf16.msra.mxu0 0
    %5124 = vmatprep.mubr.bf16.mxu0 0
    %5125 = vmatmul.mubr.bf16.gmra.mxu0 %v5090
    %v5126 = vpop.f32.mrf.mxu0
    %v5127 = vadd.f32 0.0, %v5126
    %v5128 = vpop.f32.mrf.mxu0
    %v5129 = vpop.f32.mrf.mxu0
    %v5130 = vadd.f32 0.0, %v5129
    %v5131 = vpop.f32.mrf.mxu0
    %5132 = vdwg.mxu0
    %v5133 = vadd.f32 %v4397, %v5127
    %v5134 = vadd.f32 %v4398, %v5130
    %v5135 = vld [vmem:[%s738] sm:$0xf]
    %v5136 = vld [vmem:[%s738 + $0x4] sm:$0xf]
    %v5139 = vunpack.c.l.b16 %v5135
    %v5140 = vunpack.c.l.b16 %v5136
    %v5141 = vpack.c.b16 %v5140, %v5139
    %5142 = vrot.lane.b32.xlu0 %v5079, 64
    %v5143 = vpop.permute.xlu0 %5142
    %v5146 = vsel %vm691, %v5141, 0
    %5148 = vmatprep.subr.bf16.mxu0 0
    %5149 = vmatpush1.bf16.msra.mxu0 0
    %5150 = vmatprep.subr.bf16.mxu0 0
    %5151 = vmatpush1.bf16.msra.mxu0 0
    %5152 = vmatprep.subr.bf16.mxu0 0
    %5153 = vmatpush1.bf16.msra.mxu0 0
    %5154 = vmatprep.subr.bf16.mxu0 0
    %5155 = vmatpush1.bf16.msra.mxu0 0
    %5156 = vmatprep.subr.bf16.mxu0 0
    %5157 = vmatpush1.bf16.msra.mxu0 0
    %5158 = vmatprep.subr.bf16.mxu0 0
    %5159 = vmatpush1.bf16.msra.mxu0 0
    %5160 = vmatprep.subr.bf16.mxu0 0
    %5161 = vmatpush1.bf16.msra.mxu0 0
    %5162 = vmatprep.subr.bf16.mxu0 0
    %5163 = vmatpush1.bf16.msra.mxu0 %v5143
    %5164 = vmatprep.subr.bf16.mxu0 0
    %5165 = vmatpush2.bf16.msra.mxu0 0
    %5166 = vmatprep.subr.bf16.mxu0 0
    %5167 = vmatpush2.bf16.msra.mxu0 0
    %5168 = vmatprep.subr.bf16.mxu0 0
    %5169 = vmatpush2.bf16.msra.mxu0 0
    %5170 = vmatprep.subr.bf16.mxu0 0
    %5171 = vmatpush2.bf16.msra.mxu0 0
    %5172 = vmatprep.subr.bf16.mxu0 0
    %5173 = vmatpush2.bf16.msra.mxu0 0
    %5174 = vmatprep.subr.bf16.mxu0 0
    %5175 = vmatpush2.bf16.msra.mxu0 0
    %5176 = vmatprep.subr.bf16.mxu0 0
    %5177 = vmatpush2.bf16.msra.mxu0 0
    %5178 = vmatprep.subr.bf16.mxu0 0
    %5179 = vmatpush2.bf16.msra.mxu0 0
    %5180 = vmatprep.mubr.bf16.mxu0 0
    %5181 = vmatmul.mubr.bf16.gmra.mxu0 %v5146
    %v5182 = vpop.f32.mrf.mxu0
    %v5183 = vadd.f32 0.0, %v5182
    %v5184 = vpop.f32.mrf.mxu0
    %v5185 = vpop.f32.mrf.mxu0
    %v5186 = vadd.f32 0.0, %v5185
    %v5187 = vpop.f32.mrf.mxu0
    %5188 = vdwg.mxu0
    %v5189 = vadd.f32 %v5133, %v5183
    %v5190 = vadd.f32 %v5134, %v5186
    %v5191 = vld [vmem:[%s795] sm:$0xf]
    %v5192 = vld [vmem:[%s795 + $0x4] sm:$0xf]
    %v5195 = vunpack.c.l.b16 %v5191
    %v5196 = vunpack.c.l.b16 %v5192
    %v5197 = vpack.c.b16 %v5196, %v5195
    %5198 = vrot.lane.b32.xlu0 %v5079, 32
    %v5199 = vpop.permute.xlu0 %5198
    %v5202 = vsel %vm691, %v5197, 0
    %5204 = vmatprep.subr.bf16.mxu0 0
    %5205 = vmatpush1.bf16.msra.mxu0 0
    %5206 = vmatprep.subr.bf16.mxu0 0
    %5207 = vmatpush1.bf16.msra.mxu0 0
    %5208 = vmatprep.subr.bf16.mxu0 0
    %5209 = vmatpush1.bf16.msra.mxu0 0
    %5210 = vmatprep.subr.bf16.mxu0 0
    %5211 = vmatpush1.bf16.msra.mxu0 0
    %5212 = vmatprep.subr.bf16.mxu0 0
    %5213 = vmatpush1.bf16.msra.mxu0 0
    %5214 = vmatprep.subr.bf16.mxu0 0
    %5215 = vmatpush1.bf16.msra.mxu0 0
    %5216 = vmatprep.subr.bf16.mxu0 0
    %5217 = vmatpush1.bf16.msra.mxu0 0
    %5218 = vmatprep.subr.bf16.mxu0 0
    %5219 = vmatpush1.bf16.msra.mxu0 %v5199
    %5220 = vmatprep.subr.bf16.mxu0 0
    %5221 = vmatpush2.bf16.msra.mxu0 0
    %5222 = vmatprep.subr.bf16.mxu0 0
    %5223 = vmatpush2.bf16.msra.mxu0 0
    %5224 = vmatprep.subr.bf16.mxu0 0
    %5225 = vmatpush2.bf16.msra.mxu0 0
    %5226 = vmatprep.subr.bf16.mxu0 0
    %5227 = vmatpush2.bf16.msra.mxu0 0
    %5228 = vmatprep.subr.bf16.mxu0 0
    %5229 = vmatpush2.bf16.msra.mxu0 0
    %5230 = vmatprep.subr.bf16.mxu0 0
    %5231 = vmatpush2.bf16.msra.mxu0 0
    %5232 = vmatprep.subr.bf16.mxu0 0
    %5233 = vmatpush2.bf16.msra.mxu0 0
    %5234 = vmatprep.subr.bf16.mxu0 0
    %5235 = vmatpush2.bf16.msra.mxu0 0
    %5236 = vmatprep.mubr.bf16.mxu0 0
    %5237 = vmatmul.mubr.bf16.gmra.mxu0 %v5202
    %v5238 = vpop.f32.mrf.mxu0
    %v5239 = vadd.f32 0.0, %v5238
    %v5240 = vpop.f32.mrf.mxu0
    %v5241 = vpop.f32.mrf.mxu0
    %v5242 = vadd.f32 0.0, %v5241
    %v5243 = vpop.f32.mrf.mxu0
    %5244 = vdwg.mxu0
    %v5245 = vadd.f32 %v5189, %v5239
    %v5246 = vadd.f32 %v5190, %v5242
    %v5247 = vld [vmem:[%s852] sm:$0xf]
    %v5248 = vld [vmem:[%s852 + $0x4] sm:$0xf]
    %v5249 = vpack.c.bf16 %v4381, %v4377
    %v5252 = vunpack.c.l.b16 %v5247
    %v5253 = vunpack.c.l.b16 %v5248
    %v5254 = vpack.c.b16 %v5253, %v5252
    %v5256 = vsel %vm691, %v5254, 0
    %5258 = vmatprep.subr.bf16.mxu0 0
    %5259 = vmatpush1.bf16.msra.mxu0 0
    %5260 = vmatprep.subr.bf16.mxu0 0
    %5261 = vmatpush1.bf16.msra.mxu0 0
    %5262 = vmatprep.subr.bf16.mxu0 0
    %5263 = vmatpush1.bf16.msra.mxu0 0
    %5264 = vmatprep.subr.bf16.mxu0 0
    %5265 = vmatpush1.bf16.msra.mxu0 0
    %5266 = vmatprep.subr.bf16.mxu0 0
    %5267 = vmatpush1.bf16.msra.mxu0 0
    %5268 = vmatprep.subr.bf16.mxu0 0
    %5269 = vmatpush1.bf16.msra.mxu0 0
    %5270 = vmatprep.subr.bf16.mxu0 0
    %5271 = vmatpush1.bf16.msra.mxu0 0
    %5272 = vmatprep.subr.bf16.mxu0 0
    %5273 = vmatpush1.bf16.msra.mxu0 %v5249
    %5274 = vmatprep.subr.bf16.mxu0 0
    %5275 = vmatpush2.bf16.msra.mxu0 0
    %5276 = vmatprep.subr.bf16.mxu0 0
    %5277 = vmatpush2.bf16.msra.mxu0 0
    %5278 = vmatprep.subr.bf16.mxu0 0
    %5279 = vmatpush2.bf16.msra.mxu0 0
    %5280 = vmatprep.subr.bf16.mxu0 0
    %5281 = vmatpush2.bf16.msra.mxu0 0
    %5282 = vmatprep.subr.bf16.mxu0 0
    %5283 = vmatpush2.bf16.msra.mxu0 0
    %5284 = vmatprep.subr.bf16.mxu0 0
    %5285 = vmatpush2.bf16.msra.mxu0 0
    %5286 = vmatprep.subr.bf16.mxu0 0
    %5287 = vmatpush2.bf16.msra.mxu0 0
    %5288 = vmatprep.subr.bf16.mxu0 0
    %5289 = vmatpush2.bf16.msra.mxu0 0
    %5290 = vmatprep.mubr.bf16.mxu0 0
    %5291 = vmatmul.mubr.bf16.gmra.mxu0 %v5256
    %v5292 = vpop.f32.mrf.mxu0
    %v5293 = vadd.f32 0.0, %v5292
    %v5294 = vpop.f32.mrf.mxu0
    %v5295 = vpop.f32.mrf.mxu0
    %v5296 = vadd.f32 0.0, %v5295
    %v5297 = vpop.f32.mrf.mxu0
    %5298 = vdwg.mxu0
    %v5299 = vadd.f32 %v5245, %v5293
    %v5300 = vadd.f32 %v5246, %v5296
    %5301 = vst.msk [vmem:[#allocation3 + $0x30] sm:$0xff] %vm75, %v5299
    %5302 = vst.msk [vmem:[#allocation3 + $0x38] sm:$0xff] %vm75, %v5300
    %s5303 = scalar_lea.vmem %s6, 32
    %v5304 = vld [vmem:[%s5303] sm:$0xf]
    %v5305 = vld [vmem:[%s5303 + $0x4] sm:$0xf]
    %v5306 = vld [vmem:[%s5303 + $0x8] sm:$0xf]
    %v5307 = vld [vmem:[%s5303 + $0xc] sm:$0xf]
    %v5308 = vpack.c.bf16 %v5300, %v5299
    %v5313 = vunpack.c.l.b16 %v5304
    %v5314 = vunpack.c.l.b16 %v5305
    %v5315 = vunpack.c.l.b16 %v5306
    %v5316 = vunpack.c.l.b16 %v5307
    %v5317 = vpack.c.b16 %v5314, %v5313
    %v5318 = vpack.c.b16 %v5316, %v5315
    %v5322 = vsel %vm75, %v5308, 0
    %5324 = vmatprep.subr.bf16.mxu0 0
    %5325 = vmatpush1.bf16.msra.mxu0 0
    %5326 = vmatprep.subr.bf16.mxu0 0
    %5327 = vmatpush1.bf16.msra.mxu0 0
    %5328 = vmatprep.subr.bf16.mxu0 0
    %5329 = vmatpush1.bf16.msra.mxu0 0
    %5330 = vmatprep.subr.bf16.mxu0 0
    %5331 = vmatpush1.bf16.msra.mxu0 0
    %5332 = vmatprep.subr.bf16.mxu0 0
    %5333 = vmatpush1.bf16.msra.mxu0 0
    %5334 = vmatprep.subr.bf16.mxu0 0
    %5335 = vmatpush1.bf16.msra.mxu0 0
    %5336 = vmatprep.subr.bf16.mxu0 0
    %5337 = vmatpush1.bf16.msra.mxu0 %v5318
    %5338 = vmatprep.subr.bf16.mxu0 0
    %5339 = vmatpush1.bf16.msra.mxu0 %v5317
    %5340 = vmatprep.subr.bf16.mxu0 0
    %5341 = vmatpush2.bf16.msra.mxu0 0
    %5342 = vmatprep.subr.bf16.mxu0 0
    %5343 = vmatpush2.bf16.msra.mxu0 0
    %5344 = vmatprep.subr.bf16.mxu0 0
    %5345 = vmatpush2.bf16.msra.mxu0 0
    %5346 = vmatprep.subr.bf16.mxu0 0
    %5347 = vmatpush2.bf16.msra.mxu0 0
    %5348 = vmatprep.subr.bf16.mxu0 0
    %5349 = vmatpush2.bf16.msra.mxu0 0
    %5350 = vmatprep.subr.bf16.mxu0 0
    %5351 = vmatpush2.bf16.msra.mxu0 0
    %5352 = vmatprep.subr.bf16.mxu0 0
    %5353 = vmatpush2.bf16.msra.mxu0 0
    %5354 = vmatprep.subr.bf16.mxu0 0
    %5355 = vmatpush2.bf16.msra.mxu0 0
    %5356 = vmatprep.mubr.bf16.mxu0 0
    %5357 = vmatmul.mubr.bf16.gmra.mxu0 %v5322
    %v5358 = vpop.f32.mrf.mxu0
    %v5359 = vadd.f32 0.0, %v5358
    %v5360 = vpop.f32.mrf.mxu0
    %v5361 = vpop.f32.mrf.mxu0
    %v5362 = vadd.f32 0.0, %v5361
    %v5363 = vpop.f32.mrf.mxu0
    %5364 = vdwg.mxu0
    %v5365 = vadd.f32 %v3999, %v5359
    %v5366 = vadd.f32 %v4000, %v5362
    %s5367 = scalar_lea.vmem %s7, 2
    %v5368 = vld [vmem:[%s5367] sm:$0x1]
    %v5370 = vlaneseq
    %v5371 = vshrl.u32 %v5370, 7
    %v5372 = vsub.s32 0, %v5371
    %v5373 = vrot.slane %v5368, %v5372
    %v5375 = vadd.f32 %v5365, %v5373
    %v5376 = vadd.f32 %v5366, %v5373
    %v5377 = vld [vmem:[#allocation3] sm:$0xff]
    %v5378 = vld [vmem:[#allocation3 + $0x8] sm:$0xff]
    %v5379 = vld [vmem:[#allocation3 + $0x10] sm:$0xff]
    %v5380 = vld [vmem:[#allocation3 + $0x18] sm:$0xff]
    %v5381 = vld [vmem:[#allocation3 + $0x20] sm:$0xff]
    %v5382 = vld [vmem:[#allocation3 + $0x28] sm:$0xff]
    %v5383 = vld [vmem:[#allocation3 + $0x30] sm:$0xff]
    %v5384 = vld [vmem:[#allocation3 + $0x38] sm:$0xff]
    %5389 = vrot.lane.b32.xlu0 %v5381, 32
    %v5390 = vpop.permute.xlu0 %5389
    %5391 = vrot.lane.b32.xlu0 %v5382, 32
    %v5392 = vpop.permute.xlu0 %5391
    %5393 = vrot.lane.b32.xlu0 %v5383, 32
    %v5394 = vpop.permute.xlu0 %5393
    %5395 = vrot.lane.b32.xlu0 %v5384, 32
    %v5396 = vpop.permute.xlu0 %5395
    %v5401 = vsel %vm75, %v5377, %v5390
    %v5402 = vsel %vm75, %v5378, %v5392
    %v5403 = vsel %vm75, %v5379, %v5394
    %v5404 = vsel %vm75, %v5380, %v5396
    %s5405 = scalar_lea.vmem %s2, 96
    %v5406 = vld [vmem:[%s5405] sm:$0xf]
    %v5407 = vld [vmem:[%s5405 + $0x4] sm:$0xf]
    %v5408 = vld [vmem:[%s5405 + $0x8] sm:$0xf]
    %v5409 = vld [vmem:[%s5405 + $0xc] sm:$0xf]
    %v5410 = vld [vmem:[%s5405 + $0x10] sm:$0xf]
    %v5411 = vld [vmem:[%s5405 + $0x14] sm:$0xf]
    %v5412 = vld [vmem:[%s5405 + $0x18] sm:$0xf]
    %v5413 = vld [vmem:[%s5405 + $0x1c] sm:$0xf]
    %v5414 = vpack.c.bf16 %v5402, %v5401
    %v5415 = vpack.c.bf16 %v5404, %v5403
    %s5416 = scalar_lea.vmem %s3, 3
    %v5417 = vld [vmem:[%s5416] sm:$0x1]
    %v5419 = vlaneseq
    %v5420 = vshrl.u32 %v5419, 7
    %v5421 = vsub.s32 0, %v5420
    %v5422 = vrot.slane %v5417, %v5421
    %v5432 = vunpack.c.l.b16 %v5406
    %v5433 = vunpack.c.l.b16 %v5407
    %v5434 = vunpack.c.l.b16 %v5408
    %v5435 = vunpack.c.l.b16 %v5409
    %v5436 = vunpack.c.l.b16 %v5410
    %v5437 = vunpack.c.l.b16 %v5411
    %v5438 = vunpack.c.l.b16 %v5412
    %v5439 = vunpack.c.l.b16 %v5413
    %v5440 = vpack.c.b16 %v5433, %v5432
    %v5441 = vpack.c.b16 %v5435, %v5434
    %v5442 = vpack.c.b16 %v5437, %v5436
    %v5443 = vpack.c.b16 %v5439, %v5438
    %v5449 = vsel %vm224, %v5414, 0
    %v5452 = vsel %vm224, %v5415, 0
    %5454 = vmatprep.subr.bf16.mxu0 0
    %5455 = vmatpush1.bf16.msra.mxu0 0
    %5456 = vmatprep.subr.bf16.mxu0 0
    %5457 = vmatpush1.bf16.msra.mxu0 0
    %5458 = vmatprep.subr.bf16.mxu0 0
    %5459 = vmatpush1.bf16.msra.mxu0 0
    %5460 = vmatprep.subr.bf16.mxu0 0
    %5461 = vmatpush1.bf16.msra.mxu0 0
    %5462 = vmatprep.subr.bf16.mxu0 0
    %5463 = vmatpush1.bf16.msra.mxu0 %v5443
    %5464 = vmatprep.subr.bf16.mxu0 0
    %5465 = vmatpush1.bf16.msra.mxu0 %v5442
    %5466 = vmatprep.subr.bf16.mxu0 0
    %5467 = vmatpush1.bf16.msra.mxu0 %v5441
    %5468 = vmatprep.subr.bf16.mxu0 0
    %5469 = vmatpush1.bf16.msra.mxu0 %v5440
    %5470 = vmatprep.subr.bf16.mxu0 0
    %5471 = vmatpush2.bf16.msra.mxu0 0
    %5472 = vmatprep.subr.bf16.mxu0 0
    %5473 = vmatpush2.bf16.msra.mxu0 0
    %5474 = vmatprep.subr.bf16.mxu0 0
    %5475 = vmatpush2.bf16.msra.mxu0 0
    %5476 = vmatprep.subr.bf16.mxu0 0
    %5477 = vmatpush2.bf16.msra.mxu0 0
    %5478 = vmatprep.subr.bf16.mxu0 0
    %5479 = vmatpush2.bf16.msra.mxu0 0
    %5480 = vmatprep.subr.bf16.mxu0 0
    %5481 = vmatpush2.bf16.msra.mxu0 0
    %5482 = vmatprep.subr.bf16.mxu0 0
    %5483 = vmatpush2.bf16.msra.mxu0 0
    %5484 = vmatprep.subr.bf16.mxu0 0
    %5485 = vmatpush2.bf16.msra.mxu0 0
    %5486 = vmatprep.mubr.bf16.mxu0 0
    %5487 = vmatmul.mubr.bf16.gmra.mxu0 %v5449
    %v5488 = vpop.f32.mrf.mxu0
    %v5489 = vadd.f32 %v5422, %v5488
    %v5490 = vpop.f32.mrf.mxu0
    %v5491 = vpop.f32.mrf.mxu0
    %v5492 = vadd.f32 %v5422, %v5491
    %v5493 = vpop.f32.mrf.mxu0
    %5494 = vmatprep.mubr.bf16.mxu0 0
    %5495 = vmatmul.mubr.bf16.gmra.mxu0 %v5452
    %v5496 = vpop.f32.mrf.mxu0
    %v5497 = vadd.f32 %v5422, %v5496
    %v5498 = vpop.f32.mrf.mxu0
    %v5499 = vpop.f32.mrf.mxu0
    %v5500 = vadd.f32 %v5422, %v5499
    %v5501 = vpop.f32.mrf.mxu0
    %5502 = vdwg.mxu0
    %v5503 = vtanh.pop %v5489
    %v5504 = vtanh.pop %v5492
    %v5505 = vtanh.pop %v5497
    %v5506 = vtanh.pop %v5500
    %v5507 = vxor.u32 %v5489, 2147483648
    %v5508 = vxor.u32 %v5492, 2147483648
    %v5509 = vxor.u32 %v5497, 2147483648
    %v5510 = vxor.u32 %v5500, 2147483648
    %v5511 = vmul.f32 %v5507, 1.442695
    %v5512 = vpow.pop %v5511
    %v5513 = vmul.f32 %v5508, 1.442695
    %v5514 = vpow.pop %v5513
    %v5515 = vmul.f32 %v5509, 1.442695
    %v5516 = vpow.pop %v5515
    %v5517 = vmul.f32 %v5510, 1.442695
    %v5518 = vpow.pop %v5517
    %v5519 = vadd.f32 %v5512, 1.0
    %v5520 = vadd.f32 %v5514, 1.0
    %v5521 = vadd.f32 %v5516, 1.0
    %v5522 = vadd.f32 %v5518, 1.0
    %v5523 = vrcp.pop %v5519
    %v5524 = vmul.f32 1.0, %v5523
    %v5525 = vrcp.pop %v5520
    %v5526 = vmul.f32 1.0, %v5525
    %v5527 = vrcp.pop %v5521
    %v5528 = vmul.f32 1.0, %v5527
    %v5529 = vrcp.pop %v5522
    %v5530 = vmul.f32 1.0, %v5529
    %5535 = vrot.lane.b32.xlu0 %v5524, 96
    %v5536 = vpop.permute.xlu0 %5535
    %5537 = vrot.lane.b32.xlu0 %v5526, 96
    %v5538 = vpop.permute.xlu0 %5537
    %5539 = vrot.lane.b32.xlu0 %v5528, 96
    %v5540 = vpop.permute.xlu0 %5539
    %5541 = vrot.lane.b32.xlu0 %v5530, 96
    %v5542 = vpop.permute.xlu0 %5541
    %v5547 = vmul.f32 %v5503, %v5536
    %v5548 = vmul.f32 %v5504, %v5538
    %v5549 = vmul.f32 %v5505, %v5540
    %v5550 = vmul.f32 %v5506, %v5542
    %s5551 = scalar_lea.vmem %s4, 96
    %v5552 = vld [vmem:[%s5551] sm:$0xff]
    %v5553 = vld [vmem:[%s5551 + $0x8] sm:$0xff]
    %v5554 = vld [vmem:[%s5551 + $0x10] sm:$0xff]
    %v5555 = vld [vmem:[%s5551 + $0x18] sm:$0xff]
    %v5556 = vpack.c.bf16 %v5548, %v5547
    %v5557 = vpack.c.bf16 %v5550, %v5549
    %v5562 = vunpack.c.l.b16 %v5552
    %v5563 = vunpack.c.h.b16 %v5552
    %v5564 = vunpack.c.l.b16 %v5553
    %v5565 = vunpack.c.h.b16 %v5553
    %v5566 = vunpack.c.l.b16 %v5554
    %v5567 = vunpack.c.h.b16 %v5554
    %v5568 = vunpack.c.l.b16 %v5555
    %v5569 = vunpack.c.h.b16 %v5555
    %v5570 = vpack.c.b16 %v5564, %v5562
    %v5571 = vpack.c.b16 %v5565, %v5563
    %v5572 = vpack.c.b16 %v5568, %v5566
    %v5573 = vpack.c.b16 %v5569, %v5567
    %v5579 = vsel %vm75, %v5556, 0
    %v5582 = vsel %vm75, %v5557, 0
    %5584 = vmatprep.subr.bf16.mxu0 0
    %5585 = vmatpush1.bf16.msra.mxu0 0
    %5586 = vmatprep.subr.bf16.mxu0 0
    %5587 = vmatpush1.bf16.msra.mxu0 0
    %5588 = vmatprep.subr.bf16.mxu0 0
    %5589 = vmatpush1.bf16.msra.mxu0 0
    %5590 = vmatprep.subr.bf16.mxu0 0
    %5591 = vmatpush1.bf16.msra.mxu0 0
    %5592 = vmatprep.subr.bf16.mxu0 0
    %5593 = vmatpush1.bf16.msra.mxu0 0
    %5594 = vmatprep.subr.bf16.mxu0 0
    %5595 = vmatpush1.bf16.msra.mxu0 0
    %5596 = vmatprep.subr.bf16.mxu0 %v5573
    %5597 = vmatpush1.bf16.msra.mxu0 %v5572
    %5598 = vmatprep.subr.bf16.mxu0 %v5571
    %5599 = vmatpush1.bf16.msra.mxu0 %v5570
    %5600 = vmatprep.subr.bf16.mxu0 0
    %5601 = vmatpush2.bf16.msra.mxu0 0
    %5602 = vmatprep.subr.bf16.mxu0 0
    %5603 = vmatpush2.bf16.msra.mxu0 0
    %5604 = vmatprep.subr.bf16.mxu0 0
    %5605 = vmatpush2.bf16.msra.mxu0 0
    %5606 = vmatprep.subr.bf16.mxu0 0
    %5607 = vmatpush2.bf16.msra.mxu0 0
    %5608 = vmatprep.subr.bf16.mxu0 0
    %5609 = vmatpush2.bf16.msra.mxu0 0
    %5610 = vmatprep.subr.bf16.mxu0 0
    %5611 = vmatpush2.bf16.msra.mxu0 0
    %5612 = vmatprep.subr.bf16.mxu0 0
    %5613 = vmatpush2.bf16.msra.mxu0 0
    %5614 = vmatprep.subr.bf16.mxu0 0
    %5615 = vmatpush2.bf16.msra.mxu0 0
    %5616 = vmatprep.mubr.bf16.mxu0 0
    %5617 = vmatmul.mubr.bf16.gmra.mxu0 %v5579
    %v5618 = vpop.f32.mrf.mxu0
    %v5619 = vadd.f32 0.0, %v5618
    %v5620 = vpop.f32.mrf.mxu0
    %v5621 = vadd.f32 0.0, %v5620
    %v5622 = vpop.f32.mrf.mxu0
    %v5623 = vadd.f32 0.0, %v5622
    %v5624 = vpop.f32.mrf.mxu0
    %v5625 = vadd.f32 0.0, %v5624
    %5626 = vmatprep.mubr.bf16.mxu0 0
    %5627 = vmatmul.mubr.bf16.gmra.mxu0 %v5582
    %v5628 = vpop.f32.mrf.mxu0
    %v5629 = vadd.f32 0.0, %v5628
    %v5630 = vpop.f32.mrf.mxu0
    %v5631 = vadd.f32 0.0, %v5630
    %v5632 = vpop.f32.mrf.mxu0
    %v5633 = vadd.f32 0.0, %v5632
    %v5634 = vpop.f32.mrf.mxu0
    %v5635 = vadd.f32 0.0, %v5634
    %5636 = vdwg.mxu0
    %s5637 = scalar_lea.vmem %s5, 3
    %v5638 = vld [vmem:[%s5637] sm:$0x1]
    %v5640 = vlaneseq
    %v5641 = vshrl.u32 %v5640, 7
    %v5642 = vsub.s32 0, %v5641
    %v5643 = vrot.slane %v5638, %v5642
    %v5645 = vadd.f32 %v5619, %v5643
    %v5646 = vadd.f32 %v5623, %v5643
    %v5647 = vadd.f32 %v5629, %v5643
    %v5648 = vadd.f32 %v5633, %v5643
    %v5649 = vld [vmem:[%s1] sm:$0xf]
    %v5650 = vld [vmem:[%s1 + $0x4] sm:$0xf]
    %v5651 = vpack.c.bf16 %v5623, %v5619
    %v5654 = vunpack.c.l.b16 %v5649
    %v5655 = vunpack.c.l.b16 %v5650
    %v5656 = vpack.c.b16 %v5655, %v5654
    %5658 = vrot.lane.b32.xlu0 %v5651, 96
    %v5659 = vpop.permute.xlu0 %5658
    %v5662 = vsel %vm691, %v5656, 0
    %5664 = vmatprep.subr.bf16.mxu0 0
    %5665 = vmatpush1.bf16.msra.mxu0 0
    %5666 = vmatprep.subr.bf16.mxu0 0
    %5667 = vmatpush1.bf16.msra.mxu0 0
    %5668 = vmatprep.subr.bf16.mxu0 0
    %5669 = vmatpush1.bf16.msra.mxu0 0
    %5670 = vmatprep.subr.bf16.mxu0 0
    %5671 = vmatpush1.bf16.msra.mxu0 0
    %5672 = vmatprep.subr.bf16.mxu0 0
    %5673 = vmatpush1.bf16.msra.mxu0 0
    %5674 = vmatprep.subr.bf16.mxu0 0
    %5675 = vmatpush1.bf16.msra.mxu0 0
    %5676 = vmatprep.subr.bf16.mxu0 0
    %5677 = vmatpush1.bf16.msra.mxu0 0
    %5678 = vmatprep.subr.bf16.mxu0 0
    %5679 = vmatpush1.bf16.msra.mxu0 %v5659
    %5680 = vmatprep.subr.bf16.mxu0 0
    %5681 = vmatpush2.bf16.msra.mxu0 0
    %5682 = vmatprep.subr.bf16.mxu0 0
    %5683 = vmatpush2.bf16.msra.mxu0 0
    %5684 = vmatprep.subr.bf16.mxu0 0
    %5685 = vmatpush2.bf16.msra.mxu0 0
    %5686 = vmatprep.subr.bf16.mxu0 0
    %5687 = vmatpush2.bf16.msra.mxu0 0
    %5688 = vmatprep.subr.bf16.mxu0 0
    %5689 = vmatpush2.bf16.msra.mxu0 0
    %5690 = vmatprep.subr.bf16.mxu0 0
    %5691 = vmatpush2.bf16.msra.mxu0 0
    %5692 = vmatprep.subr.bf16.mxu0 0
    %5693 = vmatpush2.bf16.msra.mxu0 0
    %5694 = vmatprep.subr.bf16.mxu0 0
    %5695 = vmatpush2.bf16.msra.mxu0 0
    %5696 = vmatprep.mubr.bf16.mxu0 0
    %5697 = vmatmul.mubr.bf16.gmra.mxu0 %v5662
    %v5698 = vpop.f32.mrf.mxu0
    %v5699 = vadd.f32 0.0, %v5698
    %v5700 = vpop.f32.mrf.mxu0
    %v5701 = vpop.f32.mrf.mxu0
    %v5702 = vadd.f32 0.0, %v5701
    %v5703 = vpop.f32.mrf.mxu0
    %5704 = vdwg.mxu0
    %v5705 = vadd.f32 %v5645, %v5699
    %v5706 = vadd.f32 %v5646, %v5702
    %v5707 = vld [vmem:[%s738] sm:$0xf]
    %v5708 = vld [vmem:[%s738 + $0x4] sm:$0xf]
    %v5711 = vunpack.c.l.b16 %v5707
    %v5712 = vunpack.c.l.b16 %v5708
    %v5713 = vpack.c.b16 %v5712, %v5711
    %5714 = vrot.lane.b32.xlu0 %v5651, 64
    %v5715 = vpop.permute.xlu0 %5714
    %v5718 = vsel %vm691, %v5713, 0
    %5720 = vmatprep.subr.bf16.mxu0 0
    %5721 = vmatpush1.bf16.msra.mxu0 0
    %5722 = vmatprep.subr.bf16.mxu0 0
    %5723 = vmatpush1.bf16.msra.mxu0 0
    %5724 = vmatprep.subr.bf16.mxu0 0
    %5725 = vmatpush1.bf16.msra.mxu0 0
    %5726 = vmatprep.subr.bf16.mxu0 0
    %5727 = vmatpush1.bf16.msra.mxu0 0
    %5728 = vmatprep.subr.bf16.mxu0 0
    %5729 = vmatpush1.bf16.msra.mxu0 0
    %5730 = vmatprep.subr.bf16.mxu0 0
    %5731 = vmatpush1.bf16.msra.mxu0 0
    %5732 = vmatprep.subr.bf16.mxu0 0
    %5733 = vmatpush1.bf16.msra.mxu0 0
    %5734 = vmatprep.subr.bf16.mxu0 0
    %5735 = vmatpush1.bf16.msra.mxu0 %v5715
    %5736 = vmatprep.subr.bf16.mxu0 0
    %5737 = vmatpush2.bf16.msra.mxu0 0
    %5738 = vmatprep.subr.bf16.mxu0 0
    %5739 = vmatpush2.bf16.msra.mxu0 0
    %5740 = vmatprep.subr.bf16.mxu0 0
    %5741 = vmatpush2.bf16.msra.mxu0 0
    %5742 = vmatprep.subr.bf16.mxu0 0
    %5743 = vmatpush2.bf16.msra.mxu0 0
    %5744 = vmatprep.subr.bf16.mxu0 0
    %5745 = vmatpush2.bf16.msra.mxu0 0
    %5746 = vmatprep.subr.bf16.mxu0 0
    %5747 = vmatpush2.bf16.msra.mxu0 0
    %5748 = vmatprep.subr.bf16.mxu0 0
    %5749 = vmatpush2.bf16.msra.mxu0 0
    %5750 = vmatprep.subr.bf16.mxu0 0
    %5751 = vmatpush2.bf16.msra.mxu0 0
    %5752 = vmatprep.mubr.bf16.mxu0 0
    %5753 = vmatmul.mubr.bf16.gmra.mxu0 %v5718
    %v5754 = vpop.f32.mrf.mxu0
    %v5755 = vadd.f32 0.0, %v5754
    %v5756 = vpop.f32.mrf.mxu0
    %v5757 = vpop.f32.mrf.mxu0
    %v5758 = vadd.f32 0.0, %v5757
    %v5759 = vpop.f32.mrf.mxu0
    %5760 = vdwg.mxu0
    %v5761 = vadd.f32 %v5705, %v5755
    %v5762 = vadd.f32 %v5706, %v5758
    %v5763 = vld [vmem:[%s795] sm:$0xf]
    %v5764 = vld [vmem:[%s795 + $0x4] sm:$0xf]
    %v5767 = vunpack.c.l.b16 %v5763
    %v5768 = vunpack.c.l.b16 %v5764
    %v5769 = vpack.c.b16 %v5768, %v5767
    %5770 = vrot.lane.b32.xlu0 %v5651, 32
    %v5771 = vpop.permute.xlu0 %5770
    %v5774 = vsel %vm691, %v5769, 0
    %5776 = vmatprep.subr.bf16.mxu0 0
    %5777 = vmatpush1.bf16.msra.mxu0 0
    %5778 = vmatprep.subr.bf16.mxu0 0
    %5779 = vmatpush1.bf16.msra.mxu0 0
    %5780 = vmatprep.subr.bf16.mxu0 0
    %5781 = vmatpush1.bf16.msra.mxu0 0
    %5782 = vmatprep.subr.bf16.mxu0 0
    %5783 = vmatpush1.bf16.msra.mxu0 0
    %5784 = vmatprep.subr.bf16.mxu0 0
    %5785 = vmatpush1.bf16.msra.mxu0 0
    %5786 = vmatprep.subr.bf16.mxu0 0
    %5787 = vmatpush1.bf16.msra.mxu0 0
    %5788 = vmatprep.subr.bf16.mxu0 0
    %5789 = vmatpush1.bf16.msra.mxu0 0
    %5790 = vmatprep.subr.bf16.mxu0 0
    %5791 = vmatpush1.bf16.msra.mxu0 %v5771
    %5792 = vmatprep.subr.bf16.mxu0 0
    %5793 = vmatpush2.bf16.msra.mxu0 0
    %5794 = vmatprep.subr.bf16.mxu0 0
    %5795 = vmatpush2.bf16.msra.mxu0 0
    %5796 = vmatprep.subr.bf16.mxu0 0
    %5797 = vmatpush2.bf16.msra.mxu0 0
    %5798 = vmatprep.subr.bf16.mxu0 0
    %5799 = vmatpush2.bf16.msra.mxu0 0
    %5800 = vmatprep.subr.bf16.mxu0 0
    %5801 = vmatpush2.bf16.msra.mxu0 0
    %5802 = vmatprep.subr.bf16.mxu0 0
    %5803 = vmatpush2.bf16.msra.mxu0 0
    %5804 = vmatprep.subr.bf16.mxu0 0
    %5805 = vmatpush2.bf16.msra.mxu0 0
    %5806 = vmatprep.subr.bf16.mxu0 0
    %5807 = vmatpush2.bf16.msra.mxu0 0
    %5808 = vmatprep.mubr.bf16.mxu0 0
    %5809 = vmatmul.mubr.bf16.gmra.mxu0 %v5774
    %v5810 = vpop.f32.mrf.mxu0
    %v5811 = vadd.f32 0.0, %v5810
    %v5812 = vpop.f32.mrf.mxu0
    %v5813 = vpop.f32.mrf.mxu0
    %v5814 = vadd.f32 0.0, %v5813
    %v5815 = vpop.f32.mrf.mxu0
    %5816 = vdwg.mxu0
    %v5817 = vadd.f32 %v5761, %v5811
    %v5818 = vadd.f32 %v5762, %v5814
    %v5819 = vld [vmem:[%s852] sm:$0xf]
    %v5820 = vld [vmem:[%s852 + $0x4] sm:$0xf]
    %v5821 = vpack.c.bf16 %v5625, %v5621
    %v5824 = vunpack.c.l.b16 %v5819
    %v5825 = vunpack.c.l.b16 %v5820
    %v5826 = vpack.c.b16 %v5825, %v5824
    %v5828 = vsel %vm691, %v5826, 0
    %5830 = vmatprep.subr.bf16.mxu0 0
    %5831 = vmatpush1.bf16.msra.mxu0 0
    %5832 = vmatprep.subr.bf16.mxu0 0
    %5833 = vmatpush1.bf16.msra.mxu0 0
    %5834 = vmatprep.subr.bf16.mxu0 0
    %5835 = vmatpush1.bf16.msra.mxu0 0
    %5836 = vmatprep.subr.bf16.mxu0 0
    %5837 = vmatpush1.bf16.msra.mxu0 0
    %5838 = vmatprep.subr.bf16.mxu0 0
    %5839 = vmatpush1.bf16.msra.mxu0 0
    %5840 = vmatprep.subr.bf16.mxu0 0
    %5841 = vmatpush1.bf16.msra.mxu0 0
    %5842 = vmatprep.subr.bf16.mxu0 0
    %5843 = vmatpush1.bf16.msra.mxu0 0
    %5844 = vmatprep.subr.bf16.mxu0 0
    %5845 = vmatpush1.bf16.msra.mxu0 %v5821
    %5846 = vmatprep.subr.bf16.mxu0 0
    %5847 = vmatpush2.bf16.msra.mxu0 0
    %5848 = vmatprep.subr.bf16.mxu0 0
    %5849 = vmatpush2.bf16.msra.mxu0 0
    %5850 = vmatprep.subr.bf16.mxu0 0
    %5851 = vmatpush2.bf16.msra.mxu0 0
    %5852 = vmatprep.subr.bf16.mxu0 0
    %5853 = vmatpush2.bf16.msra.mxu0 0
    %5854 = vmatprep.subr.bf16.mxu0 0
    %5855 = vmatpush2.bf16.msra.mxu0 0
    %5856 = vmatprep.subr.bf16.mxu0 0
    %5857 = vmatpush2.bf16.msra.mxu0 0
    %5858 = vmatprep.subr.bf16.mxu0 0
    %5859 = vmatpush2.bf16.msra.mxu0 0
    %5860 = vmatprep.subr.bf16.mxu0 0
    %5861 = vmatpush2.bf16.msra.mxu0 0
    %5862 = vmatprep.mubr.bf16.mxu0 0
    %5863 = vmatmul.mubr.bf16.gmra.mxu0 %v5828
    %v5864 = vpop.f32.mrf.mxu0
    %v5865 = vadd.f32 0.0, %v5864
    %v5866 = vpop.f32.mrf.mxu0
    %v5867 = vpop.f32.mrf.mxu0
    %v5868 = vadd.f32 0.0, %v5867
    %v5869 = vpop.f32.mrf.mxu0
    %5870 = vdwg.mxu0
    %v5871 = vadd.f32 %v5817, %v5865
    %v5872 = vadd.f32 %v5818, %v5868
    %5873 = vst.msk [vmem:[#allocation2] sm:$0xff] %vm75, %v5871
    %5874 = vst.msk [vmem:[#allocation2 + $0x8] sm:$0xff] %vm75, %v5872
    %v5875 = vld [vmem:[%s1] sm:$0xf]
    %v5876 = vld [vmem:[%s1 + $0x4] sm:$0xf]
    %v5877 = vpack.c.bf16 %v5633, %v5629
    %v5880 = vunpack.c.l.b16 %v5875
    %v5881 = vunpack.c.l.b16 %v5876
    %v5882 = vpack.c.b16 %v5881, %v5880
    %5884 = vrot.lane.b32.xlu0 %v5877, 96
    %v5885 = vpop.permute.xlu0 %5884
    %v5888 = vsel %vm691, %v5882, 0
    %5890 = vmatprep.subr.bf16.mxu0 0
    %5891 = vmatpush1.bf16.msra.mxu0 0
    %5892 = vmatprep.subr.bf16.mxu0 0
    %5893 = vmatpush1.bf16.msra.mxu0 0
    %5894 = vmatprep.subr.bf16.mxu0 0
    %5895 = vmatpush1.bf16.msra.mxu0 0
    %5896 = vmatprep.subr.bf16.mxu0 0
    %5897 = vmatpush1.bf16.msra.mxu0 0
    %5898 = vmatprep.subr.bf16.mxu0 0
    %5899 = vmatpush1.bf16.msra.mxu0 0
    %5900 = vmatprep.subr.bf16.mxu0 0
    %5901 = vmatpush1.bf16.msra.mxu0 0
    %5902 = vmatprep.subr.bf16.mxu0 0
    %5903 = vmatpush1.bf16.msra.mxu0 0
    %5904 = vmatprep.subr.bf16.mxu0 0
    %5905 = vmatpush1.bf16.msra.mxu0 %v5885
    %5906 = vmatprep.subr.bf16.mxu0 0
    %5907 = vmatpush2.bf16.msra.mxu0 0
    %5908 = vmatprep.subr.bf16.mxu0 0
    %5909 = vmatpush2.bf16.msra.mxu0 0
    %5910 = vmatprep.subr.bf16.mxu0 0
    %5911 = vmatpush2.bf16.msra.mxu0 0
    %5912 = vmatprep.subr.bf16.mxu0 0
    %5913 = vmatpush2.bf16.msra.mxu0 0
    %5914 = vmatprep.subr.bf16.mxu0 0
    %5915 = vmatpush2.bf16.msra.mxu0 0
    %5916 = vmatprep.subr.bf16.mxu0 0
    %5917 = vmatpush2.bf16.msra.mxu0 0
    %5918 = vmatprep.subr.bf16.mxu0 0
    %5919 = vmatpush2.bf16.msra.mxu0 0
    %5920 = vmatprep.subr.bf16.mxu0 0
    %5921 = vmatpush2.bf16.msra.mxu0 0
    %5922 = vmatprep.mubr.bf16.mxu0 0
    %5923 = vmatmul.mubr.bf16.gmra.mxu0 %v5888
    %v5924 = vpop.f32.mrf.mxu0
    %v5925 = vadd.f32 0.0, %v5924
    %v5926 = vpop.f32.mrf.mxu0
    %v5927 = vpop.f32.mrf.mxu0
    %v5928 = vadd.f32 0.0, %v5927
    %v5929 = vpop.f32.mrf.mxu0
    %5930 = vdwg.mxu0
    %v5931 = vadd.f32 %v5647, %v5925
    %v5932 = vadd.f32 %v5648, %v5928
    %v5933 = vld [vmem:[%s738] sm:$0xf]
    %v5934 = vld [vmem:[%s738 + $0x4] sm:$0xf]
    %v5937 = vunpack.c.l.b16 %v5933
    %v5938 = vunpack.c.l.b16 %v5934
    %v5939 = vpack.c.b16 %v5938, %v5937
    %5940 = vrot.lane.b32.xlu0 %v5877, 64
    %v5941 = vpop.permute.xlu0 %5940
    %v5944 = vsel %vm691, %v5939, 0
    %5946 = vmatprep.subr.bf16.mxu0 0
    %5947 = vmatpush1.bf16.msra.mxu0 0
    %5948 = vmatprep.subr.bf16.mxu0 0
    %5949 = vmatpush1.bf16.msra.mxu0 0
    %5950 = vmatprep.subr.bf16.mxu0 0
    %5951 = vmatpush1.bf16.msra.mxu0 0
    %5952 = vmatprep.subr.bf16.mxu0 0
    %5953 = vmatpush1.bf16.msra.mxu0 0
    %5954 = vmatprep.subr.bf16.mxu0 0
    %5955 = vmatpush1.bf16.msra.mxu0 0
    %5956 = vmatprep.subr.bf16.mxu0 0
    %5957 = vmatpush1.bf16.msra.mxu0 0
    %5958 = vmatprep.subr.bf16.mxu0 0
    %5959 = vmatpush1.bf16.msra.mxu0 0
    %5960 = vmatprep.subr.bf16.mxu0 0
    %5961 = vmatpush1.bf16.msra.mxu0 %v5941
    %5962 = vmatprep.subr.bf16.mxu0 0
    %5963 = vmatpush2.bf16.msra.mxu0 0
    %5964 = vmatprep.subr.bf16.mxu0 0
    %5965 = vmatpush2.bf16.msra.mxu0 0
    %5966 = vmatprep.subr.bf16.mxu0 0
    %5967 = vmatpush2.bf16.msra.mxu0 0
    %5968 = vmatprep.subr.bf16.mxu0 0
    %5969 = vmatpush2.bf16.msra.mxu0 0
    %5970 = vmatprep.subr.bf16.mxu0 0
    %5971 = vmatpush2.bf16.msra.mxu0 0
    %5972 = vmatprep.subr.bf16.mxu0 0
    %5973 = vmatpush2.bf16.msra.mxu0 0
    %5974 = vmatprep.subr.bf16.mxu0 0
    %5975 = vmatpush2.bf16.msra.mxu0 0
    %5976 = vmatprep.subr.bf16.mxu0 0
    %5977 = vmatpush2.bf16.msra.mxu0 0
    %5978 = vmatprep.mubr.bf16.mxu0 0
    %5979 = vmatmul.mubr.bf16.gmra.mxu0 %v5944
    %v5980 = vpop.f32.mrf.mxu0
    %v5981 = vadd.f32 0.0, %v5980
    %v5982 = vpop.f32.mrf.mxu0
    %v5983 = vpop.f32.mrf.mxu0
    %v5984 = vadd.f32 0.0, %v5983
    %v5985 = vpop.f32.mrf.mxu0
    %5986 = vdwg.mxu0
    %v5987 = vadd.f32 %v5931, %v5981
    %v5988 = vadd.f32 %v5932, %v5984
    %v5989 = vld [vmem:[%s795] sm:$0xf]
    %v5990 = vld [vmem:[%s795 + $0x4] sm:$0xf]
    %v5993 = vunpack.c.l.b16 %v5989
    %v5994 = vunpack.c.l.b16 %v5990
    %v5995 = vpack.c.b16 %v5994, %v5993
    %5996 = vrot.lane.b32.xlu0 %v5877, 32
    %v5997 = vpop.permute.xlu0 %5996
    %v6000 = vsel %vm691, %v5995, 0
    %6002 = vmatprep.subr.bf16.mxu0 0
    %6003 = vmatpush1.bf16.msra.mxu0 0
    %6004 = vmatprep.subr.bf16.mxu0 0
    %6005 = vmatpush1.bf16.msra.mxu0 0
    %6006 = vmatprep.subr.bf16.mxu0 0
    %6007 = vmatpush1.bf16.msra.mxu0 0
    %6008 = vmatprep.subr.bf16.mxu0 0
    %6009 = vmatpush1.bf16.msra.mxu0 0
    %6010 = vmatprep.subr.bf16.mxu0 0
    %6011 = vmatpush1.bf16.msra.mxu0 0
    %6012 = vmatprep.subr.bf16.mxu0 0
    %6013 = vmatpush1.bf16.msra.mxu0 0
    %6014 = vmatprep.subr.bf16.mxu0 0
    %6015 = vmatpush1.bf16.msra.mxu0 0
    %6016 = vmatprep.subr.bf16.mxu0 0
    %6017 = vmatpush1.bf16.msra.mxu0 %v5997
    %6018 = vmatprep.subr.bf16.mxu0 0
    %6019 = vmatpush2.bf16.msra.mxu0 0
    %6020 = vmatprep.subr.bf16.mxu0 0
    %6021 = vmatpush2.bf16.msra.mxu0 0
    %6022 = vmatprep.subr.bf16.mxu0 0
    %6023 = vmatpush2.bf16.msra.mxu0 0
    %6024 = vmatprep.subr.bf16.mxu0 0
    %6025 = vmatpush2.bf16.msra.mxu0 0
    %6026 = vmatprep.subr.bf16.mxu0 0
    %6027 = vmatpush2.bf16.msra.mxu0 0
    %6028 = vmatprep.subr.bf16.mxu0 0
    %6029 = vmatpush2.bf16.msra.mxu0 0
    %6030 = vmatprep.subr.bf16.mxu0 0
    %6031 = vmatpush2.bf16.msra.mxu0 0
    %6032 = vmatprep.subr.bf16.mxu0 0
    %6033 = vmatpush2.bf16.msra.mxu0 0
    %6034 = vmatprep.mubr.bf16.mxu0 0
    %6035 = vmatmul.mubr.bf16.gmra.mxu0 %v6000
    %v6036 = vpop.f32.mrf.mxu0
    %v6037 = vadd.f32 0.0, %v6036
    %v6038 = vpop.f32.mrf.mxu0
    %v6039 = vpop.f32.mrf.mxu0
    %v6040 = vadd.f32 0.0, %v6039
    %v6041 = vpop.f32.mrf.mxu0
    %6042 = vdwg.mxu0
    %v6043 = vadd.f32 %v5987, %v6037
    %v6044 = vadd.f32 %v5988, %v6040
    %v6045 = vld [vmem:[%s852] sm:$0xf]
    %v6046 = vld [vmem:[%s852 + $0x4] sm:$0xf]
    %v6047 = vpack.c.bf16 %v5635, %v5631
    %v6050 = vunpack.c.l.b16 %v6045
    %v6051 = vunpack.c.l.b16 %v6046
    %v6052 = vpack.c.b16 %v6051, %v6050
    %v6054 = vsel %vm691, %v6052, 0
    %6056 = vmatprep.subr.bf16.mxu0 0
    %6057 = vmatpush1.bf16.msra.mxu0 0
    %6058 = vmatprep.subr.bf16.mxu0 0
    %6059 = vmatpush1.bf16.msra.mxu0 0
    %6060 = vmatprep.subr.bf16.mxu0 0
    %6061 = vmatpush1.bf16.msra.mxu0 0
    %6062 = vmatprep.subr.bf16.mxu0 0
    %6063 = vmatpush1.bf16.msra.mxu0 0
    %6064 = vmatprep.subr.bf16.mxu0 0
    %6065 = vmatpush1.bf16.msra.mxu0 0
    %6066 = vmatprep.subr.bf16.mxu0 0
    %6067 = vmatpush1.bf16.msra.mxu0 0
    %6068 = vmatprep.subr.bf16.mxu0 0
    %6069 = vmatpush1.bf16.msra.mxu0 0
    %6070 = vmatprep.subr.bf16.mxu0 0
    %6071 = vmatpush1.bf16.msra.mxu0 %v6047
    %6072 = vmatprep.subr.bf16.mxu0 0
    %6073 = vmatpush2.bf16.msra.mxu0 0
    %6074 = vmatprep.subr.bf16.mxu0 0
    %6075 = vmatpush2.bf16.msra.mxu0 0
    %6076 = vmatprep.subr.bf16.mxu0 0
    %6077 = vmatpush2.bf16.msra.mxu0 0
    %6078 = vmatprep.subr.bf16.mxu0 0
    %6079 = vmatpush2.bf16.msra.mxu0 0
    %6080 = vmatprep.subr.bf16.mxu0 0
    %6081 = vmatpush2.bf16.msra.mxu0 0
    %6082 = vmatprep.subr.bf16.mxu0 0
    %6083 = vmatpush2.bf16.msra.mxu0 0
    %6084 = vmatprep.subr.bf16.mxu0 0
    %6085 = vmatpush2.bf16.msra.mxu0 0
    %6086 = vmatprep.subr.bf16.mxu0 0
    %6087 = vmatpush2.bf16.msra.mxu0 0
    %6088 = vmatprep.mubr.bf16.mxu0 0
    %6089 = vmatmul.mubr.bf16.gmra.mxu0 %v6054
    %v6090 = vpop.f32.mrf.mxu0
    %v6091 = vadd.f32 0.0, %v6090
    %v6092 = vpop.f32.mrf.mxu0
    %v6093 = vpop.f32.mrf.mxu0
    %v6094 = vadd.f32 0.0, %v6093
    %v6095 = vpop.f32.mrf.mxu0
    %6096 = vdwg.mxu0
    %v6097 = vadd.f32 %v6043, %v6091
    %v6098 = vadd.f32 %v6044, %v6094
    %6099 = vst.msk [vmem:[#allocation2 + $0x10] sm:$0xff] %vm75, %v6097
    %6100 = vst.msk [vmem:[#allocation2 + $0x18] sm:$0xff] %vm75, %v6098
    %s6101 = scalar_lea.vmem %s6, 48
    %v6102 = vld [vmem:[%s6101] sm:$0xf]
    %v6103 = vld [vmem:[%s6101 + $0x4] sm:$0xf]
    %v6104 = vld [vmem:[%s6101 + $0x8] sm:$0xf]
    %v6105 = vld [vmem:[%s6101 + $0xc] sm:$0xf]
    %v6106 = vpack.c.bf16 %v6098, %v6097
    %v6111 = vunpack.c.l.b16 %v6102
    %v6112 = vunpack.c.l.b16 %v6103
    %v6113 = vunpack.c.l.b16 %v6104
    %v6114 = vunpack.c.l.b16 %v6105
    %v6115 = vpack.c.b16 %v6112, %v6111
    %v6116 = vpack.c.b16 %v6114, %v6113
    %v6120 = vsel %vm75, %v6106, 0
    %6122 = vmatprep.subr.bf16.mxu0 0
    %6123 = vmatpush1.bf16.msra.mxu0 0
    %6124 = vmatprep.subr.bf16.mxu0 0
    %6125 = vmatpush1.bf16.msra.mxu0 0
    %6126 = vmatprep.subr.bf16.mxu0 0
    %6127 = vmatpush1.bf16.msra.mxu0 0
    %6128 = vmatprep.subr.bf16.mxu0 0
    %6129 = vmatpush1.bf16.msra.mxu0 0
    %6130 = vmatprep.subr.bf16.mxu0 0
    %6131 = vmatpush1.bf16.msra.mxu0 0
    %6132 = vmatprep.subr.bf16.mxu0 0
    %6133 = vmatpush1.bf16.msra.mxu0 0
    %6134 = vmatprep.subr.bf16.mxu0 0
    %6135 = vmatpush1.bf16.msra.mxu0 %v6116
    %6136 = vmatprep.subr.bf16.mxu0 0
    %6137 = vmatpush1.bf16.msra.mxu0 %v6115
    %6138 = vmatprep.subr.bf16.mxu0 0
    %6139 = vmatpush2.bf16.msra.mxu0 0
    %6140 = vmatprep.subr.bf16.mxu0 0
    %6141 = vmatpush2.bf16.msra.mxu0 0
    %6142 = vmatprep.subr.bf16.mxu0 0
    %6143 = vmatpush2.bf16.msra.mxu0 0
    %6144 = vmatprep.subr.bf16.mxu0 0
    %6145 = vmatpush2.bf16.msra.mxu0 0
    %6146 = vmatprep.subr.bf16.mxu0 0
    %6147 = vmatpush2.bf16.msra.mxu0 0
    %6148 = vmatprep.subr.bf16.mxu0 0
    %6149 = vmatpush2.bf16.msra.mxu0 0
    %6150 = vmatprep.subr.bf16.mxu0 0
    %6151 = vmatpush2.bf16.msra.mxu0 0
    %6152 = vmatprep.subr.bf16.mxu0 0
    %6153 = vmatpush2.bf16.msra.mxu0 0
    %6154 = vmatprep.mubr.bf16.mxu0 0
    %6155 = vmatmul.mubr.bf16.gmra.mxu0 %v6120
    %v6156 = vpop.f32.mrf.mxu0
    %v6157 = vadd.f32 0.0, %v6156
    %v6158 = vpop.f32.mrf.mxu0
    %v6159 = vpop.f32.mrf.mxu0
    %v6160 = vadd.f32 0.0, %v6159
    %v6161 = vpop.f32.mrf.mxu0
    %6162 = vdwg.mxu0
    %v6163 = vadd.f32 %v5375, %v6157
    %v6164 = vadd.f32 %v5376, %v6160
    %s6165 = scalar_lea.vmem %s7, 3
    %v6166 = vld [vmem:[%s6165] sm:$0x1]
    %v6168 = vlaneseq
    %v6169 = vshrl.u32 %v6168, 7
    %v6170 = vsub.s32 0, %v6169
    %v6171 = vrot.slane %v6166, %v6170
    %v6173 = vadd.f32 %v6163, %v6171
    %v6174 = vadd.f32 %v6164, %v6171
    %v6175 = vmax.f32 %v6173, 0.0
    %v6176 = vmax.f32 %v6174, 0.0
    %v6177 = vld [vmem:[%s8] sm:$0xf]
    %v6178 = vld [vmem:[%s8 + $0x4] sm:$0xf]
    %v6179 = vld [vmem:[%s8 + $0x8] sm:$0xf]
    %v6180 = vld [vmem:[%s8 + $0xc] sm:$0xf]
    %v6181 = vld [vmem:[%s8 + $0x10] sm:$0xf]
    %v6182 = vld [vmem:[%s8 + $0x14] sm:$0xf]
    %v6183 = vld [vmem:[%s8 + $0x18] sm:$0xf]
    %v6184 = vld [vmem:[%s8 + $0x1c] sm:$0xf]
    %v6185 = vpack.c.bf16 %v6176, %v6175
    %v6186 = vld [vmem:[%s9] sm:$0x1]
    %v6188 = vlaneseq
    %v6189 = vshrl.u32 %v6188, 7
    %v6190 = vsub.s32 0, %v6189
    %v6191 = vrot.slane %v6186, %v6190
    %v6201 = vunpack.c.l.b16 %v6177
    %v6202 = vunpack.c.l.b16 %v6178
    %v6203 = vunpack.c.l.b16 %v6179
    %v6204 = vunpack.c.l.b16 %v6180
    %v6205 = vunpack.c.l.b16 %v6181
    %v6206 = vunpack.c.l.b16 %v6182
    %v6207 = vunpack.c.l.b16 %v6183
    %v6208 = vunpack.c.l.b16 %v6184
    %v6209 = vpack.c.b16 %v6202, %v6201
    %v6210 = vpack.c.b16 %v6204, %v6203
    %v6211 = vpack.c.b16 %v6206, %v6205
    %v6212 = vpack.c.b16 %v6208, %v6207
    %v6218 = vsel %vm224, %v6185, 0
    %6220 = vmatprep.subr.bf16.mxu0 0
    %6221 = vmatpush1.bf16.msra.mxu0 0
    %6222 = vmatprep.subr.bf16.mxu0 0
    %6223 = vmatpush1.bf16.msra.mxu0 0
    %6224 = vmatprep.subr.bf16.mxu0 0
    %6225 = vmatpush1.bf16.msra.mxu0 0
    %6226 = vmatprep.subr.bf16.mxu0 0
    %6227 = vmatpush1.bf16.msra.mxu0 0
    %6228 = vmatprep.subr.bf16.mxu0 0
    %6229 = vmatpush1.bf16.msra.mxu0 %v6212
    %6230 = vmatprep.subr.bf16.mxu0 0
    %6231 = vmatpush1.bf16.msra.mxu0 %v6211
    %6232 = vmatprep.subr.bf16.mxu0 0
    %6233 = vmatpush1.bf16.msra.mxu0 %v6210
    %6234 = vmatprep.subr.bf16.mxu0 0
    %6235 = vmatpush1.bf16.msra.mxu0 %v6209
    %6236 = vmatprep.subr.bf16.mxu0 0
    %6237 = vmatpush2.bf16.msra.mxu0 0
    %6238 = vmatprep.subr.bf16.mxu0 0
    %6239 = vmatpush2.bf16.msra.mxu0 0
    %6240 = vmatprep.subr.bf16.mxu0 0
    %6241 = vmatpush2.bf16.msra.mxu0 0
    %6242 = vmatprep.subr.bf16.mxu0 0
    %6243 = vmatpush2.bf16.msra.mxu0 0
    %6244 = vmatprep.subr.bf16.mxu0 0
    %6245 = vmatpush2.bf16.msra.mxu0 0
    %6246 = vmatprep.subr.bf16.mxu0 0
    %6247 = vmatpush2.bf16.msra.mxu0 0
    %6248 = vmatprep.subr.bf16.mxu0 0
    %6249 = vmatpush2.bf16.msra.mxu0 0
    %6250 = vmatprep.subr.bf16.mxu0 0
    %6251 = vmatpush2.bf16.msra.mxu0 0
    %6252 = vmatprep.mubr.bf16.mxu0 0
    %6253 = vmatmul.mubr.bf16.gmra.mxu0 %v6218
    %v6254 = vpop.f32.mrf.mxu0
    %v6255 = vadd.f32 %v6191, %v6254
    %v6256 = vpop.f32.mrf.mxu0
    %v6257 = vpop.f32.mrf.mxu0
    %v6258 = vadd.f32 %v6191, %v6257
    %v6259 = vpop.f32.mrf.mxu0
    %6260 = vdwg.mxu0
    %v6261 = vmax.f32 %v6255, 0.0
    %v6262 = vmax.f32 %v6258, 0.0
    %v6263 = vld [vmem:[%s10] sm:$0xf]
    %v6264 = vld [vmem:[%s10 + $0x4] sm:$0xf]
    %v6265 = vld [vmem:[%s10 + $0x8] sm:$0xf]
    %v6266 = vld [vmem:[%s10 + $0xc] sm:$0xf]
    %v6267 = vld [vmem:[%s10 + $0x10] sm:$0xf]
    %v6268 = vld [vmem:[%s10 + $0x14] sm:$0xf]
    %v6269 = vld [vmem:[%s10 + $0x18] sm:$0xf]
    %v6270 = vld [vmem:[%s10 + $0x1c] sm:$0xf]
    %v6271 = vld [vmem:[%s10 + $0x20] sm:$0xf]
    %v6272 = vld [vmem:[%s10 + $0x24] sm:$0xf]
    %v6273 = vld [vmem:[%s10 + $0x28] sm:$0xf]
    %v6274 = vld [vmem:[%s10 + $0x2c] sm:$0xf]
    %v6275 = vld [vmem:[%s10 + $0x30] sm:$0xf]
    %v6276 = vld [vmem:[%s10 + $0x34] sm:$0xf]
    %v6277 = vld [vmem:[%s10 + $0x38] sm:$0xf]
    %v6278 = vld [vmem:[%s10 + $0x3c] sm:$0xf]
    %v6279 = vpack.c.bf16 %v6262, %v6261
    %v6280 = vld [vmem:[%s11] sm:$0x1]
    %v6282 = vlaneseq
    %v6283 = vshrl.u32 %v6282, 7
    %v6284 = vsub.s32 0, %v6283
    %v6285 = vrot.slane %v6280, %v6284
    %v6303 = vunpack.c.l.b16 %v6263
    %v6304 = vunpack.c.l.b16 %v6264
    %v6305 = vunpack.c.l.b16 %v6265
    %v6306 = vunpack.c.l.b16 %v6266
    %v6307 = vunpack.c.l.b16 %v6267
    %v6308 = vunpack.c.l.b16 %v6268
    %v6309 = vunpack.c.l.b16 %v6269
    %v6310 = vunpack.c.l.b16 %v6270
    %v6311 = vunpack.c.l.b16 %v6271
    %v6312 = vunpack.c.l.b16 %v6272
    %v6313 = vunpack.c.l.b16 %v6273
    %v6314 = vunpack.c.l.b16 %v6274
    %v6315 = vunpack.c.l.b16 %v6275
    %v6316 = vunpack.c.l.b16 %v6276
    %v6317 = vunpack.c.l.b16 %v6277
    %v6318 = vunpack.c.l.b16 %v6278
    %v6319 = vpack.c.b16 %v6304, %v6303
    %v6320 = vpack.c.b16 %v6306, %v6305
    %v6321 = vpack.c.b16 %v6308, %v6307
    %v6322 = vpack.c.b16 %v6310, %v6309
    %v6323 = vpack.c.b16 %v6312, %v6311
    %v6324 = vpack.c.b16 %v6314, %v6313
    %v6325 = vpack.c.b16 %v6316, %v6315
    %v6326 = vpack.c.b16 %v6318, %v6317
    %6335 = vmatprep.subr.bf16.mxu0 0
    %6336 = vmatpush1.bf16.msra.mxu0 %v6326
    %6337 = vmatprep.subr.bf16.mxu0 0
    %6338 = vmatpush1.bf16.msra.mxu0 %v6325
    %6339 = vmatprep.subr.bf16.mxu0 0
    %6340 = vmatpush1.bf16.msra.mxu0 %v6324
    %6341 = vmatprep.subr.bf16.mxu0 0
    %6342 = vmatpush1.bf16.msra.mxu0 %v6323
    %6343 = vmatprep.subr.bf16.mxu0 0
    %6344 = vmatpush1.bf16.msra.mxu0 %v6322
    %6345 = vmatprep.subr.bf16.mxu0 0
    %6346 = vmatpush1.bf16.msra.mxu0 %v6321
    %6347 = vmatprep.subr.bf16.mxu0 0
    %6348 = vmatpush1.bf16.msra.mxu0 %v6320
    %6349 = vmatprep.subr.bf16.mxu0 0
    %6350 = vmatpush1.bf16.msra.mxu0 %v6319
    %6351 = vmatprep.subr.bf16.mxu0 0
    %6352 = vmatpush2.bf16.msra.mxu0 0
    %6353 = vmatprep.subr.bf16.mxu0 0
    %6354 = vmatpush2.bf16.msra.mxu0 0
    %6355 = vmatprep.subr.bf16.mxu0 0
    %6356 = vmatpush2.bf16.msra.mxu0 0
    %6357 = vmatprep.subr.bf16.mxu0 0
    %6358 = vmatpush2.bf16.msra.mxu0 0
    %6359 = vmatprep.subr.bf16.mxu0 0
    %6360 = vmatpush2.bf16.msra.mxu0 0
    %6361 = vmatprep.subr.bf16.mxu0 0
    %6362 = vmatpush2.bf16.msra.mxu0 0
    %6363 = vmatprep.subr.bf16.mxu0 0
    %6364 = vmatpush2.bf16.msra.mxu0 0
    %6365 = vmatprep.subr.bf16.mxu0 0
    %6366 = vmatpush2.bf16.msra.mxu0 0
    %6367 = vmatprep.mubr.bf16.mxu0 0
    %6368 = vmatmul.mubr.bf16.gmra.mxu0 %v6279
    %v6369 = vpop.f32.mrf.mxu0
    %v6370 = vadd.f32 %v6285, %v6369
    %v6371 = vpop.f32.mrf.mxu0
    %v6372 = vpop.f32.mrf.mxu0
    %v6373 = vadd.f32 %v6285, %v6372
    %v6374 = vpop.f32.mrf.mxu0
    %6375 = vdwg.mxu0
    %vm6376 = vcmask 97280
    %6377 = vst.msk [vmem:[#allocation4] sm:$0xff] %vm6376, %v6370
    %6378 = vst.msk [vmem:[#allocation4 + $0x8] sm:$0xff] %vm6376, %v6373
    // Predicated region
    $region50: #{graph_wavenet_forward.1} parent=1 // pred_check
      _
    $region51: #{graph_wavenet_forward.1} parent=1 // pred_check_branch
      %6380 = sbr.rel (0) target = $region53
    $region52: #{graph_wavenet_forward.1} parent=1 // pred_region
      %s6382 = ssub.s32 256, 256
      %6383 = vsyncadd [#allocation5], %s6382
      %s6384 = sshll.u32 [#allocation4], 4
      %s6385 = int_to_ptr.vmem [resolvable:$true] %s6384
      %6390 = dma.vmem_to_hbm [thread:$0]  %s6385, 256, %s12, [#allocation5], 128, 128, 8
    $region53: #{graph_wavenet_forward.1} parent=1 // pred_fallthru
      _
    // Predicated region
    $region54: #{graph_wavenet_forward.1} parent=1 // pred_check
      _
    $region55: #{graph_wavenet_forward.1} parent=1 // pred_check_branch
      %6392 = sbr.rel (0) target = $region57
    $region56: #{graph_wavenet_forward.1} parent=1 // pred_region
      %6393 = dma.done [#allocation5], 256
    $region57: #{graph_wavenet_forward.1} parent=1 // pred_fallthru
      _
    %6394 = vsyncpa [#allocation5], 1

</llo_original>
